<compile_context>
chip_gen: v7x
topology: tpu7x:2x2x1
jax: 0.10.0
libtpu: 0.0.40
codegen_flags: <defaults>
</compile_context>

<pallas_src>
import numpy as np
import jax
import jax.numpy as jnp
from jax.experimental import pallas as pl
from jax.experimental.pallas import tpu as pltpu

# ----------------------------- configuration --------------------------------
INPUT_SIZE = 128
COMPONENTS = 2
SELF_CONCAT = 1
INPUT_CHANNEL = COMPONENTS * SELF_CONCAT     # 2
SFC_NUMS = 2
DIMS_LATENT = 8
KERNEL_SIZE = 32                              # dimension == 2
STRIDE = 4
PADDING = KERNEL_SIZE // 2
NUM_FINAL_CHANNELS = 8
INCREASE_MULTI = 4                            # unstructured
BATCH = 2


def find_sizes():
    """Reconstruction of find_size_conv_layers_and_fc_layers (synthetic, small)."""
    conv_size = [INPUT_SIZE]
    channels = [INPUT_CHANNEL]
    size = INPUT_SIZE
    size_conv = 2
    for _ in range(size_conv):
        # PyTorch Conv1d with k=32, s=4, p=16 :  L_out = L // 4 + 1
        size = size // STRIDE + 1
        conv_size.append(size)
        channels.append(min(channels[-1] * INCREASE_MULTI, NUM_FINAL_CHANNELS))
    flat = conv_size[-1] * channels[-1] * SFC_NUMS          # 9 * 8 * 2 = 144
    size_fc = [flat, 32, DIMS_LATENT]
    return conv_size, size_conv, size_fc, channels


# ------------------------- SFC ordering helpers ------------------------------
def find_plus_neigh(ordering):
    plus = np.copy(ordering)
    plus[:-1] = ordering[1:]
    plus[-1] = ordering[-1]
    return plus


def find_minus_neigh(ordering):
    minus = np.copy(ordering)
    minus[1:] = ordering[:-1]
    minus[0] = ordering[0]
    return minus


def expend_SFC_NUM(ordering, partitions):
    size = len(ordering)
    return np.concatenate([ordering + i * size for i in range(partitions)])


# ------------------------------ fused Pallas kernel ---------------------------
def _mm(a, b):
    return jnp.dot(a, b, preferred_element_type=jnp.float32,
                   precision=jax.lax.Precision.HIGHEST)


def _encoder_kernel(tm_ref, ts_ref, tp_ref, wnn_ref, bnn_ref,
                    m1_ref, b1_ref, m2_ref, b2_ref,
                    w1t_ref, bf1_ref, w2t_ref, bf2_ref, o_ref):
    # NearestNeighbouring + tanh: three explicit VPU multiply-adds, both SFC
    # branches folded into the lane dim (no cross-sublane XLU reduction).
    a0 = jnp.tanh(tm_ref[...] * wnn_ref[0:1, :]
                  + ts_ref[...] * wnn_ref[1:2, :]
                  + tp_ref[...] * wnn_ref[2:3, :]
                  + bnn_ref[...])                       # (N, SFC * Cin * L)

    # Conv layer 1 + tanh (block-diagonal unrolled conv matrix over SFC).
    a1 = jnp.tanh(_mm(a0, m1_ref[...]) + b1_ref[...])   # (N, SFC * C1 * L1)

    # Conv layer 2 + tanh; output columns are already the concatenated
    # flattened per-SFC feature maps expected by the first FC layer.
    a2 = jnp.tanh(_mm(a1, m2_ref[...]) + b2_ref[...])   # (N, SFC * C2 * L2)

    # Fully connected stack (weights pre-transposed at build time).
    h1 = jnp.tanh(_mm(a2, w1t_ref[...]) + bf1_ref[...])                 # (N, 32)
    o_ref[...] = jnp.tanh(_mm(h1, w2t_ref[...]) + bf2_ref[...]).astype(o_ref.dtype)


def _fused_encoder(tm, ts, tp, fused):
    N = tm.shape[0]
    args = [tm, ts, tp,
            fused["nn_w"], fused["nn_b"],
            fused["conv_m"][0], fused["conv_bias"][0],
            fused["conv_m"][1], fused["conv_bias"][1],
            fused["fc_wt"][0], fused["fc_b"][0],
            fused["fc_wt"][1], fused["fc_b"][1]]
    dims_latent = fused["fc_wt"][1].shape[1]

    def full_spec(shape):
        return pl.BlockSpec(shape, lambda i, _s=len(shape): (0,) * _s)

    return pl.pallas_call(
        _encoder_kernel,
        out_shape=jax.ShapeDtypeStruct((N, dims_latent), jnp.float32),
        grid=(1,),
        in_specs=[full_spec(a.shape) for a in args],
        out_specs=full_spec((N, dims_latent)),
        compiler_params=pltpu.CompilerParams(
            dimension_semantics=("arbitrary",)),
    )(*args)


# ------------------------------ encoder forward --------------------------------
def encoder_forward(x, fused):
    """x: (N, input_size, components), float32 -> (N, dims_latent)."""
    N = x.shape[0]
    # components > 1: x.permute(0, -1, -2).reshape(-1, components * input_size)
    xf = jnp.transpose(x, (0, 2, 1)).reshape(N, -1)           # (N, Cin * L)
    # self_concat == 1 -> no self-concatenation.
    # SFC gathers: one constant-index take per neighbour, all SFC branches at once.
    tm = jnp.take(xf, fused["idx_minus"], axis=1)             # (N, SFC*Cin*L)
    ts = jnp.take(xf, fused["idx_self"], axis=1)
    tp = jnp.take(xf, fused["idx_plus"], axis=1)
    return _fused_encoder(tm, ts, tp, fused)


# ------------------------------ pure-JAX reference ------------------------------
def reference_forward(x, params):
    N = x.shape[0]
    xf = jnp.transpose(x, (0, 2, 1)).reshape(N, -1)
    xs = []
    for i in range(SFC_NUMS):
        minus = xf[:, params["sfc_minus"][i]]
        selfo = xf[:, params["orderings"][i]]
        plus = xf[:, params["sfc_plus"][i]]
        tt = jnp.stack([minus, selfo, plus], axis=-1)           # (N, S, 3)
        w = params["nn_w"][i]                                   # (3, S)
        a = jnp.tanh(jnp.sum(tt * jnp.transpose(w)[None], axis=-1)
                     + params["nn_b"][i][0])
        a = a.reshape(N, INPUT_CHANNEL, INPUT_SIZE)
        for j in range(params["size_conv"]):
            a = jax.lax.conv_general_dilated(
                a, params["conv_w"][i][j], window_strides=(STRIDE,),
                padding=[(PADDING, PADDING)],
                dimension_numbers=("NCH", "OIH", "NCH"),
                precision=jax.lax.Precision.HIGHEST)
            a = jnp.tanh(a + params["conv_b"][i][j][None, :, None])
        xs.append(a.reshape(N, -1))
    h = jnp.concatenate(xs, axis=-1)
    for (w, b) in params["fcs"]:
        h = jnp.tanh(jnp.dot(h, jnp.transpose(w),
                             precision=jax.lax.Precision.HIGHEST) + b[None])
    return h


# ------------------------------ parameter construction --------------------------
def build_params(key):
    conv_size, size_conv, size_fc, channels = find_sizes()
    S = INPUT_SIZE * INPUT_CHANNEL
    params = {"size_conv": size_conv, "conv_size": conv_size,
              "size_fc": size_fc, "channels": channels}

    orderings, sfc_minus, sfc_plus = [], [], []
    for _ in range(SFC_NUMS):
        key, sub = jax.random.split(key)
        order = np.asarray(jax.random.permutation(sub, INPUT_SIZE))
        orderings.append(jnp.asarray(
            expend_SFC_NUM(order, INPUT_CHANNEL), dtype=jnp.int32))
        sfc_plus.append(jnp.asarray(
            expend_SFC_NUM(find_plus_neigh(order), INPUT_CHANNEL), dtype=jnp.int32))
        sfc_minus.append(jnp.asarray(
            expend_SFC_NUM(find_minus_neigh(order), INPUT_CHANNEL), dtype=jnp.int32))
    params["orderings"] = orderings
    params["sfc_plus"] = sfc_plus
    params["sfc_minus"] = sfc_minus

    # NearestNeighbouring: weight = 1/3, bias = 0
    params["nn_w"] = [jnp.full((3, S), 1.0 / 3.0, jnp.float32) for _ in range(SFC_NUMS)]
    params["nn_b"] = [jnp.zeros((1, S), jnp.float32) for _ in range(SFC_NUMS)]

    # Conv1d stacks (force_initialising_param-style: uniform weights, bias 0.001)
    conv_w, conv_b = [], []
    for _ in range(SFC_NUMS):
        ws, bs = [], []
        for j in range(size_conv):
            key, sub = jax.random.split(key)
            ws.append(jax.random.uniform(
                sub, (channels[j + 1], channels[j], KERNEL_SIZE),
                jnp.float32, -0.1, 0.1))
            bs.append(jnp.full((channels[j + 1],), 0.001, jnp.float32))
        conv_w.append(ws)
        conv_b.append(bs)
    params["conv_w"] = conv_w
    params["conv_b"] = conv_b

    # Fully-connected layers (last one included, non-variational path)
    fcs = []
    for i in range(len(size_fc) - 1):
        key, sub = jax.random.split(key)
        fcs.append((
            jax.random.uniform(sub, (size_fc[i + 1], size_fc[i]),
                               jnp.float32, -0.1, 0.1),
            jnp.full((size_fc[i + 1],), 0.001, jnp.float32),
        ))
    params["fcs"] = fcs
    return params


def _conv_as_matrix(w_np, b_np, L_in, stride, padding):
    """Dense unrolled-conv matrix so conv1d(x) == x_flat @ M + bias_row."""
    Cout, Cin, K = w_np.shape
    Lout = (L_in + 2 * padding - K) // stride + 1
    M = np.zeros((Cin * L_in, Cout * Lout), np.float32)
    rows_base = np.arange(Cin) * L_in
    cols_base = np.arange(Cout) * Lout
    for t in range(Lout):
        for k in range(K):
            l = t * stride + k - padding
            if 0 <= l < L_in:
                M[np.ix_(rows_base + l, cols_base + t)] = w_np[:, :, k].T
    bias_row = np.repeat(b_np, Lout).astype(np.float32)        # (Cout*Lout,)
    return M, bias_row, Lout


def _block_diag(mats):
    rows = sum(m.shape[0] for m in mats)
    cols = sum(m.shape[1] for m in mats)
    out = np.zeros((rows, cols), np.float32)
    r = c = 0
    for m in mats:
        out[r:r + m.shape[0], c:c + m.shape[1]] = m
        r += m.shape[0]
        c += m.shape[1]
    return out


def build_fused_params(params):
    """Precompute the lane-dense, SFC-block-diagonal operands for the fused kernel."""
    conv_size = params["conv_size"]
    size_conv = params["size_conv"]
    fused = {}

    # Combined gather indices (3 neighbours x all SFC branches).
    fused["idx_minus"] = jnp.asarray(np.concatenate(
        [np.asarray(params["sfc_minus"][i]) for i in range(SFC_NUMS)]), jnp.int32)
    fused["idx_self"] = jnp.asarray(np.concatenate(
        [np.asarray(params["orderings"][i]) for i in range(SFC_NUMS)]), jnp.int32)
    fused["idx_plus"] = jnp.asarray(np.concatenate(
        [np.asarray(params["sfc_plus"][i]) for i in range(SFC_NUMS)]), jnp.int32)

    # NearestNeighbouring weights/bias, SFC branches concatenated on the lane dim.
    fused["nn_w"] = jnp.asarray(np.concatenate(
        [np.asarray(params["nn_w"][i]) for i in range(SFC_NUMS)], axis=1))
    fused["nn_b"] = jnp.asarray(np.concatenate(
        [np.asarray(params["nn_b"][i]) for i in range(SFC_NUMS)], axis=1))

    # Conv layers as block-diagonal (over SFC) dense matrices.
    conv_m, conv_bias = [], []
    for j in range(size_conv):
        mats, biases = [], []
        for i in range(SFC_NUMS):
            M, brow, _ = _conv_as_matrix(np.asarray(params["conv_w"][i][j]),
                                         np.asarray(params["conv_b"][i][j]),
                                         conv_size[j], STRIDE, PADDING)
            mats.append(M)
            biases.append(brow)
        conv_m.append(jnp.asarray(_block_diag(mats)))
        conv_bias.append(jnp.asarray(np.concatenate(biases)[None, :]))
    fused["conv_m"] = conv_m
    fused["conv_bias"] = conv_bias

    # FC layers: pre-transposed weights, row biases.
    fused["fc_wt"] = [jnp.asarray(np.asarray(w).T) for (w, _) in params["fcs"]]
    fused["fc_b"] = [jnp.asarray(np.asarray(b)[None, :]) for (_, b) in params["fcs"]]
    return fused


# ------------------------------------ main ---------------------------------------
if __name__ == "__main__":
    key = jax.random.PRNGKey(0)
    key, pkey, xkey = jax.random.split(key, 3)

    params = build_params(pkey)
    fused = build_fused_params(params)
    x = jax.random.normal(xkey, (BATCH, INPUT_SIZE, COMPONENTS), jnp.float32)

    out = jax.block_until_ready(encoder_forward(x, fused))
    ref = jax.block_until_ready(reference_forward(x, params))

    assert out.shape == (BATCH, DIMS_LATENT), out.shape
    np.testing.assert_allclose(np.asarray(out), np.asarray(ref),
                               rtol=2e-3, atol=2e-3)
    print("KERNEL_OK")
</pallas_src>

<mosaic_0001>
module attributes {stable_mosaic.version = 11 : i64} {
  func.func @_encoder_kernel(%arg0: i32, %arg1: memref<2x512xf32, #tpu.memory_space<vmem>>, %arg2: memref<2x512xf32, #tpu.memory_space<vmem>>, %arg3: memref<2x512xf32, #tpu.memory_space<vmem>>, %arg4: memref<3x512xf32, #tpu.memory_space<vmem>>, %arg5: memref<1x512xf32, #tpu.memory_space<vmem>>, %arg6: memref<512x528xf32, #tpu.memory_space<vmem>>, %arg7: memref<1x528xf32, #tpu.memory_space<vmem>>, %arg8: memref<528x144xf32, #tpu.memory_space<vmem>>, %arg9: memref<1x144xf32, #tpu.memory_space<vmem>>, %arg10: memref<144x32xf32, #tpu.memory_space<vmem>>, %arg11: memref<1x32xf32, #tpu.memory_space<vmem>>, %arg12: memref<32x8xf32, #tpu.memory_space<vmem>>, %arg13: memref<1x8xf32, #tpu.memory_space<vmem>>, %arg14: memref<2x8xf32, #tpu.memory_space<vmem>>) attributes {dimension_semantics = [#tpu.dimension_semantics<arbitrary>], iteration_bounds = array<i64: 1>, scalar_prefetch = 0 : i64, scratch_operands = 0 : i64, tpu.core_type = #tpu.core_type<tc>, window_params = [{pipeline_mode = #tpu.pipeline_mode<synchronous>, transform_indices = @transform_0, window_bounds = array<i64: 2, 512>}, {pipeline_mode = #tpu.pipeline_mode<synchronous>, transform_indices = @transform_1, window_bounds = array<i64: 2, 512>}, {pipeline_mode = #tpu.pipeline_mode<synchronous>, transform_indices = @transform_2, window_bounds = array<i64: 2, 512>}, {pipeline_mode = #tpu.pipeline_mode<synchronous>, transform_indices = @transform_3, window_bounds = array<i64: 3, 512>}, {pipeline_mode = #tpu.pipeline_mode<synchronous>, transform_indices = @transform_4, window_bounds = array<i64: 1, 512>}, {pipeline_mode = #tpu.pipeline_mode<synchronous>, transform_indices = @transform_5, window_bounds = array<i64: 512, 528>}, {pipeline_mode = #tpu.pipeline_mode<synchronous>, transform_indices = @transform_6, window_bounds = array<i64: 1, 528>}, {pipeline_mode = #tpu.pipeline_mode<synchronous>, transform_indices = @transform_7, window_bounds = array<i64: 528, 144>}, {pipeline_mode = #tpu.pipeline_mode<synchronous>, transform_indices = @transform_8, window_bounds = array<i64: 1, 144>}, {pipeline_mode = #tpu.pipeline_mode<synchronous>, transform_indices = @transform_9, window_bounds = array<i64: 144, 32>}, {pipeline_mode = #tpu.pipeline_mode<synchronous>, transform_indices = @transform_10, window_bounds = array<i64: 1, 32>}, {pipeline_mode = #tpu.pipeline_mode<synchronous>, transform_indices = @transform_11, window_bounds = array<i64: 32, 8>}, {pipeline_mode = #tpu.pipeline_mode<synchronous>, transform_indices = @transform_12, window_bounds = array<i64: 1, 8>}, {pipeline_mode = #tpu.pipeline_mode<synchronous>, transform_indices = @transform_13, window_bounds = array<i64: 2, 8>}]} {
    %c0 = arith.constant 0 : index
    %c0_0 = arith.constant 0 : index
    %0 = vector.load %arg1[%c0, %c0_0] : memref<2x512xf32, #tpu.memory_space<vmem>>, vector<2x512xf32>
    %c0_1 = arith.constant 0 : index
    %c0_2 = arith.constant 0 : index
    %1 = vector.load %arg4[%c0_1, %c0_2] : memref<3x512xf32, #tpu.memory_space<vmem>>, vector<1x512xf32>
    %2 = vector.broadcast %1 : vector<1x512xf32> to vector<2x512xf32>
    %3 = arith.mulf %0, %2 : vector<2x512xf32>
    %c0_3 = arith.constant 0 : index
    %c0_4 = arith.constant 0 : index
    %4 = vector.load %arg2[%c0_3, %c0_4] : memref<2x512xf32, #tpu.memory_space<vmem>>, vector<2x512xf32>
    %c1 = arith.constant 1 : index
    %c0_5 = arith.constant 0 : index
    %5 = vector.load %arg4[%c1, %c0_5] : memref<3x512xf32, #tpu.memory_space<vmem>>, vector<1x512xf32>
    %6 = vector.broadcast %5 : vector<1x512xf32> to vector<2x512xf32>
    %7 = arith.mulf %4, %6 : vector<2x512xf32>
    %8 = arith.addf %3, %7 : vector<2x512xf32>
    %c0_6 = arith.constant 0 : index
    %c0_7 = arith.constant 0 : index
    %9 = vector.load %arg3[%c0_6, %c0_7] : memref<2x512xf32, #tpu.memory_space<vmem>>, vector<2x512xf32>
    %c2 = arith.constant 2 : index
    %c0_8 = arith.constant 0 : index
    %10 = vector.load %arg4[%c2, %c0_8] : memref<3x512xf32, #tpu.memory_space<vmem>>, vector<1x512xf32>
    %11 = vector.broadcast %10 : vector<1x512xf32> to vector<2x512xf32>
    %12 = arith.mulf %9, %11 : vector<2x512xf32>
    %13 = arith.addf %8, %12 : vector<2x512xf32>
    %c0_9 = arith.constant 0 : index
    %c0_10 = arith.constant 0 : index
    %14 = vector.load %arg5[%c0_9, %c0_10] : memref<1x512xf32, #tpu.memory_space<vmem>>, vector<1x512xf32>
    %15 = vector.broadcast %14 : vector<1x512xf32> to vector<2x512xf32>
    %16 = arith.addf %13, %15 : vector<2x512xf32>
    %17 = math.tanh %16 : vector<2x512xf32>
    %c0_11 = arith.constant 0 : index
    %c0_12 = arith.constant 0 : index
    %18 = vector.load %arg6[%c0_11, %c0_12] : memref<512x528xf32, #tpu.memory_space<vmem>>, vector<512x528xf32>
    %cst = arith.constant dense<0.000000e+00> : vector<2x528xf32>
    %19 = tpu.matmul %17, %18, %cst {dimension_numbers = #tpu.dot_dimension_numbers<[1], [0], [0], [1], [0, 0, 1, 1], [], []>, precision = #tpu.contract_precision<fp32>} : vector<2x512xf32>, vector<512x528xf32>, vector<2x528xf32> -> vector<2x528xf32>
    %c0_13 = arith.constant 0 : index
    %c0_14 = arith.constant 0 : index
    %20 = vector.load %arg7[%c0_13, %c0_14] : memref<1x528xf32, #tpu.memory_space<vmem>>, vector<1x528xf32>
    %21 = vector.broadcast %20 : vector<1x528xf32> to vector<2x528xf32>
    %22 = arith.addf %19, %21 : vector<2x528xf32>
    %23 = math.tanh %22 : vector<2x528xf32>
    %c0_15 = arith.constant 0 : index
    %c0_16 = arith.constant 0 : index
    %24 = vector.load %arg8[%c0_15, %c0_16] : memref<528x144xf32, #tpu.memory_space<vmem>>, vector<528x144xf32>
    %cst_17 = arith.constant dense<0.000000e+00> : vector<2x144xf32>
    %25 = tpu.matmul %23, %24, %cst_17 {dimension_numbers = #tpu.dot_dimension_numbers<[1], [0], [0], [1], [0, 0, 1, 1], [], []>, precision = #tpu.contract_precision<fp32>} : vector<2x528xf32>, vector<528x144xf32>, vector<2x144xf32> -> vector<2x144xf32>
    %c0_18 = arith.constant 0 : index
    %c0_19 = arith.constant 0 : index
    %26 = vector.load %arg9[%c0_18, %c0_19] : memref<1x144xf32, #tpu.memory_space<vmem>>, vector<1x144xf32>
    %27 = vector.broadcast %26 : vector<1x144xf32> to vector<2x144xf32>
    %28 = arith.addf %25, %27 : vector<2x144xf32>
    %29 = math.tanh %28 : vector<2x144xf32>
    %c0_20 = arith.constant 0 : index
    %c0_21 = arith.constant 0 : index
    %30 = vector.load %arg10[%c0_20, %c0_21] : memref<144x32xf32, #tpu.memory_space<vmem>>, vector<144x32xf32>
    %cst_22 = arith.constant dense<0.000000e+00> : vector<2x32xf32>
    %31 = tpu.matmul %29, %30, %cst_22 {dimension_numbers = #tpu.dot_dimension_numbers<[1], [0], [0], [1], [0, 0, 1, 1], [], []>, precision = #tpu.contract_precision<fp32>} : vector<2x144xf32>, vector<144x32xf32>, vector<2x32xf32> -> vector<2x32xf32>
    %c0_23 = arith.constant 0 : index
    %c0_24 = arith.constant 0 : index
    %32 = vector.load %arg11[%c0_23, %c0_24] : memref<1x32xf32, #tpu.memory_space<vmem>>, vector<1x32xf32>
    %33 = vector.broadcast %32 : vector<1x32xf32> to vector<2x32xf32>
    %34 = arith.addf %31, %33 : vector<2x32xf32>
    %35 = math.tanh %34 : vector<2x32xf32>
    %c0_25 = arith.constant 0 : index
    %c0_26 = arith.constant 0 : index
    %36 = vector.load %arg12[%c0_25, %c0_26] : memref<32x8xf32, #tpu.memory_space<vmem>>, vector<32x8xf32>
    %cst_27 = arith.constant dense<0.000000e+00> : vector<2x8xf32>
    %37 = tpu.matmul %35, %36, %cst_27 {dimension_numbers = #tpu.dot_dimension_numbers<[1], [0], [0], [1], [0, 0, 1, 1], [], []>, precision = #tpu.contract_precision<fp32>} : vector<2x32xf32>, vector<32x8xf32>, vector<2x8xf32> -> vector<2x8xf32>
    %c0_28 = arith.constant 0 : index
    %c0_29 = arith.constant 0 : index
    %38 = vector.load %arg13[%c0_28, %c0_29] : memref<1x8xf32, #tpu.memory_space<vmem>>, vector<1x8xf32>
    %39 = vector.broadcast %38 : vector<1x8xf32> to vector<2x8xf32>
    %40 = arith.addf %37, %39 : vector<2x8xf32>
    %41 = math.tanh %40 : vector<2x8xf32>
    %c0_30 = arith.constant 0 : index
    %c0_31 = arith.constant 0 : index
    %42 = vector.load %arg14[%c0_30, %c0_31] : memref<2x8xf32, #tpu.memory_space<vmem>>, vector<2x8xf32>
    tpu.vector_store %arg14[%c0_30, %c0_31], %41 {strides = array<i32>} : memref<2x8xf32, #tpu.memory_space<vmem>>, vector<2x8xf32>,
    return
  }
  func.func @transform_0(%arg0: i32) -> (i32, i32) {
    %c0_i32 = arith.constant 0 : i32
    %c0_i32_0 = arith.constant 0 : i32
    %c0_i32_1 = arith.constant 0 : i32
    return %c0_i32, %c0_i32_0 : i32, i32
  }
  func.func @transform_1(%arg0: i32) -> (i32, i32) {
    %c0_i32 = arith.constant 0 : i32
    %c0_i32_0 = arith.constant 0 : i32
    %c0_i32_1 = arith.constant 0 : i32
    return %c0_i32, %c0_i32_0 : i32, i32
  }
  func.func @transform_2(%arg0: i32) -> (i32, i32) {
    %c0_i32 = arith.constant 0 : i32
    %c0_i32_0 = arith.constant 0 : i32
    %c0_i32_1 = arith.constant 0 : i32
    return %c0_i32, %c0_i32_0 : i32, i32
  }
  func.func @transform_3(%arg0: i32) -> (i32, i32) {
    %c0_i32 = arith.constant 0 : i32
    %c0_i32_0 = arith.constant 0 : i32
    %c0_i32_1 = arith.constant 0 : i32
    return %c0_i32, %c0_i32_0 : i32, i32
  }
  func.func @transform_4(%arg0: i32) -> (i32, i32) {
    %c0_i32 = arith.constant 0 : i32
    %c0_i32_0 = arith.constant 0 : i32
    %c0_i32_1 = arith.constant 0 : i32
    return %c0_i32, %c0_i32_0 : i32, i32
  }
  func.func @transform_5(%arg0: i32) -> (i32, i32) {
    %c0_i32 = arith.constant 0 : i32
    %c0_i32_0 = arith.constant 0 : i32
    %c0_i32_1 = arith.constant 0 : i32
    return %c0_i32, %c0_i32_0 : i32, i32
  }
  func.func @transform_6(%arg0: i32) -> (i32, i32) {
    %c0_i32 = arith.constant 0 : i32
    %c0_i32_0 = arith.constant 0 : i32
    %c0_i32_1 = arith.constant 0 : i32
    return %c0_i32, %c0_i32_0 : i32, i32
  }
  func.func @transform_7(%arg0: i32) -> (i32, i32) {
    %c0_i32 = arith.constant 0 : i32
    %c0_i32_0 = arith.constant 0 : i32
    %c0_i32_1 = arith.constant 0 : i32
    return %c0_i32, %c0_i32_0 : i32, i32
  }
  func.func @transform_8(%arg0: i32) -> (i32, i32) {
    %c0_i32 = arith.constant 0 : i32
    %c0_i32_0 = arith.constant 0 : i32
    %c0_i32_1 = arith.constant 0 : i32
    return %c0_i32, %c0_i32_0 : i32, i32
  }
  func.func @transform_9(%arg0: i32) -> (i32, i32) {
    %c0_i32 = arith.constant 0 : i32
    %c0_i32_0 = arith.constant 0 : i32
    %c0_i32_1 = arith.constant 0 : i32
    return %c0_i32, %c0_i32_0 : i32, i32
  }
  func.func @transform_10(%arg0: i32) -> (i32, i32) {
    %c0_i32 = arith.constant 0 : i32
    %c0_i32_0 = arith.constant 0 : i32
    %c0_i32_1 = arith.constant 0 : i32
    return %c0_i32, %c0_i32_0 : i32, i32
  }
  func.func @transform_11(%arg0: i32) -> (i32, i32) {
    %c0_i32 = arith.constant 0 : i32
    %c0_i32_0 = arith.constant 0 : i32
    %c0_i32_1 = arith.constant 0 : i32
    return %c0_i32, %c0_i32_0 : i32, i32
  }
  func.func @transform_12(%arg0: i32) -> (i32, i32) {
    %c0_i32 = arith.constant 0 : i32
    %c0_i32_0 = arith.constant 0 : i32
    %c0_i32_1 = arith.constant 0 : i32
    return %c0_i32, %c0_i32_0 : i32, i32
  }
  func.func @transform_13(%arg0: i32) -> (i32, i32) {
    %c0_i32 = arith.constant 0 : i32
    %c0_i32_0 = arith.constant 0 : i32
    %c0_i32_1 = arith.constant 0 : i32
    return %c0_i32, %c0_i32_0 : i32, i32
  }
}

</mosaic_0001>

<llo_original>
// kernel: tpu_custom_call.1
$region0: #{tpu_custom_call.1}
  #allocation0 [shape = 'u32[]', space=smem, size = 0x4, offset = 0x4, fixed_abs, tag = 'smem constant byte address 0x4 - core index']
  #allocation1 [shape = 'u32[144,128]{1,0:T(1,128)}', space=vmem, size = 0x12000, scoped, tag = 'internal scratch']
  %s0 = inlined_call_operand.vmem [shape: f32[2,512], index: 0, kind: input, shape index: {}]
  %s1 = inlined_call_operand.vmem [shape: f32[2,512], index: 1, kind: input, shape index: {}]
  %s2 = inlined_call_operand.vmem [shape: f32[2,512], index: 2, kind: input, shape index: {}]
  %s3 = inlined_call_operand.vmem [shape: f32[3,512], index: 3, kind: input, shape index: {}]
  %s4 = inlined_call_operand.vmem [shape: f32[1,512], index: 4, kind: input, shape index: {}]
  %s5 = inlined_call_operand.vmem [shape: f32[512,528], index: 5, kind: input, shape index: {}]
  %s6 = inlined_call_operand.vmem [shape: f32[1,528], index: 6, kind: input, shape index: {}]
  %s7 = inlined_call_operand.vmem [shape: f32[528,144], index: 7, kind: input, shape index: {}]
  %s8 = inlined_call_operand.vmem [shape: f32[1,144], index: 8, kind: input, shape index: {}]
  %s9 = inlined_call_operand.vmem [shape: f32[144,32], index: 9, kind: input, shape index: {}]
  %s10 = inlined_call_operand.vmem [shape: f32[1,32], index: 10, kind: input, shape index: {}]
  %s11 = inlined_call_operand.vmem [shape: f32[32,8], index: 11, kind: input, shape index: {}]
  %s12 = inlined_call_operand.vmem [shape: f32[1,8], index: 12, kind: input, shape index: {}]
  %s13 = inlined_call_operand.hbm [shape: f32[2,8], index: 13, kind: output, shape index: {}]
  %s14 = sld [smem:[#allocation0]]
  $region62: #{tpu_custom_call.1} parent=0
    _
  %s16 = ssub.s32 1, %s14
  %s17 = scalar_select 0, %s16, %s14
  $region1: #{tpu_custom_call.1} parent=0
    #allocation2 [shape = 'u8[1024]{0}', space=vmem, size = 0x400, scoped, tag = 'output window, operand 0, single buffered']
    #allocation3 [shape = 's32[1]{0}', space=sflag, size = 0x4, scoped, tag = 'scoped memory for tpu_custom_call.1']
    %18 = vsyncpa [#allocation3], 0
    // Predicated region
    $region2: #{tpu_custom_call.1} parent=1 // pred_check
      _
    $region3: #{tpu_custom_call.1} parent=1 // pred_check_branch
      %20 = sbr.rel (0) target = $region5
    $region4: #{tpu_custom_call.1} parent=1 // pred_region
      _
    $region5: #{tpu_custom_call.1} parent=1 // pred_fallthru
      _
    // Predicated region
    $region6: #{tpu_custom_call.1} parent=1 // pred_check
      _
    $region7: #{tpu_custom_call.1} parent=1 // pred_check_branch
      %22 = sbr.rel (0) target = $region9
    $region8: #{tpu_custom_call.1} parent=1 // pred_region
      _
    $region9: #{tpu_custom_call.1} parent=1 // pred_fallthru
      _
    // Predicated region
    $region10: #{tpu_custom_call.1} parent=1 // pred_check
      _
    $region11: #{tpu_custom_call.1} parent=1 // pred_check_branch
      %24 = sbr.rel (0) target = $region13
    $region12: #{tpu_custom_call.1} parent=1 // pred_region
      _
    $region13: #{tpu_custom_call.1} parent=1 // pred_fallthru
      _
    // Predicated region
    $region14: #{tpu_custom_call.1} parent=1 // pred_check
      _
    $region15: #{tpu_custom_call.1} parent=1 // pred_check_branch
      %26 = sbr.rel (0) target = $region17
    $region16: #{tpu_custom_call.1} parent=1 // pred_region
      _
    $region17: #{tpu_custom_call.1} parent=1 // pred_fallthru
      _
    // Predicated region
    $region18: #{tpu_custom_call.1} parent=1 // pred_check
      _
    $region19: #{tpu_custom_call.1} parent=1 // pred_check_branch
      %28 = sbr.rel (0) target = $region21
    $region20: #{tpu_custom_call.1} parent=1 // pred_region
      _
    $region21: #{tpu_custom_call.1} parent=1 // pred_fallthru
      _
    // Predicated region
    $region22: #{tpu_custom_call.1} parent=1 // pred_check
      _
    $region23: #{tpu_custom_call.1} parent=1 // pred_check_branch
      %30 = sbr.rel (0) target = $region25
    $region24: #{tpu_custom_call.1} parent=1 // pred_region
      _
    $region25: #{tpu_custom_call.1} parent=1 // pred_fallthru
      _
    // Predicated region
    $region26: #{tpu_custom_call.1} parent=1 // pred_check
      _
    $region27: #{tpu_custom_call.1} parent=1 // pred_check_branch
      %32 = sbr.rel (0) target = $region29
    $region28: #{tpu_custom_call.1} parent=1 // pred_region
      _
    $region29: #{tpu_custom_call.1} parent=1 // pred_fallthru
      _
    // Predicated region
    $region30: #{tpu_custom_call.1} parent=1 // pred_check
      _
    $region31: #{tpu_custom_call.1} parent=1 // pred_check_branch
      %34 = sbr.rel (0) target = $region33
    $region32: #{tpu_custom_call.1} parent=1 // pred_region
      _
    $region33: #{tpu_custom_call.1} parent=1 // pred_fallthru
      _
    // Predicated region
    $region34: #{tpu_custom_call.1} parent=1 // pred_check
      _
    $region35: #{tpu_custom_call.1} parent=1 // pred_check_branch
      %36 = sbr.rel (0) target = $region37
    $region36: #{tpu_custom_call.1} parent=1 // pred_region
      _
    $region37: #{tpu_custom_call.1} parent=1 // pred_fallthru
      _
    // Predicated region
    $region38: #{tpu_custom_call.1} parent=1 // pred_check
      _
    $region39: #{tpu_custom_call.1} parent=1 // pred_check_branch
      %38 = sbr.rel (0) target = $region41
    $region40: #{tpu_custom_call.1} parent=1 // pred_region
      _
    $region41: #{tpu_custom_call.1} parent=1 // pred_fallthru
      _
    // Predicated region
    $region42: #{tpu_custom_call.1} parent=1 // pred_check
      _
    $region43: #{tpu_custom_call.1} parent=1 // pred_check_branch
      %40 = sbr.rel (0) target = $region45
    $region44: #{tpu_custom_call.1} parent=1 // pred_region
      _
    $region45: #{tpu_custom_call.1} parent=1 // pred_fallthru
      _
    // Predicated region
    $region46: #{tpu_custom_call.1} parent=1 // pred_check
      _
    $region47: #{tpu_custom_call.1} parent=1 // pred_check_branch
      %42 = sbr.rel (0) target = $region49
    $region48: #{tpu_custom_call.1} parent=1 // pred_region
      _
    $region49: #{tpu_custom_call.1} parent=1 // pred_fallthru
      _
    // Predicated region
    $region50: #{tpu_custom_call.1} parent=1 // pred_check
      _
    $region51: #{tpu_custom_call.1} parent=1 // pred_check_branch
      %44 = sbr.rel (0) target = $region53
    $region52: #{tpu_custom_call.1} parent=1 // pred_region
      _
    $region53: #{tpu_custom_call.1} parent=1 // pred_fallthru
      _
    %v45 = vld [vmem:[%s0] sm:$0xff]
    %v46 = vld [vmem:[%s3] ss:$4 sm:$0xf]
    %v48 = vlaneseq
    %v49 = vshrl.u32 %v48, 7
    %v50 = vsub.s32 0, %v49
    %v51 = vrot.slane %v46, %v50
    %v52 = vlaneseq
    %v53 = vshrl.u32 %v52, 7
    %v54 = vsub.s32 1, %v53
    %v55 = vrot.slane %v46, %v54
    %v56 = vlaneseq
    %v57 = vshrl.u32 %v56, 7
    %v58 = vsub.s32 2, %v57
    %v59 = vrot.slane %v46, %v58
    %v60 = vlaneseq
    %v61 = vshrl.u32 %v60, 7
    %v62 = vsub.s32 3, %v61
    %v63 = vrot.slane %v46, %v62
    %v64 = vcombine.low %v51, %v55
    %v65 = vcombine.low %v59, %v63
    %v67 = vunpack.c.l.s4 1983009808
    %v68 = vunpack.c.0.s8 %v67
    %v69 = vlaneseq
    %v70 = vshrl.u32 %v69, 7
    %v71 = vsub.s32 %v68, %v70
    %v72 = vrot.slane %v64, %v71
    %v74 = vunpack.c.l.s4 1983009808
    %v75 = vunpack.c.0.s8 %v74
    %v76 = vlaneseq
    %v77 = vshrl.u32 %v76, 7
    %v78 = vsub.s32 %v75, %v77
    %v79 = vrot.slane %v65, %v78
    %v80 = vcombine.low %v72, %v79
    %v82 = vmul.f32 %v45, %v80
    %v83 = vld [vmem:[%s1] sm:$0xff]
    %s84 = scalar_lea.vmem %s3, 1
    %v85 = vld [vmem:[%s84] ss:$4 sm:$0xf]
    %v87 = vlaneseq
    %v88 = vshrl.u32 %v87, 7
    %v89 = vsub.s32 0, %v88
    %v90 = vrot.slane %v85, %v89
    %v91 = vlaneseq
    %v92 = vshrl.u32 %v91, 7
    %v93 = vsub.s32 1, %v92
    %v94 = vrot.slane %v85, %v93
    %v95 = vlaneseq
    %v96 = vshrl.u32 %v95, 7
    %v97 = vsub.s32 2, %v96
    %v98 = vrot.slane %v85, %v97
    %v99 = vlaneseq
    %v100 = vshrl.u32 %v99, 7
    %v101 = vsub.s32 3, %v100
    %v102 = vrot.slane %v85, %v101
    %v103 = vcombine.low %v90, %v94
    %v104 = vcombine.low %v98, %v102
    %v106 = vunpack.c.l.s4 1983009808
    %v107 = vunpack.c.0.s8 %v106
    %v108 = vlaneseq
    %v109 = vshrl.u32 %v108, 7
    %v110 = vsub.s32 %v107, %v109
    %v111 = vrot.slane %v103, %v110
    %v113 = vunpack.c.l.s4 1983009808
    %v114 = vunpack.c.0.s8 %v113
    %v115 = vlaneseq
    %v116 = vshrl.u32 %v115, 7
    %v117 = vsub.s32 %v114, %v116
    %v118 = vrot.slane %v104, %v117
    %v119 = vcombine.low %v111, %v118
    %v121 = vmul.f32 %v83, %v119
    %v122 = vadd.f32 %v82, %v121
    %v123 = vld [vmem:[%s2] sm:$0xff]
    %s124 = scalar_lea.vmem %s3, 2
    %v125 = vld [vmem:[%s124] ss:$4 sm:$0xf]
    %v127 = vlaneseq
    %v128 = vshrl.u32 %v127, 7
    %v129 = vsub.s32 0, %v128
    %v130 = vrot.slane %v125, %v129
    %v131 = vlaneseq
    %v132 = vshrl.u32 %v131, 7
    %v133 = vsub.s32 1, %v132
    %v134 = vrot.slane %v125, %v133
    %v135 = vlaneseq
    %v136 = vshrl.u32 %v135, 7
    %v137 = vsub.s32 2, %v136
    %v138 = vrot.slane %v125, %v137
    %v139 = vlaneseq
    %v140 = vshrl.u32 %v139, 7
    %v141 = vsub.s32 3, %v140
    %v142 = vrot.slane %v125, %v141
    %v143 = vcombine.low %v130, %v134
    %v144 = vcombine.low %v138, %v142
    %v146 = vunpack.c.l.s4 1983009808
    %v147 = vunpack.c.0.s8 %v146
    %v148 = vlaneseq
    %v149 = vshrl.u32 %v148, 7
    %v150 = vsub.s32 %v147, %v149
    %v151 = vrot.slane %v143, %v150
    %v153 = vunpack.c.l.s4 1983009808
    %v154 = vunpack.c.0.s8 %v153
    %v155 = vlaneseq
    %v156 = vshrl.u32 %v155, 7
    %v157 = vsub.s32 %v154, %v156
    %v158 = vrot.slane %v144, %v157
    %v159 = vcombine.low %v151, %v158
    %v161 = vmul.f32 %v123, %v159
    %v162 = vadd.f32 %v122, %v161
    %v163 = vld [vmem:[%s4] sm:$0xf]
    %v165 = vlaneseq
    %v166 = vshrl.u32 %v165, 7
    %v167 = vsub.s32 0, %v166
    %v168 = vrot.slane %v163, %v167
    %v169 = vlaneseq
    %v170 = vshrl.u32 %v169, 7
    %v171 = vsub.s32 1, %v170
    %v172 = vrot.slane %v163, %v171
    %v173 = vlaneseq
    %v174 = vshrl.u32 %v173, 7
    %v175 = vsub.s32 2, %v174
    %v176 = vrot.slane %v163, %v175
    %v177 = vlaneseq
    %v178 = vshrl.u32 %v177, 7
    %v179 = vsub.s32 3, %v178
    %v180 = vrot.slane %v163, %v179
    %v181 = vcombine.low %v168, %v172
    %v182 = vcombine.low %v176, %v180
    %v184 = vunpack.c.l.s4 1983009808
    %v185 = vunpack.c.0.s8 %v184
    %v186 = vlaneseq
    %v187 = vshrl.u32 %v186, 7
    %v188 = vsub.s32 %v185, %v187
    %v189 = vrot.slane %v181, %v188
    %v191 = vunpack.c.l.s4 1983009808
    %v192 = vunpack.c.0.s8 %v191
    %v193 = vlaneseq
    %v194 = vshrl.u32 %v193, 7
    %v195 = vsub.s32 %v192, %v194
    %v196 = vrot.slane %v182, %v195
    %v197 = vcombine.low %v189, %v196
    %v199 = vadd.f32 %v162, %v197
    %v200 = vtanh.pop %v199
    %v201 = vld [vmem:[%s5] sm:$0xff]
    %v202 = vld [vmem:[%s5 + $0x8] sm:$0xff]
    %v203 = vld [vmem:[%s5 + $0x10] sm:$0xff]
    %v204 = vld [vmem:[%s5 + $0x18] sm:$0xff]
    %v205 = vld [vmem:[%s5 + $0x20] sm:$0xff]
    %v206 = vld [vmem:[%s5 + $0x28] sm:$0xff]
    %v207 = vld [vmem:[%s5 + $0x30] sm:$0xff]
    %v208 = vld [vmem:[%s5 + $0x38] sm:$0xff]
    %v209 = vld [vmem:[%s5 + $0x40] sm:$0xff]
    %v210 = vld [vmem:[%s5 + $0x48] sm:$0xff]
    %v211 = vld [vmem:[%s5 + $0x50] sm:$0xff]
    %v212 = vld [vmem:[%s5 + $0x58] sm:$0xff]
    %v213 = vld [vmem:[%s5 + $0x60] sm:$0xff]
    %v214 = vld [vmem:[%s5 + $0x68] sm:$0xff]
    %v215 = vld [vmem:[%s5 + $0x70] sm:$0xff]
    %v216 = vld [vmem:[%s5 + $0x78] sm:$0xff]
    %v217 = vld [vmem:[%s5 + $0x80] sm:$0xff]
    %v218 = vld [vmem:[%s5 + $0x88] sm:$0xff]
    %v219 = vld [vmem:[%s5 + $0x90] sm:$0xff]
    %v220 = vld [vmem:[%s5 + $0x98] sm:$0xff]
    %v221 = vld [vmem:[%s5 + $0xa0] sm:$0xff]
    %v222 = vld [vmem:[%s5 + $0xa8] sm:$0xff]
    %v223 = vld [vmem:[%s5 + $0xb0] sm:$0xff]
    %v224 = vld [vmem:[%s5 + $0xb8] sm:$0xff]
    %v225 = vld [vmem:[%s5 + $0xc0] sm:$0xff]
    %v226 = vld [vmem:[%s5 + $0xc8] sm:$0xff]
    %v227 = vld [vmem:[%s5 + $0xd0] sm:$0xff]
    %v228 = vld [vmem:[%s5 + $0xd8] sm:$0xff]
    %v229 = vld [vmem:[%s5 + $0xe0] sm:$0xff]
    %v230 = vld [vmem:[%s5 + $0xe8] sm:$0xff]
    %v231 = vld [vmem:[%s5 + $0xf0] sm:$0xff]
    %v232 = vld [vmem:[%s5 + $0xf8] sm:$0xff]
    %v233 = vld [vmem:[%s5 + $0x100] sm:$0xff]
    %v234 = vld [vmem:[%s5 + $0x108] sm:$0xff]
    %v235 = vld [vmem:[%s5 + $0x110] sm:$0xff]
    %v236 = vld [vmem:[%s5 + $0x118] sm:$0xff]
    %v237 = vld [vmem:[%s5 + $0x120] sm:$0xff]
    %v238 = vld [vmem:[%s5 + $0x128] sm:$0xff]
    %v239 = vld [vmem:[%s5 + $0x130] sm:$0xff]
    %v240 = vld [vmem:[%s5 + $0x138] sm:$0xff]
    %v241 = vld [vmem:[%s5 + $0x140] sm:$0xff]
    %v242 = vld [vmem:[%s5 + $0x148] sm:$0xff]
    %v243 = vld [vmem:[%s5 + $0x150] sm:$0xff]
    %v244 = vld [vmem:[%s5 + $0x158] sm:$0xff]
    %v245 = vld [vmem:[%s5 + $0x160] sm:$0xff]
    %v246 = vld [vmem:[%s5 + $0x168] sm:$0xff]
    %v247 = vld [vmem:[%s5 + $0x170] sm:$0xff]
    %v248 = vld [vmem:[%s5 + $0x178] sm:$0xff]
    %v249 = vld [vmem:[%s5 + $0x180] sm:$0xff]
    %v250 = vld [vmem:[%s5 + $0x188] sm:$0xff]
    %v251 = vld [vmem:[%s5 + $0x190] sm:$0xff]
    %v252 = vld [vmem:[%s5 + $0x198] sm:$0xff]
    %v253 = vld [vmem:[%s5 + $0x1a0] sm:$0xff]
    %v254 = vld [vmem:[%s5 + $0x1a8] sm:$0xff]
    %v255 = vld [vmem:[%s5 + $0x1b0] sm:$0xff]
    %v256 = vld [vmem:[%s5 + $0x1b8] sm:$0xff]
    %v257 = vld [vmem:[%s5 + $0x1c0] sm:$0xff]
    %v258 = vld [vmem:[%s5 + $0x1c8] sm:$0xff]
    %v259 = vld [vmem:[%s5 + $0x1d0] sm:$0xff]
    %v260 = vld [vmem:[%s5 + $0x1d8] sm:$0xff]
    %v261 = vld [vmem:[%s5 + $0x1e0] sm:$0xff]
    %v262 = vld [vmem:[%s5 + $0x1e8] sm:$0xff]
    %v263 = vld [vmem:[%s5 + $0x1f0] sm:$0xff]
    %v264 = vld [vmem:[%s5 + $0x1f8] sm:$0xff]
    %v265 = vld [vmem:[%s5 + $0x200] sm:$0xff]
    %v266 = vld [vmem:[%s5 + $0x208] sm:$0xff]
    %v267 = vld [vmem:[%s5 + $0x210] sm:$0xff]
    %v268 = vld [vmem:[%s5 + $0x218] sm:$0xff]
    %v269 = vld [vmem:[%s5 + $0x220] sm:$0xff]
    %v270 = vld [vmem:[%s5 + $0x228] sm:$0xff]
    %v271 = vld [vmem:[%s5 + $0x230] sm:$0xff]
    %v272 = vld [vmem:[%s5 + $0x238] sm:$0xff]
    %v273 = vld [vmem:[%s5 + $0x240] sm:$0xff]
    %v274 = vld [vmem:[%s5 + $0x248] sm:$0xff]
    %v275 = vld [vmem:[%s5 + $0x250] sm:$0xff]
    %v276 = vld [vmem:[%s5 + $0x258] sm:$0xff]
    %v277 = vld [vmem:[%s5 + $0x260] sm:$0xff]
    %v278 = vld [vmem:[%s5 + $0x268] sm:$0xff]
    %v279 = vld [vmem:[%s5 + $0x270] sm:$0xff]
    %v280 = vld [vmem:[%s5 + $0x278] sm:$0xff]
    %v281 = vld [vmem:[%s5 + $0x280] sm:$0xff]
    %v282 = vld [vmem:[%s5 + $0x288] sm:$0xff]
    %v283 = vld [vmem:[%s5 + $0x290] sm:$0xff]
    %v284 = vld [vmem:[%s5 + $0x298] sm:$0xff]
    %v285 = vld [vmem:[%s5 + $0x2a0] sm:$0xff]
    %v286 = vld [vmem:[%s5 + $0x2a8] sm:$0xff]
    %v287 = vld [vmem:[%s5 + $0x2b0] sm:$0xff]
    %v288 = vld [vmem:[%s5 + $0x2b8] sm:$0xff]
    %v289 = vld [vmem:[%s5 + $0x2c0] sm:$0xff]
    %v290 = vld [vmem:[%s5 + $0x2c8] sm:$0xff]
    %v291 = vld [vmem:[%s5 + $0x2d0] sm:$0xff]
    %v292 = vld [vmem:[%s5 + $0x2d8] sm:$0xff]
    %v293 = vld [vmem:[%s5 + $0x2e0] sm:$0xff]
    %v294 = vld [vmem:[%s5 + $0x2e8] sm:$0xff]
    %v295 = vld [vmem:[%s5 + $0x2f0] sm:$0xff]
    %v296 = vld [vmem:[%s5 + $0x2f8] sm:$0xff]
    %v297 = vld [vmem:[%s5 + $0x300] sm:$0xff]
    %v298 = vld [vmem:[%s5 + $0x308] sm:$0xff]
    %v299 = vld [vmem:[%s5 + $0x310] sm:$0xff]
    %v300 = vld [vmem:[%s5 + $0x318] sm:$0xff]
    %v301 = vld [vmem:[%s5 + $0x320] sm:$0xff]
    %v302 = vld [vmem:[%s5 + $0x328] sm:$0xff]
    %v303 = vld [vmem:[%s5 + $0x330] sm:$0xff]
    %v304 = vld [vmem:[%s5 + $0x338] sm:$0xff]
    %v305 = vld [vmem:[%s5 + $0x340] sm:$0xff]
    %v306 = vld [vmem:[%s5 + $0x348] sm:$0xff]
    %v307 = vld [vmem:[%s5 + $0x350] sm:$0xff]
    %v308 = vld [vmem:[%s5 + $0x358] sm:$0xff]
    %v309 = vld [vmem:[%s5 + $0x360] sm:$0xff]
    %v310 = vld [vmem:[%s5 + $0x368] sm:$0xff]
    %v311 = vld [vmem:[%s5 + $0x370] sm:$0xff]
    %v312 = vld [vmem:[%s5 + $0x378] sm:$0xff]
    %v313 = vld [vmem:[%s5 + $0x380] sm:$0xff]
    %v314 = vld [vmem:[%s5 + $0x388] sm:$0xff]
    %v315 = vld [vmem:[%s5 + $0x390] sm:$0xff]
    %v316 = vld [vmem:[%s5 + $0x398] sm:$0xff]
    %v317 = vld [vmem:[%s5 + $0x3a0] sm:$0xff]
    %v318 = vld [vmem:[%s5 + $0x3a8] sm:$0xff]
    %v319 = vld [vmem:[%s5 + $0x3b0] sm:$0xff]
    %v320 = vld [vmem:[%s5 + $0x3b8] sm:$0xff]
    %v321 = vld [vmem:[%s5 + $0x3c0] sm:$0xff]
    %v322 = vld [vmem:[%s5 + $0x3c8] sm:$0xff]
    %v323 = vld [vmem:[%s5 + $0x3d0] sm:$0xff]
    %v324 = vld [vmem:[%s5 + $0x3d8] sm:$0xff]
    %v325 = vld [vmem:[%s5 + $0x3e0] sm:$0xff]
    %v326 = vld [vmem:[%s5 + $0x3e8] sm:$0xff]
    %v327 = vld [vmem:[%s5 + $0x3f0] sm:$0xff]
    %v328 = vld [vmem:[%s5 + $0x3f8] sm:$0xff]
    %v329 = vld [vmem:[%s5 + $0x400] sm:$0xff]
    %v330 = vld [vmem:[%s5 + $0x408] sm:$0xff]
    %v331 = vld [vmem:[%s5 + $0x410] sm:$0xff]
    %v332 = vld [vmem:[%s5 + $0x418] sm:$0xff]
    %v333 = vld [vmem:[%s5 + $0x420] sm:$0xff]
    %v334 = vld [vmem:[%s5 + $0x428] sm:$0xff]
    %v335 = vld [vmem:[%s5 + $0x430] sm:$0xff]
    %v336 = vld [vmem:[%s5 + $0x438] sm:$0xff]
    %v337 = vld [vmem:[%s5 + $0x440] sm:$0xff]
    %v338 = vld [vmem:[%s5 + $0x448] sm:$0xff]
    %v339 = vld [vmem:[%s5 + $0x450] sm:$0xff]
    %v340 = vld [vmem:[%s5 + $0x458] sm:$0xff]
    %v341 = vld [vmem:[%s5 + $0x460] sm:$0xff]
    %v342 = vld [vmem:[%s5 + $0x468] sm:$0xff]
    %v343 = vld [vmem:[%s5 + $0x470] sm:$0xff]
    %v344 = vld [vmem:[%s5 + $0x478] sm:$0xff]
    %v345 = vld [vmem:[%s5 + $0x480] sm:$0xff]
    %v346 = vld [vmem:[%s5 + $0x488] sm:$0xff]
    %v347 = vld [vmem:[%s5 + $0x490] sm:$0xff]
    %v348 = vld [vmem:[%s5 + $0x498] sm:$0xff]
    %v349 = vld [vmem:[%s5 + $0x4a0] sm:$0xff]
    %v350 = vld [vmem:[%s5 + $0x4a8] sm:$0xff]
    %v351 = vld [vmem:[%s5 + $0x4b0] sm:$0xff]
    %v352 = vld [vmem:[%s5 + $0x4b8] sm:$0xff]
    %v353 = vld [vmem:[%s5 + $0x4c0] sm:$0xff]
    %v354 = vld [vmem:[%s5 + $0x4c8] sm:$0xff]
    %v355 = vld [vmem:[%s5 + $0x4d0] sm:$0xff]
    %v356 = vld [vmem:[%s5 + $0x4d8] sm:$0xff]
    %v357 = vld [vmem:[%s5 + $0x4e0] sm:$0xff]
    %v358 = vld [vmem:[%s5 + $0x4e8] sm:$0xff]
    %v359 = vld [vmem:[%s5 + $0x4f0] sm:$0xff]
    %v360 = vld [vmem:[%s5 + $0x4f8] sm:$0xff]
    %v361 = vld [vmem:[%s5 + $0x500] sm:$0xff]
    %v362 = vld [vmem:[%s5 + $0x508] sm:$0xff]
    %v363 = vld [vmem:[%s5 + $0x510] sm:$0xff]
    %v364 = vld [vmem:[%s5 + $0x518] sm:$0xff]
    %v365 = vld [vmem:[%s5 + $0x520] sm:$0xff]
    %v366 = vld [vmem:[%s5 + $0x528] sm:$0xff]
    %v367 = vld [vmem:[%s5 + $0x530] sm:$0xff]
    %v368 = vld [vmem:[%s5 + $0x538] sm:$0xff]
    %v369 = vld [vmem:[%s5 + $0x540] sm:$0xff]
    %v370 = vld [vmem:[%s5 + $0x548] sm:$0xff]
    %v371 = vld [vmem:[%s5 + $0x550] sm:$0xff]
    %v372 = vld [vmem:[%s5 + $0x558] sm:$0xff]
    %v373 = vld [vmem:[%s5 + $0x560] sm:$0xff]
    %v374 = vld [vmem:[%s5 + $0x568] sm:$0xff]
    %v375 = vld [vmem:[%s5 + $0x570] sm:$0xff]
    %v376 = vld [vmem:[%s5 + $0x578] sm:$0xff]
    %v377 = vld [vmem:[%s5 + $0x580] sm:$0xff]
    %v378 = vld [vmem:[%s5 + $0x588] sm:$0xff]
    %v379 = vld [vmem:[%s5 + $0x590] sm:$0xff]
    %v380 = vld [vmem:[%s5 + $0x598] sm:$0xff]
    %v381 = vld [vmem:[%s5 + $0x5a0] sm:$0xff]
    %v382 = vld [vmem:[%s5 + $0x5a8] sm:$0xff]
    %v383 = vld [vmem:[%s5 + $0x5b0] sm:$0xff]
    %v384 = vld [vmem:[%s5 + $0x5b8] sm:$0xff]
    %v385 = vld [vmem:[%s5 + $0x5c0] sm:$0xff]
    %v386 = vld [vmem:[%s5 + $0x5c8] sm:$0xff]
    %v387 = vld [vmem:[%s5 + $0x5d0] sm:$0xff]
    %v388 = vld [vmem:[%s5 + $0x5d8] sm:$0xff]
    %v389 = vld [vmem:[%s5 + $0x5e0] sm:$0xff]
    %v390 = vld [vmem:[%s5 + $0x5e8] sm:$0xff]
    %v391 = vld [vmem:[%s5 + $0x5f0] sm:$0xff]
    %v392 = vld [vmem:[%s5 + $0x5f8] sm:$0xff]
    %v393 = vld [vmem:[%s5 + $0x600] sm:$0xff]
    %v394 = vld [vmem:[%s5 + $0x608] sm:$0xff]
    %v395 = vld [vmem:[%s5 + $0x610] sm:$0xff]
    %v396 = vld [vmem:[%s5 + $0x618] sm:$0xff]
    %v397 = vld [vmem:[%s5 + $0x620] sm:$0xff]
    %v398 = vld [vmem:[%s5 + $0x628] sm:$0xff]
    %v399 = vld [vmem:[%s5 + $0x630] sm:$0xff]
    %v400 = vld [vmem:[%s5 + $0x638] sm:$0xff]
    %v401 = vld [vmem:[%s5 + $0x640] sm:$0xff]
    %v402 = vld [vmem:[%s5 + $0x648] sm:$0xff]
    %v403 = vld [vmem:[%s5 + $0x650] sm:$0xff]
    %v404 = vld [vmem:[%s5 + $0x658] sm:$0xff]
    %v405 = vld [vmem:[%s5 + $0x660] sm:$0xff]
    %v406 = vld [vmem:[%s5 + $0x668] sm:$0xff]
    %v407 = vld [vmem:[%s5 + $0x670] sm:$0xff]
    %v408 = vld [vmem:[%s5 + $0x678] sm:$0xff]
    %v409 = vld [vmem:[%s5 + $0x680] sm:$0xff]
    %v410 = vld [vmem:[%s5 + $0x688] sm:$0xff]
    %v411 = vld [vmem:[%s5 + $0x690] sm:$0xff]
    %v412 = vld [vmem:[%s5 + $0x698] sm:$0xff]
    %v413 = vld [vmem:[%s5 + $0x6a0] sm:$0xff]
    %v414 = vld [vmem:[%s5 + $0x6a8] sm:$0xff]
    %v415 = vld [vmem:[%s5 + $0x6b0] sm:$0xff]
    %v416 = vld [vmem:[%s5 + $0x6b8] sm:$0xff]
    %v417 = vld [vmem:[%s5 + $0x6c0] sm:$0xff]
    %v418 = vld [vmem:[%s5 + $0x6c8] sm:$0xff]
    %v419 = vld [vmem:[%s5 + $0x6d0] sm:$0xff]
    %v420 = vld [vmem:[%s5 + $0x6d8] sm:$0xff]
    %v421 = vld [vmem:[%s5 + $0x6e0] sm:$0xff]
    %v422 = vld [vmem:[%s5 + $0x6e8] sm:$0xff]
    %v423 = vld [vmem:[%s5 + $0x6f0] sm:$0xff]
    %v424 = vld [vmem:[%s5 + $0x6f8] sm:$0xff]
    %v425 = vld [vmem:[%s5 + $0x700] sm:$0xff]
    %v426 = vld [vmem:[%s5 + $0x708] sm:$0xff]
    %v427 = vld [vmem:[%s5 + $0x710] sm:$0xff]
    %v428 = vld [vmem:[%s5 + $0x718] sm:$0xff]
    %v429 = vld [vmem:[%s5 + $0x720] sm:$0xff]
    %v430 = vld [vmem:[%s5 + $0x728] sm:$0xff]
    %v431 = vld [vmem:[%s5 + $0x730] sm:$0xff]
    %v432 = vld [vmem:[%s5 + $0x738] sm:$0xff]
    %v433 = vld [vmem:[%s5 + $0x740] sm:$0xff]
    %v434 = vld [vmem:[%s5 + $0x748] sm:$0xff]
    %v435 = vld [vmem:[%s5 + $0x750] sm:$0xff]
    %v436 = vld [vmem:[%s5 + $0x758] sm:$0xff]
    %v437 = vld [vmem:[%s5 + $0x760] sm:$0xff]
    %v438 = vld [vmem:[%s5 + $0x768] sm:$0xff]
    %v439 = vld [vmem:[%s5 + $0x770] sm:$0xff]
    %v440 = vld [vmem:[%s5 + $0x778] sm:$0xff]
    %v441 = vld [vmem:[%s5 + $0x780] sm:$0xff]
    %v442 = vld [vmem:[%s5 + $0x788] sm:$0xff]
    %v443 = vld [vmem:[%s5 + $0x790] sm:$0xff]
    %v444 = vld [vmem:[%s5 + $0x798] sm:$0xff]
    %v445 = vld [vmem:[%s5 + $0x7a0] sm:$0xff]
    %v446 = vld [vmem:[%s5 + $0x7a8] sm:$0xff]
    %v447 = vld [vmem:[%s5 + $0x7b0] sm:$0xff]
    %v448 = vld [vmem:[%s5 + $0x7b8] sm:$0xff]
    %v449 = vld [vmem:[%s5 + $0x7c0] sm:$0xff]
    %v450 = vld [vmem:[%s5 + $0x7c8] sm:$0xff]
    %v451 = vld [vmem:[%s5 + $0x7d0] sm:$0xff]
    %v452 = vld [vmem:[%s5 + $0x7d8] sm:$0xff]
    %v453 = vld [vmem:[%s5 + $0x7e0] sm:$0xff]
    %v454 = vld [vmem:[%s5 + $0x7e8] sm:$0xff]
    %v455 = vld [vmem:[%s5 + $0x7f0] sm:$0xff]
    %v456 = vld [vmem:[%s5 + $0x7f8] sm:$0xff]
    %v457 = vld [vmem:[%s5 + $0x800] sm:$0xff]
    %v458 = vld [vmem:[%s5 + $0x808] sm:$0xff]
    %v459 = vld [vmem:[%s5 + $0x810] sm:$0xff]
    %v460 = vld [vmem:[%s5 + $0x818] sm:$0xff]
    %v461 = vld [vmem:[%s5 + $0x820] sm:$0xff]
    %v462 = vld [vmem:[%s5 + $0x828] sm:$0xff]
    %v463 = vld [vmem:[%s5 + $0x830] sm:$0xff]
    %v464 = vld [vmem:[%s5 + $0x838] sm:$0xff]
    %v465 = vld [vmem:[%s5 + $0x840] sm:$0xff]
    %v466 = vld [vmem:[%s5 + $0x848] sm:$0xff]
    %v467 = vld [vmem:[%s5 + $0x850] sm:$0xff]
    %v468 = vld [vmem:[%s5 + $0x858] sm:$0xff]
    %v469 = vld [vmem:[%s5 + $0x860] sm:$0xff]
    %v470 = vld [vmem:[%s5 + $0x868] sm:$0xff]
    %v471 = vld [vmem:[%s5 + $0x870] sm:$0xff]
    %v472 = vld [vmem:[%s5 + $0x878] sm:$0xff]
    %v473 = vld [vmem:[%s5 + $0x880] sm:$0xff]
    %v474 = vld [vmem:[%s5 + $0x888] sm:$0xff]
    %v475 = vld [vmem:[%s5 + $0x890] sm:$0xff]
    %v476 = vld [vmem:[%s5 + $0x898] sm:$0xff]
    %v477 = vld [vmem:[%s5 + $0x8a0] sm:$0xff]
    %v478 = vld [vmem:[%s5 + $0x8a8] sm:$0xff]
    %v479 = vld [vmem:[%s5 + $0x8b0] sm:$0xff]
    %v480 = vld [vmem:[%s5 + $0x8b8] sm:$0xff]
    %v481 = vld [vmem:[%s5 + $0x8c0] sm:$0xff]
    %v482 = vld [vmem:[%s5 + $0x8c8] sm:$0xff]
    %v483 = vld [vmem:[%s5 + $0x8d0] sm:$0xff]
    %v484 = vld [vmem:[%s5 + $0x8d8] sm:$0xff]
    %v485 = vld [vmem:[%s5 + $0x8e0] sm:$0xff]
    %v486 = vld [vmem:[%s5 + $0x8e8] sm:$0xff]
    %v487 = vld [vmem:[%s5 + $0x8f0] sm:$0xff]
    %v488 = vld [vmem:[%s5 + $0x8f8] sm:$0xff]
    %v489 = vld [vmem:[%s5 + $0x900] sm:$0xff]
    %v490 = vld [vmem:[%s5 + $0x908] sm:$0xff]
    %v491 = vld [vmem:[%s5 + $0x910] sm:$0xff]
    %v492 = vld [vmem:[%s5 + $0x918] sm:$0xff]
    %v493 = vld [vmem:[%s5 + $0x920] sm:$0xff]
    %v494 = vld [vmem:[%s5 + $0x928] sm:$0xff]
    %v495 = vld [vmem:[%s5 + $0x930] sm:$0xff]
    %v496 = vld [vmem:[%s5 + $0x938] sm:$0xff]
    %v497 = vld [vmem:[%s5 + $0x940] sm:$0xff]
    %v498 = vld [vmem:[%s5 + $0x948] sm:$0xff]
    %v499 = vld [vmem:[%s5 + $0x950] sm:$0xff]
    %v500 = vld [vmem:[%s5 + $0x958] sm:$0xff]
    %v501 = vld [vmem:[%s5 + $0x960] sm:$0xff]
    %v502 = vld [vmem:[%s5 + $0x968] sm:$0xff]
    %v503 = vld [vmem:[%s5 + $0x970] sm:$0xff]
    %v504 = vld [vmem:[%s5 + $0x978] sm:$0xff]
    %v505 = vld [vmem:[%s5 + $0x980] sm:$0xff]
    %v506 = vld [vmem:[%s5 + $0x988] sm:$0xff]
    %v507 = vld [vmem:[%s5 + $0x990] sm:$0xff]
    %v508 = vld [vmem:[%s5 + $0x998] sm:$0xff]
    %v509 = vld [vmem:[%s5 + $0x9a0] sm:$0xff]
    %v510 = vld [vmem:[%s5 + $0x9a8] sm:$0xff]
    %v511 = vld [vmem:[%s5 + $0x9b0] sm:$0xff]
    %v512 = vld [vmem:[%s5 + $0x9b8] sm:$0xff]
    %v513 = vld [vmem:[%s5 + $0x9c0] sm:$0xff]
    %v514 = vld [vmem:[%s5 + $0x9c8] sm:$0xff]
    %v515 = vld [vmem:[%s5 + $0x9d0] sm:$0xff]
    %v516 = vld [vmem:[%s5 + $0x9d8] sm:$0xff]
    %v517 = vld [vmem:[%s5 + $0x9e0] sm:$0xff]
    %v518 = vld [vmem:[%s5 + $0x9e8] sm:$0xff]
    %v519 = vld [vmem:[%s5 + $0x9f0] sm:$0xff]
    %v520 = vld [vmem:[%s5 + $0x9f8] sm:$0xff]
    %v521 = vld [vmem:[%s6] sm:$0x1f]
    %v523 = vlaneseq
    %v524 = vshrl.u32 %v523, 7
    %v525 = vsub.s32 0, %v524
    %v526 = vrot.slane %v521, %v525
    %v527 = vlaneseq
    %v528 = vshrl.u32 %v527, 7
    %v529 = vsub.s32 1, %v528
    %v530 = vrot.slane %v521, %v529
    %v531 = vlaneseq
    %v532 = vshrl.u32 %v531, 7
    %v533 = vsub.s32 2, %v532
    %v534 = vrot.slane %v521, %v533
    %v535 = vlaneseq
    %v536 = vshrl.u32 %v535, 7
    %v537 = vsub.s32 3, %v536
    %v538 = vrot.slane %v521, %v537
    %v539 = vlaneseq
    %v540 = vshrl.u32 %v539, 7
    %v541 = vsub.s32 4, %v540
    %v542 = vrot.slane %v521, %v541
    %v549 = vcombine.high %v200, %v200
    %v551 = vunpack.c.l.s4 1983009808
    %v552 = vunpack.c.0.s8 %v551
    %v553 = vlaneseq
    %v554 = vshrl.u32 %v553, 7
    %v555 = vsub.s32 %v552, %v554
    %v556 = vrot.slane %v200, %v555
    %v558 = vunpack.c.l.s4 1983009808
    %v559 = vunpack.c.0.s8 %v558
    %v560 = vlaneseq
    %v561 = vshrl.u32 %v560, 7
    %v562 = vsub.s32 %v559, %v561
    %v563 = vrot.slane %v549, %v562
    %v564 = vcombine.high %v556, %v556
    %v565 = vcombine.high %v563, %v563
    %v570 = vand.u32 %v202, 4294901760
    %571 = vmatprep.subr.mxu0 %v570
    %v572 = vand.u32 %v201, 4294901760
    %573 = vmatpush1.msra.mxu0 %v572
    %v574 = vand.u32 %v207, 4294901760
    %575 = vmatprep.subr.mxu0 %v574
    %v576 = vand.u32 %v206, 4294901760
    %577 = vmatpush1.msra.mxu0 %v576
    %v578 = vand.u32 %v212, 4294901760
    %579 = vmatprep.subr.mxu0 %v578
    %v580 = vand.u32 %v211, 4294901760
    %581 = vmatpush1.msra.mxu0 %v580
    %v582 = vand.u32 %v217, 4294901760
    %583 = vmatprep.subr.mxu0 %v582
    %v584 = vand.u32 %v216, 4294901760
    %585 = vmatpush1.msra.mxu0 %v584
    %v586 = vand.u32 %v222, 4294901760
    %587 = vmatprep.subr.mxu0 %v586
    %v588 = vand.u32 %v221, 4294901760
    %589 = vmatpush1.msra.mxu0 %v588
    %v590 = vand.u32 %v227, 4294901760
    %591 = vmatprep.subr.mxu0 %v590
    %v592 = vand.u32 %v226, 4294901760
    %593 = vmatpush1.msra.mxu0 %v592
    %v594 = vand.u32 %v232, 4294901760
    %595 = vmatprep.subr.mxu0 %v594
    %v596 = vand.u32 %v231, 4294901760
    %597 = vmatpush1.msra.mxu0 %v596
    %v598 = vand.u32 %v237, 4294901760
    %599 = vmatprep.subr.mxu0 %v598
    %v600 = vand.u32 %v236, 4294901760
    %601 = vmatpush1.msra.mxu0 %v600
    %v602 = vand.u32 %v242, 4294901760
    %603 = vmatprep.subr.mxu0 %v602
    %v604 = vand.u32 %v241, 4294901760
    %605 = vmatpush1.msra.mxu0 %v604
    %v606 = vand.u32 %v247, 4294901760
    %607 = vmatprep.subr.mxu0 %v606
    %v608 = vand.u32 %v246, 4294901760
    %609 = vmatpush1.msra.mxu0 %v608
    %v610 = vand.u32 %v252, 4294901760
    %611 = vmatprep.subr.mxu0 %v610
    %v612 = vand.u32 %v251, 4294901760
    %613 = vmatpush1.msra.mxu0 %v612
    %v614 = vand.u32 %v257, 4294901760
    %615 = vmatprep.subr.mxu0 %v614
    %v616 = vand.u32 %v256, 4294901760
    %617 = vmatpush1.msra.mxu0 %v616
    %v618 = vand.u32 %v262, 4294901760
    %619 = vmatprep.subr.mxu0 %v618
    %v620 = vand.u32 %v261, 4294901760
    %621 = vmatpush1.msra.mxu0 %v620
    %v622 = vand.u32 %v267, 4294901760
    %623 = vmatprep.subr.mxu0 %v622
    %v624 = vand.u32 %v266, 4294901760
    %625 = vmatpush1.msra.mxu0 %v624
    %v626 = vand.u32 %v272, 4294901760
    %627 = vmatprep.subr.mxu0 %v626
    %v628 = vand.u32 %v271, 4294901760
    %629 = vmatpush1.msra.mxu0 %v628
    %v630 = vand.u32 %v277, 4294901760
    %631 = vmatprep.subr.mxu0 %v630
    %v632 = vand.u32 %v276, 4294901760
    %633 = vmatpush1.msra.mxu0 %v632
    %v634 = vand.u32 %v282, 4294901760
    %635 = vmatprep.subr.mxu0 %v634
    %v636 = vand.u32 %v281, 4294901760
    %637 = vmatpush1.msra.mxu0 %v636
    %v638 = vand.u32 %v287, 4294901760
    %639 = vmatprep.subr.mxu0 %v638
    %v640 = vand.u32 %v286, 4294901760
    %641 = vmatpush1.msra.mxu0 %v640
    %v642 = vand.u32 %v292, 4294901760
    %643 = vmatprep.subr.mxu0 %v642
    %v644 = vand.u32 %v291, 4294901760
    %645 = vmatpush1.msra.mxu0 %v644
    %v646 = vand.u32 %v297, 4294901760
    %647 = vmatprep.subr.mxu0 %v646
    %v648 = vand.u32 %v296, 4294901760
    %649 = vmatpush1.msra.mxu0 %v648
    %v650 = vand.u32 %v302, 4294901760
    %651 = vmatprep.subr.mxu0 %v650
    %v652 = vand.u32 %v301, 4294901760
    %653 = vmatpush1.msra.mxu0 %v652
    %v654 = vand.u32 %v307, 4294901760
    %655 = vmatprep.subr.mxu0 %v654
    %v656 = vand.u32 %v306, 4294901760
    %657 = vmatpush1.msra.mxu0 %v656
    %v658 = vand.u32 %v312, 4294901760
    %659 = vmatprep.subr.mxu0 %v658
    %v660 = vand.u32 %v311, 4294901760
    %661 = vmatpush1.msra.mxu0 %v660
    %v662 = vand.u32 %v317, 4294901760
    %663 = vmatprep.subr.mxu0 %v662
    %v664 = vand.u32 %v316, 4294901760
    %665 = vmatpush1.msra.mxu0 %v664
    %v666 = vand.u32 %v322, 4294901760
    %667 = vmatprep.subr.mxu0 %v666
    %v668 = vand.u32 %v321, 4294901760
    %669 = vmatpush1.msra.mxu0 %v668
    %v670 = vand.u32 %v327, 4294901760
    %671 = vmatprep.subr.mxu0 %v670
    %v672 = vand.u32 %v326, 4294901760
    %673 = vmatpush1.msra.mxu0 %v672
    %v674 = vand.u32 %v332, 4294901760
    %675 = vmatprep.subr.mxu0 %v674
    %v676 = vand.u32 %v331, 4294901760
    %677 = vmatpush1.msra.mxu0 %v676
    %v678 = vand.u32 %v337, 4294901760
    %679 = vmatprep.subr.mxu0 %v678
    %v680 = vand.u32 %v336, 4294901760
    %681 = vmatpush1.msra.mxu0 %v680
    %v682 = vand.u32 %v342, 4294901760
    %683 = vmatprep.subr.mxu0 %v682
    %v684 = vand.u32 %v341, 4294901760
    %685 = vmatpush1.msra.mxu0 %v684
    %v686 = vand.u32 %v347, 4294901760
    %687 = vmatprep.subr.mxu0 %v686
    %v688 = vand.u32 %v346, 4294901760
    %689 = vmatpush1.msra.mxu0 %v688
    %v690 = vand.u32 %v352, 4294901760
    %691 = vmatprep.subr.mxu0 %v690
    %v692 = vand.u32 %v351, 4294901760
    %693 = vmatpush1.msra.mxu0 %v692
    %v694 = vand.u32 %v357, 4294901760
    %695 = vmatprep.subr.mxu0 %v694
    %v696 = vand.u32 %v356, 4294901760
    %697 = vmatpush1.msra.mxu0 %v696
    %v698 = vand.u32 %v564, 4294901760
    %v699 = vsub.f32 %v564, %v698
    %v700 = vand.u32 %v699, 4294901760
    %v701 = vsub.f32 %v699, %v700
    %v702 = vand.u32 %v701, 4294901760
    %703 = vmatprep.mubr.f32.mxu0 %v702
    %v704 = vand.u32 %v556, 4294901760
    %v705 = vsub.f32 %v556, %v704
    %v706 = vand.u32 %v705, 4294901760
    %v707 = vsub.f32 %v705, %v706
    %v708 = vand.u32 %v707, 4294901760
    %709 = vmatmul.mubr.f32.gmra.mrb[0].mxu0 %v708
    %v710 = vpop.f32.mrb[0].mxu0
    %v711 = vadd.f32 %v526, %v710
    %v712 = vpop.f32.mrb[0].mxu0
    %v713 = vadd.f32 %v530, %v712
    %714 = vdwg.mxu0
    %v715 = vand.u32 %v202, 4294901760
    %v716 = vsub.f32 %v202, %v715
    %v717 = vand.u32 %v716, 4294901760
    %v718 = vsub.f32 %v716, %v717
    %v719 = vand.u32 %v718, 4294901760
    %720 = vmatprep.subr.mxu0 %v719
    %v721 = vand.u32 %v201, 4294901760
    %v722 = vsub.f32 %v201, %v721
    %v723 = vand.u32 %v722, 4294901760
    %v724 = vsub.f32 %v722, %v723
    %v725 = vand.u32 %v724, 4294901760
    %726 = vmatpush1.msra.mxu0 %v725
    %v727 = vand.u32 %v207, 4294901760
    %v728 = vsub.f32 %v207, %v727
    %v729 = vand.u32 %v728, 4294901760
    %v730 = vsub.f32 %v728, %v729
    %v731 = vand.u32 %v730, 4294901760
    %732 = vmatprep.subr.mxu0 %v731
    %v733 = vand.u32 %v206, 4294901760
    %v734 = vsub.f32 %v206, %v733
    %v735 = vand.u32 %v734, 4294901760
    %v736 = vsub.f32 %v734, %v735
    %v737 = vand.u32 %v736, 4294901760
    %738 = vmatpush1.msra.mxu0 %v737
    %v739 = vand.u32 %v212, 4294901760
    %v740 = vsub.f32 %v212, %v739
    %v741 = vand.u32 %v740, 4294901760
    %v742 = vsub.f32 %v740, %v741
    %v743 = vand.u32 %v742, 4294901760
    %744 = vmatprep.subr.mxu0 %v743
    %v745 = vand.u32 %v211, 4294901760
    %v746 = vsub.f32 %v211, %v745
    %v747 = vand.u32 %v746, 4294901760
    %v748 = vsub.f32 %v746, %v747
    %v749 = vand.u32 %v748, 4294901760
    %750 = vmatpush1.msra.mxu0 %v749
    %v751 = vand.u32 %v217, 4294901760
    %v752 = vsub.f32 %v217, %v751
    %v753 = vand.u32 %v752, 4294901760
    %v754 = vsub.f32 %v752, %v753
    %v755 = vand.u32 %v754, 4294901760
    %756 = vmatprep.subr.mxu0 %v755
    %v757 = vand.u32 %v216, 4294901760
    %v758 = vsub.f32 %v216, %v757
    %v759 = vand.u32 %v758, 4294901760
    %v760 = vsub.f32 %v758, %v759
    %v761 = vand.u32 %v760, 4294901760
    %762 = vmatpush1.msra.mxu0 %v761
    %v763 = vand.u32 %v222, 4294901760
    %v764 = vsub.f32 %v222, %v763
    %v765 = vand.u32 %v764, 4294901760
    %v766 = vsub.f32 %v764, %v765
    %v767 = vand.u32 %v766, 4294901760
    %768 = vmatprep.subr.mxu0 %v767
    %v769 = vand.u32 %v221, 4294901760
    %v770 = vsub.f32 %v221, %v769
    %v771 = vand.u32 %v770, 4294901760
    %v772 = vsub.f32 %v770, %v771
    %v773 = vand.u32 %v772, 4294901760
    %774 = vmatpush1.msra.mxu0 %v773
    %v775 = vand.u32 %v227, 4294901760
    %v776 = vsub.f32 %v227, %v775
    %v777 = vand.u32 %v776, 4294901760
    %v778 = vsub.f32 %v776, %v777
    %v779 = vand.u32 %v778, 4294901760
    %780 = vmatprep.subr.mxu0 %v779
    %v781 = vand.u32 %v226, 4294901760
    %v782 = vsub.f32 %v226, %v781
    %v783 = vand.u32 %v782, 4294901760
    %v784 = vsub.f32 %v782, %v783
    %v785 = vand.u32 %v784, 4294901760
    %786 = vmatpush1.msra.mxu0 %v785
    %v787 = vand.u32 %v232, 4294901760
    %v788 = vsub.f32 %v232, %v787
    %v789 = vand.u32 %v788, 4294901760
    %v790 = vsub.f32 %v788, %v789
    %v791 = vand.u32 %v790, 4294901760
    %792 = vmatprep.subr.mxu0 %v791
    %v793 = vand.u32 %v231, 4294901760
    %v794 = vsub.f32 %v231, %v793
    %v795 = vand.u32 %v794, 4294901760
    %v796 = vsub.f32 %v794, %v795
    %v797 = vand.u32 %v796, 4294901760
    %798 = vmatpush1.msra.mxu0 %v797
    %v799 = vand.u32 %v237, 4294901760
    %v800 = vsub.f32 %v237, %v799
    %v801 = vand.u32 %v800, 4294901760
    %v802 = vsub.f32 %v800, %v801
    %v803 = vand.u32 %v802, 4294901760
    %804 = vmatprep.subr.mxu0 %v803
    %v805 = vand.u32 %v236, 4294901760
    %v806 = vsub.f32 %v236, %v805
    %v807 = vand.u32 %v806, 4294901760
    %v808 = vsub.f32 %v806, %v807
    %v809 = vand.u32 %v808, 4294901760
    %810 = vmatpush1.msra.mxu0 %v809
    %v811 = vand.u32 %v242, 4294901760
    %v812 = vsub.f32 %v242, %v811
    %v813 = vand.u32 %v812, 4294901760
    %v814 = vsub.f32 %v812, %v813
    %v815 = vand.u32 %v814, 4294901760
    %816 = vmatprep.subr.mxu0 %v815
    %v817 = vand.u32 %v241, 4294901760
    %v818 = vsub.f32 %v241, %v817
    %v819 = vand.u32 %v818, 4294901760
    %v820 = vsub.f32 %v818, %v819
    %v821 = vand.u32 %v820, 4294901760
    %822 = vmatpush1.msra.mxu0 %v821
    %v823 = vand.u32 %v247, 4294901760
    %v824 = vsub.f32 %v247, %v823
    %v825 = vand.u32 %v824, 4294901760
    %v826 = vsub.f32 %v824, %v825
    %v827 = vand.u32 %v826, 4294901760
    %828 = vmatprep.subr.mxu0 %v827
    %v829 = vand.u32 %v246, 4294901760
    %v830 = vsub.f32 %v246, %v829
    %v831 = vand.u32 %v830, 4294901760
    %v832 = vsub.f32 %v830, %v831
    %v833 = vand.u32 %v832, 4294901760
    %834 = vmatpush1.msra.mxu0 %v833
    %v835 = vand.u32 %v252, 4294901760
    %v836 = vsub.f32 %v252, %v835
    %v837 = vand.u32 %v836, 4294901760
    %v838 = vsub.f32 %v836, %v837
    %v839 = vand.u32 %v838, 4294901760
    %840 = vmatprep.subr.mxu0 %v839
    %v841 = vand.u32 %v251, 4294901760
    %v842 = vsub.f32 %v251, %v841
    %v843 = vand.u32 %v842, 4294901760
    %v844 = vsub.f32 %v842, %v843
    %v845 = vand.u32 %v844, 4294901760
    %846 = vmatpush1.msra.mxu0 %v845
    %v847 = vand.u32 %v257, 4294901760
    %v848 = vsub.f32 %v257, %v847
    %v849 = vand.u32 %v848, 4294901760
    %v850 = vsub.f32 %v848, %v849
    %v851 = vand.u32 %v850, 4294901760
    %852 = vmatprep.subr.mxu0 %v851
    %v853 = vand.u32 %v256, 4294901760
    %v854 = vsub.f32 %v256, %v853
    %v855 = vand.u32 %v854, 4294901760
    %v856 = vsub.f32 %v854, %v855
    %v857 = vand.u32 %v856, 4294901760
    %858 = vmatpush1.msra.mxu0 %v857
    %v859 = vand.u32 %v262, 4294901760
    %v860 = vsub.f32 %v262, %v859
    %v861 = vand.u32 %v860, 4294901760
    %v862 = vsub.f32 %v860, %v861
    %v863 = vand.u32 %v862, 4294901760
    %864 = vmatprep.subr.mxu0 %v863
    %v865 = vand.u32 %v261, 4294901760
    %v866 = vsub.f32 %v261, %v865
    %v867 = vand.u32 %v866, 4294901760
    %v868 = vsub.f32 %v866, %v867
    %v869 = vand.u32 %v868, 4294901760
    %870 = vmatpush1.msra.mxu0 %v869
    %v871 = vand.u32 %v267, 4294901760
    %v872 = vsub.f32 %v267, %v871
    %v873 = vand.u32 %v872, 4294901760
    %v874 = vsub.f32 %v872, %v873
    %v875 = vand.u32 %v874, 4294901760
    %876 = vmatprep.subr.mxu0 %v875
    %v877 = vand.u32 %v266, 4294901760
    %v878 = vsub.f32 %v266, %v877
    %v879 = vand.u32 %v878, 4294901760
    %v880 = vsub.f32 %v878, %v879
    %v881 = vand.u32 %v880, 4294901760
    %882 = vmatpush1.msra.mxu0 %v881
    %v883 = vand.u32 %v272, 4294901760
    %v884 = vsub.f32 %v272, %v883
    %v885 = vand.u32 %v884, 4294901760
    %v886 = vsub.f32 %v884, %v885
    %v887 = vand.u32 %v886, 4294901760
    %888 = vmatprep.subr.mxu0 %v887
    %v889 = vand.u32 %v271, 4294901760
    %v890 = vsub.f32 %v271, %v889
    %v891 = vand.u32 %v890, 4294901760
    %v892 = vsub.f32 %v890, %v891
    %v893 = vand.u32 %v892, 4294901760
    %894 = vmatpush1.msra.mxu0 %v893
    %v895 = vand.u32 %v277, 4294901760
    %v896 = vsub.f32 %v277, %v895
    %v897 = vand.u32 %v896, 4294901760
    %v898 = vsub.f32 %v896, %v897
    %v899 = vand.u32 %v898, 4294901760
    %900 = vmatprep.subr.mxu0 %v899
    %v901 = vand.u32 %v276, 4294901760
    %v902 = vsub.f32 %v276, %v901
    %v903 = vand.u32 %v902, 4294901760
    %v904 = vsub.f32 %v902, %v903
    %v905 = vand.u32 %v904, 4294901760
    %906 = vmatpush1.msra.mxu0 %v905
    %v907 = vand.u32 %v282, 4294901760
    %v908 = vsub.f32 %v282, %v907
    %v909 = vand.u32 %v908, 4294901760
    %v910 = vsub.f32 %v908, %v909
    %v911 = vand.u32 %v910, 4294901760
    %912 = vmatprep.subr.mxu0 %v911
    %v913 = vand.u32 %v281, 4294901760
    %v914 = vsub.f32 %v281, %v913
    %v915 = vand.u32 %v914, 4294901760
    %v916 = vsub.f32 %v914, %v915
    %v917 = vand.u32 %v916, 4294901760
    %918 = vmatpush1.msra.mxu0 %v917
    %v919 = vand.u32 %v287, 4294901760
    %v920 = vsub.f32 %v287, %v919
    %v921 = vand.u32 %v920, 4294901760
    %v922 = vsub.f32 %v920, %v921
    %v923 = vand.u32 %v922, 4294901760
    %924 = vmatprep.subr.mxu0 %v923
    %v925 = vand.u32 %v286, 4294901760
    %v926 = vsub.f32 %v286, %v925
    %v927 = vand.u32 %v926, 4294901760
    %v928 = vsub.f32 %v926, %v927
    %v929 = vand.u32 %v928, 4294901760
    %930 = vmatpush1.msra.mxu0 %v929
    %v931 = vand.u32 %v292, 4294901760
    %v932 = vsub.f32 %v292, %v931
    %v933 = vand.u32 %v932, 4294901760
    %v934 = vsub.f32 %v932, %v933
    %v935 = vand.u32 %v934, 4294901760
    %936 = vmatprep.subr.mxu0 %v935
    %v937 = vand.u32 %v291, 4294901760
    %v938 = vsub.f32 %v291, %v937
    %v939 = vand.u32 %v938, 4294901760
    %v940 = vsub.f32 %v938, %v939
    %v941 = vand.u32 %v940, 4294901760
    %942 = vmatpush1.msra.mxu0 %v941
    %v943 = vand.u32 %v297, 4294901760
    %v944 = vsub.f32 %v297, %v943
    %v945 = vand.u32 %v944, 4294901760
    %v946 = vsub.f32 %v944, %v945
    %v947 = vand.u32 %v946, 4294901760
    %948 = vmatprep.subr.mxu0 %v947
    %v949 = vand.u32 %v296, 4294901760
    %v950 = vsub.f32 %v296, %v949
    %v951 = vand.u32 %v950, 4294901760
    %v952 = vsub.f32 %v950, %v951
    %v953 = vand.u32 %v952, 4294901760
    %954 = vmatpush1.msra.mxu0 %v953
    %v955 = vand.u32 %v302, 4294901760
    %v956 = vsub.f32 %v302, %v955
    %v957 = vand.u32 %v956, 4294901760
    %v958 = vsub.f32 %v956, %v957
    %v959 = vand.u32 %v958, 4294901760
    %960 = vmatprep.subr.mxu0 %v959
    %v961 = vand.u32 %v301, 4294901760
    %v962 = vsub.f32 %v301, %v961
    %v963 = vand.u32 %v962, 4294901760
    %v964 = vsub.f32 %v962, %v963
    %v965 = vand.u32 %v964, 4294901760
    %966 = vmatpush1.msra.mxu0 %v965
    %v967 = vand.u32 %v307, 4294901760
    %v968 = vsub.f32 %v307, %v967
    %v969 = vand.u32 %v968, 4294901760
    %v970 = vsub.f32 %v968, %v969
    %v971 = vand.u32 %v970, 4294901760
    %972 = vmatprep.subr.mxu0 %v971
    %v973 = vand.u32 %v306, 4294901760
    %v974 = vsub.f32 %v306, %v973
    %v975 = vand.u32 %v974, 4294901760
    %v976 = vsub.f32 %v974, %v975
    %v977 = vand.u32 %v976, 4294901760
    %978 = vmatpush1.msra.mxu0 %v977
    %v979 = vand.u32 %v312, 4294901760
    %v980 = vsub.f32 %v312, %v979
    %v981 = vand.u32 %v980, 4294901760
    %v982 = vsub.f32 %v980, %v981
    %v983 = vand.u32 %v982, 4294901760
    %984 = vmatprep.subr.mxu0 %v983
    %v985 = vand.u32 %v311, 4294901760
    %v986 = vsub.f32 %v311, %v985
    %v987 = vand.u32 %v986, 4294901760
    %v988 = vsub.f32 %v986, %v987
    %v989 = vand.u32 %v988, 4294901760
    %990 = vmatpush1.msra.mxu0 %v989
    %v991 = vand.u32 %v317, 4294901760
    %v992 = vsub.f32 %v317, %v991
    %v993 = vand.u32 %v992, 4294901760
    %v994 = vsub.f32 %v992, %v993
    %v995 = vand.u32 %v994, 4294901760
    %996 = vmatprep.subr.mxu0 %v995
    %v997 = vand.u32 %v316, 4294901760
    %v998 = vsub.f32 %v316, %v997
    %v999 = vand.u32 %v998, 4294901760
    %v1000 = vsub.f32 %v998, %v999
    %v1001 = vand.u32 %v1000, 4294901760
    %1002 = vmatpush1.msra.mxu0 %v1001
    %v1003 = vand.u32 %v322, 4294901760
    %v1004 = vsub.f32 %v322, %v1003
    %v1005 = vand.u32 %v1004, 4294901760
    %v1006 = vsub.f32 %v1004, %v1005
    %v1007 = vand.u32 %v1006, 4294901760
    %1008 = vmatprep.subr.mxu0 %v1007
    %v1009 = vand.u32 %v321, 4294901760
    %v1010 = vsub.f32 %v321, %v1009
    %v1011 = vand.u32 %v1010, 4294901760
    %v1012 = vsub.f32 %v1010, %v1011
    %v1013 = vand.u32 %v1012, 4294901760
    %1014 = vmatpush1.msra.mxu0 %v1013
    %v1015 = vand.u32 %v327, 4294901760
    %v1016 = vsub.f32 %v327, %v1015
    %v1017 = vand.u32 %v1016, 4294901760
    %v1018 = vsub.f32 %v1016, %v1017
    %v1019 = vand.u32 %v1018, 4294901760
    %1020 = vmatprep.subr.mxu0 %v1019
    %v1021 = vand.u32 %v326, 4294901760
    %v1022 = vsub.f32 %v326, %v1021
    %v1023 = vand.u32 %v1022, 4294901760
    %v1024 = vsub.f32 %v1022, %v1023
    %v1025 = vand.u32 %v1024, 4294901760
    %1026 = vmatpush1.msra.mxu0 %v1025
    %v1027 = vand.u32 %v332, 4294901760
    %v1028 = vsub.f32 %v332, %v1027
    %v1029 = vand.u32 %v1028, 4294901760
    %v1030 = vsub.f32 %v1028, %v1029
    %v1031 = vand.u32 %v1030, 4294901760
    %1032 = vmatprep.subr.mxu0 %v1031
    %v1033 = vand.u32 %v331, 4294901760
    %v1034 = vsub.f32 %v331, %v1033
    %v1035 = vand.u32 %v1034, 4294901760
    %v1036 = vsub.f32 %v1034, %v1035
    %v1037 = vand.u32 %v1036, 4294901760
    %1038 = vmatpush1.msra.mxu0 %v1037
    %v1039 = vand.u32 %v337, 4294901760
    %v1040 = vsub.f32 %v337, %v1039
    %v1041 = vand.u32 %v1040, 4294901760
    %v1042 = vsub.f32 %v1040, %v1041
    %v1043 = vand.u32 %v1042, 4294901760
    %1044 = vmatprep.subr.mxu0 %v1043
    %v1045 = vand.u32 %v336, 4294901760
    %v1046 = vsub.f32 %v336, %v1045
    %v1047 = vand.u32 %v1046, 4294901760
    %v1048 = vsub.f32 %v1046, %v1047
    %v1049 = vand.u32 %v1048, 4294901760
    %1050 = vmatpush1.msra.mxu0 %v1049
    %v1051 = vand.u32 %v342, 4294901760
    %v1052 = vsub.f32 %v342, %v1051
    %v1053 = vand.u32 %v1052, 4294901760
    %v1054 = vsub.f32 %v1052, %v1053
    %v1055 = vand.u32 %v1054, 4294901760
    %1056 = vmatprep.subr.mxu0 %v1055
    %v1057 = vand.u32 %v341, 4294901760
    %v1058 = vsub.f32 %v341, %v1057
    %v1059 = vand.u32 %v1058, 4294901760
    %v1060 = vsub.f32 %v1058, %v1059
    %v1061 = vand.u32 %v1060, 4294901760
    %1062 = vmatpush1.msra.mxu0 %v1061
    %v1063 = vand.u32 %v347, 4294901760
    %v1064 = vsub.f32 %v347, %v1063
    %v1065 = vand.u32 %v1064, 4294901760
    %v1066 = vsub.f32 %v1064, %v1065
    %v1067 = vand.u32 %v1066, 4294901760
    %1068 = vmatprep.subr.mxu0 %v1067
    %v1069 = vand.u32 %v346, 4294901760
    %v1070 = vsub.f32 %v346, %v1069
    %v1071 = vand.u32 %v1070, 4294901760
    %v1072 = vsub.f32 %v1070, %v1071
    %v1073 = vand.u32 %v1072, 4294901760
    %1074 = vmatpush1.msra.mxu0 %v1073
    %v1075 = vand.u32 %v352, 4294901760
    %v1076 = vsub.f32 %v352, %v1075
    %v1077 = vand.u32 %v1076, 4294901760
    %v1078 = vsub.f32 %v1076, %v1077
    %v1079 = vand.u32 %v1078, 4294901760
    %1080 = vmatprep.subr.mxu0 %v1079
    %v1081 = vand.u32 %v351, 4294901760
    %v1082 = vsub.f32 %v351, %v1081
    %v1083 = vand.u32 %v1082, 4294901760
    %v1084 = vsub.f32 %v1082, %v1083
    %v1085 = vand.u32 %v1084, 4294901760
    %1086 = vmatpush1.msra.mxu0 %v1085
    %v1087 = vand.u32 %v357, 4294901760
    %v1088 = vsub.f32 %v357, %v1087
    %v1089 = vand.u32 %v1088, 4294901760
    %v1090 = vsub.f32 %v1088, %v1089
    %v1091 = vand.u32 %v1090, 4294901760
    %1092 = vmatprep.subr.mxu0 %v1091
    %v1093 = vand.u32 %v356, 4294901760
    %v1094 = vsub.f32 %v356, %v1093
    %v1095 = vand.u32 %v1094, 4294901760
    %v1096 = vsub.f32 %v1094, %v1095
    %v1097 = vand.u32 %v1096, 4294901760
    %1098 = vmatpush1.msra.mxu0 %v1097
    %v1099 = vand.u32 %v564, 4294901760
    %1100 = vmatprep.mubr.f32.mxu0 %v1099
    %v1101 = vand.u32 %v556, 4294901760
    %1102 = vmatmul.mubr.f32.gmra.mrb[0].mxu0 %v1101
    %v1103 = vpop.f32.mrb[0].mxu0
    %v1104 = vadd.f32 %v711, %v1103
    %v1105 = vpop.f32.mrb[0].mxu0
    %v1106 = vadd.f32 %v713, %v1105
    %1107 = vdwg.mxu0
    %v1108 = vand.u32 %v202, 4294901760
    %v1109 = vsub.f32 %v202, %v1108
    %1110 = vmatprep.subr.mxu0 %v1109
    %v1111 = vand.u32 %v201, 4294901760
    %v1112 = vsub.f32 %v201, %v1111
    %1113 = vmatpush1.msra.mxu0 %v1112
    %v1114 = vand.u32 %v207, 4294901760
    %v1115 = vsub.f32 %v207, %v1114
    %1116 = vmatprep.subr.mxu0 %v1115
    %v1117 = vand.u32 %v206, 4294901760
    %v1118 = vsub.f32 %v206, %v1117
    %1119 = vmatpush1.msra.mxu0 %v1118
    %v1120 = vand.u32 %v212, 4294901760
    %v1121 = vsub.f32 %v212, %v1120
    %1122 = vmatprep.subr.mxu0 %v1121
    %v1123 = vand.u32 %v211, 4294901760
    %v1124 = vsub.f32 %v211, %v1123
    %1125 = vmatpush1.msra.mxu0 %v1124
    %v1126 = vand.u32 %v217, 4294901760
    %v1127 = vsub.f32 %v217, %v1126
    %1128 = vmatprep.subr.mxu0 %v1127
    %v1129 = vand.u32 %v216, 4294901760
    %v1130 = vsub.f32 %v216, %v1129
    %1131 = vmatpush1.msra.mxu0 %v1130
    %v1132 = vand.u32 %v222, 4294901760
    %v1133 = vsub.f32 %v222, %v1132
    %1134 = vmatprep.subr.mxu0 %v1133
    %v1135 = vand.u32 %v221, 4294901760
    %v1136 = vsub.f32 %v221, %v1135
    %1137 = vmatpush1.msra.mxu0 %v1136
    %v1138 = vand.u32 %v227, 4294901760
    %v1139 = vsub.f32 %v227, %v1138
    %1140 = vmatprep.subr.mxu0 %v1139
    %v1141 = vand.u32 %v226, 4294901760
    %v1142 = vsub.f32 %v226, %v1141
    %1143 = vmatpush1.msra.mxu0 %v1142
    %v1144 = vand.u32 %v232, 4294901760
    %v1145 = vsub.f32 %v232, %v1144
    %1146 = vmatprep.subr.mxu0 %v1145
    %v1147 = vand.u32 %v231, 4294901760
    %v1148 = vsub.f32 %v231, %v1147
    %1149 = vmatpush1.msra.mxu0 %v1148
    %v1150 = vand.u32 %v237, 4294901760
    %v1151 = vsub.f32 %v237, %v1150
    %1152 = vmatprep.subr.mxu0 %v1151
    %v1153 = vand.u32 %v236, 4294901760
    %v1154 = vsub.f32 %v236, %v1153
    %1155 = vmatpush1.msra.mxu0 %v1154
    %v1156 = vand.u32 %v242, 4294901760
    %v1157 = vsub.f32 %v242, %v1156
    %1158 = vmatprep.subr.mxu0 %v1157
    %v1159 = vand.u32 %v241, 4294901760
    %v1160 = vsub.f32 %v241, %v1159
    %1161 = vmatpush1.msra.mxu0 %v1160
    %v1162 = vand.u32 %v247, 4294901760
    %v1163 = vsub.f32 %v247, %v1162
    %1164 = vmatprep.subr.mxu0 %v1163
    %v1165 = vand.u32 %v246, 4294901760
    %v1166 = vsub.f32 %v246, %v1165
    %1167 = vmatpush1.msra.mxu0 %v1166
    %v1168 = vand.u32 %v252, 4294901760
    %v1169 = vsub.f32 %v252, %v1168
    %1170 = vmatprep.subr.mxu0 %v1169
    %v1171 = vand.u32 %v251, 4294901760
    %v1172 = vsub.f32 %v251, %v1171
    %1173 = vmatpush1.msra.mxu0 %v1172
    %v1174 = vand.u32 %v257, 4294901760
    %v1175 = vsub.f32 %v257, %v1174
    %1176 = vmatprep.subr.mxu0 %v1175
    %v1177 = vand.u32 %v256, 4294901760
    %v1178 = vsub.f32 %v256, %v1177
    %1179 = vmatpush1.msra.mxu0 %v1178
    %v1180 = vand.u32 %v262, 4294901760
    %v1181 = vsub.f32 %v262, %v1180
    %1182 = vmatprep.subr.mxu0 %v1181
    %v1183 = vand.u32 %v261, 4294901760
    %v1184 = vsub.f32 %v261, %v1183
    %1185 = vmatpush1.msra.mxu0 %v1184
    %v1186 = vand.u32 %v267, 4294901760
    %v1187 = vsub.f32 %v267, %v1186
    %1188 = vmatprep.subr.mxu0 %v1187
    %v1189 = vand.u32 %v266, 4294901760
    %v1190 = vsub.f32 %v266, %v1189
    %1191 = vmatpush1.msra.mxu0 %v1190
    %v1192 = vand.u32 %v272, 4294901760
    %v1193 = vsub.f32 %v272, %v1192
    %1194 = vmatprep.subr.mxu0 %v1193
    %v1195 = vand.u32 %v271, 4294901760
    %v1196 = vsub.f32 %v271, %v1195
    %1197 = vmatpush1.msra.mxu0 %v1196
    %v1198 = vand.u32 %v277, 4294901760
    %v1199 = vsub.f32 %v277, %v1198
    %1200 = vmatprep.subr.mxu0 %v1199
    %v1201 = vand.u32 %v276, 4294901760
    %v1202 = vsub.f32 %v276, %v1201
    %1203 = vmatpush1.msra.mxu0 %v1202
    %v1204 = vand.u32 %v282, 4294901760
    %v1205 = vsub.f32 %v282, %v1204
    %1206 = vmatprep.subr.mxu0 %v1205
    %v1207 = vand.u32 %v281, 4294901760
    %v1208 = vsub.f32 %v281, %v1207
    %1209 = vmatpush1.msra.mxu0 %v1208
    %v1210 = vand.u32 %v287, 4294901760
    %v1211 = vsub.f32 %v287, %v1210
    %1212 = vmatprep.subr.mxu0 %v1211
    %v1213 = vand.u32 %v286, 4294901760
    %v1214 = vsub.f32 %v286, %v1213
    %1215 = vmatpush1.msra.mxu0 %v1214
    %v1216 = vand.u32 %v292, 4294901760
    %v1217 = vsub.f32 %v292, %v1216
    %1218 = vmatprep.subr.mxu0 %v1217
    %v1219 = vand.u32 %v291, 4294901760
    %v1220 = vsub.f32 %v291, %v1219
    %1221 = vmatpush1.msra.mxu0 %v1220
    %v1222 = vand.u32 %v297, 4294901760
    %v1223 = vsub.f32 %v297, %v1222
    %1224 = vmatprep.subr.mxu0 %v1223
    %v1225 = vand.u32 %v296, 4294901760
    %v1226 = vsub.f32 %v296, %v1225
    %1227 = vmatpush1.msra.mxu0 %v1226
    %v1228 = vand.u32 %v302, 4294901760
    %v1229 = vsub.f32 %v302, %v1228
    %1230 = vmatprep.subr.mxu0 %v1229
    %v1231 = vand.u32 %v301, 4294901760
    %v1232 = vsub.f32 %v301, %v1231
    %1233 = vmatpush1.msra.mxu0 %v1232
    %v1234 = vand.u32 %v307, 4294901760
    %v1235 = vsub.f32 %v307, %v1234
    %1236 = vmatprep.subr.mxu0 %v1235
    %v1237 = vand.u32 %v306, 4294901760
    %v1238 = vsub.f32 %v306, %v1237
    %1239 = vmatpush1.msra.mxu0 %v1238
    %v1240 = vand.u32 %v312, 4294901760
    %v1241 = vsub.f32 %v312, %v1240
    %1242 = vmatprep.subr.mxu0 %v1241
    %v1243 = vand.u32 %v311, 4294901760
    %v1244 = vsub.f32 %v311, %v1243
    %1245 = vmatpush1.msra.mxu0 %v1244
    %v1246 = vand.u32 %v317, 4294901760
    %v1247 = vsub.f32 %v317, %v1246
    %1248 = vmatprep.subr.mxu0 %v1247
    %v1249 = vand.u32 %v316, 4294901760
    %v1250 = vsub.f32 %v316, %v1249
    %1251 = vmatpush1.msra.mxu0 %v1250
    %v1252 = vand.u32 %v322, 4294901760
    %v1253 = vsub.f32 %v322, %v1252
    %1254 = vmatprep.subr.mxu0 %v1253
    %v1255 = vand.u32 %v321, 4294901760
    %v1256 = vsub.f32 %v321, %v1255
    %1257 = vmatpush1.msra.mxu0 %v1256
    %v1258 = vand.u32 %v327, 4294901760
    %v1259 = vsub.f32 %v327, %v1258
    %1260 = vmatprep.subr.mxu0 %v1259
    %v1261 = vand.u32 %v326, 4294901760
    %v1262 = vsub.f32 %v326, %v1261
    %1263 = vmatpush1.msra.mxu0 %v1262
    %v1264 = vand.u32 %v332, 4294901760
    %v1265 = vsub.f32 %v332, %v1264
    %1266 = vmatprep.subr.mxu0 %v1265
    %v1267 = vand.u32 %v331, 4294901760
    %v1268 = vsub.f32 %v331, %v1267
    %1269 = vmatpush1.msra.mxu0 %v1268
    %v1270 = vand.u32 %v337, 4294901760
    %v1271 = vsub.f32 %v337, %v1270
    %1272 = vmatprep.subr.mxu0 %v1271
    %v1273 = vand.u32 %v336, 4294901760
    %v1274 = vsub.f32 %v336, %v1273
    %1275 = vmatpush1.msra.mxu0 %v1274
    %v1276 = vand.u32 %v342, 4294901760
    %v1277 = vsub.f32 %v342, %v1276
    %1278 = vmatprep.subr.mxu0 %v1277
    %v1279 = vand.u32 %v341, 4294901760
    %v1280 = vsub.f32 %v341, %v1279
    %1281 = vmatpush1.msra.mxu0 %v1280
    %v1282 = vand.u32 %v347, 4294901760
    %v1283 = vsub.f32 %v347, %v1282
    %1284 = vmatprep.subr.mxu0 %v1283
    %v1285 = vand.u32 %v346, 4294901760
    %v1286 = vsub.f32 %v346, %v1285
    %1287 = vmatpush1.msra.mxu0 %v1286
    %v1288 = vand.u32 %v352, 4294901760
    %v1289 = vsub.f32 %v352, %v1288
    %1290 = vmatprep.subr.mxu0 %v1289
    %v1291 = vand.u32 %v351, 4294901760
    %v1292 = vsub.f32 %v351, %v1291
    %1293 = vmatpush1.msra.mxu0 %v1292
    %v1294 = vand.u32 %v357, 4294901760
    %v1295 = vsub.f32 %v357, %v1294
    %1296 = vmatprep.subr.mxu0 %v1295
    %v1297 = vand.u32 %v356, 4294901760
    %v1298 = vsub.f32 %v356, %v1297
    %1299 = vmatpush1.msra.mxu0 %v1298
    %v1300 = vand.u32 %v564, 4294901760
    %v1301 = vsub.f32 %v564, %v1300
    %1302 = vmatprep.mubr.f32.mxu0 %v1301
    %v1303 = vand.u32 %v556, 4294901760
    %v1304 = vsub.f32 %v556, %v1303
    %1305 = vmatmul.mubr.f32.gmra.mrb[0].mxu0 %v1304
    %v1306 = vpop.f32.mrb[0].mxu0
    %v1307 = vadd.f32 %v1104, %v1306
    %v1308 = vpop.f32.mrb[0].mxu0
    %v1309 = vadd.f32 %v1106, %v1308
    %1310 = vdwg.mxu0
    %v1311 = vand.u32 %v202, 4294901760
    %1312 = vmatprep.subr.mxu0 %v1311
    %v1313 = vand.u32 %v201, 4294901760
    %1314 = vmatpush1.msra.mxu0 %v1313
    %v1315 = vand.u32 %v207, 4294901760
    %1316 = vmatprep.subr.mxu0 %v1315
    %v1317 = vand.u32 %v206, 4294901760
    %1318 = vmatpush1.msra.mxu0 %v1317
    %v1319 = vand.u32 %v212, 4294901760
    %1320 = vmatprep.subr.mxu0 %v1319
    %v1321 = vand.u32 %v211, 4294901760
    %1322 = vmatpush1.msra.mxu0 %v1321
    %v1323 = vand.u32 %v217, 4294901760
    %1324 = vmatprep.subr.mxu0 %v1323
    %v1325 = vand.u32 %v216, 4294901760
    %1326 = vmatpush1.msra.mxu0 %v1325
    %v1327 = vand.u32 %v222, 4294901760
    %1328 = vmatprep.subr.mxu0 %v1327
    %v1329 = vand.u32 %v221, 4294901760
    %1330 = vmatpush1.msra.mxu0 %v1329
    %v1331 = vand.u32 %v227, 4294901760
    %1332 = vmatprep.subr.mxu0 %v1331
    %v1333 = vand.u32 %v226, 4294901760
    %1334 = vmatpush1.msra.mxu0 %v1333
    %v1335 = vand.u32 %v232, 4294901760
    %1336 = vmatprep.subr.mxu0 %v1335
    %v1337 = vand.u32 %v231, 4294901760
    %1338 = vmatpush1.msra.mxu0 %v1337
    %v1339 = vand.u32 %v237, 4294901760
    %1340 = vmatprep.subr.mxu0 %v1339
    %v1341 = vand.u32 %v236, 4294901760
    %1342 = vmatpush1.msra.mxu0 %v1341
    %v1343 = vand.u32 %v242, 4294901760
    %1344 = vmatprep.subr.mxu0 %v1343
    %v1345 = vand.u32 %v241, 4294901760
    %1346 = vmatpush1.msra.mxu0 %v1345
    %v1347 = vand.u32 %v247, 4294901760
    %1348 = vmatprep.subr.mxu0 %v1347
    %v1349 = vand.u32 %v246, 4294901760
    %1350 = vmatpush1.msra.mxu0 %v1349
    %v1351 = vand.u32 %v252, 4294901760
    %1352 = vmatprep.subr.mxu0 %v1351
    %v1353 = vand.u32 %v251, 4294901760
    %1354 = vmatpush1.msra.mxu0 %v1353
    %v1355 = vand.u32 %v257, 4294901760
    %1356 = vmatprep.subr.mxu0 %v1355
    %v1357 = vand.u32 %v256, 4294901760
    %1358 = vmatpush1.msra.mxu0 %v1357
    %v1359 = vand.u32 %v262, 4294901760
    %1360 = vmatprep.subr.mxu0 %v1359
    %v1361 = vand.u32 %v261, 4294901760
    %1362 = vmatpush1.msra.mxu0 %v1361
    %v1363 = vand.u32 %v267, 4294901760
    %1364 = vmatprep.subr.mxu0 %v1363
    %v1365 = vand.u32 %v266, 4294901760
    %1366 = vmatpush1.msra.mxu0 %v1365
    %v1367 = vand.u32 %v272, 4294901760
    %1368 = vmatprep.subr.mxu0 %v1367
    %v1369 = vand.u32 %v271, 4294901760
    %1370 = vmatpush1.msra.mxu0 %v1369
    %v1371 = vand.u32 %v277, 4294901760
    %1372 = vmatprep.subr.mxu0 %v1371
    %v1373 = vand.u32 %v276, 4294901760
    %1374 = vmatpush1.msra.mxu0 %v1373
    %v1375 = vand.u32 %v282, 4294901760
    %1376 = vmatprep.subr.mxu0 %v1375
    %v1377 = vand.u32 %v281, 4294901760
    %1378 = vmatpush1.msra.mxu0 %v1377
    %v1379 = vand.u32 %v287, 4294901760
    %1380 = vmatprep.subr.mxu0 %v1379
    %v1381 = vand.u32 %v286, 4294901760
    %1382 = vmatpush1.msra.mxu0 %v1381
    %v1383 = vand.u32 %v292, 4294901760
    %1384 = vmatprep.subr.mxu0 %v1383
    %v1385 = vand.u32 %v291, 4294901760
    %1386 = vmatpush1.msra.mxu0 %v1385
    %v1387 = vand.u32 %v297, 4294901760
    %1388 = vmatprep.subr.mxu0 %v1387
    %v1389 = vand.u32 %v296, 4294901760
    %1390 = vmatpush1.msra.mxu0 %v1389
    %v1391 = vand.u32 %v302, 4294901760
    %1392 = vmatprep.subr.mxu0 %v1391
    %v1393 = vand.u32 %v301, 4294901760
    %1394 = vmatpush1.msra.mxu0 %v1393
    %v1395 = vand.u32 %v307, 4294901760
    %1396 = vmatprep.subr.mxu0 %v1395
    %v1397 = vand.u32 %v306, 4294901760
    %1398 = vmatpush1.msra.mxu0 %v1397
    %v1399 = vand.u32 %v312, 4294901760
    %1400 = vmatprep.subr.mxu0 %v1399
    %v1401 = vand.u32 %v311, 4294901760
    %1402 = vmatpush1.msra.mxu0 %v1401
    %v1403 = vand.u32 %v317, 4294901760
    %1404 = vmatprep.subr.mxu0 %v1403
    %v1405 = vand.u32 %v316, 4294901760
    %1406 = vmatpush1.msra.mxu0 %v1405
    %v1407 = vand.u32 %v322, 4294901760
    %1408 = vmatprep.subr.mxu0 %v1407
    %v1409 = vand.u32 %v321, 4294901760
    %1410 = vmatpush1.msra.mxu0 %v1409
    %v1411 = vand.u32 %v327, 4294901760
    %1412 = vmatprep.subr.mxu0 %v1411
    %v1413 = vand.u32 %v326, 4294901760
    %1414 = vmatpush1.msra.mxu0 %v1413
    %v1415 = vand.u32 %v332, 4294901760
    %1416 = vmatprep.subr.mxu0 %v1415
    %v1417 = vand.u32 %v331, 4294901760
    %1418 = vmatpush1.msra.mxu0 %v1417
    %v1419 = vand.u32 %v337, 4294901760
    %1420 = vmatprep.subr.mxu0 %v1419
    %v1421 = vand.u32 %v336, 4294901760
    %1422 = vmatpush1.msra.mxu0 %v1421
    %v1423 = vand.u32 %v342, 4294901760
    %1424 = vmatprep.subr.mxu0 %v1423
    %v1425 = vand.u32 %v341, 4294901760
    %1426 = vmatpush1.msra.mxu0 %v1425
    %v1427 = vand.u32 %v347, 4294901760
    %1428 = vmatprep.subr.mxu0 %v1427
    %v1429 = vand.u32 %v346, 4294901760
    %1430 = vmatpush1.msra.mxu0 %v1429
    %v1431 = vand.u32 %v352, 4294901760
    %1432 = vmatprep.subr.mxu0 %v1431
    %v1433 = vand.u32 %v351, 4294901760
    %1434 = vmatpush1.msra.mxu0 %v1433
    %v1435 = vand.u32 %v357, 4294901760
    %1436 = vmatprep.subr.mxu0 %v1435
    %v1437 = vand.u32 %v356, 4294901760
    %1438 = vmatpush1.msra.mxu0 %v1437
    %v1439 = vand.u32 %v564, 4294901760
    %v1440 = vsub.f32 %v564, %v1439
    %v1441 = vand.u32 %v1440, 4294901760
    %1442 = vmatprep.mubr.f32.mxu0 %v1441
    %v1443 = vand.u32 %v556, 4294901760
    %v1444 = vsub.f32 %v556, %v1443
    %v1445 = vand.u32 %v1444, 4294901760
    %1446 = vmatmul.mubr.f32.gmra.mrb[0].mxu0 %v1445
    %v1447 = vpop.f32.mrb[0].mxu0
    %v1448 = vadd.f32 %v1307, %v1447
    %v1449 = vpop.f32.mrb[0].mxu0
    %v1450 = vadd.f32 %v1309, %v1449
    %1451 = vdwg.mxu0
    %v1452 = vand.u32 %v202, 4294901760
    %v1453 = vsub.f32 %v202, %v1452
    %v1454 = vand.u32 %v1453, 4294901760
    %1455 = vmatprep.subr.mxu0 %v1454
    %v1456 = vand.u32 %v201, 4294901760
    %v1457 = vsub.f32 %v201, %v1456
    %v1458 = vand.u32 %v1457, 4294901760
    %1459 = vmatpush1.msra.mxu0 %v1458
    %v1460 = vand.u32 %v207, 4294901760
    %v1461 = vsub.f32 %v207, %v1460
    %v1462 = vand.u32 %v1461, 4294901760
    %1463 = vmatprep.subr.mxu0 %v1462
    %v1464 = vand.u32 %v206, 4294901760
    %v1465 = vsub.f32 %v206, %v1464
    %v1466 = vand.u32 %v1465, 4294901760
    %1467 = vmatpush1.msra.mxu0 %v1466
    %v1468 = vand.u32 %v212, 4294901760
    %v1469 = vsub.f32 %v212, %v1468
    %v1470 = vand.u32 %v1469, 4294901760
    %1471 = vmatprep.subr.mxu0 %v1470
    %v1472 = vand.u32 %v211, 4294901760
    %v1473 = vsub.f32 %v211, %v1472
    %v1474 = vand.u32 %v1473, 4294901760
    %1475 = vmatpush1.msra.mxu0 %v1474
    %v1476 = vand.u32 %v217, 4294901760
    %v1477 = vsub.f32 %v217, %v1476
    %v1478 = vand.u32 %v1477, 4294901760
    %1479 = vmatprep.subr.mxu0 %v1478
    %v1480 = vand.u32 %v216, 4294901760
    %v1481 = vsub.f32 %v216, %v1480
    %v1482 = vand.u32 %v1481, 4294901760
    %1483 = vmatpush1.msra.mxu0 %v1482
    %v1484 = vand.u32 %v222, 4294901760
    %v1485 = vsub.f32 %v222, %v1484
    %v1486 = vand.u32 %v1485, 4294901760
    %1487 = vmatprep.subr.mxu0 %v1486
    %v1488 = vand.u32 %v221, 4294901760
    %v1489 = vsub.f32 %v221, %v1488
    %v1490 = vand.u32 %v1489, 4294901760
    %1491 = vmatpush1.msra.mxu0 %v1490
    %v1492 = vand.u32 %v227, 4294901760
    %v1493 = vsub.f32 %v227, %v1492
    %v1494 = vand.u32 %v1493, 4294901760
    %1495 = vmatprep.subr.mxu0 %v1494
    %v1496 = vand.u32 %v226, 4294901760
    %v1497 = vsub.f32 %v226, %v1496
    %v1498 = vand.u32 %v1497, 4294901760
    %1499 = vmatpush1.msra.mxu0 %v1498
    %v1500 = vand.u32 %v232, 4294901760
    %v1501 = vsub.f32 %v232, %v1500
    %v1502 = vand.u32 %v1501, 4294901760
    %1503 = vmatprep.subr.mxu0 %v1502
    %v1504 = vand.u32 %v231, 4294901760
    %v1505 = vsub.f32 %v231, %v1504
    %v1506 = vand.u32 %v1505, 4294901760
    %1507 = vmatpush1.msra.mxu0 %v1506
    %v1508 = vand.u32 %v237, 4294901760
    %v1509 = vsub.f32 %v237, %v1508
    %v1510 = vand.u32 %v1509, 4294901760
    %1511 = vmatprep.subr.mxu0 %v1510
    %v1512 = vand.u32 %v236, 4294901760
    %v1513 = vsub.f32 %v236, %v1512
    %v1514 = vand.u32 %v1513, 4294901760
    %1515 = vmatpush1.msra.mxu0 %v1514
    %v1516 = vand.u32 %v242, 4294901760
    %v1517 = vsub.f32 %v242, %v1516
    %v1518 = vand.u32 %v1517, 4294901760
    %1519 = vmatprep.subr.mxu0 %v1518
    %v1520 = vand.u32 %v241, 4294901760
    %v1521 = vsub.f32 %v241, %v1520
    %v1522 = vand.u32 %v1521, 4294901760
    %1523 = vmatpush1.msra.mxu0 %v1522
    %v1524 = vand.u32 %v247, 4294901760
    %v1525 = vsub.f32 %v247, %v1524
    %v1526 = vand.u32 %v1525, 4294901760
    %1527 = vmatprep.subr.mxu0 %v1526
    %v1528 = vand.u32 %v246, 4294901760
    %v1529 = vsub.f32 %v246, %v1528
    %v1530 = vand.u32 %v1529, 4294901760
    %1531 = vmatpush1.msra.mxu0 %v1530
    %v1532 = vand.u32 %v252, 4294901760
    %v1533 = vsub.f32 %v252, %v1532
    %v1534 = vand.u32 %v1533, 4294901760
    %1535 = vmatprep.subr.mxu0 %v1534
    %v1536 = vand.u32 %v251, 4294901760
    %v1537 = vsub.f32 %v251, %v1536
    %v1538 = vand.u32 %v1537, 4294901760
    %1539 = vmatpush1.msra.mxu0 %v1538
    %v1540 = vand.u32 %v257, 4294901760
    %v1541 = vsub.f32 %v257, %v1540
    %v1542 = vand.u32 %v1541, 4294901760
    %1543 = vmatprep.subr.mxu0 %v1542
    %v1544 = vand.u32 %v256, 4294901760
    %v1545 = vsub.f32 %v256, %v1544
    %v1546 = vand.u32 %v1545, 4294901760
    %1547 = vmatpush1.msra.mxu0 %v1546
    %v1548 = vand.u32 %v262, 4294901760
    %v1549 = vsub.f32 %v262, %v1548
    %v1550 = vand.u32 %v1549, 4294901760
    %1551 = vmatprep.subr.mxu0 %v1550
    %v1552 = vand.u32 %v261, 4294901760
    %v1553 = vsub.f32 %v261, %v1552
    %v1554 = vand.u32 %v1553, 4294901760
    %1555 = vmatpush1.msra.mxu0 %v1554
    %v1556 = vand.u32 %v267, 4294901760
    %v1557 = vsub.f32 %v267, %v1556
    %v1558 = vand.u32 %v1557, 4294901760
    %1559 = vmatprep.subr.mxu0 %v1558
    %v1560 = vand.u32 %v266, 4294901760
    %v1561 = vsub.f32 %v266, %v1560
    %v1562 = vand.u32 %v1561, 4294901760
    %1563 = vmatpush1.msra.mxu0 %v1562
    %v1564 = vand.u32 %v272, 4294901760
    %v1565 = vsub.f32 %v272, %v1564
    %v1566 = vand.u32 %v1565, 4294901760
    %1567 = vmatprep.subr.mxu0 %v1566
    %v1568 = vand.u32 %v271, 4294901760
    %v1569 = vsub.f32 %v271, %v1568
    %v1570 = vand.u32 %v1569, 4294901760
    %1571 = vmatpush1.msra.mxu0 %v1570
    %v1572 = vand.u32 %v277, 4294901760
    %v1573 = vsub.f32 %v277, %v1572
    %v1574 = vand.u32 %v1573, 4294901760
    %1575 = vmatprep.subr.mxu0 %v1574
    %v1576 = vand.u32 %v276, 4294901760
    %v1577 = vsub.f32 %v276, %v1576
    %v1578 = vand.u32 %v1577, 4294901760
    %1579 = vmatpush1.msra.mxu0 %v1578
    %v1580 = vand.u32 %v282, 4294901760
    %v1581 = vsub.f32 %v282, %v1580
    %v1582 = vand.u32 %v1581, 4294901760
    %1583 = vmatprep.subr.mxu0 %v1582
    %v1584 = vand.u32 %v281, 4294901760
    %v1585 = vsub.f32 %v281, %v1584
    %v1586 = vand.u32 %v1585, 4294901760
    %1587 = vmatpush1.msra.mxu0 %v1586
    %v1588 = vand.u32 %v287, 4294901760
    %v1589 = vsub.f32 %v287, %v1588
    %v1590 = vand.u32 %v1589, 4294901760
    %1591 = vmatprep.subr.mxu0 %v1590
    %v1592 = vand.u32 %v286, 4294901760
    %v1593 = vsub.f32 %v286, %v1592
    %v1594 = vand.u32 %v1593, 4294901760
    %1595 = vmatpush1.msra.mxu0 %v1594
    %v1596 = vand.u32 %v292, 4294901760
    %v1597 = vsub.f32 %v292, %v1596
    %v1598 = vand.u32 %v1597, 4294901760
    %1599 = vmatprep.subr.mxu0 %v1598
    %v1600 = vand.u32 %v291, 4294901760
    %v1601 = vsub.f32 %v291, %v1600
    %v1602 = vand.u32 %v1601, 4294901760
    %1603 = vmatpush1.msra.mxu0 %v1602
    %v1604 = vand.u32 %v297, 4294901760
    %v1605 = vsub.f32 %v297, %v1604
    %v1606 = vand.u32 %v1605, 4294901760
    %1607 = vmatprep.subr.mxu0 %v1606
    %v1608 = vand.u32 %v296, 4294901760
    %v1609 = vsub.f32 %v296, %v1608
    %v1610 = vand.u32 %v1609, 4294901760
    %1611 = vmatpush1.msra.mxu0 %v1610
    %v1612 = vand.u32 %v302, 4294901760
    %v1613 = vsub.f32 %v302, %v1612
    %v1614 = vand.u32 %v1613, 4294901760
    %1615 = vmatprep.subr.mxu0 %v1614
    %v1616 = vand.u32 %v301, 4294901760
    %v1617 = vsub.f32 %v301, %v1616
    %v1618 = vand.u32 %v1617, 4294901760
    %1619 = vmatpush1.msra.mxu0 %v1618
    %v1620 = vand.u32 %v307, 4294901760
    %v1621 = vsub.f32 %v307, %v1620
    %v1622 = vand.u32 %v1621, 4294901760
    %1623 = vmatprep.subr.mxu0 %v1622
    %v1624 = vand.u32 %v306, 4294901760
    %v1625 = vsub.f32 %v306, %v1624
    %v1626 = vand.u32 %v1625, 4294901760
    %1627 = vmatpush1.msra.mxu0 %v1626
    %v1628 = vand.u32 %v312, 4294901760
    %v1629 = vsub.f32 %v312, %v1628
    %v1630 = vand.u32 %v1629, 4294901760
    %1631 = vmatprep.subr.mxu0 %v1630
    %v1632 = vand.u32 %v311, 4294901760
    %v1633 = vsub.f32 %v311, %v1632
    %v1634 = vand.u32 %v1633, 4294901760
    %1635 = vmatpush1.msra.mxu0 %v1634
    %v1636 = vand.u32 %v317, 4294901760
    %v1637 = vsub.f32 %v317, %v1636
    %v1638 = vand.u32 %v1637, 4294901760
    %1639 = vmatprep.subr.mxu0 %v1638
    %v1640 = vand.u32 %v316, 4294901760
    %v1641 = vsub.f32 %v316, %v1640
    %v1642 = vand.u32 %v1641, 4294901760
    %1643 = vmatpush1.msra.mxu0 %v1642
    %v1644 = vand.u32 %v322, 4294901760
    %v1645 = vsub.f32 %v322, %v1644
    %v1646 = vand.u32 %v1645, 4294901760
    %1647 = vmatprep.subr.mxu0 %v1646
    %v1648 = vand.u32 %v321, 4294901760
    %v1649 = vsub.f32 %v321, %v1648
    %v1650 = vand.u32 %v1649, 4294901760
    %1651 = vmatpush1.msra.mxu0 %v1650
    %v1652 = vand.u32 %v327, 4294901760
    %v1653 = vsub.f32 %v327, %v1652
    %v1654 = vand.u32 %v1653, 4294901760
    %1655 = vmatprep.subr.mxu0 %v1654
    %v1656 = vand.u32 %v326, 4294901760
    %v1657 = vsub.f32 %v326, %v1656
    %v1658 = vand.u32 %v1657, 4294901760
    %1659 = vmatpush1.msra.mxu0 %v1658
    %v1660 = vand.u32 %v332, 4294901760
    %v1661 = vsub.f32 %v332, %v1660
    %v1662 = vand.u32 %v1661, 4294901760
    %1663 = vmatprep.subr.mxu0 %v1662
    %v1664 = vand.u32 %v331, 4294901760
    %v1665 = vsub.f32 %v331, %v1664
    %v1666 = vand.u32 %v1665, 4294901760
    %1667 = vmatpush1.msra.mxu0 %v1666
    %v1668 = vand.u32 %v337, 4294901760
    %v1669 = vsub.f32 %v337, %v1668
    %v1670 = vand.u32 %v1669, 4294901760
    %1671 = vmatprep.subr.mxu0 %v1670
    %v1672 = vand.u32 %v336, 4294901760
    %v1673 = vsub.f32 %v336, %v1672
    %v1674 = vand.u32 %v1673, 4294901760
    %1675 = vmatpush1.msra.mxu0 %v1674
    %v1676 = vand.u32 %v342, 4294901760
    %v1677 = vsub.f32 %v342, %v1676
    %v1678 = vand.u32 %v1677, 4294901760
    %1679 = vmatprep.subr.mxu0 %v1678
    %v1680 = vand.u32 %v341, 4294901760
    %v1681 = vsub.f32 %v341, %v1680
    %v1682 = vand.u32 %v1681, 4294901760
    %1683 = vmatpush1.msra.mxu0 %v1682
    %v1684 = vand.u32 %v347, 4294901760
    %v1685 = vsub.f32 %v347, %v1684
    %v1686 = vand.u32 %v1685, 4294901760
    %1687 = vmatprep.subr.mxu0 %v1686
    %v1688 = vand.u32 %v346, 4294901760
    %v1689 = vsub.f32 %v346, %v1688
    %v1690 = vand.u32 %v1689, 4294901760
    %1691 = vmatpush1.msra.mxu0 %v1690
    %v1692 = vand.u32 %v352, 4294901760
    %v1693 = vsub.f32 %v352, %v1692
    %v1694 = vand.u32 %v1693, 4294901760
    %1695 = vmatprep.subr.mxu0 %v1694
    %v1696 = vand.u32 %v351, 4294901760
    %v1697 = vsub.f32 %v351, %v1696
    %v1698 = vand.u32 %v1697, 4294901760
    %1699 = vmatpush1.msra.mxu0 %v1698
    %v1700 = vand.u32 %v357, 4294901760
    %v1701 = vsub.f32 %v357, %v1700
    %v1702 = vand.u32 %v1701, 4294901760
    %1703 = vmatprep.subr.mxu0 %v1702
    %v1704 = vand.u32 %v356, 4294901760
    %v1705 = vsub.f32 %v356, %v1704
    %v1706 = vand.u32 %v1705, 4294901760
    %1707 = vmatpush1.msra.mxu0 %v1706
    %v1708 = vand.u32 %v564, 4294901760
    %1709 = vmatprep.mubr.f32.mxu0 %v1708
    %v1710 = vand.u32 %v556, 4294901760
    %1711 = vmatmul.mubr.f32.gmra.mrb[0].mxu0 %v1710
    %v1712 = vpop.f32.mrb[0].mxu0
    %v1713 = vadd.f32 %v1448, %v1712
    %v1714 = vpop.f32.mrb[0].mxu0
    %v1715 = vadd.f32 %v1450, %v1714
    %1716 = vdwg.mxu0
    %v1717 = vand.u32 %v202, 4294901760
    %1718 = vmatprep.subr.mxu0 %v1717
    %v1719 = vand.u32 %v201, 4294901760
    %1720 = vmatpush1.msra.mxu0 %v1719
    %v1721 = vand.u32 %v207, 4294901760
    %1722 = vmatprep.subr.mxu0 %v1721
    %v1723 = vand.u32 %v206, 4294901760
    %1724 = vmatpush1.msra.mxu0 %v1723
    %v1725 = vand.u32 %v212, 4294901760
    %1726 = vmatprep.subr.mxu0 %v1725
    %v1727 = vand.u32 %v211, 4294901760
    %1728 = vmatpush1.msra.mxu0 %v1727
    %v1729 = vand.u32 %v217, 4294901760
    %1730 = vmatprep.subr.mxu0 %v1729
    %v1731 = vand.u32 %v216, 4294901760
    %1732 = vmatpush1.msra.mxu0 %v1731
    %v1733 = vand.u32 %v222, 4294901760
    %1734 = vmatprep.subr.mxu0 %v1733
    %v1735 = vand.u32 %v221, 4294901760
    %1736 = vmatpush1.msra.mxu0 %v1735
    %v1737 = vand.u32 %v227, 4294901760
    %1738 = vmatprep.subr.mxu0 %v1737
    %v1739 = vand.u32 %v226, 4294901760
    %1740 = vmatpush1.msra.mxu0 %v1739
    %v1741 = vand.u32 %v232, 4294901760
    %1742 = vmatprep.subr.mxu0 %v1741
    %v1743 = vand.u32 %v231, 4294901760
    %1744 = vmatpush1.msra.mxu0 %v1743
    %v1745 = vand.u32 %v237, 4294901760
    %1746 = vmatprep.subr.mxu0 %v1745
    %v1747 = vand.u32 %v236, 4294901760
    %1748 = vmatpush1.msra.mxu0 %v1747
    %v1749 = vand.u32 %v242, 4294901760
    %1750 = vmatprep.subr.mxu0 %v1749
    %v1751 = vand.u32 %v241, 4294901760
    %1752 = vmatpush1.msra.mxu0 %v1751
    %v1753 = vand.u32 %v247, 4294901760
    %1754 = vmatprep.subr.mxu0 %v1753
    %v1755 = vand.u32 %v246, 4294901760
    %1756 = vmatpush1.msra.mxu0 %v1755
    %v1757 = vand.u32 %v252, 4294901760
    %1758 = vmatprep.subr.mxu0 %v1757
    %v1759 = vand.u32 %v251, 4294901760
    %1760 = vmatpush1.msra.mxu0 %v1759
    %v1761 = vand.u32 %v257, 4294901760
    %1762 = vmatprep.subr.mxu0 %v1761
    %v1763 = vand.u32 %v256, 4294901760
    %1764 = vmatpush1.msra.mxu0 %v1763
    %v1765 = vand.u32 %v262, 4294901760
    %1766 = vmatprep.subr.mxu0 %v1765
    %v1767 = vand.u32 %v261, 4294901760
    %1768 = vmatpush1.msra.mxu0 %v1767
    %v1769 = vand.u32 %v267, 4294901760
    %1770 = vmatprep.subr.mxu0 %v1769
    %v1771 = vand.u32 %v266, 4294901760
    %1772 = vmatpush1.msra.mxu0 %v1771
    %v1773 = vand.u32 %v272, 4294901760
    %1774 = vmatprep.subr.mxu0 %v1773
    %v1775 = vand.u32 %v271, 4294901760
    %1776 = vmatpush1.msra.mxu0 %v1775
    %v1777 = vand.u32 %v277, 4294901760
    %1778 = vmatprep.subr.mxu0 %v1777
    %v1779 = vand.u32 %v276, 4294901760
    %1780 = vmatpush1.msra.mxu0 %v1779
    %v1781 = vand.u32 %v282, 4294901760
    %1782 = vmatprep.subr.mxu0 %v1781
    %v1783 = vand.u32 %v281, 4294901760
    %1784 = vmatpush1.msra.mxu0 %v1783
    %v1785 = vand.u32 %v287, 4294901760
    %1786 = vmatprep.subr.mxu0 %v1785
    %v1787 = vand.u32 %v286, 4294901760
    %1788 = vmatpush1.msra.mxu0 %v1787
    %v1789 = vand.u32 %v292, 4294901760
    %1790 = vmatprep.subr.mxu0 %v1789
    %v1791 = vand.u32 %v291, 4294901760
    %1792 = vmatpush1.msra.mxu0 %v1791
    %v1793 = vand.u32 %v297, 4294901760
    %1794 = vmatprep.subr.mxu0 %v1793
    %v1795 = vand.u32 %v296, 4294901760
    %1796 = vmatpush1.msra.mxu0 %v1795
    %v1797 = vand.u32 %v302, 4294901760
    %1798 = vmatprep.subr.mxu0 %v1797
    %v1799 = vand.u32 %v301, 4294901760
    %1800 = vmatpush1.msra.mxu0 %v1799
    %v1801 = vand.u32 %v307, 4294901760
    %1802 = vmatprep.subr.mxu0 %v1801
    %v1803 = vand.u32 %v306, 4294901760
    %1804 = vmatpush1.msra.mxu0 %v1803
    %v1805 = vand.u32 %v312, 4294901760
    %1806 = vmatprep.subr.mxu0 %v1805
    %v1807 = vand.u32 %v311, 4294901760
    %1808 = vmatpush1.msra.mxu0 %v1807
    %v1809 = vand.u32 %v317, 4294901760
    %1810 = vmatprep.subr.mxu0 %v1809
    %v1811 = vand.u32 %v316, 4294901760
    %1812 = vmatpush1.msra.mxu0 %v1811
    %v1813 = vand.u32 %v322, 4294901760
    %1814 = vmatprep.subr.mxu0 %v1813
    %v1815 = vand.u32 %v321, 4294901760
    %1816 = vmatpush1.msra.mxu0 %v1815
    %v1817 = vand.u32 %v327, 4294901760
    %1818 = vmatprep.subr.mxu0 %v1817
    %v1819 = vand.u32 %v326, 4294901760
    %1820 = vmatpush1.msra.mxu0 %v1819
    %v1821 = vand.u32 %v332, 4294901760
    %1822 = vmatprep.subr.mxu0 %v1821
    %v1823 = vand.u32 %v331, 4294901760
    %1824 = vmatpush1.msra.mxu0 %v1823
    %v1825 = vand.u32 %v337, 4294901760
    %1826 = vmatprep.subr.mxu0 %v1825
    %v1827 = vand.u32 %v336, 4294901760
    %1828 = vmatpush1.msra.mxu0 %v1827
    %v1829 = vand.u32 %v342, 4294901760
    %1830 = vmatprep.subr.mxu0 %v1829
    %v1831 = vand.u32 %v341, 4294901760
    %1832 = vmatpush1.msra.mxu0 %v1831
    %v1833 = vand.u32 %v347, 4294901760
    %1834 = vmatprep.subr.mxu0 %v1833
    %v1835 = vand.u32 %v346, 4294901760
    %1836 = vmatpush1.msra.mxu0 %v1835
    %v1837 = vand.u32 %v352, 4294901760
    %1838 = vmatprep.subr.mxu0 %v1837
    %v1839 = vand.u32 %v351, 4294901760
    %1840 = vmatpush1.msra.mxu0 %v1839
    %v1841 = vand.u32 %v357, 4294901760
    %1842 = vmatprep.subr.mxu0 %v1841
    %v1843 = vand.u32 %v356, 4294901760
    %1844 = vmatpush1.msra.mxu0 %v1843
    %v1845 = vand.u32 %v564, 4294901760
    %1846 = vmatprep.mubr.f32.mxu0 %v1845
    %v1847 = vand.u32 %v556, 4294901760
    %1848 = vmatmul.mubr.f32.gmra.mrb[0].mxu0 %v1847
    %v1849 = vpop.f32.mrb[0].mxu0
    %v1850 = vadd.f32 %v1713, %v1849
    %v1851 = vpop.f32.mrb[0].mxu0
    %v1852 = vadd.f32 %v1715, %v1851
    %1853 = vdwg.mxu0
    %v1854 = vand.u32 %v362, 4294901760
    %1855 = vmatprep.subr.mxu0 %v1854
    %v1856 = vand.u32 %v361, 4294901760
    %1857 = vmatpush1.msra.mxu0 %v1856
    %v1858 = vand.u32 %v367, 4294901760
    %1859 = vmatprep.subr.mxu0 %v1858
    %v1860 = vand.u32 %v366, 4294901760
    %1861 = vmatpush1.msra.mxu0 %v1860
    %v1862 = vand.u32 %v372, 4294901760
    %1863 = vmatprep.subr.mxu0 %v1862
    %v1864 = vand.u32 %v371, 4294901760
    %1865 = vmatpush1.msra.mxu0 %v1864
    %v1866 = vand.u32 %v377, 4294901760
    %1867 = vmatprep.subr.mxu0 %v1866
    %v1868 = vand.u32 %v376, 4294901760
    %1869 = vmatpush1.msra.mxu0 %v1868
    %v1870 = vand.u32 %v382, 4294901760
    %1871 = vmatprep.subr.mxu0 %v1870
    %v1872 = vand.u32 %v381, 4294901760
    %1873 = vmatpush1.msra.mxu0 %v1872
    %v1874 = vand.u32 %v387, 4294901760
    %1875 = vmatprep.subr.mxu0 %v1874
    %v1876 = vand.u32 %v386, 4294901760
    %1877 = vmatpush1.msra.mxu0 %v1876
    %v1878 = vand.u32 %v392, 4294901760
    %1879 = vmatprep.subr.mxu0 %v1878
    %v1880 = vand.u32 %v391, 4294901760
    %1881 = vmatpush1.msra.mxu0 %v1880
    %v1882 = vand.u32 %v397, 4294901760
    %1883 = vmatprep.subr.mxu0 %v1882
    %v1884 = vand.u32 %v396, 4294901760
    %1885 = vmatpush1.msra.mxu0 %v1884
    %v1886 = vand.u32 %v402, 4294901760
    %1887 = vmatprep.subr.mxu0 %v1886
    %v1888 = vand.u32 %v401, 4294901760
    %1889 = vmatpush1.msra.mxu0 %v1888
    %v1890 = vand.u32 %v407, 4294901760
    %1891 = vmatprep.subr.mxu0 %v1890
    %v1892 = vand.u32 %v406, 4294901760
    %1893 = vmatpush1.msra.mxu0 %v1892
    %v1894 = vand.u32 %v412, 4294901760
    %1895 = vmatprep.subr.mxu0 %v1894
    %v1896 = vand.u32 %v411, 4294901760
    %1897 = vmatpush1.msra.mxu0 %v1896
    %v1898 = vand.u32 %v417, 4294901760
    %1899 = vmatprep.subr.mxu0 %v1898
    %v1900 = vand.u32 %v416, 4294901760
    %1901 = vmatpush1.msra.mxu0 %v1900
    %v1902 = vand.u32 %v422, 4294901760
    %1903 = vmatprep.subr.mxu0 %v1902
    %v1904 = vand.u32 %v421, 4294901760
    %1905 = vmatpush1.msra.mxu0 %v1904
    %v1906 = vand.u32 %v427, 4294901760
    %1907 = vmatprep.subr.mxu0 %v1906
    %v1908 = vand.u32 %v426, 4294901760
    %1909 = vmatpush1.msra.mxu0 %v1908
    %v1910 = vand.u32 %v432, 4294901760
    %1911 = vmatprep.subr.mxu0 %v1910
    %v1912 = vand.u32 %v431, 4294901760
    %1913 = vmatpush1.msra.mxu0 %v1912
    %v1914 = vand.u32 %v437, 4294901760
    %1915 = vmatprep.subr.mxu0 %v1914
    %v1916 = vand.u32 %v436, 4294901760
    %1917 = vmatpush1.msra.mxu0 %v1916
    %v1918 = vand.u32 %v442, 4294901760
    %1919 = vmatprep.subr.mxu0 %v1918
    %v1920 = vand.u32 %v441, 4294901760
    %1921 = vmatpush1.msra.mxu0 %v1920
    %v1922 = vand.u32 %v447, 4294901760
    %1923 = vmatprep.subr.mxu0 %v1922
    %v1924 = vand.u32 %v446, 4294901760
    %1925 = vmatpush1.msra.mxu0 %v1924
    %v1926 = vand.u32 %v452, 4294901760
    %1927 = vmatprep.subr.mxu0 %v1926
    %v1928 = vand.u32 %v451, 4294901760
    %1929 = vmatpush1.msra.mxu0 %v1928
    %v1930 = vand.u32 %v457, 4294901760
    %1931 = vmatprep.subr.mxu0 %v1930
    %v1932 = vand.u32 %v456, 4294901760
    %1933 = vmatpush1.msra.mxu0 %v1932
    %v1934 = vand.u32 %v462, 4294901760
    %1935 = vmatprep.subr.mxu0 %v1934
    %v1936 = vand.u32 %v461, 4294901760
    %1937 = vmatpush1.msra.mxu0 %v1936
    %v1938 = vand.u32 %v467, 4294901760
    %1939 = vmatprep.subr.mxu0 %v1938
    %v1940 = vand.u32 %v466, 4294901760
    %1941 = vmatpush1.msra.mxu0 %v1940
    %v1942 = vand.u32 %v472, 4294901760
    %1943 = vmatprep.subr.mxu0 %v1942
    %v1944 = vand.u32 %v471, 4294901760
    %1945 = vmatpush1.msra.mxu0 %v1944
    %v1946 = vand.u32 %v477, 4294901760
    %1947 = vmatprep.subr.mxu0 %v1946
    %v1948 = vand.u32 %v476, 4294901760
    %1949 = vmatpush1.msra.mxu0 %v1948
    %v1950 = vand.u32 %v482, 4294901760
    %1951 = vmatprep.subr.mxu0 %v1950
    %v1952 = vand.u32 %v481, 4294901760
    %1953 = vmatpush1.msra.mxu0 %v1952
    %v1954 = vand.u32 %v487, 4294901760
    %1955 = vmatprep.subr.mxu0 %v1954
    %v1956 = vand.u32 %v486, 4294901760
    %1957 = vmatpush1.msra.mxu0 %v1956
    %v1958 = vand.u32 %v492, 4294901760
    %1959 = vmatprep.subr.mxu0 %v1958
    %v1960 = vand.u32 %v491, 4294901760
    %1961 = vmatpush1.msra.mxu0 %v1960
    %v1962 = vand.u32 %v497, 4294901760
    %1963 = vmatprep.subr.mxu0 %v1962
    %v1964 = vand.u32 %v496, 4294901760
    %1965 = vmatpush1.msra.mxu0 %v1964
    %v1966 = vand.u32 %v502, 4294901760
    %1967 = vmatprep.subr.mxu0 %v1966
    %v1968 = vand.u32 %v501, 4294901760
    %1969 = vmatpush1.msra.mxu0 %v1968
    %v1970 = vand.u32 %v507, 4294901760
    %1971 = vmatprep.subr.mxu0 %v1970
    %v1972 = vand.u32 %v506, 4294901760
    %1973 = vmatpush1.msra.mxu0 %v1972
    %v1974 = vand.u32 %v512, 4294901760
    %1975 = vmatprep.subr.mxu0 %v1974
    %v1976 = vand.u32 %v511, 4294901760
    %1977 = vmatpush1.msra.mxu0 %v1976
    %v1978 = vand.u32 %v517, 4294901760
    %1979 = vmatprep.subr.mxu0 %v1978
    %v1980 = vand.u32 %v516, 4294901760
    %1981 = vmatpush1.msra.mxu0 %v1980
    %v1982 = vand.u32 %v565, 4294901760
    %v1983 = vsub.f32 %v565, %v1982
    %v1984 = vand.u32 %v1983, 4294901760
    %v1985 = vsub.f32 %v1983, %v1984
    %v1986 = vand.u32 %v1985, 4294901760
    %1987 = vmatprep.mubr.f32.mxu0 %v1986
    %v1988 = vand.u32 %v563, 4294901760
    %v1989 = vsub.f32 %v563, %v1988
    %v1990 = vand.u32 %v1989, 4294901760
    %v1991 = vsub.f32 %v1989, %v1990
    %v1992 = vand.u32 %v1991, 4294901760
    %1993 = vmatmul.mubr.f32.gmra.mrb[0].mxu0 %v1992
    %v1994 = vpop.f32.mrb[0].mxu0
    %v1995 = vadd.f32 %v1850, %v1994
    %v1996 = vpop.f32.mrb[0].mxu0
    %v1997 = vadd.f32 %v1852, %v1996
    %1998 = vdwg.mxu0
    %v1999 = vand.u32 %v362, 4294901760
    %v2000 = vsub.f32 %v362, %v1999
    %v2001 = vand.u32 %v2000, 4294901760
    %v2002 = vsub.f32 %v2000, %v2001
    %v2003 = vand.u32 %v2002, 4294901760
    %2004 = vmatprep.subr.mxu0 %v2003
    %v2005 = vand.u32 %v361, 4294901760
    %v2006 = vsub.f32 %v361, %v2005
    %v2007 = vand.u32 %v2006, 4294901760
    %v2008 = vsub.f32 %v2006, %v2007
    %v2009 = vand.u32 %v2008, 4294901760
    %2010 = vmatpush1.msra.mxu0 %v2009
    %v2011 = vand.u32 %v367, 4294901760
    %v2012 = vsub.f32 %v367, %v2011
    %v2013 = vand.u32 %v2012, 4294901760
    %v2014 = vsub.f32 %v2012, %v2013
    %v2015 = vand.u32 %v2014, 4294901760
    %2016 = vmatprep.subr.mxu0 %v2015
    %v2017 = vand.u32 %v366, 4294901760
    %v2018 = vsub.f32 %v366, %v2017
    %v2019 = vand.u32 %v2018, 4294901760
    %v2020 = vsub.f32 %v2018, %v2019
    %v2021 = vand.u32 %v2020, 4294901760
    %2022 = vmatpush1.msra.mxu0 %v2021
    %v2023 = vand.u32 %v372, 4294901760
    %v2024 = vsub.f32 %v372, %v2023
    %v2025 = vand.u32 %v2024, 4294901760
    %v2026 = vsub.f32 %v2024, %v2025
    %v2027 = vand.u32 %v2026, 4294901760
    %2028 = vmatprep.subr.mxu0 %v2027
    %v2029 = vand.u32 %v371, 4294901760
    %v2030 = vsub.f32 %v371, %v2029
    %v2031 = vand.u32 %v2030, 4294901760
    %v2032 = vsub.f32 %v2030, %v2031
    %v2033 = vand.u32 %v2032, 4294901760
    %2034 = vmatpush1.msra.mxu0 %v2033
    %v2035 = vand.u32 %v377, 4294901760
    %v2036 = vsub.f32 %v377, %v2035
    %v2037 = vand.u32 %v2036, 4294901760
    %v2038 = vsub.f32 %v2036, %v2037
    %v2039 = vand.u32 %v2038, 4294901760
    %2040 = vmatprep.subr.mxu0 %v2039
    %v2041 = vand.u32 %v376, 4294901760
    %v2042 = vsub.f32 %v376, %v2041
    %v2043 = vand.u32 %v2042, 4294901760
    %v2044 = vsub.f32 %v2042, %v2043
    %v2045 = vand.u32 %v2044, 4294901760
    %2046 = vmatpush1.msra.mxu0 %v2045
    %v2047 = vand.u32 %v382, 4294901760
    %v2048 = vsub.f32 %v382, %v2047
    %v2049 = vand.u32 %v2048, 4294901760
    %v2050 = vsub.f32 %v2048, %v2049
    %v2051 = vand.u32 %v2050, 4294901760
    %2052 = vmatprep.subr.mxu0 %v2051
    %v2053 = vand.u32 %v381, 4294901760
    %v2054 = vsub.f32 %v381, %v2053
    %v2055 = vand.u32 %v2054, 4294901760
    %v2056 = vsub.f32 %v2054, %v2055
    %v2057 = vand.u32 %v2056, 4294901760
    %2058 = vmatpush1.msra.mxu0 %v2057
    %v2059 = vand.u32 %v387, 4294901760
    %v2060 = vsub.f32 %v387, %v2059
    %v2061 = vand.u32 %v2060, 4294901760
    %v2062 = vsub.f32 %v2060, %v2061
    %v2063 = vand.u32 %v2062, 4294901760
    %2064 = vmatprep.subr.mxu0 %v2063
    %v2065 = vand.u32 %v386, 4294901760
    %v2066 = vsub.f32 %v386, %v2065
    %v2067 = vand.u32 %v2066, 4294901760
    %v2068 = vsub.f32 %v2066, %v2067
    %v2069 = vand.u32 %v2068, 4294901760
    %2070 = vmatpush1.msra.mxu0 %v2069
    %v2071 = vand.u32 %v392, 4294901760
    %v2072 = vsub.f32 %v392, %v2071
    %v2073 = vand.u32 %v2072, 4294901760
    %v2074 = vsub.f32 %v2072, %v2073
    %v2075 = vand.u32 %v2074, 4294901760
    %2076 = vmatprep.subr.mxu0 %v2075
    %v2077 = vand.u32 %v391, 4294901760
    %v2078 = vsub.f32 %v391, %v2077
    %v2079 = vand.u32 %v2078, 4294901760
    %v2080 = vsub.f32 %v2078, %v2079
    %v2081 = vand.u32 %v2080, 4294901760
    %2082 = vmatpush1.msra.mxu0 %v2081
    %v2083 = vand.u32 %v397, 4294901760
    %v2084 = vsub.f32 %v397, %v2083
    %v2085 = vand.u32 %v2084, 4294901760
    %v2086 = vsub.f32 %v2084, %v2085
    %v2087 = vand.u32 %v2086, 4294901760
    %2088 = vmatprep.subr.mxu0 %v2087
    %v2089 = vand.u32 %v396, 4294901760
    %v2090 = vsub.f32 %v396, %v2089
    %v2091 = vand.u32 %v2090, 4294901760
    %v2092 = vsub.f32 %v2090, %v2091
    %v2093 = vand.u32 %v2092, 4294901760
    %2094 = vmatpush1.msra.mxu0 %v2093
    %v2095 = vand.u32 %v402, 4294901760
    %v2096 = vsub.f32 %v402, %v2095
    %v2097 = vand.u32 %v2096, 4294901760
    %v2098 = vsub.f32 %v2096, %v2097
    %v2099 = vand.u32 %v2098, 4294901760
    %2100 = vmatprep.subr.mxu0 %v2099
    %v2101 = vand.u32 %v401, 4294901760
    %v2102 = vsub.f32 %v401, %v2101
    %v2103 = vand.u32 %v2102, 4294901760
    %v2104 = vsub.f32 %v2102, %v2103
    %v2105 = vand.u32 %v2104, 4294901760
    %2106 = vmatpush1.msra.mxu0 %v2105
    %v2107 = vand.u32 %v407, 4294901760
    %v2108 = vsub.f32 %v407, %v2107
    %v2109 = vand.u32 %v2108, 4294901760
    %v2110 = vsub.f32 %v2108, %v2109
    %v2111 = vand.u32 %v2110, 4294901760
    %2112 = vmatprep.subr.mxu0 %v2111
    %v2113 = vand.u32 %v406, 4294901760
    %v2114 = vsub.f32 %v406, %v2113
    %v2115 = vand.u32 %v2114, 4294901760
    %v2116 = vsub.f32 %v2114, %v2115
    %v2117 = vand.u32 %v2116, 4294901760
    %2118 = vmatpush1.msra.mxu0 %v2117
    %v2119 = vand.u32 %v412, 4294901760
    %v2120 = vsub.f32 %v412, %v2119
    %v2121 = vand.u32 %v2120, 4294901760
    %v2122 = vsub.f32 %v2120, %v2121
    %v2123 = vand.u32 %v2122, 4294901760
    %2124 = vmatprep.subr.mxu0 %v2123
    %v2125 = vand.u32 %v411, 4294901760
    %v2126 = vsub.f32 %v411, %v2125
    %v2127 = vand.u32 %v2126, 4294901760
    %v2128 = vsub.f32 %v2126, %v2127
    %v2129 = vand.u32 %v2128, 4294901760
    %2130 = vmatpush1.msra.mxu0 %v2129
    %v2131 = vand.u32 %v417, 4294901760
    %v2132 = vsub.f32 %v417, %v2131
    %v2133 = vand.u32 %v2132, 4294901760
    %v2134 = vsub.f32 %v2132, %v2133
    %v2135 = vand.u32 %v2134, 4294901760
    %2136 = vmatprep.subr.mxu0 %v2135
    %v2137 = vand.u32 %v416, 4294901760
    %v2138 = vsub.f32 %v416, %v2137
    %v2139 = vand.u32 %v2138, 4294901760
    %v2140 = vsub.f32 %v2138, %v2139
    %v2141 = vand.u32 %v2140, 4294901760
    %2142 = vmatpush1.msra.mxu0 %v2141
    %v2143 = vand.u32 %v422, 4294901760
    %v2144 = vsub.f32 %v422, %v2143
    %v2145 = vand.u32 %v2144, 4294901760
    %v2146 = vsub.f32 %v2144, %v2145
    %v2147 = vand.u32 %v2146, 4294901760
    %2148 = vmatprep.subr.mxu0 %v2147
    %v2149 = vand.u32 %v421, 4294901760
    %v2150 = vsub.f32 %v421, %v2149
    %v2151 = vand.u32 %v2150, 4294901760
    %v2152 = vsub.f32 %v2150, %v2151
    %v2153 = vand.u32 %v2152, 4294901760
    %2154 = vmatpush1.msra.mxu0 %v2153
    %v2155 = vand.u32 %v427, 4294901760
    %v2156 = vsub.f32 %v427, %v2155
    %v2157 = vand.u32 %v2156, 4294901760
    %v2158 = vsub.f32 %v2156, %v2157
    %v2159 = vand.u32 %v2158, 4294901760
    %2160 = vmatprep.subr.mxu0 %v2159
    %v2161 = vand.u32 %v426, 4294901760
    %v2162 = vsub.f32 %v426, %v2161
    %v2163 = vand.u32 %v2162, 4294901760
    %v2164 = vsub.f32 %v2162, %v2163
    %v2165 = vand.u32 %v2164, 4294901760
    %2166 = vmatpush1.msra.mxu0 %v2165
    %v2167 = vand.u32 %v432, 4294901760
    %v2168 = vsub.f32 %v432, %v2167
    %v2169 = vand.u32 %v2168, 4294901760
    %v2170 = vsub.f32 %v2168, %v2169
    %v2171 = vand.u32 %v2170, 4294901760
    %2172 = vmatprep.subr.mxu0 %v2171
    %v2173 = vand.u32 %v431, 4294901760
    %v2174 = vsub.f32 %v431, %v2173
    %v2175 = vand.u32 %v2174, 4294901760
    %v2176 = vsub.f32 %v2174, %v2175
    %v2177 = vand.u32 %v2176, 4294901760
    %2178 = vmatpush1.msra.mxu0 %v2177
    %v2179 = vand.u32 %v437, 4294901760
    %v2180 = vsub.f32 %v437, %v2179
    %v2181 = vand.u32 %v2180, 4294901760
    %v2182 = vsub.f32 %v2180, %v2181
    %v2183 = vand.u32 %v2182, 4294901760
    %2184 = vmatprep.subr.mxu0 %v2183
    %v2185 = vand.u32 %v436, 4294901760
    %v2186 = vsub.f32 %v436, %v2185
    %v2187 = vand.u32 %v2186, 4294901760
    %v2188 = vsub.f32 %v2186, %v2187
    %v2189 = vand.u32 %v2188, 4294901760
    %2190 = vmatpush1.msra.mxu0 %v2189
    %v2191 = vand.u32 %v442, 4294901760
    %v2192 = vsub.f32 %v442, %v2191
    %v2193 = vand.u32 %v2192, 4294901760
    %v2194 = vsub.f32 %v2192, %v2193
    %v2195 = vand.u32 %v2194, 4294901760
    %2196 = vmatprep.subr.mxu0 %v2195
    %v2197 = vand.u32 %v441, 4294901760
    %v2198 = vsub.f32 %v441, %v2197
    %v2199 = vand.u32 %v2198, 4294901760
    %v2200 = vsub.f32 %v2198, %v2199
    %v2201 = vand.u32 %v2200, 4294901760
    %2202 = vmatpush1.msra.mxu0 %v2201
    %v2203 = vand.u32 %v447, 4294901760
    %v2204 = vsub.f32 %v447, %v2203
    %v2205 = vand.u32 %v2204, 4294901760
    %v2206 = vsub.f32 %v2204, %v2205
    %v2207 = vand.u32 %v2206, 4294901760
    %2208 = vmatprep.subr.mxu0 %v2207
    %v2209 = vand.u32 %v446, 4294901760
    %v2210 = vsub.f32 %v446, %v2209
    %v2211 = vand.u32 %v2210, 4294901760
    %v2212 = vsub.f32 %v2210, %v2211
    %v2213 = vand.u32 %v2212, 4294901760
    %2214 = vmatpush1.msra.mxu0 %v2213
    %v2215 = vand.u32 %v452, 4294901760
    %v2216 = vsub.f32 %v452, %v2215
    %v2217 = vand.u32 %v2216, 4294901760
    %v2218 = vsub.f32 %v2216, %v2217
    %v2219 = vand.u32 %v2218, 4294901760
    %2220 = vmatprep.subr.mxu0 %v2219
    %v2221 = vand.u32 %v451, 4294901760
    %v2222 = vsub.f32 %v451, %v2221
    %v2223 = vand.u32 %v2222, 4294901760
    %v2224 = vsub.f32 %v2222, %v2223
    %v2225 = vand.u32 %v2224, 4294901760
    %2226 = vmatpush1.msra.mxu0 %v2225
    %v2227 = vand.u32 %v457, 4294901760
    %v2228 = vsub.f32 %v457, %v2227
    %v2229 = vand.u32 %v2228, 4294901760
    %v2230 = vsub.f32 %v2228, %v2229
    %v2231 = vand.u32 %v2230, 4294901760
    %2232 = vmatprep.subr.mxu0 %v2231
    %v2233 = vand.u32 %v456, 4294901760
    %v2234 = vsub.f32 %v456, %v2233
    %v2235 = vand.u32 %v2234, 4294901760
    %v2236 = vsub.f32 %v2234, %v2235
    %v2237 = vand.u32 %v2236, 4294901760
    %2238 = vmatpush1.msra.mxu0 %v2237
    %v2239 = vand.u32 %v462, 4294901760
    %v2240 = vsub.f32 %v462, %v2239
    %v2241 = vand.u32 %v2240, 4294901760
    %v2242 = vsub.f32 %v2240, %v2241
    %v2243 = vand.u32 %v2242, 4294901760
    %2244 = vmatprep.subr.mxu0 %v2243
    %v2245 = vand.u32 %v461, 4294901760
    %v2246 = vsub.f32 %v461, %v2245
    %v2247 = vand.u32 %v2246, 4294901760
    %v2248 = vsub.f32 %v2246, %v2247
    %v2249 = vand.u32 %v2248, 4294901760
    %2250 = vmatpush1.msra.mxu0 %v2249
    %v2251 = vand.u32 %v467, 4294901760
    %v2252 = vsub.f32 %v467, %v2251
    %v2253 = vand.u32 %v2252, 4294901760
    %v2254 = vsub.f32 %v2252, %v2253
    %v2255 = vand.u32 %v2254, 4294901760
    %2256 = vmatprep.subr.mxu0 %v2255
    %v2257 = vand.u32 %v466, 4294901760
    %v2258 = vsub.f32 %v466, %v2257
    %v2259 = vand.u32 %v2258, 4294901760
    %v2260 = vsub.f32 %v2258, %v2259
    %v2261 = vand.u32 %v2260, 4294901760
    %2262 = vmatpush1.msra.mxu0 %v2261
    %v2263 = vand.u32 %v472, 4294901760
    %v2264 = vsub.f32 %v472, %v2263
    %v2265 = vand.u32 %v2264, 4294901760
    %v2266 = vsub.f32 %v2264, %v2265
    %v2267 = vand.u32 %v2266, 4294901760
    %2268 = vmatprep.subr.mxu0 %v2267
    %v2269 = vand.u32 %v471, 4294901760
    %v2270 = vsub.f32 %v471, %v2269
    %v2271 = vand.u32 %v2270, 4294901760
    %v2272 = vsub.f32 %v2270, %v2271
    %v2273 = vand.u32 %v2272, 4294901760
    %2274 = vmatpush1.msra.mxu0 %v2273
    %v2275 = vand.u32 %v477, 4294901760
    %v2276 = vsub.f32 %v477, %v2275
    %v2277 = vand.u32 %v2276, 4294901760
    %v2278 = vsub.f32 %v2276, %v2277
    %v2279 = vand.u32 %v2278, 4294901760
    %2280 = vmatprep.subr.mxu0 %v2279
    %v2281 = vand.u32 %v476, 4294901760
    %v2282 = vsub.f32 %v476, %v2281
    %v2283 = vand.u32 %v2282, 4294901760
    %v2284 = vsub.f32 %v2282, %v2283
    %v2285 = vand.u32 %v2284, 4294901760
    %2286 = vmatpush1.msra.mxu0 %v2285
    %v2287 = vand.u32 %v482, 4294901760
    %v2288 = vsub.f32 %v482, %v2287
    %v2289 = vand.u32 %v2288, 4294901760
    %v2290 = vsub.f32 %v2288, %v2289
    %v2291 = vand.u32 %v2290, 4294901760
    %2292 = vmatprep.subr.mxu0 %v2291
    %v2293 = vand.u32 %v481, 4294901760
    %v2294 = vsub.f32 %v481, %v2293
    %v2295 = vand.u32 %v2294, 4294901760
    %v2296 = vsub.f32 %v2294, %v2295
    %v2297 = vand.u32 %v2296, 4294901760
    %2298 = vmatpush1.msra.mxu0 %v2297
    %v2299 = vand.u32 %v487, 4294901760
    %v2300 = vsub.f32 %v487, %v2299
    %v2301 = vand.u32 %v2300, 4294901760
    %v2302 = vsub.f32 %v2300, %v2301
    %v2303 = vand.u32 %v2302, 4294901760
    %2304 = vmatprep.subr.mxu0 %v2303
    %v2305 = vand.u32 %v486, 4294901760
    %v2306 = vsub.f32 %v486, %v2305
    %v2307 = vand.u32 %v2306, 4294901760
    %v2308 = vsub.f32 %v2306, %v2307
    %v2309 = vand.u32 %v2308, 4294901760
    %2310 = vmatpush1.msra.mxu0 %v2309
    %v2311 = vand.u32 %v492, 4294901760
    %v2312 = vsub.f32 %v492, %v2311
    %v2313 = vand.u32 %v2312, 4294901760
    %v2314 = vsub.f32 %v2312, %v2313
    %v2315 = vand.u32 %v2314, 4294901760
    %2316 = vmatprep.subr.mxu0 %v2315
    %v2317 = vand.u32 %v491, 4294901760
    %v2318 = vsub.f32 %v491, %v2317
    %v2319 = vand.u32 %v2318, 4294901760
    %v2320 = vsub.f32 %v2318, %v2319
    %v2321 = vand.u32 %v2320, 4294901760
    %2322 = vmatpush1.msra.mxu0 %v2321
    %v2323 = vand.u32 %v497, 4294901760
    %v2324 = vsub.f32 %v497, %v2323
    %v2325 = vand.u32 %v2324, 4294901760
    %v2326 = vsub.f32 %v2324, %v2325
    %v2327 = vand.u32 %v2326, 4294901760
    %2328 = vmatprep.subr.mxu0 %v2327
    %v2329 = vand.u32 %v496, 4294901760
    %v2330 = vsub.f32 %v496, %v2329
    %v2331 = vand.u32 %v2330, 4294901760
    %v2332 = vsub.f32 %v2330, %v2331
    %v2333 = vand.u32 %v2332, 4294901760
    %2334 = vmatpush1.msra.mxu0 %v2333
    %v2335 = vand.u32 %v502, 4294901760
    %v2336 = vsub.f32 %v502, %v2335
    %v2337 = vand.u32 %v2336, 4294901760
    %v2338 = vsub.f32 %v2336, %v2337
    %v2339 = vand.u32 %v2338, 4294901760
    %2340 = vmatprep.subr.mxu0 %v2339
    %v2341 = vand.u32 %v501, 4294901760
    %v2342 = vsub.f32 %v501, %v2341
    %v2343 = vand.u32 %v2342, 4294901760
    %v2344 = vsub.f32 %v2342, %v2343
    %v2345 = vand.u32 %v2344, 4294901760
    %2346 = vmatpush1.msra.mxu0 %v2345
    %v2347 = vand.u32 %v507, 4294901760
    %v2348 = vsub.f32 %v507, %v2347
    %v2349 = vand.u32 %v2348, 4294901760
    %v2350 = vsub.f32 %v2348, %v2349
    %v2351 = vand.u32 %v2350, 4294901760
    %2352 = vmatprep.subr.mxu0 %v2351
    %v2353 = vand.u32 %v506, 4294901760
    %v2354 = vsub.f32 %v506, %v2353
    %v2355 = vand.u32 %v2354, 4294901760
    %v2356 = vsub.f32 %v2354, %v2355
    %v2357 = vand.u32 %v2356, 4294901760
    %2358 = vmatpush1.msra.mxu0 %v2357
    %v2359 = vand.u32 %v512, 4294901760
    %v2360 = vsub.f32 %v512, %v2359
    %v2361 = vand.u32 %v2360, 4294901760
    %v2362 = vsub.f32 %v2360, %v2361
    %v2363 = vand.u32 %v2362, 4294901760
    %2364 = vmatprep.subr.mxu0 %v2363
    %v2365 = vand.u32 %v511, 4294901760
    %v2366 = vsub.f32 %v511, %v2365
    %v2367 = vand.u32 %v2366, 4294901760
    %v2368 = vsub.f32 %v2366, %v2367
    %v2369 = vand.u32 %v2368, 4294901760
    %2370 = vmatpush1.msra.mxu0 %v2369
    %v2371 = vand.u32 %v517, 4294901760
    %v2372 = vsub.f32 %v517, %v2371
    %v2373 = vand.u32 %v2372, 4294901760
    %v2374 = vsub.f32 %v2372, %v2373
    %v2375 = vand.u32 %v2374, 4294901760
    %2376 = vmatprep.subr.mxu0 %v2375
    %v2377 = vand.u32 %v516, 4294901760
    %v2378 = vsub.f32 %v516, %v2377
    %v2379 = vand.u32 %v2378, 4294901760
    %v2380 = vsub.f32 %v2378, %v2379
    %v2381 = vand.u32 %v2380, 4294901760
    %2382 = vmatpush1.msra.mxu0 %v2381
    %v2383 = vand.u32 %v565, 4294901760
    %2384 = vmatprep.mubr.f32.mxu0 %v2383
    %v2385 = vand.u32 %v563, 4294901760
    %2386 = vmatmul.mubr.f32.gmra.mrb[0].mxu0 %v2385
    %v2387 = vpop.f32.mrb[0].mxu0
    %v2388 = vadd.f32 %v1995, %v2387
    %v2389 = vpop.f32.mrb[0].mxu0
    %v2390 = vadd.f32 %v1997, %v2389
    %2391 = vdwg.mxu0
    %v2392 = vand.u32 %v362, 4294901760
    %v2393 = vsub.f32 %v362, %v2392
    %2394 = vmatprep.subr.mxu0 %v2393
    %v2395 = vand.u32 %v361, 4294901760
    %v2396 = vsub.f32 %v361, %v2395
    %2397 = vmatpush1.msra.mxu0 %v2396
    %v2398 = vand.u32 %v367, 4294901760
    %v2399 = vsub.f32 %v367, %v2398
    %2400 = vmatprep.subr.mxu0 %v2399
    %v2401 = vand.u32 %v366, 4294901760
    %v2402 = vsub.f32 %v366, %v2401
    %2403 = vmatpush1.msra.mxu0 %v2402
    %v2404 = vand.u32 %v372, 4294901760
    %v2405 = vsub.f32 %v372, %v2404
    %2406 = vmatprep.subr.mxu0 %v2405
    %v2407 = vand.u32 %v371, 4294901760
    %v2408 = vsub.f32 %v371, %v2407
    %2409 = vmatpush1.msra.mxu0 %v2408
    %v2410 = vand.u32 %v377, 4294901760
    %v2411 = vsub.f32 %v377, %v2410
    %2412 = vmatprep.subr.mxu0 %v2411
    %v2413 = vand.u32 %v376, 4294901760
    %v2414 = vsub.f32 %v376, %v2413
    %2415 = vmatpush1.msra.mxu0 %v2414
    %v2416 = vand.u32 %v382, 4294901760
    %v2417 = vsub.f32 %v382, %v2416
    %2418 = vmatprep.subr.mxu0 %v2417
    %v2419 = vand.u32 %v381, 4294901760
    %v2420 = vsub.f32 %v381, %v2419
    %2421 = vmatpush1.msra.mxu0 %v2420
    %v2422 = vand.u32 %v387, 4294901760
    %v2423 = vsub.f32 %v387, %v2422
    %2424 = vmatprep.subr.mxu0 %v2423
    %v2425 = vand.u32 %v386, 4294901760
    %v2426 = vsub.f32 %v386, %v2425
    %2427 = vmatpush1.msra.mxu0 %v2426
    %v2428 = vand.u32 %v392, 4294901760
    %v2429 = vsub.f32 %v392, %v2428
    %2430 = vmatprep.subr.mxu0 %v2429
    %v2431 = vand.u32 %v391, 4294901760
    %v2432 = vsub.f32 %v391, %v2431
    %2433 = vmatpush1.msra.mxu0 %v2432
    %v2434 = vand.u32 %v397, 4294901760
    %v2435 = vsub.f32 %v397, %v2434
    %2436 = vmatprep.subr.mxu0 %v2435
    %v2437 = vand.u32 %v396, 4294901760
    %v2438 = vsub.f32 %v396, %v2437
    %2439 = vmatpush1.msra.mxu0 %v2438
    %v2440 = vand.u32 %v402, 4294901760
    %v2441 = vsub.f32 %v402, %v2440
    %2442 = vmatprep.subr.mxu0 %v2441
    %v2443 = vand.u32 %v401, 4294901760
    %v2444 = vsub.f32 %v401, %v2443
    %2445 = vmatpush1.msra.mxu0 %v2444
    %v2446 = vand.u32 %v407, 4294901760
    %v2447 = vsub.f32 %v407, %v2446
    %2448 = vmatprep.subr.mxu0 %v2447
    %v2449 = vand.u32 %v406, 4294901760
    %v2450 = vsub.f32 %v406, %v2449
    %2451 = vmatpush1.msra.mxu0 %v2450
    %v2452 = vand.u32 %v412, 4294901760
    %v2453 = vsub.f32 %v412, %v2452
    %2454 = vmatprep.subr.mxu0 %v2453
    %v2455 = vand.u32 %v411, 4294901760
    %v2456 = vsub.f32 %v411, %v2455
    %2457 = vmatpush1.msra.mxu0 %v2456
    %v2458 = vand.u32 %v417, 4294901760
    %v2459 = vsub.f32 %v417, %v2458
    %2460 = vmatprep.subr.mxu0 %v2459
    %v2461 = vand.u32 %v416, 4294901760
    %v2462 = vsub.f32 %v416, %v2461
    %2463 = vmatpush1.msra.mxu0 %v2462
    %v2464 = vand.u32 %v422, 4294901760
    %v2465 = vsub.f32 %v422, %v2464
    %2466 = vmatprep.subr.mxu0 %v2465
    %v2467 = vand.u32 %v421, 4294901760
    %v2468 = vsub.f32 %v421, %v2467
    %2469 = vmatpush1.msra.mxu0 %v2468
    %v2470 = vand.u32 %v427, 4294901760
    %v2471 = vsub.f32 %v427, %v2470
    %2472 = vmatprep.subr.mxu0 %v2471
    %v2473 = vand.u32 %v426, 4294901760
    %v2474 = vsub.f32 %v426, %v2473
    %2475 = vmatpush1.msra.mxu0 %v2474
    %v2476 = vand.u32 %v432, 4294901760
    %v2477 = vsub.f32 %v432, %v2476
    %2478 = vmatprep.subr.mxu0 %v2477
    %v2479 = vand.u32 %v431, 4294901760
    %v2480 = vsub.f32 %v431, %v2479
    %2481 = vmatpush1.msra.mxu0 %v2480
    %v2482 = vand.u32 %v437, 4294901760
    %v2483 = vsub.f32 %v437, %v2482
    %2484 = vmatprep.subr.mxu0 %v2483
    %v2485 = vand.u32 %v436, 4294901760
    %v2486 = vsub.f32 %v436, %v2485
    %2487 = vmatpush1.msra.mxu0 %v2486
    %v2488 = vand.u32 %v442, 4294901760
    %v2489 = vsub.f32 %v442, %v2488
    %2490 = vmatprep.subr.mxu0 %v2489
    %v2491 = vand.u32 %v441, 4294901760
    %v2492 = vsub.f32 %v441, %v2491
    %2493 = vmatpush1.msra.mxu0 %v2492
    %v2494 = vand.u32 %v447, 4294901760
    %v2495 = vsub.f32 %v447, %v2494
    %2496 = vmatprep.subr.mxu0 %v2495
    %v2497 = vand.u32 %v446, 4294901760
    %v2498 = vsub.f32 %v446, %v2497
    %2499 = vmatpush1.msra.mxu0 %v2498
    %v2500 = vand.u32 %v452, 4294901760
    %v2501 = vsub.f32 %v452, %v2500
    %2502 = vmatprep.subr.mxu0 %v2501
    %v2503 = vand.u32 %v451, 4294901760
    %v2504 = vsub.f32 %v451, %v2503
    %2505 = vmatpush1.msra.mxu0 %v2504
    %v2506 = vand.u32 %v457, 4294901760
    %v2507 = vsub.f32 %v457, %v2506
    %2508 = vmatprep.subr.mxu0 %v2507
    %v2509 = vand.u32 %v456, 4294901760
    %v2510 = vsub.f32 %v456, %v2509
    %2511 = vmatpush1.msra.mxu0 %v2510
    %v2512 = vand.u32 %v462, 4294901760
    %v2513 = vsub.f32 %v462, %v2512
    %2514 = vmatprep.subr.mxu0 %v2513
    %v2515 = vand.u32 %v461, 4294901760
    %v2516 = vsub.f32 %v461, %v2515
    %2517 = vmatpush1.msra.mxu0 %v2516
    %v2518 = vand.u32 %v467, 4294901760
    %v2519 = vsub.f32 %v467, %v2518
    %2520 = vmatprep.subr.mxu0 %v2519
    %v2521 = vand.u32 %v466, 4294901760
    %v2522 = vsub.f32 %v466, %v2521
    %2523 = vmatpush1.msra.mxu0 %v2522
    %v2524 = vand.u32 %v472, 4294901760
    %v2525 = vsub.f32 %v472, %v2524
    %2526 = vmatprep.subr.mxu0 %v2525
    %v2527 = vand.u32 %v471, 4294901760
    %v2528 = vsub.f32 %v471, %v2527
    %2529 = vmatpush1.msra.mxu0 %v2528
    %v2530 = vand.u32 %v477, 4294901760
    %v2531 = vsub.f32 %v477, %v2530
    %2532 = vmatprep.subr.mxu0 %v2531
    %v2533 = vand.u32 %v476, 4294901760
    %v2534 = vsub.f32 %v476, %v2533
    %2535 = vmatpush1.msra.mxu0 %v2534
    %v2536 = vand.u32 %v482, 4294901760
    %v2537 = vsub.f32 %v482, %v2536
    %2538 = vmatprep.subr.mxu0 %v2537
    %v2539 = vand.u32 %v481, 4294901760
    %v2540 = vsub.f32 %v481, %v2539
    %2541 = vmatpush1.msra.mxu0 %v2540
    %v2542 = vand.u32 %v487, 4294901760
    %v2543 = vsub.f32 %v487, %v2542
    %2544 = vmatprep.subr.mxu0 %v2543
    %v2545 = vand.u32 %v486, 4294901760
    %v2546 = vsub.f32 %v486, %v2545
    %2547 = vmatpush1.msra.mxu0 %v2546
    %v2548 = vand.u32 %v492, 4294901760
    %v2549 = vsub.f32 %v492, %v2548
    %2550 = vmatprep.subr.mxu0 %v2549
    %v2551 = vand.u32 %v491, 4294901760
    %v2552 = vsub.f32 %v491, %v2551
    %2553 = vmatpush1.msra.mxu0 %v2552
    %v2554 = vand.u32 %v497, 4294901760
    %v2555 = vsub.f32 %v497, %v2554
    %2556 = vmatprep.subr.mxu0 %v2555
    %v2557 = vand.u32 %v496, 4294901760
    %v2558 = vsub.f32 %v496, %v2557
    %2559 = vmatpush1.msra.mxu0 %v2558
    %v2560 = vand.u32 %v502, 4294901760
    %v2561 = vsub.f32 %v502, %v2560
    %2562 = vmatprep.subr.mxu0 %v2561
    %v2563 = vand.u32 %v501, 4294901760
    %v2564 = vsub.f32 %v501, %v2563
    %2565 = vmatpush1.msra.mxu0 %v2564
    %v2566 = vand.u32 %v507, 4294901760
    %v2567 = vsub.f32 %v507, %v2566
    %2568 = vmatprep.subr.mxu0 %v2567
    %v2569 = vand.u32 %v506, 4294901760
    %v2570 = vsub.f32 %v506, %v2569
    %2571 = vmatpush1.msra.mxu0 %v2570
    %v2572 = vand.u32 %v512, 4294901760
    %v2573 = vsub.f32 %v512, %v2572
    %2574 = vmatprep.subr.mxu0 %v2573
    %v2575 = vand.u32 %v511, 4294901760
    %v2576 = vsub.f32 %v511, %v2575
    %2577 = vmatpush1.msra.mxu0 %v2576
    %v2578 = vand.u32 %v517, 4294901760
    %v2579 = vsub.f32 %v517, %v2578
    %2580 = vmatprep.subr.mxu0 %v2579
    %v2581 = vand.u32 %v516, 4294901760
    %v2582 = vsub.f32 %v516, %v2581
    %2583 = vmatpush1.msra.mxu0 %v2582
    %v2584 = vand.u32 %v565, 4294901760
    %v2585 = vsub.f32 %v565, %v2584
    %2586 = vmatprep.mubr.f32.mxu0 %v2585
    %v2587 = vand.u32 %v563, 4294901760
    %v2588 = vsub.f32 %v563, %v2587
    %2589 = vmatmul.mubr.f32.gmra.mrb[0].mxu0 %v2588
    %v2590 = vpop.f32.mrb[0].mxu0
    %v2591 = vadd.f32 %v2388, %v2590
    %v2592 = vpop.f32.mrb[0].mxu0
    %v2593 = vadd.f32 %v2390, %v2592
    %2594 = vdwg.mxu0
    %v2595 = vand.u32 %v362, 4294901760
    %2596 = vmatprep.subr.mxu0 %v2595
    %v2597 = vand.u32 %v361, 4294901760
    %2598 = vmatpush1.msra.mxu0 %v2597
    %v2599 = vand.u32 %v367, 4294901760
    %2600 = vmatprep.subr.mxu0 %v2599
    %v2601 = vand.u32 %v366, 4294901760
    %2602 = vmatpush1.msra.mxu0 %v2601
    %v2603 = vand.u32 %v372, 4294901760
    %2604 = vmatprep.subr.mxu0 %v2603
    %v2605 = vand.u32 %v371, 4294901760
    %2606 = vmatpush1.msra.mxu0 %v2605
    %v2607 = vand.u32 %v377, 4294901760
    %2608 = vmatprep.subr.mxu0 %v2607
    %v2609 = vand.u32 %v376, 4294901760
    %2610 = vmatpush1.msra.mxu0 %v2609
    %v2611 = vand.u32 %v382, 4294901760
    %2612 = vmatprep.subr.mxu0 %v2611
    %v2613 = vand.u32 %v381, 4294901760
    %2614 = vmatpush1.msra.mxu0 %v2613
    %v2615 = vand.u32 %v387, 4294901760
    %2616 = vmatprep.subr.mxu0 %v2615
    %v2617 = vand.u32 %v386, 4294901760
    %2618 = vmatpush1.msra.mxu0 %v2617
    %v2619 = vand.u32 %v392, 4294901760
    %2620 = vmatprep.subr.mxu0 %v2619
    %v2621 = vand.u32 %v391, 4294901760
    %2622 = vmatpush1.msra.mxu0 %v2621
    %v2623 = vand.u32 %v397, 4294901760
    %2624 = vmatprep.subr.mxu0 %v2623
    %v2625 = vand.u32 %v396, 4294901760
    %2626 = vmatpush1.msra.mxu0 %v2625
    %v2627 = vand.u32 %v402, 4294901760
    %2628 = vmatprep.subr.mxu0 %v2627
    %v2629 = vand.u32 %v401, 4294901760
    %2630 = vmatpush1.msra.mxu0 %v2629
    %v2631 = vand.u32 %v407, 4294901760
    %2632 = vmatprep.subr.mxu0 %v2631
    %v2633 = vand.u32 %v406, 4294901760
    %2634 = vmatpush1.msra.mxu0 %v2633
    %v2635 = vand.u32 %v412, 4294901760
    %2636 = vmatprep.subr.mxu0 %v2635
    %v2637 = vand.u32 %v411, 4294901760
    %2638 = vmatpush1.msra.mxu0 %v2637
    %v2639 = vand.u32 %v417, 4294901760
    %2640 = vmatprep.subr.mxu0 %v2639
    %v2641 = vand.u32 %v416, 4294901760
    %2642 = vmatpush1.msra.mxu0 %v2641
    %v2643 = vand.u32 %v422, 4294901760
    %2644 = vmatprep.subr.mxu0 %v2643
    %v2645 = vand.u32 %v421, 4294901760
    %2646 = vmatpush1.msra.mxu0 %v2645
    %v2647 = vand.u32 %v427, 4294901760
    %2648 = vmatprep.subr.mxu0 %v2647
    %v2649 = vand.u32 %v426, 4294901760
    %2650 = vmatpush1.msra.mxu0 %v2649
    %v2651 = vand.u32 %v432, 4294901760
    %2652 = vmatprep.subr.mxu0 %v2651
    %v2653 = vand.u32 %v431, 4294901760
    %2654 = vmatpush1.msra.mxu0 %v2653
    %v2655 = vand.u32 %v437, 4294901760
    %2656 = vmatprep.subr.mxu0 %v2655
    %v2657 = vand.u32 %v436, 4294901760
    %2658 = vmatpush1.msra.mxu0 %v2657
    %v2659 = vand.u32 %v442, 4294901760
    %2660 = vmatprep.subr.mxu0 %v2659
    %v2661 = vand.u32 %v441, 4294901760
    %2662 = vmatpush1.msra.mxu0 %v2661
    %v2663 = vand.u32 %v447, 4294901760
    %2664 = vmatprep.subr.mxu0 %v2663
    %v2665 = vand.u32 %v446, 4294901760
    %2666 = vmatpush1.msra.mxu0 %v2665
    %v2667 = vand.u32 %v452, 4294901760
    %2668 = vmatprep.subr.mxu0 %v2667
    %v2669 = vand.u32 %v451, 4294901760
    %2670 = vmatpush1.msra.mxu0 %v2669
    %v2671 = vand.u32 %v457, 4294901760
    %2672 = vmatprep.subr.mxu0 %v2671
    %v2673 = vand.u32 %v456, 4294901760
    %2674 = vmatpush1.msra.mxu0 %v2673
    %v2675 = vand.u32 %v462, 4294901760
    %2676 = vmatprep.subr.mxu0 %v2675
    %v2677 = vand.u32 %v461, 4294901760
    %2678 = vmatpush1.msra.mxu0 %v2677
    %v2679 = vand.u32 %v467, 4294901760
    %2680 = vmatprep.subr.mxu0 %v2679
    %v2681 = vand.u32 %v466, 4294901760
    %2682 = vmatpush1.msra.mxu0 %v2681
    %v2683 = vand.u32 %v472, 4294901760
    %2684 = vmatprep.subr.mxu0 %v2683
    %v2685 = vand.u32 %v471, 4294901760
    %2686 = vmatpush1.msra.mxu0 %v2685
    %v2687 = vand.u32 %v477, 4294901760
    %2688 = vmatprep.subr.mxu0 %v2687
    %v2689 = vand.u32 %v476, 4294901760
    %2690 = vmatpush1.msra.mxu0 %v2689
    %v2691 = vand.u32 %v482, 4294901760
    %2692 = vmatprep.subr.mxu0 %v2691
    %v2693 = vand.u32 %v481, 4294901760
    %2694 = vmatpush1.msra.mxu0 %v2693
    %v2695 = vand.u32 %v487, 4294901760
    %2696 = vmatprep.subr.mxu0 %v2695
    %v2697 = vand.u32 %v486, 4294901760
    %2698 = vmatpush1.msra.mxu0 %v2697
    %v2699 = vand.u32 %v492, 4294901760
    %2700 = vmatprep.subr.mxu0 %v2699
    %v2701 = vand.u32 %v491, 4294901760
    %2702 = vmatpush1.msra.mxu0 %v2701
    %v2703 = vand.u32 %v497, 4294901760
    %2704 = vmatprep.subr.mxu0 %v2703
    %v2705 = vand.u32 %v496, 4294901760
    %2706 = vmatpush1.msra.mxu0 %v2705
    %v2707 = vand.u32 %v502, 4294901760
    %2708 = vmatprep.subr.mxu0 %v2707
    %v2709 = vand.u32 %v501, 4294901760
    %2710 = vmatpush1.msra.mxu0 %v2709
    %v2711 = vand.u32 %v507, 4294901760
    %2712 = vmatprep.subr.mxu0 %v2711
    %v2713 = vand.u32 %v506, 4294901760
    %2714 = vmatpush1.msra.mxu0 %v2713
    %v2715 = vand.u32 %v512, 4294901760
    %2716 = vmatprep.subr.mxu0 %v2715
    %v2717 = vand.u32 %v511, 4294901760
    %2718 = vmatpush1.msra.mxu0 %v2717
    %v2719 = vand.u32 %v517, 4294901760
    %2720 = vmatprep.subr.mxu0 %v2719
    %v2721 = vand.u32 %v516, 4294901760
    %2722 = vmatpush1.msra.mxu0 %v2721
    %v2723 = vand.u32 %v565, 4294901760
    %v2724 = vsub.f32 %v565, %v2723
    %v2725 = vand.u32 %v2724, 4294901760
    %2726 = vmatprep.mubr.f32.mxu0 %v2725
    %v2727 = vand.u32 %v563, 4294901760
    %v2728 = vsub.f32 %v563, %v2727
    %v2729 = vand.u32 %v2728, 4294901760
    %2730 = vmatmul.mubr.f32.gmra.mrb[0].mxu0 %v2729
    %v2731 = vpop.f32.mrb[0].mxu0
    %v2732 = vadd.f32 %v2591, %v2731
    %v2733 = vpop.f32.mrb[0].mxu0
    %v2734 = vadd.f32 %v2593, %v2733
    %2735 = vdwg.mxu0
    %v2736 = vand.u32 %v362, 4294901760
    %v2737 = vsub.f32 %v362, %v2736
    %v2738 = vand.u32 %v2737, 4294901760
    %2739 = vmatprep.subr.mxu0 %v2738
    %v2740 = vand.u32 %v361, 4294901760
    %v2741 = vsub.f32 %v361, %v2740
    %v2742 = vand.u32 %v2741, 4294901760
    %2743 = vmatpush1.msra.mxu0 %v2742
    %v2744 = vand.u32 %v367, 4294901760
    %v2745 = vsub.f32 %v367, %v2744
    %v2746 = vand.u32 %v2745, 4294901760
    %2747 = vmatprep.subr.mxu0 %v2746
    %v2748 = vand.u32 %v366, 4294901760
    %v2749 = vsub.f32 %v366, %v2748
    %v2750 = vand.u32 %v2749, 4294901760
    %2751 = vmatpush1.msra.mxu0 %v2750
    %v2752 = vand.u32 %v372, 4294901760
    %v2753 = vsub.f32 %v372, %v2752
    %v2754 = vand.u32 %v2753, 4294901760
    %2755 = vmatprep.subr.mxu0 %v2754
    %v2756 = vand.u32 %v371, 4294901760
    %v2757 = vsub.f32 %v371, %v2756
    %v2758 = vand.u32 %v2757, 4294901760
    %2759 = vmatpush1.msra.mxu0 %v2758
    %v2760 = vand.u32 %v377, 4294901760
    %v2761 = vsub.f32 %v377, %v2760
    %v2762 = vand.u32 %v2761, 4294901760
    %2763 = vmatprep.subr.mxu0 %v2762
    %v2764 = vand.u32 %v376, 4294901760
    %v2765 = vsub.f32 %v376, %v2764
    %v2766 = vand.u32 %v2765, 4294901760
    %2767 = vmatpush1.msra.mxu0 %v2766
    %v2768 = vand.u32 %v382, 4294901760
    %v2769 = vsub.f32 %v382, %v2768
    %v2770 = vand.u32 %v2769, 4294901760
    %2771 = vmatprep.subr.mxu0 %v2770
    %v2772 = vand.u32 %v381, 4294901760
    %v2773 = vsub.f32 %v381, %v2772
    %v2774 = vand.u32 %v2773, 4294901760
    %2775 = vmatpush1.msra.mxu0 %v2774
    %v2776 = vand.u32 %v387, 4294901760
    %v2777 = vsub.f32 %v387, %v2776
    %v2778 = vand.u32 %v2777, 4294901760
    %2779 = vmatprep.subr.mxu0 %v2778
    %v2780 = vand.u32 %v386, 4294901760
    %v2781 = vsub.f32 %v386, %v2780
    %v2782 = vand.u32 %v2781, 4294901760
    %2783 = vmatpush1.msra.mxu0 %v2782
    %v2784 = vand.u32 %v392, 4294901760
    %v2785 = vsub.f32 %v392, %v2784
    %v2786 = vand.u32 %v2785, 4294901760
    %2787 = vmatprep.subr.mxu0 %v2786
    %v2788 = vand.u32 %v391, 4294901760
    %v2789 = vsub.f32 %v391, %v2788
    %v2790 = vand.u32 %v2789, 4294901760
    %2791 = vmatpush1.msra.mxu0 %v2790
    %v2792 = vand.u32 %v397, 4294901760
    %v2793 = vsub.f32 %v397, %v2792
    %v2794 = vand.u32 %v2793, 4294901760
    %2795 = vmatprep.subr.mxu0 %v2794
    %v2796 = vand.u32 %v396, 4294901760
    %v2797 = vsub.f32 %v396, %v2796
    %v2798 = vand.u32 %v2797, 4294901760
    %2799 = vmatpush1.msra.mxu0 %v2798
    %v2800 = vand.u32 %v402, 4294901760
    %v2801 = vsub.f32 %v402, %v2800
    %v2802 = vand.u32 %v2801, 4294901760
    %2803 = vmatprep.subr.mxu0 %v2802
    %v2804 = vand.u32 %v401, 4294901760
    %v2805 = vsub.f32 %v401, %v2804
    %v2806 = vand.u32 %v2805, 4294901760
    %2807 = vmatpush1.msra.mxu0 %v2806
    %v2808 = vand.u32 %v407, 4294901760
    %v2809 = vsub.f32 %v407, %v2808
    %v2810 = vand.u32 %v2809, 4294901760
    %2811 = vmatprep.subr.mxu0 %v2810
    %v2812 = vand.u32 %v406, 4294901760
    %v2813 = vsub.f32 %v406, %v2812
    %v2814 = vand.u32 %v2813, 4294901760
    %2815 = vmatpush1.msra.mxu0 %v2814
    %v2816 = vand.u32 %v412, 4294901760
    %v2817 = vsub.f32 %v412, %v2816
    %v2818 = vand.u32 %v2817, 4294901760
    %2819 = vmatprep.subr.mxu0 %v2818
    %v2820 = vand.u32 %v411, 4294901760
    %v2821 = vsub.f32 %v411, %v2820
    %v2822 = vand.u32 %v2821, 4294901760
    %2823 = vmatpush1.msra.mxu0 %v2822
    %v2824 = vand.u32 %v417, 4294901760
    %v2825 = vsub.f32 %v417, %v2824
    %v2826 = vand.u32 %v2825, 4294901760
    %2827 = vmatprep.subr.mxu0 %v2826
    %v2828 = vand.u32 %v416, 4294901760
    %v2829 = vsub.f32 %v416, %v2828
    %v2830 = vand.u32 %v2829, 4294901760
    %2831 = vmatpush1.msra.mxu0 %v2830
    %v2832 = vand.u32 %v422, 4294901760
    %v2833 = vsub.f32 %v422, %v2832
    %v2834 = vand.u32 %v2833, 4294901760
    %2835 = vmatprep.subr.mxu0 %v2834
    %v2836 = vand.u32 %v421, 4294901760
    %v2837 = vsub.f32 %v421, %v2836
    %v2838 = vand.u32 %v2837, 4294901760
    %2839 = vmatpush1.msra.mxu0 %v2838
    %v2840 = vand.u32 %v427, 4294901760
    %v2841 = vsub.f32 %v427, %v2840
    %v2842 = vand.u32 %v2841, 4294901760
    %2843 = vmatprep.subr.mxu0 %v2842
    %v2844 = vand.u32 %v426, 4294901760
    %v2845 = vsub.f32 %v426, %v2844
    %v2846 = vand.u32 %v2845, 4294901760
    %2847 = vmatpush1.msra.mxu0 %v2846
    %v2848 = vand.u32 %v432, 4294901760
    %v2849 = vsub.f32 %v432, %v2848
    %v2850 = vand.u32 %v2849, 4294901760
    %2851 = vmatprep.subr.mxu0 %v2850
    %v2852 = vand.u32 %v431, 4294901760
    %v2853 = vsub.f32 %v431, %v2852
    %v2854 = vand.u32 %v2853, 4294901760
    %2855 = vmatpush1.msra.mxu0 %v2854
    %v2856 = vand.u32 %v437, 4294901760
    %v2857 = vsub.f32 %v437, %v2856
    %v2858 = vand.u32 %v2857, 4294901760
    %2859 = vmatprep.subr.mxu0 %v2858
    %v2860 = vand.u32 %v436, 4294901760
    %v2861 = vsub.f32 %v436, %v2860
    %v2862 = vand.u32 %v2861, 4294901760
    %2863 = vmatpush1.msra.mxu0 %v2862
    %v2864 = vand.u32 %v442, 4294901760
    %v2865 = vsub.f32 %v442, %v2864
    %v2866 = vand.u32 %v2865, 4294901760
    %2867 = vmatprep.subr.mxu0 %v2866
    %v2868 = vand.u32 %v441, 4294901760
    %v2869 = vsub.f32 %v441, %v2868
    %v2870 = vand.u32 %v2869, 4294901760
    %2871 = vmatpush1.msra.mxu0 %v2870
    %v2872 = vand.u32 %v447, 4294901760
    %v2873 = vsub.f32 %v447, %v2872
    %v2874 = vand.u32 %v2873, 4294901760
    %2875 = vmatprep.subr.mxu0 %v2874
    %v2876 = vand.u32 %v446, 4294901760
    %v2877 = vsub.f32 %v446, %v2876
    %v2878 = vand.u32 %v2877, 4294901760
    %2879 = vmatpush1.msra.mxu0 %v2878
    %v2880 = vand.u32 %v452, 4294901760
    %v2881 = vsub.f32 %v452, %v2880
    %v2882 = vand.u32 %v2881, 4294901760
    %2883 = vmatprep.subr.mxu0 %v2882
    %v2884 = vand.u32 %v451, 4294901760
    %v2885 = vsub.f32 %v451, %v2884
    %v2886 = vand.u32 %v2885, 4294901760
    %2887 = vmatpush1.msra.mxu0 %v2886
    %v2888 = vand.u32 %v457, 4294901760
    %v2889 = vsub.f32 %v457, %v2888
    %v2890 = vand.u32 %v2889, 4294901760
    %2891 = vmatprep.subr.mxu0 %v2890
    %v2892 = vand.u32 %v456, 4294901760
    %v2893 = vsub.f32 %v456, %v2892
    %v2894 = vand.u32 %v2893, 4294901760
    %2895 = vmatpush1.msra.mxu0 %v2894
    %v2896 = vand.u32 %v462, 4294901760
    %v2897 = vsub.f32 %v462, %v2896
    %v2898 = vand.u32 %v2897, 4294901760
    %2899 = vmatprep.subr.mxu0 %v2898
    %v2900 = vand.u32 %v461, 4294901760
    %v2901 = vsub.f32 %v461, %v2900
    %v2902 = vand.u32 %v2901, 4294901760
    %2903 = vmatpush1.msra.mxu0 %v2902
    %v2904 = vand.u32 %v467, 4294901760
    %v2905 = vsub.f32 %v467, %v2904
    %v2906 = vand.u32 %v2905, 4294901760
    %2907 = vmatprep.subr.mxu0 %v2906
    %v2908 = vand.u32 %v466, 4294901760
    %v2909 = vsub.f32 %v466, %v2908
    %v2910 = vand.u32 %v2909, 4294901760
    %2911 = vmatpush1.msra.mxu0 %v2910
    %v2912 = vand.u32 %v472, 4294901760
    %v2913 = vsub.f32 %v472, %v2912
    %v2914 = vand.u32 %v2913, 4294901760
    %2915 = vmatprep.subr.mxu0 %v2914
    %v2916 = vand.u32 %v471, 4294901760
    %v2917 = vsub.f32 %v471, %v2916
    %v2918 = vand.u32 %v2917, 4294901760
    %2919 = vmatpush1.msra.mxu0 %v2918
    %v2920 = vand.u32 %v477, 4294901760
    %v2921 = vsub.f32 %v477, %v2920
    %v2922 = vand.u32 %v2921, 4294901760
    %2923 = vmatprep.subr.mxu0 %v2922
    %v2924 = vand.u32 %v476, 4294901760
    %v2925 = vsub.f32 %v476, %v2924
    %v2926 = vand.u32 %v2925, 4294901760
    %2927 = vmatpush1.msra.mxu0 %v2926
    %v2928 = vand.u32 %v482, 4294901760
    %v2929 = vsub.f32 %v482, %v2928
    %v2930 = vand.u32 %v2929, 4294901760
    %2931 = vmatprep.subr.mxu0 %v2930
    %v2932 = vand.u32 %v481, 4294901760
    %v2933 = vsub.f32 %v481, %v2932
    %v2934 = vand.u32 %v2933, 4294901760
    %2935 = vmatpush1.msra.mxu0 %v2934
    %v2936 = vand.u32 %v487, 4294901760
    %v2937 = vsub.f32 %v487, %v2936
    %v2938 = vand.u32 %v2937, 4294901760
    %2939 = vmatprep.subr.mxu0 %v2938
    %v2940 = vand.u32 %v486, 4294901760
    %v2941 = vsub.f32 %v486, %v2940
    %v2942 = vand.u32 %v2941, 4294901760
    %2943 = vmatpush1.msra.mxu0 %v2942
    %v2944 = vand.u32 %v492, 4294901760
    %v2945 = vsub.f32 %v492, %v2944
    %v2946 = vand.u32 %v2945, 4294901760
    %2947 = vmatprep.subr.mxu0 %v2946
    %v2948 = vand.u32 %v491, 4294901760
    %v2949 = vsub.f32 %v491, %v2948
    %v2950 = vand.u32 %v2949, 4294901760
    %2951 = vmatpush1.msra.mxu0 %v2950
    %v2952 = vand.u32 %v497, 4294901760
    %v2953 = vsub.f32 %v497, %v2952
    %v2954 = vand.u32 %v2953, 4294901760
    %2955 = vmatprep.subr.mxu0 %v2954
    %v2956 = vand.u32 %v496, 4294901760
    %v2957 = vsub.f32 %v496, %v2956
    %v2958 = vand.u32 %v2957, 4294901760
    %2959 = vmatpush1.msra.mxu0 %v2958
    %v2960 = vand.u32 %v502, 4294901760
    %v2961 = vsub.f32 %v502, %v2960
    %v2962 = vand.u32 %v2961, 4294901760
    %2963 = vmatprep.subr.mxu0 %v2962
    %v2964 = vand.u32 %v501, 4294901760
    %v2965 = vsub.f32 %v501, %v2964
    %v2966 = vand.u32 %v2965, 4294901760
    %2967 = vmatpush1.msra.mxu0 %v2966
    %v2968 = vand.u32 %v507, 4294901760
    %v2969 = vsub.f32 %v507, %v2968
    %v2970 = vand.u32 %v2969, 4294901760
    %2971 = vmatprep.subr.mxu0 %v2970
    %v2972 = vand.u32 %v506, 4294901760
    %v2973 = vsub.f32 %v506, %v2972
    %v2974 = vand.u32 %v2973, 4294901760
    %2975 = vmatpush1.msra.mxu0 %v2974
    %v2976 = vand.u32 %v512, 4294901760
    %v2977 = vsub.f32 %v512, %v2976
    %v2978 = vand.u32 %v2977, 4294901760
    %2979 = vmatprep.subr.mxu0 %v2978
    %v2980 = vand.u32 %v511, 4294901760
    %v2981 = vsub.f32 %v511, %v2980
    %v2982 = vand.u32 %v2981, 4294901760
    %2983 = vmatpush1.msra.mxu0 %v2982
    %v2984 = vand.u32 %v517, 4294901760
    %v2985 = vsub.f32 %v517, %v2984
    %v2986 = vand.u32 %v2985, 4294901760
    %2987 = vmatprep.subr.mxu0 %v2986
    %v2988 = vand.u32 %v516, 4294901760
    %v2989 = vsub.f32 %v516, %v2988
    %v2990 = vand.u32 %v2989, 4294901760
    %2991 = vmatpush1.msra.mxu0 %v2990
    %v2992 = vand.u32 %v565, 4294901760
    %2993 = vmatprep.mubr.f32.mxu0 %v2992
    %v2994 = vand.u32 %v563, 4294901760
    %2995 = vmatmul.mubr.f32.gmra.mrb[0].mxu0 %v2994
    %v2996 = vpop.f32.mrb[0].mxu0
    %v2997 = vadd.f32 %v2732, %v2996
    %v2998 = vpop.f32.mrb[0].mxu0
    %v2999 = vadd.f32 %v2734, %v2998
    %3000 = vdwg.mxu0
    %v3001 = vand.u32 %v362, 4294901760
    %3002 = vmatprep.subr.mxu0 %v3001
    %v3003 = vand.u32 %v361, 4294901760
    %3004 = vmatpush1.msra.mxu0 %v3003
    %v3005 = vand.u32 %v367, 4294901760
    %3006 = vmatprep.subr.mxu0 %v3005
    %v3007 = vand.u32 %v366, 4294901760
    %3008 = vmatpush1.msra.mxu0 %v3007
    %v3009 = vand.u32 %v372, 4294901760
    %3010 = vmatprep.subr.mxu0 %v3009
    %v3011 = vand.u32 %v371, 4294901760
    %3012 = vmatpush1.msra.mxu0 %v3011
    %v3013 = vand.u32 %v377, 4294901760
    %3014 = vmatprep.subr.mxu0 %v3013
    %v3015 = vand.u32 %v376, 4294901760
    %3016 = vmatpush1.msra.mxu0 %v3015
    %v3017 = vand.u32 %v382, 4294901760
    %3018 = vmatprep.subr.mxu0 %v3017
    %v3019 = vand.u32 %v381, 4294901760
    %3020 = vmatpush1.msra.mxu0 %v3019
    %v3021 = vand.u32 %v387, 4294901760
    %3022 = vmatprep.subr.mxu0 %v3021
    %v3023 = vand.u32 %v386, 4294901760
    %3024 = vmatpush1.msra.mxu0 %v3023
    %v3025 = vand.u32 %v392, 4294901760
    %3026 = vmatprep.subr.mxu0 %v3025
    %v3027 = vand.u32 %v391, 4294901760
    %3028 = vmatpush1.msra.mxu0 %v3027
    %v3029 = vand.u32 %v397, 4294901760
    %3030 = vmatprep.subr.mxu0 %v3029
    %v3031 = vand.u32 %v396, 4294901760
    %3032 = vmatpush1.msra.mxu0 %v3031
    %v3033 = vand.u32 %v402, 4294901760
    %3034 = vmatprep.subr.mxu0 %v3033
    %v3035 = vand.u32 %v401, 4294901760
    %3036 = vmatpush1.msra.mxu0 %v3035
    %v3037 = vand.u32 %v407, 4294901760
    %3038 = vmatprep.subr.mxu0 %v3037
    %v3039 = vand.u32 %v406, 4294901760
    %3040 = vmatpush1.msra.mxu0 %v3039
    %v3041 = vand.u32 %v412, 4294901760
    %3042 = vmatprep.subr.mxu0 %v3041
    %v3043 = vand.u32 %v411, 4294901760
    %3044 = vmatpush1.msra.mxu0 %v3043
    %v3045 = vand.u32 %v417, 4294901760
    %3046 = vmatprep.subr.mxu0 %v3045
    %v3047 = vand.u32 %v416, 4294901760
    %3048 = vmatpush1.msra.mxu0 %v3047
    %v3049 = vand.u32 %v422, 4294901760
    %3050 = vmatprep.subr.mxu0 %v3049
    %v3051 = vand.u32 %v421, 4294901760
    %3052 = vmatpush1.msra.mxu0 %v3051
    %v3053 = vand.u32 %v427, 4294901760
    %3054 = vmatprep.subr.mxu0 %v3053
    %v3055 = vand.u32 %v426, 4294901760
    %3056 = vmatpush1.msra.mxu0 %v3055
    %v3057 = vand.u32 %v432, 4294901760
    %3058 = vmatprep.subr.mxu0 %v3057
    %v3059 = vand.u32 %v431, 4294901760
    %3060 = vmatpush1.msra.mxu0 %v3059
    %v3061 = vand.u32 %v437, 4294901760
    %3062 = vmatprep.subr.mxu0 %v3061
    %v3063 = vand.u32 %v436, 4294901760
    %3064 = vmatpush1.msra.mxu0 %v3063
    %v3065 = vand.u32 %v442, 4294901760
    %3066 = vmatprep.subr.mxu0 %v3065
    %v3067 = vand.u32 %v441, 4294901760
    %3068 = vmatpush1.msra.mxu0 %v3067
    %v3069 = vand.u32 %v447, 4294901760
    %3070 = vmatprep.subr.mxu0 %v3069
    %v3071 = vand.u32 %v446, 4294901760
    %3072 = vmatpush1.msra.mxu0 %v3071
    %v3073 = vand.u32 %v452, 4294901760
    %3074 = vmatprep.subr.mxu0 %v3073
    %v3075 = vand.u32 %v451, 4294901760
    %3076 = vmatpush1.msra.mxu0 %v3075
    %v3077 = vand.u32 %v457, 4294901760
    %3078 = vmatprep.subr.mxu0 %v3077
    %v3079 = vand.u32 %v456, 4294901760
    %3080 = vmatpush1.msra.mxu0 %v3079
    %v3081 = vand.u32 %v462, 4294901760
    %3082 = vmatprep.subr.mxu0 %v3081
    %v3083 = vand.u32 %v461, 4294901760
    %3084 = vmatpush1.msra.mxu0 %v3083
    %v3085 = vand.u32 %v467, 4294901760
    %3086 = vmatprep.subr.mxu0 %v3085
    %v3087 = vand.u32 %v466, 4294901760
    %3088 = vmatpush1.msra.mxu0 %v3087
    %v3089 = vand.u32 %v472, 4294901760
    %3090 = vmatprep.subr.mxu0 %v3089
    %v3091 = vand.u32 %v471, 4294901760
    %3092 = vmatpush1.msra.mxu0 %v3091
    %v3093 = vand.u32 %v477, 4294901760
    %3094 = vmatprep.subr.mxu0 %v3093
    %v3095 = vand.u32 %v476, 4294901760
    %3096 = vmatpush1.msra.mxu0 %v3095
    %v3097 = vand.u32 %v482, 4294901760
    %3098 = vmatprep.subr.mxu0 %v3097
    %v3099 = vand.u32 %v481, 4294901760
    %3100 = vmatpush1.msra.mxu0 %v3099
    %v3101 = vand.u32 %v487, 4294901760
    %3102 = vmatprep.subr.mxu0 %v3101
    %v3103 = vand.u32 %v486, 4294901760
    %3104 = vmatpush1.msra.mxu0 %v3103
    %v3105 = vand.u32 %v492, 4294901760
    %3106 = vmatprep.subr.mxu0 %v3105
    %v3107 = vand.u32 %v491, 4294901760
    %3108 = vmatpush1.msra.mxu0 %v3107
    %v3109 = vand.u32 %v497, 4294901760
    %3110 = vmatprep.subr.mxu0 %v3109
    %v3111 = vand.u32 %v496, 4294901760
    %3112 = vmatpush1.msra.mxu0 %v3111
    %v3113 = vand.u32 %v502, 4294901760
    %3114 = vmatprep.subr.mxu0 %v3113
    %v3115 = vand.u32 %v501, 4294901760
    %3116 = vmatpush1.msra.mxu0 %v3115
    %v3117 = vand.u32 %v507, 4294901760
    %3118 = vmatprep.subr.mxu0 %v3117
    %v3119 = vand.u32 %v506, 4294901760
    %3120 = vmatpush1.msra.mxu0 %v3119
    %v3121 = vand.u32 %v512, 4294901760
    %3122 = vmatprep.subr.mxu0 %v3121
    %v3123 = vand.u32 %v511, 4294901760
    %3124 = vmatpush1.msra.mxu0 %v3123
    %v3125 = vand.u32 %v517, 4294901760
    %3126 = vmatprep.subr.mxu0 %v3125
    %v3127 = vand.u32 %v516, 4294901760
    %3128 = vmatpush1.msra.mxu0 %v3127
    %v3129 = vand.u32 %v565, 4294901760
    %3130 = vmatprep.mubr.f32.mxu0 %v3129
    %v3131 = vand.u32 %v563, 4294901760
    %3132 = vmatmul.mubr.f32.gmra.mrb[0].mxu0 %v3131
    %v3133 = vpop.f32.mrb[0].mxu0
    %v3134 = vadd.f32 %v2997, %v3133
    %v3135 = vpop.f32.mrb[0].mxu0
    %v3136 = vadd.f32 %v2999, %v3135
    %3137 = vdwg.mxu0
    %v3138 = vand.u32 %v204, 4294901760
    %3139 = vmatprep.subr.mxu0 %v3138
    %v3140 = vand.u32 %v203, 4294901760
    %3141 = vmatpush1.msra.mxu0 %v3140
    %v3142 = vand.u32 %v209, 4294901760
    %3143 = vmatprep.subr.mxu0 %v3142
    %v3144 = vand.u32 %v208, 4294901760
    %3145 = vmatpush1.msra.mxu0 %v3144
    %v3146 = vand.u32 %v214, 4294901760
    %3147 = vmatprep.subr.mxu0 %v3146
    %v3148 = vand.u32 %v213, 4294901760
    %3149 = vmatpush1.msra.mxu0 %v3148
    %v3150 = vand.u32 %v219, 4294901760
    %3151 = vmatprep.subr.mxu0 %v3150
    %v3152 = vand.u32 %v218, 4294901760
    %3153 = vmatpush1.msra.mxu0 %v3152
    %v3154 = vand.u32 %v224, 4294901760
    %3155 = vmatprep.subr.mxu0 %v3154
    %v3156 = vand.u32 %v223, 4294901760
    %3157 = vmatpush1.msra.mxu0 %v3156
    %v3158 = vand.u32 %v229, 4294901760
    %3159 = vmatprep.subr.mxu0 %v3158
    %v3160 = vand.u32 %v228, 4294901760
    %3161 = vmatpush1.msra.mxu0 %v3160
    %v3162 = vand.u32 %v234, 4294901760
    %3163 = vmatprep.subr.mxu0 %v3162
    %v3164 = vand.u32 %v233, 4294901760
    %3165 = vmatpush1.msra.mxu0 %v3164
    %v3166 = vand.u32 %v239, 4294901760
    %3167 = vmatprep.subr.mxu0 %v3166
    %v3168 = vand.u32 %v238, 4294901760
    %3169 = vmatpush1.msra.mxu0 %v3168
    %v3170 = vand.u32 %v244, 4294901760
    %3171 = vmatprep.subr.mxu0 %v3170
    %v3172 = vand.u32 %v243, 4294901760
    %3173 = vmatpush1.msra.mxu0 %v3172
    %v3174 = vand.u32 %v249, 4294901760
    %3175 = vmatprep.subr.mxu0 %v3174
    %v3176 = vand.u32 %v248, 4294901760
    %3177 = vmatpush1.msra.mxu0 %v3176
    %v3178 = vand.u32 %v254, 4294901760
    %3179 = vmatprep.subr.mxu0 %v3178
    %v3180 = vand.u32 %v253, 4294901760
    %3181 = vmatpush1.msra.mxu0 %v3180
    %v3182 = vand.u32 %v259, 4294901760
    %3183 = vmatprep.subr.mxu0 %v3182
    %v3184 = vand.u32 %v258, 4294901760
    %3185 = vmatpush1.msra.mxu0 %v3184
    %v3186 = vand.u32 %v264, 4294901760
    %3187 = vmatprep.subr.mxu0 %v3186
    %v3188 = vand.u32 %v263, 4294901760
    %3189 = vmatpush1.msra.mxu0 %v3188
    %v3190 = vand.u32 %v269, 4294901760
    %3191 = vmatprep.subr.mxu0 %v3190
    %v3192 = vand.u32 %v268, 4294901760
    %3193 = vmatpush1.msra.mxu0 %v3192
    %v3194 = vand.u32 %v274, 4294901760
    %3195 = vmatprep.subr.mxu0 %v3194
    %v3196 = vand.u32 %v273, 4294901760
    %3197 = vmatpush1.msra.mxu0 %v3196
    %v3198 = vand.u32 %v279, 4294901760
    %3199 = vmatprep.subr.mxu0 %v3198
    %v3200 = vand.u32 %v278, 4294901760
    %3201 = vmatpush1.msra.mxu0 %v3200
    %v3202 = vand.u32 %v284, 4294901760
    %3203 = vmatprep.subr.mxu0 %v3202
    %v3204 = vand.u32 %v283, 4294901760
    %3205 = vmatpush1.msra.mxu0 %v3204
    %v3206 = vand.u32 %v289, 4294901760
    %3207 = vmatprep.subr.mxu0 %v3206
    %v3208 = vand.u32 %v288, 4294901760
    %3209 = vmatpush1.msra.mxu0 %v3208
    %v3210 = vand.u32 %v294, 4294901760
    %3211 = vmatprep.subr.mxu0 %v3210
    %v3212 = vand.u32 %v293, 4294901760
    %3213 = vmatpush1.msra.mxu0 %v3212
    %v3214 = vand.u32 %v299, 4294901760
    %3215 = vmatprep.subr.mxu0 %v3214
    %v3216 = vand.u32 %v298, 4294901760
    %3217 = vmatpush1.msra.mxu0 %v3216
    %v3218 = vand.u32 %v304, 4294901760
    %3219 = vmatprep.subr.mxu0 %v3218
    %v3220 = vand.u32 %v303, 4294901760
    %3221 = vmatpush1.msra.mxu0 %v3220
    %v3222 = vand.u32 %v309, 4294901760
    %3223 = vmatprep.subr.mxu0 %v3222
    %v3224 = vand.u32 %v308, 4294901760
    %3225 = vmatpush1.msra.mxu0 %v3224
    %v3226 = vand.u32 %v314, 4294901760
    %3227 = vmatprep.subr.mxu0 %v3226
    %v3228 = vand.u32 %v313, 4294901760
    %3229 = vmatpush1.msra.mxu0 %v3228
    %v3230 = vand.u32 %v319, 4294901760
    %3231 = vmatprep.subr.mxu0 %v3230
    %v3232 = vand.u32 %v318, 4294901760
    %3233 = vmatpush1.msra.mxu0 %v3232
    %v3234 = vand.u32 %v324, 4294901760
    %3235 = vmatprep.subr.mxu0 %v3234
    %v3236 = vand.u32 %v323, 4294901760
    %3237 = vmatpush1.msra.mxu0 %v3236
    %v3238 = vand.u32 %v329, 4294901760
    %3239 = vmatprep.subr.mxu0 %v3238
    %v3240 = vand.u32 %v328, 4294901760
    %3241 = vmatpush1.msra.mxu0 %v3240
    %v3242 = vand.u32 %v334, 4294901760
    %3243 = vmatprep.subr.mxu0 %v3242
    %v3244 = vand.u32 %v333, 4294901760
    %3245 = vmatpush1.msra.mxu0 %v3244
    %v3246 = vand.u32 %v339, 4294901760
    %3247 = vmatprep.subr.mxu0 %v3246
    %v3248 = vand.u32 %v338, 4294901760
    %3249 = vmatpush1.msra.mxu0 %v3248
    %v3250 = vand.u32 %v344, 4294901760
    %3251 = vmatprep.subr.mxu0 %v3250
    %v3252 = vand.u32 %v343, 4294901760
    %3253 = vmatpush1.msra.mxu0 %v3252
    %v3254 = vand.u32 %v349, 4294901760
    %3255 = vmatprep.subr.mxu0 %v3254
    %v3256 = vand.u32 %v348, 4294901760
    %3257 = vmatpush1.msra.mxu0 %v3256
    %v3258 = vand.u32 %v354, 4294901760
    %3259 = vmatprep.subr.mxu0 %v3258
    %v3260 = vand.u32 %v353, 4294901760
    %3261 = vmatpush1.msra.mxu0 %v3260
    %v3262 = vand.u32 %v359, 4294901760
    %3263 = vmatprep.subr.mxu0 %v3262
    %v3264 = vand.u32 %v358, 4294901760
    %3265 = vmatpush1.msra.mxu0 %v3264
    %v3266 = vand.u32 %v564, 4294901760
    %v3267 = vsub.f32 %v564, %v3266
    %v3268 = vand.u32 %v3267, 4294901760
    %v3269 = vsub.f32 %v3267, %v3268
    %v3270 = vand.u32 %v3269, 4294901760
    %3271 = vmatprep.mubr.f32.mxu0 %v3270
    %v3272 = vand.u32 %v556, 4294901760
    %v3273 = vsub.f32 %v556, %v3272
    %v3274 = vand.u32 %v3273, 4294901760
    %v3275 = vsub.f32 %v3273, %v3274
    %v3276 = vand.u32 %v3275, 4294901760
    %3277 = vmatmul.mubr.f32.gmra.mrb[0].mxu0 %v3276
    %v3278 = vpop.f32.mrb[0].mxu0
    %v3279 = vadd.f32 %v534, %v3278
    %v3280 = vpop.f32.mrb[0].mxu0
    %v3281 = vadd.f32 %v538, %v3280
    %3282 = vdwg.mxu0
    %v3283 = vand.u32 %v204, 4294901760
    %v3284 = vsub.f32 %v204, %v3283
    %v3285 = vand.u32 %v3284, 4294901760
    %v3286 = vsub.f32 %v3284, %v3285
    %v3287 = vand.u32 %v3286, 4294901760
    %3288 = vmatprep.subr.mxu0 %v3287
    %v3289 = vand.u32 %v203, 4294901760
    %v3290 = vsub.f32 %v203, %v3289
    %v3291 = vand.u32 %v3290, 4294901760
    %v3292 = vsub.f32 %v3290, %v3291
    %v3293 = vand.u32 %v3292, 4294901760
    %3294 = vmatpush1.msra.mxu0 %v3293
    %v3295 = vand.u32 %v209, 4294901760
    %v3296 = vsub.f32 %v209, %v3295
    %v3297 = vand.u32 %v3296, 4294901760
    %v3298 = vsub.f32 %v3296, %v3297
    %v3299 = vand.u32 %v3298, 4294901760
    %3300 = vmatprep.subr.mxu0 %v3299
    %v3301 = vand.u32 %v208, 4294901760
    %v3302 = vsub.f32 %v208, %v3301
    %v3303 = vand.u32 %v3302, 4294901760
    %v3304 = vsub.f32 %v3302, %v3303
    %v3305 = vand.u32 %v3304, 4294901760
    %3306 = vmatpush1.msra.mxu0 %v3305
    %v3307 = vand.u32 %v214, 4294901760
    %v3308 = vsub.f32 %v214, %v3307
    %v3309 = vand.u32 %v3308, 4294901760
    %v3310 = vsub.f32 %v3308, %v3309
    %v3311 = vand.u32 %v3310, 4294901760
    %3312 = vmatprep.subr.mxu0 %v3311
    %v3313 = vand.u32 %v213, 4294901760
    %v3314 = vsub.f32 %v213, %v3313
    %v3315 = vand.u32 %v3314, 4294901760
    %v3316 = vsub.f32 %v3314, %v3315
    %v3317 = vand.u32 %v3316, 4294901760
    %3318 = vmatpush1.msra.mxu0 %v3317
    %v3319 = vand.u32 %v219, 4294901760
    %v3320 = vsub.f32 %v219, %v3319
    %v3321 = vand.u32 %v3320, 4294901760
    %v3322 = vsub.f32 %v3320, %v3321
    %v3323 = vand.u32 %v3322, 4294901760
    %3324 = vmatprep.subr.mxu0 %v3323
    %v3325 = vand.u32 %v218, 4294901760
    %v3326 = vsub.f32 %v218, %v3325
    %v3327 = vand.u32 %v3326, 4294901760
    %v3328 = vsub.f32 %v3326, %v3327
    %v3329 = vand.u32 %v3328, 4294901760
    %3330 = vmatpush1.msra.mxu0 %v3329
    %v3331 = vand.u32 %v224, 4294901760
    %v3332 = vsub.f32 %v224, %v3331
    %v3333 = vand.u32 %v3332, 4294901760
    %v3334 = vsub.f32 %v3332, %v3333
    %v3335 = vand.u32 %v3334, 4294901760
    %3336 = vmatprep.subr.mxu0 %v3335
    %v3337 = vand.u32 %v223, 4294901760
    %v3338 = vsub.f32 %v223, %v3337
    %v3339 = vand.u32 %v3338, 4294901760
    %v3340 = vsub.f32 %v3338, %v3339
    %v3341 = vand.u32 %v3340, 4294901760
    %3342 = vmatpush1.msra.mxu0 %v3341
    %v3343 = vand.u32 %v229, 4294901760
    %v3344 = vsub.f32 %v229, %v3343
    %v3345 = vand.u32 %v3344, 4294901760
    %v3346 = vsub.f32 %v3344, %v3345
    %v3347 = vand.u32 %v3346, 4294901760
    %3348 = vmatprep.subr.mxu0 %v3347
    %v3349 = vand.u32 %v228, 4294901760
    %v3350 = vsub.f32 %v228, %v3349
    %v3351 = vand.u32 %v3350, 4294901760
    %v3352 = vsub.f32 %v3350, %v3351
    %v3353 = vand.u32 %v3352, 4294901760
    %3354 = vmatpush1.msra.mxu0 %v3353
    %v3355 = vand.u32 %v234, 4294901760
    %v3356 = vsub.f32 %v234, %v3355
    %v3357 = vand.u32 %v3356, 4294901760
    %v3358 = vsub.f32 %v3356, %v3357
    %v3359 = vand.u32 %v3358, 4294901760
    %3360 = vmatprep.subr.mxu0 %v3359
    %v3361 = vand.u32 %v233, 4294901760
    %v3362 = vsub.f32 %v233, %v3361
    %v3363 = vand.u32 %v3362, 4294901760
    %v3364 = vsub.f32 %v3362, %v3363
    %v3365 = vand.u32 %v3364, 4294901760
    %3366 = vmatpush1.msra.mxu0 %v3365
    %v3367 = vand.u32 %v239, 4294901760
    %v3368 = vsub.f32 %v239, %v3367
    %v3369 = vand.u32 %v3368, 4294901760
    %v3370 = vsub.f32 %v3368, %v3369
    %v3371 = vand.u32 %v3370, 4294901760
    %3372 = vmatprep.subr.mxu0 %v3371
    %v3373 = vand.u32 %v238, 4294901760
    %v3374 = vsub.f32 %v238, %v3373
    %v3375 = vand.u32 %v3374, 4294901760
    %v3376 = vsub.f32 %v3374, %v3375
    %v3377 = vand.u32 %v3376, 4294901760
    %3378 = vmatpush1.msra.mxu0 %v3377
    %v3379 = vand.u32 %v244, 4294901760
    %v3380 = vsub.f32 %v244, %v3379
    %v3381 = vand.u32 %v3380, 4294901760
    %v3382 = vsub.f32 %v3380, %v3381
    %v3383 = vand.u32 %v3382, 4294901760
    %3384 = vmatprep.subr.mxu0 %v3383
    %v3385 = vand.u32 %v243, 4294901760
    %v3386 = vsub.f32 %v243, %v3385
    %v3387 = vand.u32 %v3386, 4294901760
    %v3388 = vsub.f32 %v3386, %v3387
    %v3389 = vand.u32 %v3388, 4294901760
    %3390 = vmatpush1.msra.mxu0 %v3389
    %v3391 = vand.u32 %v249, 4294901760
    %v3392 = vsub.f32 %v249, %v3391
    %v3393 = vand.u32 %v3392, 4294901760
    %v3394 = vsub.f32 %v3392, %v3393
    %v3395 = vand.u32 %v3394, 4294901760
    %3396 = vmatprep.subr.mxu0 %v3395
    %v3397 = vand.u32 %v248, 4294901760
    %v3398 = vsub.f32 %v248, %v3397
    %v3399 = vand.u32 %v3398, 4294901760
    %v3400 = vsub.f32 %v3398, %v3399
    %v3401 = vand.u32 %v3400, 4294901760
    %3402 = vmatpush1.msra.mxu0 %v3401
    %v3403 = vand.u32 %v254, 4294901760
    %v3404 = vsub.f32 %v254, %v3403
    %v3405 = vand.u32 %v3404, 4294901760
    %v3406 = vsub.f32 %v3404, %v3405
    %v3407 = vand.u32 %v3406, 4294901760
    %3408 = vmatprep.subr.mxu0 %v3407
    %v3409 = vand.u32 %v253, 4294901760
    %v3410 = vsub.f32 %v253, %v3409
    %v3411 = vand.u32 %v3410, 4294901760
    %v3412 = vsub.f32 %v3410, %v3411
    %v3413 = vand.u32 %v3412, 4294901760
    %3414 = vmatpush1.msra.mxu0 %v3413
    %v3415 = vand.u32 %v259, 4294901760
    %v3416 = vsub.f32 %v259, %v3415
    %v3417 = vand.u32 %v3416, 4294901760
    %v3418 = vsub.f32 %v3416, %v3417
    %v3419 = vand.u32 %v3418, 4294901760
    %3420 = vmatprep.subr.mxu0 %v3419
    %v3421 = vand.u32 %v258, 4294901760
    %v3422 = vsub.f32 %v258, %v3421
    %v3423 = vand.u32 %v3422, 4294901760
    %v3424 = vsub.f32 %v3422, %v3423
    %v3425 = vand.u32 %v3424, 4294901760
    %3426 = vmatpush1.msra.mxu0 %v3425
    %v3427 = vand.u32 %v264, 4294901760
    %v3428 = vsub.f32 %v264, %v3427
    %v3429 = vand.u32 %v3428, 4294901760
    %v3430 = vsub.f32 %v3428, %v3429
    %v3431 = vand.u32 %v3430, 4294901760
    %3432 = vmatprep.subr.mxu0 %v3431
    %v3433 = vand.u32 %v263, 4294901760
    %v3434 = vsub.f32 %v263, %v3433
    %v3435 = vand.u32 %v3434, 4294901760
    %v3436 = vsub.f32 %v3434, %v3435
    %v3437 = vand.u32 %v3436, 4294901760
    %3438 = vmatpush1.msra.mxu0 %v3437
    %v3439 = vand.u32 %v269, 4294901760
    %v3440 = vsub.f32 %v269, %v3439
    %v3441 = vand.u32 %v3440, 4294901760
    %v3442 = vsub.f32 %v3440, %v3441
    %v3443 = vand.u32 %v3442, 4294901760
    %3444 = vmatprep.subr.mxu0 %v3443
    %v3445 = vand.u32 %v268, 4294901760
    %v3446 = vsub.f32 %v268, %v3445
    %v3447 = vand.u32 %v3446, 4294901760
    %v3448 = vsub.f32 %v3446, %v3447
    %v3449 = vand.u32 %v3448, 4294901760
    %3450 = vmatpush1.msra.mxu0 %v3449
    %v3451 = vand.u32 %v274, 4294901760
    %v3452 = vsub.f32 %v274, %v3451
    %v3453 = vand.u32 %v3452, 4294901760
    %v3454 = vsub.f32 %v3452, %v3453
    %v3455 = vand.u32 %v3454, 4294901760
    %3456 = vmatprep.subr.mxu0 %v3455
    %v3457 = vand.u32 %v273, 4294901760
    %v3458 = vsub.f32 %v273, %v3457
    %v3459 = vand.u32 %v3458, 4294901760
    %v3460 = vsub.f32 %v3458, %v3459
    %v3461 = vand.u32 %v3460, 4294901760
    %3462 = vmatpush1.msra.mxu0 %v3461
    %v3463 = vand.u32 %v279, 4294901760
    %v3464 = vsub.f32 %v279, %v3463
    %v3465 = vand.u32 %v3464, 4294901760
    %v3466 = vsub.f32 %v3464, %v3465
    %v3467 = vand.u32 %v3466, 4294901760
    %3468 = vmatprep.subr.mxu0 %v3467
    %v3469 = vand.u32 %v278, 4294901760
    %v3470 = vsub.f32 %v278, %v3469
    %v3471 = vand.u32 %v3470, 4294901760
    %v3472 = vsub.f32 %v3470, %v3471
    %v3473 = vand.u32 %v3472, 4294901760
    %3474 = vmatpush1.msra.mxu0 %v3473
    %v3475 = vand.u32 %v284, 4294901760
    %v3476 = vsub.f32 %v284, %v3475
    %v3477 = vand.u32 %v3476, 4294901760
    %v3478 = vsub.f32 %v3476, %v3477
    %v3479 = vand.u32 %v3478, 4294901760
    %3480 = vmatprep.subr.mxu0 %v3479
    %v3481 = vand.u32 %v283, 4294901760
    %v3482 = vsub.f32 %v283, %v3481
    %v3483 = vand.u32 %v3482, 4294901760
    %v3484 = vsub.f32 %v3482, %v3483
    %v3485 = vand.u32 %v3484, 4294901760
    %3486 = vmatpush1.msra.mxu0 %v3485
    %v3487 = vand.u32 %v289, 4294901760
    %v3488 = vsub.f32 %v289, %v3487
    %v3489 = vand.u32 %v3488, 4294901760
    %v3490 = vsub.f32 %v3488, %v3489
    %v3491 = vand.u32 %v3490, 4294901760
    %3492 = vmatprep.subr.mxu0 %v3491
    %v3493 = vand.u32 %v288, 4294901760
    %v3494 = vsub.f32 %v288, %v3493
    %v3495 = vand.u32 %v3494, 4294901760
    %v3496 = vsub.f32 %v3494, %v3495
    %v3497 = vand.u32 %v3496, 4294901760
    %3498 = vmatpush1.msra.mxu0 %v3497
    %v3499 = vand.u32 %v294, 4294901760
    %v3500 = vsub.f32 %v294, %v3499
    %v3501 = vand.u32 %v3500, 4294901760
    %v3502 = vsub.f32 %v3500, %v3501
    %v3503 = vand.u32 %v3502, 4294901760
    %3504 = vmatprep.subr.mxu0 %v3503
    %v3505 = vand.u32 %v293, 4294901760
    %v3506 = vsub.f32 %v293, %v3505
    %v3507 = vand.u32 %v3506, 4294901760
    %v3508 = vsub.f32 %v3506, %v3507
    %v3509 = vand.u32 %v3508, 4294901760
    %3510 = vmatpush1.msra.mxu0 %v3509
    %v3511 = vand.u32 %v299, 4294901760
    %v3512 = vsub.f32 %v299, %v3511
    %v3513 = vand.u32 %v3512, 4294901760
    %v3514 = vsub.f32 %v3512, %v3513
    %v3515 = vand.u32 %v3514, 4294901760
    %3516 = vmatprep.subr.mxu0 %v3515
    %v3517 = vand.u32 %v298, 4294901760
    %v3518 = vsub.f32 %v298, %v3517
    %v3519 = vand.u32 %v3518, 4294901760
    %v3520 = vsub.f32 %v3518, %v3519
    %v3521 = vand.u32 %v3520, 4294901760
    %3522 = vmatpush1.msra.mxu0 %v3521
    %v3523 = vand.u32 %v304, 4294901760
    %v3524 = vsub.f32 %v304, %v3523
    %v3525 = vand.u32 %v3524, 4294901760
    %v3526 = vsub.f32 %v3524, %v3525
    %v3527 = vand.u32 %v3526, 4294901760
    %3528 = vmatprep.subr.mxu0 %v3527
    %v3529 = vand.u32 %v303, 4294901760
    %v3530 = vsub.f32 %v303, %v3529
    %v3531 = vand.u32 %v3530, 4294901760
    %v3532 = vsub.f32 %v3530, %v3531
    %v3533 = vand.u32 %v3532, 4294901760
    %3534 = vmatpush1.msra.mxu0 %v3533
    %v3535 = vand.u32 %v309, 4294901760
    %v3536 = vsub.f32 %v309, %v3535
    %v3537 = vand.u32 %v3536, 4294901760
    %v3538 = vsub.f32 %v3536, %v3537
    %v3539 = vand.u32 %v3538, 4294901760
    %3540 = vmatprep.subr.mxu0 %v3539
    %v3541 = vand.u32 %v308, 4294901760
    %v3542 = vsub.f32 %v308, %v3541
    %v3543 = vand.u32 %v3542, 4294901760
    %v3544 = vsub.f32 %v3542, %v3543
    %v3545 = vand.u32 %v3544, 4294901760
    %3546 = vmatpush1.msra.mxu0 %v3545
    %v3547 = vand.u32 %v314, 4294901760
    %v3548 = vsub.f32 %v314, %v3547
    %v3549 = vand.u32 %v3548, 4294901760
    %v3550 = vsub.f32 %v3548, %v3549
    %v3551 = vand.u32 %v3550, 4294901760
    %3552 = vmatprep.subr.mxu0 %v3551
    %v3553 = vand.u32 %v313, 4294901760
    %v3554 = vsub.f32 %v313, %v3553
    %v3555 = vand.u32 %v3554, 4294901760
    %v3556 = vsub.f32 %v3554, %v3555
    %v3557 = vand.u32 %v3556, 4294901760
    %3558 = vmatpush1.msra.mxu0 %v3557
    %v3559 = vand.u32 %v319, 4294901760
    %v3560 = vsub.f32 %v319, %v3559
    %v3561 = vand.u32 %v3560, 4294901760
    %v3562 = vsub.f32 %v3560, %v3561
    %v3563 = vand.u32 %v3562, 4294901760
    %3564 = vmatprep.subr.mxu0 %v3563
    %v3565 = vand.u32 %v318, 4294901760
    %v3566 = vsub.f32 %v318, %v3565
    %v3567 = vand.u32 %v3566, 4294901760
    %v3568 = vsub.f32 %v3566, %v3567
    %v3569 = vand.u32 %v3568, 4294901760
    %3570 = vmatpush1.msra.mxu0 %v3569
    %v3571 = vand.u32 %v324, 4294901760
    %v3572 = vsub.f32 %v324, %v3571
    %v3573 = vand.u32 %v3572, 4294901760
    %v3574 = vsub.f32 %v3572, %v3573
    %v3575 = vand.u32 %v3574, 4294901760
    %3576 = vmatprep.subr.mxu0 %v3575
    %v3577 = vand.u32 %v323, 4294901760
    %v3578 = vsub.f32 %v323, %v3577
    %v3579 = vand.u32 %v3578, 4294901760
    %v3580 = vsub.f32 %v3578, %v3579
    %v3581 = vand.u32 %v3580, 4294901760
    %3582 = vmatpush1.msra.mxu0 %v3581
    %v3583 = vand.u32 %v329, 4294901760
    %v3584 = vsub.f32 %v329, %v3583
    %v3585 = vand.u32 %v3584, 4294901760
    %v3586 = vsub.f32 %v3584, %v3585
    %v3587 = vand.u32 %v3586, 4294901760
    %3588 = vmatprep.subr.mxu0 %v3587
    %v3589 = vand.u32 %v328, 4294901760
    %v3590 = vsub.f32 %v328, %v3589
    %v3591 = vand.u32 %v3590, 4294901760
    %v3592 = vsub.f32 %v3590, %v3591
    %v3593 = vand.u32 %v3592, 4294901760
    %3594 = vmatpush1.msra.mxu0 %v3593
    %v3595 = vand.u32 %v334, 4294901760
    %v3596 = vsub.f32 %v334, %v3595
    %v3597 = vand.u32 %v3596, 4294901760
    %v3598 = vsub.f32 %v3596, %v3597
    %v3599 = vand.u32 %v3598, 4294901760
    %3600 = vmatprep.subr.mxu0 %v3599
    %v3601 = vand.u32 %v333, 4294901760
    %v3602 = vsub.f32 %v333, %v3601
    %v3603 = vand.u32 %v3602, 4294901760
    %v3604 = vsub.f32 %v3602, %v3603
    %v3605 = vand.u32 %v3604, 4294901760
    %3606 = vmatpush1.msra.mxu0 %v3605
    %v3607 = vand.u32 %v339, 4294901760
    %v3608 = vsub.f32 %v339, %v3607
    %v3609 = vand.u32 %v3608, 4294901760
    %v3610 = vsub.f32 %v3608, %v3609
    %v3611 = vand.u32 %v3610, 4294901760
    %3612 = vmatprep.subr.mxu0 %v3611
    %v3613 = vand.u32 %v338, 4294901760
    %v3614 = vsub.f32 %v338, %v3613
    %v3615 = vand.u32 %v3614, 4294901760
    %v3616 = vsub.f32 %v3614, %v3615
    %v3617 = vand.u32 %v3616, 4294901760
    %3618 = vmatpush1.msra.mxu0 %v3617
    %v3619 = vand.u32 %v344, 4294901760
    %v3620 = vsub.f32 %v344, %v3619
    %v3621 = vand.u32 %v3620, 4294901760
    %v3622 = vsub.f32 %v3620, %v3621
    %v3623 = vand.u32 %v3622, 4294901760
    %3624 = vmatprep.subr.mxu0 %v3623
    %v3625 = vand.u32 %v343, 4294901760
    %v3626 = vsub.f32 %v343, %v3625
    %v3627 = vand.u32 %v3626, 4294901760
    %v3628 = vsub.f32 %v3626, %v3627
    %v3629 = vand.u32 %v3628, 4294901760
    %3630 = vmatpush1.msra.mxu0 %v3629
    %v3631 = vand.u32 %v349, 4294901760
    %v3632 = vsub.f32 %v349, %v3631
    %v3633 = vand.u32 %v3632, 4294901760
    %v3634 = vsub.f32 %v3632, %v3633
    %v3635 = vand.u32 %v3634, 4294901760
    %3636 = vmatprep.subr.mxu0 %v3635
    %v3637 = vand.u32 %v348, 4294901760
    %v3638 = vsub.f32 %v348, %v3637
    %v3639 = vand.u32 %v3638, 4294901760
    %v3640 = vsub.f32 %v3638, %v3639
    %v3641 = vand.u32 %v3640, 4294901760
    %3642 = vmatpush1.msra.mxu0 %v3641
    %v3643 = vand.u32 %v354, 4294901760
    %v3644 = vsub.f32 %v354, %v3643
    %v3645 = vand.u32 %v3644, 4294901760
    %v3646 = vsub.f32 %v3644, %v3645
    %v3647 = vand.u32 %v3646, 4294901760
    %3648 = vmatprep.subr.mxu0 %v3647
    %v3649 = vand.u32 %v353, 4294901760
    %v3650 = vsub.f32 %v353, %v3649
    %v3651 = vand.u32 %v3650, 4294901760
    %v3652 = vsub.f32 %v3650, %v3651
    %v3653 = vand.u32 %v3652, 4294901760
    %3654 = vmatpush1.msra.mxu0 %v3653
    %v3655 = vand.u32 %v359, 4294901760
    %v3656 = vsub.f32 %v359, %v3655
    %v3657 = vand.u32 %v3656, 4294901760
    %v3658 = vsub.f32 %v3656, %v3657
    %v3659 = vand.u32 %v3658, 4294901760
    %3660 = vmatprep.subr.mxu0 %v3659
    %v3661 = vand.u32 %v358, 4294901760
    %v3662 = vsub.f32 %v358, %v3661
    %v3663 = vand.u32 %v3662, 4294901760
    %v3664 = vsub.f32 %v3662, %v3663
    %v3665 = vand.u32 %v3664, 4294901760
    %3666 = vmatpush1.msra.mxu0 %v3665
    %v3667 = vand.u32 %v564, 4294901760
    %3668 = vmatprep.mubr.f32.mxu0 %v3667
    %v3669 = vand.u32 %v556, 4294901760
    %3670 = vmatmul.mubr.f32.gmra.mrb[0].mxu0 %v3669
    %v3671 = vpop.f32.mrb[0].mxu0
    %v3672 = vadd.f32 %v3279, %v3671
    %v3673 = vpop.f32.mrb[0].mxu0
    %v3674 = vadd.f32 %v3281, %v3673
    %3675 = vdwg.mxu0
    %v3676 = vand.u32 %v204, 4294901760
    %v3677 = vsub.f32 %v204, %v3676
    %3678 = vmatprep.subr.mxu0 %v3677
    %v3679 = vand.u32 %v203, 4294901760
    %v3680 = vsub.f32 %v203, %v3679
    %3681 = vmatpush1.msra.mxu0 %v3680
    %v3682 = vand.u32 %v209, 4294901760
    %v3683 = vsub.f32 %v209, %v3682
    %3684 = vmatprep.subr.mxu0 %v3683
    %v3685 = vand.u32 %v208, 4294901760
    %v3686 = vsub.f32 %v208, %v3685
    %3687 = vmatpush1.msra.mxu0 %v3686
    %v3688 = vand.u32 %v214, 4294901760
    %v3689 = vsub.f32 %v214, %v3688
    %3690 = vmatprep.subr.mxu0 %v3689
    %v3691 = vand.u32 %v213, 4294901760
    %v3692 = vsub.f32 %v213, %v3691
    %3693 = vmatpush1.msra.mxu0 %v3692
    %v3694 = vand.u32 %v219, 4294901760
    %v3695 = vsub.f32 %v219, %v3694
    %3696 = vmatprep.subr.mxu0 %v3695
    %v3697 = vand.u32 %v218, 4294901760
    %v3698 = vsub.f32 %v218, %v3697
    %3699 = vmatpush1.msra.mxu0 %v3698
    %v3700 = vand.u32 %v224, 4294901760
    %v3701 = vsub.f32 %v224, %v3700
    %3702 = vmatprep.subr.mxu0 %v3701
    %v3703 = vand.u32 %v223, 4294901760
    %v3704 = vsub.f32 %v223, %v3703
    %3705 = vmatpush1.msra.mxu0 %v3704
    %v3706 = vand.u32 %v229, 4294901760
    %v3707 = vsub.f32 %v229, %v3706
    %3708 = vmatprep.subr.mxu0 %v3707
    %v3709 = vand.u32 %v228, 4294901760
    %v3710 = vsub.f32 %v228, %v3709
    %3711 = vmatpush1.msra.mxu0 %v3710
    %v3712 = vand.u32 %v234, 4294901760
    %v3713 = vsub.f32 %v234, %v3712
    %3714 = vmatprep.subr.mxu0 %v3713
    %v3715 = vand.u32 %v233, 4294901760
    %v3716 = vsub.f32 %v233, %v3715
    %3717 = vmatpush1.msra.mxu0 %v3716
    %v3718 = vand.u32 %v239, 4294901760
    %v3719 = vsub.f32 %v239, %v3718
    %3720 = vmatprep.subr.mxu0 %v3719
    %v3721 = vand.u32 %v238, 4294901760
    %v3722 = vsub.f32 %v238, %v3721
    %3723 = vmatpush1.msra.mxu0 %v3722
    %v3724 = vand.u32 %v244, 4294901760
    %v3725 = vsub.f32 %v244, %v3724
    %3726 = vmatprep.subr.mxu0 %v3725
    %v3727 = vand.u32 %v243, 4294901760
    %v3728 = vsub.f32 %v243, %v3727
    %3729 = vmatpush1.msra.mxu0 %v3728
    %v3730 = vand.u32 %v249, 4294901760
    %v3731 = vsub.f32 %v249, %v3730
    %3732 = vmatprep.subr.mxu0 %v3731
    %v3733 = vand.u32 %v248, 4294901760
    %v3734 = vsub.f32 %v248, %v3733
    %3735 = vmatpush1.msra.mxu0 %v3734
    %v3736 = vand.u32 %v254, 4294901760
    %v3737 = vsub.f32 %v254, %v3736
    %3738 = vmatprep.subr.mxu0 %v3737
    %v3739 = vand.u32 %v253, 4294901760
    %v3740 = vsub.f32 %v253, %v3739
    %3741 = vmatpush1.msra.mxu0 %v3740
    %v3742 = vand.u32 %v259, 4294901760
    %v3743 = vsub.f32 %v259, %v3742
    %3744 = vmatprep.subr.mxu0 %v3743
    %v3745 = vand.u32 %v258, 4294901760
    %v3746 = vsub.f32 %v258, %v3745
    %3747 = vmatpush1.msra.mxu0 %v3746
    %v3748 = vand.u32 %v264, 4294901760
    %v3749 = vsub.f32 %v264, %v3748
    %3750 = vmatprep.subr.mxu0 %v3749
    %v3751 = vand.u32 %v263, 4294901760
    %v3752 = vsub.f32 %v263, %v3751
    %3753 = vmatpush1.msra.mxu0 %v3752
    %v3754 = vand.u32 %v269, 4294901760
    %v3755 = vsub.f32 %v269, %v3754
    %3756 = vmatprep.subr.mxu0 %v3755
    %v3757 = vand.u32 %v268, 4294901760
    %v3758 = vsub.f32 %v268, %v3757
    %3759 = vmatpush1.msra.mxu0 %v3758
    %v3760 = vand.u32 %v274, 4294901760
    %v3761 = vsub.f32 %v274, %v3760
    %3762 = vmatprep.subr.mxu0 %v3761
    %v3763 = vand.u32 %v273, 4294901760
    %v3764 = vsub.f32 %v273, %v3763
    %3765 = vmatpush1.msra.mxu0 %v3764
    %v3766 = vand.u32 %v279, 4294901760
    %v3767 = vsub.f32 %v279, %v3766
    %3768 = vmatprep.subr.mxu0 %v3767
    %v3769 = vand.u32 %v278, 4294901760
    %v3770 = vsub.f32 %v278, %v3769
    %3771 = vmatpush1.msra.mxu0 %v3770
    %v3772 = vand.u32 %v284, 4294901760
    %v3773 = vsub.f32 %v284, %v3772
    %3774 = vmatprep.subr.mxu0 %v3773
    %v3775 = vand.u32 %v283, 4294901760
    %v3776 = vsub.f32 %v283, %v3775
    %3777 = vmatpush1.msra.mxu0 %v3776
    %v3778 = vand.u32 %v289, 4294901760
    %v3779 = vsub.f32 %v289, %v3778
    %3780 = vmatprep.subr.mxu0 %v3779
    %v3781 = vand.u32 %v288, 4294901760
    %v3782 = vsub.f32 %v288, %v3781
    %3783 = vmatpush1.msra.mxu0 %v3782
    %v3784 = vand.u32 %v294, 4294901760
    %v3785 = vsub.f32 %v294, %v3784
    %3786 = vmatprep.subr.mxu0 %v3785
    %v3787 = vand.u32 %v293, 4294901760
    %v3788 = vsub.f32 %v293, %v3787
    %3789 = vmatpush1.msra.mxu0 %v3788
    %v3790 = vand.u32 %v299, 4294901760
    %v3791 = vsub.f32 %v299, %v3790
    %3792 = vmatprep.subr.mxu0 %v3791
    %v3793 = vand.u32 %v298, 4294901760
    %v3794 = vsub.f32 %v298, %v3793
    %3795 = vmatpush1.msra.mxu0 %v3794
    %v3796 = vand.u32 %v304, 4294901760
    %v3797 = vsub.f32 %v304, %v3796
    %3798 = vmatprep.subr.mxu0 %v3797
    %v3799 = vand.u32 %v303, 4294901760
    %v3800 = vsub.f32 %v303, %v3799
    %3801 = vmatpush1.msra.mxu0 %v3800
    %v3802 = vand.u32 %v309, 4294901760
    %v3803 = vsub.f32 %v309, %v3802
    %3804 = vmatprep.subr.mxu0 %v3803
    %v3805 = vand.u32 %v308, 4294901760
    %v3806 = vsub.f32 %v308, %v3805
    %3807 = vmatpush1.msra.mxu0 %v3806
    %v3808 = vand.u32 %v314, 4294901760
    %v3809 = vsub.f32 %v314, %v3808
    %3810 = vmatprep.subr.mxu0 %v3809
    %v3811 = vand.u32 %v313, 4294901760
    %v3812 = vsub.f32 %v313, %v3811
    %3813 = vmatpush1.msra.mxu0 %v3812
    %v3814 = vand.u32 %v319, 4294901760
    %v3815 = vsub.f32 %v319, %v3814
    %3816 = vmatprep.subr.mxu0 %v3815
    %v3817 = vand.u32 %v318, 4294901760
    %v3818 = vsub.f32 %v318, %v3817
    %3819 = vmatpush1.msra.mxu0 %v3818
    %v3820 = vand.u32 %v324, 4294901760
    %v3821 = vsub.f32 %v324, %v3820
    %3822 = vmatprep.subr.mxu0 %v3821
    %v3823 = vand.u32 %v323, 4294901760
    %v3824 = vsub.f32 %v323, %v3823
    %3825 = vmatpush1.msra.mxu0 %v3824
    %v3826 = vand.u32 %v329, 4294901760
    %v3827 = vsub.f32 %v329, %v3826
    %3828 = vmatprep.subr.mxu0 %v3827
    %v3829 = vand.u32 %v328, 4294901760
    %v3830 = vsub.f32 %v328, %v3829
    %3831 = vmatpush1.msra.mxu0 %v3830
    %v3832 = vand.u32 %v334, 4294901760
    %v3833 = vsub.f32 %v334, %v3832
    %3834 = vmatprep.subr.mxu0 %v3833
    %v3835 = vand.u32 %v333, 4294901760
    %v3836 = vsub.f32 %v333, %v3835
    %3837 = vmatpush1.msra.mxu0 %v3836
    %v3838 = vand.u32 %v339, 4294901760
    %v3839 = vsub.f32 %v339, %v3838
    %3840 = vmatprep.subr.mxu0 %v3839
    %v3841 = vand.u32 %v338, 4294901760
    %v3842 = vsub.f32 %v338, %v3841
    %3843 = vmatpush1.msra.mxu0 %v3842
    %v3844 = vand.u32 %v344, 4294901760
    %v3845 = vsub.f32 %v344, %v3844
    %3846 = vmatprep.subr.mxu0 %v3845
    %v3847 = vand.u32 %v343, 4294901760
    %v3848 = vsub.f32 %v343, %v3847
    %3849 = vmatpush1.msra.mxu0 %v3848
    %v3850 = vand.u32 %v349, 4294901760
    %v3851 = vsub.f32 %v349, %v3850
    %3852 = vmatprep.subr.mxu0 %v3851
    %v3853 = vand.u32 %v348, 4294901760
    %v3854 = vsub.f32 %v348, %v3853
    %3855 = vmatpush1.msra.mxu0 %v3854
    %v3856 = vand.u32 %v354, 4294901760
    %v3857 = vsub.f32 %v354, %v3856
    %3858 = vmatprep.subr.mxu0 %v3857
    %v3859 = vand.u32 %v353, 4294901760
    %v3860 = vsub.f32 %v353, %v3859
    %3861 = vmatpush1.msra.mxu0 %v3860
    %v3862 = vand.u32 %v359, 4294901760
    %v3863 = vsub.f32 %v359, %v3862
    %3864 = vmatprep.subr.mxu0 %v3863
    %v3865 = vand.u32 %v358, 4294901760
    %v3866 = vsub.f32 %v358, %v3865
    %3867 = vmatpush1.msra.mxu0 %v3866
    %v3868 = vand.u32 %v564, 4294901760
    %v3869 = vsub.f32 %v564, %v3868
    %3870 = vmatprep.mubr.f32.mxu0 %v3869
    %v3871 = vand.u32 %v556, 4294901760
    %v3872 = vsub.f32 %v556, %v3871
    %3873 = vmatmul.mubr.f32.gmra.mrb[0].mxu0 %v3872
    %v3874 = vpop.f32.mrb[0].mxu0
    %v3875 = vadd.f32 %v3672, %v3874
    %v3876 = vpop.f32.mrb[0].mxu0
    %v3877 = vadd.f32 %v3674, %v3876
    %3878 = vdwg.mxu0
    %v3879 = vand.u32 %v204, 4294901760
    %3880 = vmatprep.subr.mxu0 %v3879
    %v3881 = vand.u32 %v203, 4294901760
    %3882 = vmatpush1.msra.mxu0 %v3881
    %v3883 = vand.u32 %v209, 4294901760
    %3884 = vmatprep.subr.mxu0 %v3883
    %v3885 = vand.u32 %v208, 4294901760
    %3886 = vmatpush1.msra.mxu0 %v3885
    %v3887 = vand.u32 %v214, 4294901760
    %3888 = vmatprep.subr.mxu0 %v3887
    %v3889 = vand.u32 %v213, 4294901760
    %3890 = vmatpush1.msra.mxu0 %v3889
    %v3891 = vand.u32 %v219, 4294901760
    %3892 = vmatprep.subr.mxu0 %v3891
    %v3893 = vand.u32 %v218, 4294901760
    %3894 = vmatpush1.msra.mxu0 %v3893
    %v3895 = vand.u32 %v224, 4294901760
    %3896 = vmatprep.subr.mxu0 %v3895
    %v3897 = vand.u32 %v223, 4294901760
    %3898 = vmatpush1.msra.mxu0 %v3897
    %v3899 = vand.u32 %v229, 4294901760
    %3900 = vmatprep.subr.mxu0 %v3899
    %v3901 = vand.u32 %v228, 4294901760
    %3902 = vmatpush1.msra.mxu0 %v3901
    %v3903 = vand.u32 %v234, 4294901760
    %3904 = vmatprep.subr.mxu0 %v3903
    %v3905 = vand.u32 %v233, 4294901760
    %3906 = vmatpush1.msra.mxu0 %v3905
    %v3907 = vand.u32 %v239, 4294901760
    %3908 = vmatprep.subr.mxu0 %v3907
    %v3909 = vand.u32 %v238, 4294901760
    %3910 = vmatpush1.msra.mxu0 %v3909
    %v3911 = vand.u32 %v244, 4294901760
    %3912 = vmatprep.subr.mxu0 %v3911
    %v3913 = vand.u32 %v243, 4294901760
    %3914 = vmatpush1.msra.mxu0 %v3913
    %v3915 = vand.u32 %v249, 4294901760
    %3916 = vmatprep.subr.mxu0 %v3915
    %v3917 = vand.u32 %v248, 4294901760
    %3918 = vmatpush1.msra.mxu0 %v3917
    %v3919 = vand.u32 %v254, 4294901760
    %3920 = vmatprep.subr.mxu0 %v3919
    %v3921 = vand.u32 %v253, 4294901760
    %3922 = vmatpush1.msra.mxu0 %v3921
    %v3923 = vand.u32 %v259, 4294901760
    %3924 = vmatprep.subr.mxu0 %v3923
    %v3925 = vand.u32 %v258, 4294901760
    %3926 = vmatpush1.msra.mxu0 %v3925
    %v3927 = vand.u32 %v264, 4294901760
    %3928 = vmatprep.subr.mxu0 %v3927
    %v3929 = vand.u32 %v263, 4294901760
    %3930 = vmatpush1.msra.mxu0 %v3929
    %v3931 = vand.u32 %v269, 4294901760
    %3932 = vmatprep.subr.mxu0 %v3931
    %v3933 = vand.u32 %v268, 4294901760
    %3934 = vmatpush1.msra.mxu0 %v3933
    %v3935 = vand.u32 %v274, 4294901760
    %3936 = vmatprep.subr.mxu0 %v3935
    %v3937 = vand.u32 %v273, 4294901760
    %3938 = vmatpush1.msra.mxu0 %v3937
    %v3939 = vand.u32 %v279, 4294901760
    %3940 = vmatprep.subr.mxu0 %v3939
    %v3941 = vand.u32 %v278, 4294901760
    %3942 = vmatpush1.msra.mxu0 %v3941
    %v3943 = vand.u32 %v284, 4294901760
    %3944 = vmatprep.subr.mxu0 %v3943
    %v3945 = vand.u32 %v283, 4294901760
    %3946 = vmatpush1.msra.mxu0 %v3945
    %v3947 = vand.u32 %v289, 4294901760
    %3948 = vmatprep.subr.mxu0 %v3947
    %v3949 = vand.u32 %v288, 4294901760
    %3950 = vmatpush1.msra.mxu0 %v3949
    %v3951 = vand.u32 %v294, 4294901760
    %3952 = vmatprep.subr.mxu0 %v3951
    %v3953 = vand.u32 %v293, 4294901760
    %3954 = vmatpush1.msra.mxu0 %v3953
    %v3955 = vand.u32 %v299, 4294901760
    %3956 = vmatprep.subr.mxu0 %v3955
    %v3957 = vand.u32 %v298, 4294901760
    %3958 = vmatpush1.msra.mxu0 %v3957
    %v3959 = vand.u32 %v304, 4294901760
    %3960 = vmatprep.subr.mxu0 %v3959
    %v3961 = vand.u32 %v303, 4294901760
    %3962 = vmatpush1.msra.mxu0 %v3961
    %v3963 = vand.u32 %v309, 4294901760
    %3964 = vmatprep.subr.mxu0 %v3963
    %v3965 = vand.u32 %v308, 4294901760
    %3966 = vmatpush1.msra.mxu0 %v3965
    %v3967 = vand.u32 %v314, 4294901760
    %3968 = vmatprep.subr.mxu0 %v3967
    %v3969 = vand.u32 %v313, 4294901760
    %3970 = vmatpush1.msra.mxu0 %v3969
    %v3971 = vand.u32 %v319, 4294901760
    %3972 = vmatprep.subr.mxu0 %v3971
    %v3973 = vand.u32 %v318, 4294901760
    %3974 = vmatpush1.msra.mxu0 %v3973
    %v3975 = vand.u32 %v324, 4294901760
    %3976 = vmatprep.subr.mxu0 %v3975
    %v3977 = vand.u32 %v323, 4294901760
    %3978 = vmatpush1.msra.mxu0 %v3977
    %v3979 = vand.u32 %v329, 4294901760
    %3980 = vmatprep.subr.mxu0 %v3979
    %v3981 = vand.u32 %v328, 4294901760
    %3982 = vmatpush1.msra.mxu0 %v3981
    %v3983 = vand.u32 %v334, 4294901760
    %3984 = vmatprep.subr.mxu0 %v3983
    %v3985 = vand.u32 %v333, 4294901760
    %3986 = vmatpush1.msra.mxu0 %v3985
    %v3987 = vand.u32 %v339, 4294901760
    %3988 = vmatprep.subr.mxu0 %v3987
    %v3989 = vand.u32 %v338, 4294901760
    %3990 = vmatpush1.msra.mxu0 %v3989
    %v3991 = vand.u32 %v344, 4294901760
    %3992 = vmatprep.subr.mxu0 %v3991
    %v3993 = vand.u32 %v343, 4294901760
    %3994 = vmatpush1.msra.mxu0 %v3993
    %v3995 = vand.u32 %v349, 4294901760
    %3996 = vmatprep.subr.mxu0 %v3995
    %v3997 = vand.u32 %v348, 4294901760
    %3998 = vmatpush1.msra.mxu0 %v3997
    %v3999 = vand.u32 %v354, 4294901760
    %4000 = vmatprep.subr.mxu0 %v3999
    %v4001 = vand.u32 %v353, 4294901760
    %4002 = vmatpush1.msra.mxu0 %v4001
    %v4003 = vand.u32 %v359, 4294901760
    %4004 = vmatprep.subr.mxu0 %v4003
    %v4005 = vand.u32 %v358, 4294901760
    %4006 = vmatpush1.msra.mxu0 %v4005
    %v4007 = vand.u32 %v564, 4294901760
    %v4008 = vsub.f32 %v564, %v4007
    %v4009 = vand.u32 %v4008, 4294901760
    %4010 = vmatprep.mubr.f32.mxu0 %v4009
    %v4011 = vand.u32 %v556, 4294901760
    %v4012 = vsub.f32 %v556, %v4011
    %v4013 = vand.u32 %v4012, 4294901760
    %4014 = vmatmul.mubr.f32.gmra.mrb[0].mxu0 %v4013
    %v4015 = vpop.f32.mrb[0].mxu0
    %v4016 = vadd.f32 %v3875, %v4015
    %v4017 = vpop.f32.mrb[0].mxu0
    %v4018 = vadd.f32 %v3877, %v4017
    %4019 = vdwg.mxu0
    %v4020 = vand.u32 %v204, 4294901760
    %v4021 = vsub.f32 %v204, %v4020
    %v4022 = vand.u32 %v4021, 4294901760
    %4023 = vmatprep.subr.mxu0 %v4022
    %v4024 = vand.u32 %v203, 4294901760
    %v4025 = vsub.f32 %v203, %v4024
    %v4026 = vand.u32 %v4025, 4294901760
    %4027 = vmatpush1.msra.mxu0 %v4026
    %v4028 = vand.u32 %v209, 4294901760
    %v4029 = vsub.f32 %v209, %v4028
    %v4030 = vand.u32 %v4029, 4294901760
    %4031 = vmatprep.subr.mxu0 %v4030
    %v4032 = vand.u32 %v208, 4294901760
    %v4033 = vsub.f32 %v208, %v4032
    %v4034 = vand.u32 %v4033, 4294901760
    %4035 = vmatpush1.msra.mxu0 %v4034
    %v4036 = vand.u32 %v214, 4294901760
    %v4037 = vsub.f32 %v214, %v4036
    %v4038 = vand.u32 %v4037, 4294901760
    %4039 = vmatprep.subr.mxu0 %v4038
    %v4040 = vand.u32 %v213, 4294901760
    %v4041 = vsub.f32 %v213, %v4040
    %v4042 = vand.u32 %v4041, 4294901760
    %4043 = vmatpush1.msra.mxu0 %v4042
    %v4044 = vand.u32 %v219, 4294901760
    %v4045 = vsub.f32 %v219, %v4044
    %v4046 = vand.u32 %v4045, 4294901760
    %4047 = vmatprep.subr.mxu0 %v4046
    %v4048 = vand.u32 %v218, 4294901760
    %v4049 = vsub.f32 %v218, %v4048
    %v4050 = vand.u32 %v4049, 4294901760
    %4051 = vmatpush1.msra.mxu0 %v4050
    %v4052 = vand.u32 %v224, 4294901760
    %v4053 = vsub.f32 %v224, %v4052
    %v4054 = vand.u32 %v4053, 4294901760
    %4055 = vmatprep.subr.mxu0 %v4054
    %v4056 = vand.u32 %v223, 4294901760
    %v4057 = vsub.f32 %v223, %v4056
    %v4058 = vand.u32 %v4057, 4294901760
    %4059 = vmatpush1.msra.mxu0 %v4058
    %v4060 = vand.u32 %v229, 4294901760
    %v4061 = vsub.f32 %v229, %v4060
    %v4062 = vand.u32 %v4061, 4294901760
    %4063 = vmatprep.subr.mxu0 %v4062
    %v4064 = vand.u32 %v228, 4294901760
    %v4065 = vsub.f32 %v228, %v4064
    %v4066 = vand.u32 %v4065, 4294901760
    %4067 = vmatpush1.msra.mxu0 %v4066
    %v4068 = vand.u32 %v234, 4294901760
    %v4069 = vsub.f32 %v234, %v4068
    %v4070 = vand.u32 %v4069, 4294901760
    %4071 = vmatprep.subr.mxu0 %v4070
    %v4072 = vand.u32 %v233, 4294901760
    %v4073 = vsub.f32 %v233, %v4072
    %v4074 = vand.u32 %v4073, 4294901760
    %4075 = vmatpush1.msra.mxu0 %v4074
    %v4076 = vand.u32 %v239, 4294901760
    %v4077 = vsub.f32 %v239, %v4076
    %v4078 = vand.u32 %v4077, 4294901760
    %4079 = vmatprep.subr.mxu0 %v4078
    %v4080 = vand.u32 %v238, 4294901760
    %v4081 = vsub.f32 %v238, %v4080
    %v4082 = vand.u32 %v4081, 4294901760
    %4083 = vmatpush1.msra.mxu0 %v4082
    %v4084 = vand.u32 %v244, 4294901760
    %v4085 = vsub.f32 %v244, %v4084
    %v4086 = vand.u32 %v4085, 4294901760
    %4087 = vmatprep.subr.mxu0 %v4086
    %v4088 = vand.u32 %v243, 4294901760
    %v4089 = vsub.f32 %v243, %v4088
    %v4090 = vand.u32 %v4089, 4294901760
    %4091 = vmatpush1.msra.mxu0 %v4090
    %v4092 = vand.u32 %v249, 4294901760
    %v4093 = vsub.f32 %v249, %v4092
    %v4094 = vand.u32 %v4093, 4294901760
    %4095 = vmatprep.subr.mxu0 %v4094
    %v4096 = vand.u32 %v248, 4294901760
    %v4097 = vsub.f32 %v248, %v4096
    %v4098 = vand.u32 %v4097, 4294901760
    %4099 = vmatpush1.msra.mxu0 %v4098
    %v4100 = vand.u32 %v254, 4294901760
    %v4101 = vsub.f32 %v254, %v4100
    %v4102 = vand.u32 %v4101, 4294901760
    %4103 = vmatprep.subr.mxu0 %v4102
    %v4104 = vand.u32 %v253, 4294901760
    %v4105 = vsub.f32 %v253, %v4104
    %v4106 = vand.u32 %v4105, 4294901760
    %4107 = vmatpush1.msra.mxu0 %v4106
    %v4108 = vand.u32 %v259, 4294901760
    %v4109 = vsub.f32 %v259, %v4108
    %v4110 = vand.u32 %v4109, 4294901760
    %4111 = vmatprep.subr.mxu0 %v4110
    %v4112 = vand.u32 %v258, 4294901760
    %v4113 = vsub.f32 %v258, %v4112
    %v4114 = vand.u32 %v4113, 4294901760
    %4115 = vmatpush1.msra.mxu0 %v4114
    %v4116 = vand.u32 %v264, 4294901760
    %v4117 = vsub.f32 %v264, %v4116
    %v4118 = vand.u32 %v4117, 4294901760
    %4119 = vmatprep.subr.mxu0 %v4118
    %v4120 = vand.u32 %v263, 4294901760
    %v4121 = vsub.f32 %v263, %v4120
    %v4122 = vand.u32 %v4121, 4294901760
    %4123 = vmatpush1.msra.mxu0 %v4122
    %v4124 = vand.u32 %v269, 4294901760
    %v4125 = vsub.f32 %v269, %v4124
    %v4126 = vand.u32 %v4125, 4294901760
    %4127 = vmatprep.subr.mxu0 %v4126
    %v4128 = vand.u32 %v268, 4294901760
    %v4129 = vsub.f32 %v268, %v4128
    %v4130 = vand.u32 %v4129, 4294901760
    %4131 = vmatpush1.msra.mxu0 %v4130
    %v4132 = vand.u32 %v274, 4294901760
    %v4133 = vsub.f32 %v274, %v4132
    %v4134 = vand.u32 %v4133, 4294901760
    %4135 = vmatprep.subr.mxu0 %v4134
    %v4136 = vand.u32 %v273, 4294901760
    %v4137 = vsub.f32 %v273, %v4136
    %v4138 = vand.u32 %v4137, 4294901760
    %4139 = vmatpush1.msra.mxu0 %v4138
    %v4140 = vand.u32 %v279, 4294901760
    %v4141 = vsub.f32 %v279, %v4140
    %v4142 = vand.u32 %v4141, 4294901760
    %4143 = vmatprep.subr.mxu0 %v4142
    %v4144 = vand.u32 %v278, 4294901760
    %v4145 = vsub.f32 %v278, %v4144
    %v4146 = vand.u32 %v4145, 4294901760
    %4147 = vmatpush1.msra.mxu0 %v4146
    %v4148 = vand.u32 %v284, 4294901760
    %v4149 = vsub.f32 %v284, %v4148
    %v4150 = vand.u32 %v4149, 4294901760
    %4151 = vmatprep.subr.mxu0 %v4150
    %v4152 = vand.u32 %v283, 4294901760
    %v4153 = vsub.f32 %v283, %v4152
    %v4154 = vand.u32 %v4153, 4294901760
    %4155 = vmatpush1.msra.mxu0 %v4154
    %v4156 = vand.u32 %v289, 4294901760
    %v4157 = vsub.f32 %v289, %v4156
    %v4158 = vand.u32 %v4157, 4294901760
    %4159 = vmatprep.subr.mxu0 %v4158
    %v4160 = vand.u32 %v288, 4294901760
    %v4161 = vsub.f32 %v288, %v4160
    %v4162 = vand.u32 %v4161, 4294901760
    %4163 = vmatpush1.msra.mxu0 %v4162
    %v4164 = vand.u32 %v294, 4294901760
    %v4165 = vsub.f32 %v294, %v4164
    %v4166 = vand.u32 %v4165, 4294901760
    %4167 = vmatprep.subr.mxu0 %v4166
    %v4168 = vand.u32 %v293, 4294901760
    %v4169 = vsub.f32 %v293, %v4168
    %v4170 = vand.u32 %v4169, 4294901760
    %4171 = vmatpush1.msra.mxu0 %v4170
    %v4172 = vand.u32 %v299, 4294901760
    %v4173 = vsub.f32 %v299, %v4172
    %v4174 = vand.u32 %v4173, 4294901760
    %4175 = vmatprep.subr.mxu0 %v4174
    %v4176 = vand.u32 %v298, 4294901760
    %v4177 = vsub.f32 %v298, %v4176
    %v4178 = vand.u32 %v4177, 4294901760
    %4179 = vmatpush1.msra.mxu0 %v4178
    %v4180 = vand.u32 %v304, 4294901760
    %v4181 = vsub.f32 %v304, %v4180
    %v4182 = vand.u32 %v4181, 4294901760
    %4183 = vmatprep.subr.mxu0 %v4182
    %v4184 = vand.u32 %v303, 4294901760
    %v4185 = vsub.f32 %v303, %v4184
    %v4186 = vand.u32 %v4185, 4294901760
    %4187 = vmatpush1.msra.mxu0 %v4186
    %v4188 = vand.u32 %v309, 4294901760
    %v4189 = vsub.f32 %v309, %v4188
    %v4190 = vand.u32 %v4189, 4294901760
    %4191 = vmatprep.subr.mxu0 %v4190
    %v4192 = vand.u32 %v308, 4294901760
    %v4193 = vsub.f32 %v308, %v4192
    %v4194 = vand.u32 %v4193, 4294901760
    %4195 = vmatpush1.msra.mxu0 %v4194
    %v4196 = vand.u32 %v314, 4294901760
    %v4197 = vsub.f32 %v314, %v4196
    %v4198 = vand.u32 %v4197, 4294901760
    %4199 = vmatprep.subr.mxu0 %v4198
    %v4200 = vand.u32 %v313, 4294901760
    %v4201 = vsub.f32 %v313, %v4200
    %v4202 = vand.u32 %v4201, 4294901760
    %4203 = vmatpush1.msra.mxu0 %v4202
    %v4204 = vand.u32 %v319, 4294901760
    %v4205 = vsub.f32 %v319, %v4204
    %v4206 = vand.u32 %v4205, 4294901760
    %4207 = vmatprep.subr.mxu0 %v4206
    %v4208 = vand.u32 %v318, 4294901760
    %v4209 = vsub.f32 %v318, %v4208
    %v4210 = vand.u32 %v4209, 4294901760
    %4211 = vmatpush1.msra.mxu0 %v4210
    %v4212 = vand.u32 %v324, 4294901760
    %v4213 = vsub.f32 %v324, %v4212
    %v4214 = vand.u32 %v4213, 4294901760
    %4215 = vmatprep.subr.mxu0 %v4214
    %v4216 = vand.u32 %v323, 4294901760
    %v4217 = vsub.f32 %v323, %v4216
    %v4218 = vand.u32 %v4217, 4294901760
    %4219 = vmatpush1.msra.mxu0 %v4218
    %v4220 = vand.u32 %v329, 4294901760
    %v4221 = vsub.f32 %v329, %v4220
    %v4222 = vand.u32 %v4221, 4294901760
    %4223 = vmatprep.subr.mxu0 %v4222
    %v4224 = vand.u32 %v328, 4294901760
    %v4225 = vsub.f32 %v328, %v4224
    %v4226 = vand.u32 %v4225, 4294901760
    %4227 = vmatpush1.msra.mxu0 %v4226
    %v4228 = vand.u32 %v334, 4294901760
    %v4229 = vsub.f32 %v334, %v4228
    %v4230 = vand.u32 %v4229, 4294901760
    %4231 = vmatprep.subr.mxu0 %v4230
    %v4232 = vand.u32 %v333, 4294901760
    %v4233 = vsub.f32 %v333, %v4232
    %v4234 = vand.u32 %v4233, 4294901760
    %4235 = vmatpush1.msra.mxu0 %v4234
    %v4236 = vand.u32 %v339, 4294901760
    %v4237 = vsub.f32 %v339, %v4236
    %v4238 = vand.u32 %v4237, 4294901760
    %4239 = vmatprep.subr.mxu0 %v4238
    %v4240 = vand.u32 %v338, 4294901760
    %v4241 = vsub.f32 %v338, %v4240
    %v4242 = vand.u32 %v4241, 4294901760
    %4243 = vmatpush1.msra.mxu0 %v4242
    %v4244 = vand.u32 %v344, 4294901760
    %v4245 = vsub.f32 %v344, %v4244
    %v4246 = vand.u32 %v4245, 4294901760
    %4247 = vmatprep.subr.mxu0 %v4246
    %v4248 = vand.u32 %v343, 4294901760
    %v4249 = vsub.f32 %v343, %v4248
    %v4250 = vand.u32 %v4249, 4294901760
    %4251 = vmatpush1.msra.mxu0 %v4250
    %v4252 = vand.u32 %v349, 4294901760
    %v4253 = vsub.f32 %v349, %v4252
    %v4254 = vand.u32 %v4253, 4294901760
    %4255 = vmatprep.subr.mxu0 %v4254
    %v4256 = vand.u32 %v348, 4294901760
    %v4257 = vsub.f32 %v348, %v4256
    %v4258 = vand.u32 %v4257, 4294901760
    %4259 = vmatpush1.msra.mxu0 %v4258
    %v4260 = vand.u32 %v354, 4294901760
    %v4261 = vsub.f32 %v354, %v4260
    %v4262 = vand.u32 %v4261, 4294901760
    %4263 = vmatprep.subr.mxu0 %v4262
    %v4264 = vand.u32 %v353, 4294901760
    %v4265 = vsub.f32 %v353, %v4264
    %v4266 = vand.u32 %v4265, 4294901760
    %4267 = vmatpush1.msra.mxu0 %v4266
    %v4268 = vand.u32 %v359, 4294901760
    %v4269 = vsub.f32 %v359, %v4268
    %v4270 = vand.u32 %v4269, 4294901760
    %4271 = vmatprep.subr.mxu0 %v4270
    %v4272 = vand.u32 %v358, 4294901760
    %v4273 = vsub.f32 %v358, %v4272
    %v4274 = vand.u32 %v4273, 4294901760
    %4275 = vmatpush1.msra.mxu0 %v4274
    %v4276 = vand.u32 %v564, 4294901760
    %4277 = vmatprep.mubr.f32.mxu0 %v4276
    %v4278 = vand.u32 %v556, 4294901760
    %4279 = vmatmul.mubr.f32.gmra.mrb[0].mxu0 %v4278
    %v4280 = vpop.f32.mrb[0].mxu0
    %v4281 = vadd.f32 %v4016, %v4280
    %v4282 = vpop.f32.mrb[0].mxu0
    %v4283 = vadd.f32 %v4018, %v4282
    %4284 = vdwg.mxu0
    %v4285 = vand.u32 %v204, 4294901760
    %4286 = vmatprep.subr.mxu0 %v4285
    %v4287 = vand.u32 %v203, 4294901760
    %4288 = vmatpush1.msra.mxu0 %v4287
    %v4289 = vand.u32 %v209, 4294901760
    %4290 = vmatprep.subr.mxu0 %v4289
    %v4291 = vand.u32 %v208, 4294901760
    %4292 = vmatpush1.msra.mxu0 %v4291
    %v4293 = vand.u32 %v214, 4294901760
    %4294 = vmatprep.subr.mxu0 %v4293
    %v4295 = vand.u32 %v213, 4294901760
    %4296 = vmatpush1.msra.mxu0 %v4295
    %v4297 = vand.u32 %v219, 4294901760
    %4298 = vmatprep.subr.mxu0 %v4297
    %v4299 = vand.u32 %v218, 4294901760
    %4300 = vmatpush1.msra.mxu0 %v4299
    %v4301 = vand.u32 %v224, 4294901760
    %4302 = vmatprep.subr.mxu0 %v4301
    %v4303 = vand.u32 %v223, 4294901760
    %4304 = vmatpush1.msra.mxu0 %v4303
    %v4305 = vand.u32 %v229, 4294901760
    %4306 = vmatprep.subr.mxu0 %v4305
    %v4307 = vand.u32 %v228, 4294901760
    %4308 = vmatpush1.msra.mxu0 %v4307
    %v4309 = vand.u32 %v234, 4294901760
    %4310 = vmatprep.subr.mxu0 %v4309
    %v4311 = vand.u32 %v233, 4294901760
    %4312 = vmatpush1.msra.mxu0 %v4311
    %v4313 = vand.u32 %v239, 4294901760
    %4314 = vmatprep.subr.mxu0 %v4313
    %v4315 = vand.u32 %v238, 4294901760
    %4316 = vmatpush1.msra.mxu0 %v4315
    %v4317 = vand.u32 %v244, 4294901760
    %4318 = vmatprep.subr.mxu0 %v4317
    %v4319 = vand.u32 %v243, 4294901760
    %4320 = vmatpush1.msra.mxu0 %v4319
    %v4321 = vand.u32 %v249, 4294901760
    %4322 = vmatprep.subr.mxu0 %v4321
    %v4323 = vand.u32 %v248, 4294901760
    %4324 = vmatpush1.msra.mxu0 %v4323
    %v4325 = vand.u32 %v254, 4294901760
    %4326 = vmatprep.subr.mxu0 %v4325
    %v4327 = vand.u32 %v253, 4294901760
    %4328 = vmatpush1.msra.mxu0 %v4327
    %v4329 = vand.u32 %v259, 4294901760
    %4330 = vmatprep.subr.mxu0 %v4329
    %v4331 = vand.u32 %v258, 4294901760
    %4332 = vmatpush1.msra.mxu0 %v4331
    %v4333 = vand.u32 %v264, 4294901760
    %4334 = vmatprep.subr.mxu0 %v4333
    %v4335 = vand.u32 %v263, 4294901760
    %4336 = vmatpush1.msra.mxu0 %v4335
    %v4337 = vand.u32 %v269, 4294901760
    %4338 = vmatprep.subr.mxu0 %v4337
    %v4339 = vand.u32 %v268, 4294901760
    %4340 = vmatpush1.msra.mxu0 %v4339
    %v4341 = vand.u32 %v274, 4294901760
    %4342 = vmatprep.subr.mxu0 %v4341
    %v4343 = vand.u32 %v273, 4294901760
    %4344 = vmatpush1.msra.mxu0 %v4343
    %v4345 = vand.u32 %v279, 4294901760
    %4346 = vmatprep.subr.mxu0 %v4345
    %v4347 = vand.u32 %v278, 4294901760
    %4348 = vmatpush1.msra.mxu0 %v4347
    %v4349 = vand.u32 %v284, 4294901760
    %4350 = vmatprep.subr.mxu0 %v4349
    %v4351 = vand.u32 %v283, 4294901760
    %4352 = vmatpush1.msra.mxu0 %v4351
    %v4353 = vand.u32 %v289, 4294901760
    %4354 = vmatprep.subr.mxu0 %v4353
    %v4355 = vand.u32 %v288, 4294901760
    %4356 = vmatpush1.msra.mxu0 %v4355
    %v4357 = vand.u32 %v294, 4294901760
    %4358 = vmatprep.subr.mxu0 %v4357
    %v4359 = vand.u32 %v293, 4294901760
    %4360 = vmatpush1.msra.mxu0 %v4359
    %v4361 = vand.u32 %v299, 4294901760
    %4362 = vmatprep.subr.mxu0 %v4361
    %v4363 = vand.u32 %v298, 4294901760
    %4364 = vmatpush1.msra.mxu0 %v4363
    %v4365 = vand.u32 %v304, 4294901760
    %4366 = vmatprep.subr.mxu0 %v4365
    %v4367 = vand.u32 %v303, 4294901760
    %4368 = vmatpush1.msra.mxu0 %v4367
    %v4369 = vand.u32 %v309, 4294901760
    %4370 = vmatprep.subr.mxu0 %v4369
    %v4371 = vand.u32 %v308, 4294901760
    %4372 = vmatpush1.msra.mxu0 %v4371
    %v4373 = vand.u32 %v314, 4294901760
    %4374 = vmatprep.subr.mxu0 %v4373
    %v4375 = vand.u32 %v313, 4294901760
    %4376 = vmatpush1.msra.mxu0 %v4375
    %v4377 = vand.u32 %v319, 4294901760
    %4378 = vmatprep.subr.mxu0 %v4377
    %v4379 = vand.u32 %v318, 4294901760
    %4380 = vmatpush1.msra.mxu0 %v4379
    %v4381 = vand.u32 %v324, 4294901760
    %4382 = vmatprep.subr.mxu0 %v4381
    %v4383 = vand.u32 %v323, 4294901760
    %4384 = vmatpush1.msra.mxu0 %v4383
    %v4385 = vand.u32 %v329, 4294901760
    %4386 = vmatprep.subr.mxu0 %v4385
    %v4387 = vand.u32 %v328, 4294901760
    %4388 = vmatpush1.msra.mxu0 %v4387
    %v4389 = vand.u32 %v334, 4294901760
    %4390 = vmatprep.subr.mxu0 %v4389
    %v4391 = vand.u32 %v333, 4294901760
    %4392 = vmatpush1.msra.mxu0 %v4391
    %v4393 = vand.u32 %v339, 4294901760
    %4394 = vmatprep.subr.mxu0 %v4393
    %v4395 = vand.u32 %v338, 4294901760
    %4396 = vmatpush1.msra.mxu0 %v4395
    %v4397 = vand.u32 %v344, 4294901760
    %4398 = vmatprep.subr.mxu0 %v4397
    %v4399 = vand.u32 %v343, 4294901760
    %4400 = vmatpush1.msra.mxu0 %v4399
    %v4401 = vand.u32 %v349, 4294901760
    %4402 = vmatprep.subr.mxu0 %v4401
    %v4403 = vand.u32 %v348, 4294901760
    %4404 = vmatpush1.msra.mxu0 %v4403
    %v4405 = vand.u32 %v354, 4294901760
    %4406 = vmatprep.subr.mxu0 %v4405
    %v4407 = vand.u32 %v353, 4294901760
    %4408 = vmatpush1.msra.mxu0 %v4407
    %v4409 = vand.u32 %v359, 4294901760
    %4410 = vmatprep.subr.mxu0 %v4409
    %v4411 = vand.u32 %v358, 4294901760
    %4412 = vmatpush1.msra.mxu0 %v4411
    %v4413 = vand.u32 %v564, 4294901760
    %4414 = vmatprep.mubr.f32.mxu0 %v4413
    %v4415 = vand.u32 %v556, 4294901760
    %4416 = vmatmul.mubr.f32.gmra.mrb[0].mxu0 %v4415
    %v4417 = vpop.f32.mrb[0].mxu0
    %v4418 = vadd.f32 %v4281, %v4417
    %v4419 = vpop.f32.mrb[0].mxu0
    %v4420 = vadd.f32 %v4283, %v4419
    %4421 = vdwg.mxu0
    %v4422 = vand.u32 %v364, 4294901760
    %4423 = vmatprep.subr.mxu0 %v4422
    %v4424 = vand.u32 %v363, 4294901760
    %4425 = vmatpush1.msra.mxu0 %v4424
    %v4426 = vand.u32 %v369, 4294901760
    %4427 = vmatprep.subr.mxu0 %v4426
    %v4428 = vand.u32 %v368, 4294901760
    %4429 = vmatpush1.msra.mxu0 %v4428
    %v4430 = vand.u32 %v374, 4294901760
    %4431 = vmatprep.subr.mxu0 %v4430
    %v4432 = vand.u32 %v373, 4294901760
    %4433 = vmatpush1.msra.mxu0 %v4432
    %v4434 = vand.u32 %v379, 4294901760
    %4435 = vmatprep.subr.mxu0 %v4434
    %v4436 = vand.u32 %v378, 4294901760
    %4437 = vmatpush1.msra.mxu0 %v4436
    %v4438 = vand.u32 %v384, 4294901760
    %4439 = vmatprep.subr.mxu0 %v4438
    %v4440 = vand.u32 %v383, 4294901760
    %4441 = vmatpush1.msra.mxu0 %v4440
    %v4442 = vand.u32 %v389, 4294901760
    %4443 = vmatprep.subr.mxu0 %v4442
    %v4444 = vand.u32 %v388, 4294901760
    %4445 = vmatpush1.msra.mxu0 %v4444
    %v4446 = vand.u32 %v394, 4294901760
    %4447 = vmatprep.subr.mxu0 %v4446
    %v4448 = vand.u32 %v393, 4294901760
    %4449 = vmatpush1.msra.mxu0 %v4448
    %v4450 = vand.u32 %v399, 4294901760
    %4451 = vmatprep.subr.mxu0 %v4450
    %v4452 = vand.u32 %v398, 4294901760
    %4453 = vmatpush1.msra.mxu0 %v4452
    %v4454 = vand.u32 %v404, 4294901760
    %4455 = vmatprep.subr.mxu0 %v4454
    %v4456 = vand.u32 %v403, 4294901760
    %4457 = vmatpush1.msra.mxu0 %v4456
    %v4458 = vand.u32 %v409, 4294901760
    %4459 = vmatprep.subr.mxu0 %v4458
    %v4460 = vand.u32 %v408, 4294901760
    %4461 = vmatpush1.msra.mxu0 %v4460
    %v4462 = vand.u32 %v414, 4294901760
    %4463 = vmatprep.subr.mxu0 %v4462
    %v4464 = vand.u32 %v413, 4294901760
    %4465 = vmatpush1.msra.mxu0 %v4464
    %v4466 = vand.u32 %v419, 4294901760
    %4467 = vmatprep.subr.mxu0 %v4466
    %v4468 = vand.u32 %v418, 4294901760
    %4469 = vmatpush1.msra.mxu0 %v4468
    %v4470 = vand.u32 %v424, 4294901760
    %4471 = vmatprep.subr.mxu0 %v4470
    %v4472 = vand.u32 %v423, 4294901760
    %4473 = vmatpush1.msra.mxu0 %v4472
    %v4474 = vand.u32 %v429, 4294901760
    %4475 = vmatprep.subr.mxu0 %v4474
    %v4476 = vand.u32 %v428, 4294901760
    %4477 = vmatpush1.msra.mxu0 %v4476
    %v4478 = vand.u32 %v434, 4294901760
    %4479 = vmatprep.subr.mxu0 %v4478
    %v4480 = vand.u32 %v433, 4294901760
    %4481 = vmatpush1.msra.mxu0 %v4480
    %v4482 = vand.u32 %v439, 4294901760
    %4483 = vmatprep.subr.mxu0 %v4482
    %v4484 = vand.u32 %v438, 4294901760
    %4485 = vmatpush1.msra.mxu0 %v4484
    %v4486 = vand.u32 %v444, 4294901760
    %4487 = vmatprep.subr.mxu0 %v4486
    %v4488 = vand.u32 %v443, 4294901760
    %4489 = vmatpush1.msra.mxu0 %v4488
    %v4490 = vand.u32 %v449, 4294901760
    %4491 = vmatprep.subr.mxu0 %v4490
    %v4492 = vand.u32 %v448, 4294901760
    %4493 = vmatpush1.msra.mxu0 %v4492
    %v4494 = vand.u32 %v454, 4294901760
    %4495 = vmatprep.subr.mxu0 %v4494
    %v4496 = vand.u32 %v453, 4294901760
    %4497 = vmatpush1.msra.mxu0 %v4496
    %v4498 = vand.u32 %v459, 4294901760
    %4499 = vmatprep.subr.mxu0 %v4498
    %v4500 = vand.u32 %v458, 4294901760
    %4501 = vmatpush1.msra.mxu0 %v4500
    %v4502 = vand.u32 %v464, 4294901760
    %4503 = vmatprep.subr.mxu0 %v4502
    %v4504 = vand.u32 %v463, 4294901760
    %4505 = vmatpush1.msra.mxu0 %v4504
    %v4506 = vand.u32 %v469, 4294901760
    %4507 = vmatprep.subr.mxu0 %v4506
    %v4508 = vand.u32 %v468, 4294901760
    %4509 = vmatpush1.msra.mxu0 %v4508
    %v4510 = vand.u32 %v474, 4294901760
    %4511 = vmatprep.subr.mxu0 %v4510
    %v4512 = vand.u32 %v473, 4294901760
    %4513 = vmatpush1.msra.mxu0 %v4512
    %v4514 = vand.u32 %v479, 4294901760
    %4515 = vmatprep.subr.mxu0 %v4514
    %v4516 = vand.u32 %v478, 4294901760
    %4517 = vmatpush1.msra.mxu0 %v4516
    %v4518 = vand.u32 %v484, 4294901760
    %4519 = vmatprep.subr.mxu0 %v4518
    %v4520 = vand.u32 %v483, 4294901760
    %4521 = vmatpush1.msra.mxu0 %v4520
    %v4522 = vand.u32 %v489, 4294901760
    %4523 = vmatprep.subr.mxu0 %v4522
    %v4524 = vand.u32 %v488, 4294901760
    %4525 = vmatpush1.msra.mxu0 %v4524
    %v4526 = vand.u32 %v494, 4294901760
    %4527 = vmatprep.subr.mxu0 %v4526
    %v4528 = vand.u32 %v493, 4294901760
    %4529 = vmatpush1.msra.mxu0 %v4528
    %v4530 = vand.u32 %v499, 4294901760
    %4531 = vmatprep.subr.mxu0 %v4530
    %v4532 = vand.u32 %v498, 4294901760
    %4533 = vmatpush1.msra.mxu0 %v4532
    %v4534 = vand.u32 %v504, 4294901760
    %4535 = vmatprep.subr.mxu0 %v4534
    %v4536 = vand.u32 %v503, 4294901760
    %4537 = vmatpush1.msra.mxu0 %v4536
    %v4538 = vand.u32 %v509, 4294901760
    %4539 = vmatprep.subr.mxu0 %v4538
    %v4540 = vand.u32 %v508, 4294901760
    %4541 = vmatpush1.msra.mxu0 %v4540
    %v4542 = vand.u32 %v514, 4294901760
    %4543 = vmatprep.subr.mxu0 %v4542
    %v4544 = vand.u32 %v513, 4294901760
    %4545 = vmatpush1.msra.mxu0 %v4544
    %v4546 = vand.u32 %v519, 4294901760
    %4547 = vmatprep.subr.mxu0 %v4546
    %v4548 = vand.u32 %v518, 4294901760
    %4549 = vmatpush1.msra.mxu0 %v4548
    %v4550 = vand.u32 %v565, 4294901760
    %v4551 = vsub.f32 %v565, %v4550
    %v4552 = vand.u32 %v4551, 4294901760
    %v4553 = vsub.f32 %v4551, %v4552
    %v4554 = vand.u32 %v4553, 4294901760
    %4555 = vmatprep.mubr.f32.mxu0 %v4554
    %v4556 = vand.u32 %v563, 4294901760
    %v4557 = vsub.f32 %v563, %v4556
    %v4558 = vand.u32 %v4557, 4294901760
    %v4559 = vsub.f32 %v4557, %v4558
    %v4560 = vand.u32 %v4559, 4294901760
    %4561 = vmatmul.mubr.f32.gmra.mrb[0].mxu0 %v4560
    %v4562 = vpop.f32.mrb[0].mxu0
    %v4563 = vadd.f32 %v4418, %v4562
    %v4564 = vpop.f32.mrb[0].mxu0
    %v4565 = vadd.f32 %v4420, %v4564
    %4566 = vdwg.mxu0
    %v4567 = vand.u32 %v364, 4294901760
    %v4568 = vsub.f32 %v364, %v4567
    %v4569 = vand.u32 %v4568, 4294901760
    %v4570 = vsub.f32 %v4568, %v4569
    %v4571 = vand.u32 %v4570, 4294901760
    %4572 = vmatprep.subr.mxu0 %v4571
    %v4573 = vand.u32 %v363, 4294901760
    %v4574 = vsub.f32 %v363, %v4573
    %v4575 = vand.u32 %v4574, 4294901760
    %v4576 = vsub.f32 %v4574, %v4575
    %v4577 = vand.u32 %v4576, 4294901760
    %4578 = vmatpush1.msra.mxu0 %v4577
    %v4579 = vand.u32 %v369, 4294901760
    %v4580 = vsub.f32 %v369, %v4579
    %v4581 = vand.u32 %v4580, 4294901760
    %v4582 = vsub.f32 %v4580, %v4581
    %v4583 = vand.u32 %v4582, 4294901760
    %4584 = vmatprep.subr.mxu0 %v4583
    %v4585 = vand.u32 %v368, 4294901760
    %v4586 = vsub.f32 %v368, %v4585
    %v4587 = vand.u32 %v4586, 4294901760
    %v4588 = vsub.f32 %v4586, %v4587
    %v4589 = vand.u32 %v4588, 4294901760
    %4590 = vmatpush1.msra.mxu0 %v4589
    %v4591 = vand.u32 %v374, 4294901760
    %v4592 = vsub.f32 %v374, %v4591
    %v4593 = vand.u32 %v4592, 4294901760
    %v4594 = vsub.f32 %v4592, %v4593
    %v4595 = vand.u32 %v4594, 4294901760
    %4596 = vmatprep.subr.mxu0 %v4595
    %v4597 = vand.u32 %v373, 4294901760
    %v4598 = vsub.f32 %v373, %v4597
    %v4599 = vand.u32 %v4598, 4294901760
    %v4600 = vsub.f32 %v4598, %v4599
    %v4601 = vand.u32 %v4600, 4294901760
    %4602 = vmatpush1.msra.mxu0 %v4601
    %v4603 = vand.u32 %v379, 4294901760
    %v4604 = vsub.f32 %v379, %v4603
    %v4605 = vand.u32 %v4604, 4294901760
    %v4606 = vsub.f32 %v4604, %v4605
    %v4607 = vand.u32 %v4606, 4294901760
    %4608 = vmatprep.subr.mxu0 %v4607
    %v4609 = vand.u32 %v378, 4294901760
    %v4610 = vsub.f32 %v378, %v4609
    %v4611 = vand.u32 %v4610, 4294901760
    %v4612 = vsub.f32 %v4610, %v4611
    %v4613 = vand.u32 %v4612, 4294901760
    %4614 = vmatpush1.msra.mxu0 %v4613
    %v4615 = vand.u32 %v384, 4294901760
    %v4616 = vsub.f32 %v384, %v4615
    %v4617 = vand.u32 %v4616, 4294901760
    %v4618 = vsub.f32 %v4616, %v4617
    %v4619 = vand.u32 %v4618, 4294901760
    %4620 = vmatprep.subr.mxu0 %v4619
    %v4621 = vand.u32 %v383, 4294901760
    %v4622 = vsub.f32 %v383, %v4621
    %v4623 = vand.u32 %v4622, 4294901760
    %v4624 = vsub.f32 %v4622, %v4623
    %v4625 = vand.u32 %v4624, 4294901760
    %4626 = vmatpush1.msra.mxu0 %v4625
    %v4627 = vand.u32 %v389, 4294901760
    %v4628 = vsub.f32 %v389, %v4627
    %v4629 = vand.u32 %v4628, 4294901760
    %v4630 = vsub.f32 %v4628, %v4629
    %v4631 = vand.u32 %v4630, 4294901760
    %4632 = vmatprep.subr.mxu0 %v4631
    %v4633 = vand.u32 %v388, 4294901760
    %v4634 = vsub.f32 %v388, %v4633
    %v4635 = vand.u32 %v4634, 4294901760
    %v4636 = vsub.f32 %v4634, %v4635
    %v4637 = vand.u32 %v4636, 4294901760
    %4638 = vmatpush1.msra.mxu0 %v4637
    %v4639 = vand.u32 %v394, 4294901760
    %v4640 = vsub.f32 %v394, %v4639
    %v4641 = vand.u32 %v4640, 4294901760
    %v4642 = vsub.f32 %v4640, %v4641
    %v4643 = vand.u32 %v4642, 4294901760
    %4644 = vmatprep.subr.mxu0 %v4643
    %v4645 = vand.u32 %v393, 4294901760
    %v4646 = vsub.f32 %v393, %v4645
    %v4647 = vand.u32 %v4646, 4294901760
    %v4648 = vsub.f32 %v4646, %v4647
    %v4649 = vand.u32 %v4648, 4294901760
    %4650 = vmatpush1.msra.mxu0 %v4649
    %v4651 = vand.u32 %v399, 4294901760
    %v4652 = vsub.f32 %v399, %v4651
    %v4653 = vand.u32 %v4652, 4294901760
    %v4654 = vsub.f32 %v4652, %v4653
    %v4655 = vand.u32 %v4654, 4294901760
    %4656 = vmatprep.subr.mxu0 %v4655
    %v4657 = vand.u32 %v398, 4294901760
    %v4658 = vsub.f32 %v398, %v4657
    %v4659 = vand.u32 %v4658, 4294901760
    %v4660 = vsub.f32 %v4658, %v4659
    %v4661 = vand.u32 %v4660, 4294901760
    %4662 = vmatpush1.msra.mxu0 %v4661
    %v4663 = vand.u32 %v404, 4294901760
    %v4664 = vsub.f32 %v404, %v4663
    %v4665 = vand.u32 %v4664, 4294901760
    %v4666 = vsub.f32 %v4664, %v4665
    %v4667 = vand.u32 %v4666, 4294901760
    %4668 = vmatprep.subr.mxu0 %v4667
    %v4669 = vand.u32 %v403, 4294901760
    %v4670 = vsub.f32 %v403, %v4669
    %v4671 = vand.u32 %v4670, 4294901760
    %v4672 = vsub.f32 %v4670, %v4671
    %v4673 = vand.u32 %v4672, 4294901760
    %4674 = vmatpush1.msra.mxu0 %v4673
    %v4675 = vand.u32 %v409, 4294901760
    %v4676 = vsub.f32 %v409, %v4675
    %v4677 = vand.u32 %v4676, 4294901760
    %v4678 = vsub.f32 %v4676, %v4677
    %v4679 = vand.u32 %v4678, 4294901760
    %4680 = vmatprep.subr.mxu0 %v4679
    %v4681 = vand.u32 %v408, 4294901760
    %v4682 = vsub.f32 %v408, %v4681
    %v4683 = vand.u32 %v4682, 4294901760
    %v4684 = vsub.f32 %v4682, %v4683
    %v4685 = vand.u32 %v4684, 4294901760
    %4686 = vmatpush1.msra.mxu0 %v4685
    %v4687 = vand.u32 %v414, 4294901760
    %v4688 = vsub.f32 %v414, %v4687
    %v4689 = vand.u32 %v4688, 4294901760
    %v4690 = vsub.f32 %v4688, %v4689
    %v4691 = vand.u32 %v4690, 4294901760
    %4692 = vmatprep.subr.mxu0 %v4691
    %v4693 = vand.u32 %v413, 4294901760
    %v4694 = vsub.f32 %v413, %v4693
    %v4695 = vand.u32 %v4694, 4294901760
    %v4696 = vsub.f32 %v4694, %v4695
    %v4697 = vand.u32 %v4696, 4294901760
    %4698 = vmatpush1.msra.mxu0 %v4697
    %v4699 = vand.u32 %v419, 4294901760
    %v4700 = vsub.f32 %v419, %v4699
    %v4701 = vand.u32 %v4700, 4294901760
    %v4702 = vsub.f32 %v4700, %v4701
    %v4703 = vand.u32 %v4702, 4294901760
    %4704 = vmatprep.subr.mxu0 %v4703
    %v4705 = vand.u32 %v418, 4294901760
    %v4706 = vsub.f32 %v418, %v4705
    %v4707 = vand.u32 %v4706, 4294901760
    %v4708 = vsub.f32 %v4706, %v4707
    %v4709 = vand.u32 %v4708, 4294901760
    %4710 = vmatpush1.msra.mxu0 %v4709
    %v4711 = vand.u32 %v424, 4294901760
    %v4712 = vsub.f32 %v424, %v4711
    %v4713 = vand.u32 %v4712, 4294901760
    %v4714 = vsub.f32 %v4712, %v4713
    %v4715 = vand.u32 %v4714, 4294901760
    %4716 = vmatprep.subr.mxu0 %v4715
    %v4717 = vand.u32 %v423, 4294901760
    %v4718 = vsub.f32 %v423, %v4717
    %v4719 = vand.u32 %v4718, 4294901760
    %v4720 = vsub.f32 %v4718, %v4719
    %v4721 = vand.u32 %v4720, 4294901760
    %4722 = vmatpush1.msra.mxu0 %v4721
    %v4723 = vand.u32 %v429, 4294901760
    %v4724 = vsub.f32 %v429, %v4723
    %v4725 = vand.u32 %v4724, 4294901760
    %v4726 = vsub.f32 %v4724, %v4725
    %v4727 = vand.u32 %v4726, 4294901760
    %4728 = vmatprep.subr.mxu0 %v4727
    %v4729 = vand.u32 %v428, 4294901760
    %v4730 = vsub.f32 %v428, %v4729
    %v4731 = vand.u32 %v4730, 4294901760
    %v4732 = vsub.f32 %v4730, %v4731
    %v4733 = vand.u32 %v4732, 4294901760
    %4734 = vmatpush1.msra.mxu0 %v4733
    %v4735 = vand.u32 %v434, 4294901760
    %v4736 = vsub.f32 %v434, %v4735
    %v4737 = vand.u32 %v4736, 4294901760
    %v4738 = vsub.f32 %v4736, %v4737
    %v4739 = vand.u32 %v4738, 4294901760
    %4740 = vmatprep.subr.mxu0 %v4739
    %v4741 = vand.u32 %v433, 4294901760
    %v4742 = vsub.f32 %v433, %v4741
    %v4743 = vand.u32 %v4742, 4294901760
    %v4744 = vsub.f32 %v4742, %v4743
    %v4745 = vand.u32 %v4744, 4294901760
    %4746 = vmatpush1.msra.mxu0 %v4745
    %v4747 = vand.u32 %v439, 4294901760
    %v4748 = vsub.f32 %v439, %v4747
    %v4749 = vand.u32 %v4748, 4294901760
    %v4750 = vsub.f32 %v4748, %v4749
    %v4751 = vand.u32 %v4750, 4294901760
    %4752 = vmatprep.subr.mxu0 %v4751
    %v4753 = vand.u32 %v438, 4294901760
    %v4754 = vsub.f32 %v438, %v4753
    %v4755 = vand.u32 %v4754, 4294901760
    %v4756 = vsub.f32 %v4754, %v4755
    %v4757 = vand.u32 %v4756, 4294901760
    %4758 = vmatpush1.msra.mxu0 %v4757
    %v4759 = vand.u32 %v444, 4294901760
    %v4760 = vsub.f32 %v444, %v4759
    %v4761 = vand.u32 %v4760, 4294901760
    %v4762 = vsub.f32 %v4760, %v4761
    %v4763 = vand.u32 %v4762, 4294901760
    %4764 = vmatprep.subr.mxu0 %v4763
    %v4765 = vand.u32 %v443, 4294901760
    %v4766 = vsub.f32 %v443, %v4765
    %v4767 = vand.u32 %v4766, 4294901760
    %v4768 = vsub.f32 %v4766, %v4767
    %v4769 = vand.u32 %v4768, 4294901760
    %4770 = vmatpush1.msra.mxu0 %v4769
    %v4771 = vand.u32 %v449, 4294901760
    %v4772 = vsub.f32 %v449, %v4771
    %v4773 = vand.u32 %v4772, 4294901760
    %v4774 = vsub.f32 %v4772, %v4773
    %v4775 = vand.u32 %v4774, 4294901760
    %4776 = vmatprep.subr.mxu0 %v4775
    %v4777 = vand.u32 %v448, 4294901760
    %v4778 = vsub.f32 %v448, %v4777
    %v4779 = vand.u32 %v4778, 4294901760
    %v4780 = vsub.f32 %v4778, %v4779
    %v4781 = vand.u32 %v4780, 4294901760
    %4782 = vmatpush1.msra.mxu0 %v4781
    %v4783 = vand.u32 %v454, 4294901760
    %v4784 = vsub.f32 %v454, %v4783
    %v4785 = vand.u32 %v4784, 4294901760
    %v4786 = vsub.f32 %v4784, %v4785
    %v4787 = vand.u32 %v4786, 4294901760
    %4788 = vmatprep.subr.mxu0 %v4787
    %v4789 = vand.u32 %v453, 4294901760
    %v4790 = vsub.f32 %v453, %v4789
    %v4791 = vand.u32 %v4790, 4294901760
    %v4792 = vsub.f32 %v4790, %v4791
    %v4793 = vand.u32 %v4792, 4294901760
    %4794 = vmatpush1.msra.mxu0 %v4793
    %v4795 = vand.u32 %v459, 4294901760
    %v4796 = vsub.f32 %v459, %v4795
    %v4797 = vand.u32 %v4796, 4294901760
    %v4798 = vsub.f32 %v4796, %v4797
    %v4799 = vand.u32 %v4798, 4294901760
    %4800 = vmatprep.subr.mxu0 %v4799
    %v4801 = vand.u32 %v458, 4294901760
    %v4802 = vsub.f32 %v458, %v4801
    %v4803 = vand.u32 %v4802, 4294901760
    %v4804 = vsub.f32 %v4802, %v4803
    %v4805 = vand.u32 %v4804, 4294901760
    %4806 = vmatpush1.msra.mxu0 %v4805
    %v4807 = vand.u32 %v464, 4294901760
    %v4808 = vsub.f32 %v464, %v4807
    %v4809 = vand.u32 %v4808, 4294901760
    %v4810 = vsub.f32 %v4808, %v4809
    %v4811 = vand.u32 %v4810, 4294901760
    %4812 = vmatprep.subr.mxu0 %v4811
    %v4813 = vand.u32 %v463, 4294901760
    %v4814 = vsub.f32 %v463, %v4813
    %v4815 = vand.u32 %v4814, 4294901760
    %v4816 = vsub.f32 %v4814, %v4815
    %v4817 = vand.u32 %v4816, 4294901760
    %4818 = vmatpush1.msra.mxu0 %v4817
    %v4819 = vand.u32 %v469, 4294901760
    %v4820 = vsub.f32 %v469, %v4819
    %v4821 = vand.u32 %v4820, 4294901760
    %v4822 = vsub.f32 %v4820, %v4821
    %v4823 = vand.u32 %v4822, 4294901760
    %4824 = vmatprep.subr.mxu0 %v4823
    %v4825 = vand.u32 %v468, 4294901760
    %v4826 = vsub.f32 %v468, %v4825
    %v4827 = vand.u32 %v4826, 4294901760
    %v4828 = vsub.f32 %v4826, %v4827
    %v4829 = vand.u32 %v4828, 4294901760
    %4830 = vmatpush1.msra.mxu0 %v4829
    %v4831 = vand.u32 %v474, 4294901760
    %v4832 = vsub.f32 %v474, %v4831
    %v4833 = vand.u32 %v4832, 4294901760
    %v4834 = vsub.f32 %v4832, %v4833
    %v4835 = vand.u32 %v4834, 4294901760
    %4836 = vmatprep.subr.mxu0 %v4835
    %v4837 = vand.u32 %v473, 4294901760
    %v4838 = vsub.f32 %v473, %v4837
    %v4839 = vand.u32 %v4838, 4294901760
    %v4840 = vsub.f32 %v4838, %v4839
    %v4841 = vand.u32 %v4840, 4294901760
    %4842 = vmatpush1.msra.mxu0 %v4841
    %v4843 = vand.u32 %v479, 4294901760
    %v4844 = vsub.f32 %v479, %v4843
    %v4845 = vand.u32 %v4844, 4294901760
    %v4846 = vsub.f32 %v4844, %v4845
    %v4847 = vand.u32 %v4846, 4294901760
    %4848 = vmatprep.subr.mxu0 %v4847
    %v4849 = vand.u32 %v478, 4294901760
    %v4850 = vsub.f32 %v478, %v4849
    %v4851 = vand.u32 %v4850, 4294901760
    %v4852 = vsub.f32 %v4850, %v4851
    %v4853 = vand.u32 %v4852, 4294901760
    %4854 = vmatpush1.msra.mxu0 %v4853
    %v4855 = vand.u32 %v484, 4294901760
    %v4856 = vsub.f32 %v484, %v4855
    %v4857 = vand.u32 %v4856, 4294901760
    %v4858 = vsub.f32 %v4856, %v4857
    %v4859 = vand.u32 %v4858, 4294901760
    %4860 = vmatprep.subr.mxu0 %v4859
    %v4861 = vand.u32 %v483, 4294901760
    %v4862 = vsub.f32 %v483, %v4861
    %v4863 = vand.u32 %v4862, 4294901760
    %v4864 = vsub.f32 %v4862, %v4863
    %v4865 = vand.u32 %v4864, 4294901760
    %4866 = vmatpush1.msra.mxu0 %v4865
    %v4867 = vand.u32 %v489, 4294901760
    %v4868 = vsub.f32 %v489, %v4867
    %v4869 = vand.u32 %v4868, 4294901760
    %v4870 = vsub.f32 %v4868, %v4869
    %v4871 = vand.u32 %v4870, 4294901760
    %4872 = vmatprep.subr.mxu0 %v4871
    %v4873 = vand.u32 %v488, 4294901760
    %v4874 = vsub.f32 %v488, %v4873
    %v4875 = vand.u32 %v4874, 4294901760
    %v4876 = vsub.f32 %v4874, %v4875
    %v4877 = vand.u32 %v4876, 4294901760
    %4878 = vmatpush1.msra.mxu0 %v4877
    %v4879 = vand.u32 %v494, 4294901760
    %v4880 = vsub.f32 %v494, %v4879
    %v4881 = vand.u32 %v4880, 4294901760
    %v4882 = vsub.f32 %v4880, %v4881
    %v4883 = vand.u32 %v4882, 4294901760
    %4884 = vmatprep.subr.mxu0 %v4883
    %v4885 = vand.u32 %v493, 4294901760
    %v4886 = vsub.f32 %v493, %v4885
    %v4887 = vand.u32 %v4886, 4294901760
    %v4888 = vsub.f32 %v4886, %v4887
    %v4889 = vand.u32 %v4888, 4294901760
    %4890 = vmatpush1.msra.mxu0 %v4889
    %v4891 = vand.u32 %v499, 4294901760
    %v4892 = vsub.f32 %v499, %v4891
    %v4893 = vand.u32 %v4892, 4294901760
    %v4894 = vsub.f32 %v4892, %v4893
    %v4895 = vand.u32 %v4894, 4294901760
    %4896 = vmatprep.subr.mxu0 %v4895
    %v4897 = vand.u32 %v498, 4294901760
    %v4898 = vsub.f32 %v498, %v4897
    %v4899 = vand.u32 %v4898, 4294901760
    %v4900 = vsub.f32 %v4898, %v4899
    %v4901 = vand.u32 %v4900, 4294901760
    %4902 = vmatpush1.msra.mxu0 %v4901
    %v4903 = vand.u32 %v504, 4294901760
    %v4904 = vsub.f32 %v504, %v4903
    %v4905 = vand.u32 %v4904, 4294901760
    %v4906 = vsub.f32 %v4904, %v4905
    %v4907 = vand.u32 %v4906, 4294901760
    %4908 = vmatprep.subr.mxu0 %v4907
    %v4909 = vand.u32 %v503, 4294901760
    %v4910 = vsub.f32 %v503, %v4909
    %v4911 = vand.u32 %v4910, 4294901760
    %v4912 = vsub.f32 %v4910, %v4911
    %v4913 = vand.u32 %v4912, 4294901760
    %4914 = vmatpush1.msra.mxu0 %v4913
    %v4915 = vand.u32 %v509, 4294901760
    %v4916 = vsub.f32 %v509, %v4915
    %v4917 = vand.u32 %v4916, 4294901760
    %v4918 = vsub.f32 %v4916, %v4917
    %v4919 = vand.u32 %v4918, 4294901760
    %4920 = vmatprep.subr.mxu0 %v4919
    %v4921 = vand.u32 %v508, 4294901760
    %v4922 = vsub.f32 %v508, %v4921
    %v4923 = vand.u32 %v4922, 4294901760
    %v4924 = vsub.f32 %v4922, %v4923
    %v4925 = vand.u32 %v4924, 4294901760
    %4926 = vmatpush1.msra.mxu0 %v4925
    %v4927 = vand.u32 %v514, 4294901760
    %v4928 = vsub.f32 %v514, %v4927
    %v4929 = vand.u32 %v4928, 4294901760
    %v4930 = vsub.f32 %v4928, %v4929
    %v4931 = vand.u32 %v4930, 4294901760
    %4932 = vmatprep.subr.mxu0 %v4931
    %v4933 = vand.u32 %v513, 4294901760
    %v4934 = vsub.f32 %v513, %v4933
    %v4935 = vand.u32 %v4934, 4294901760
    %v4936 = vsub.f32 %v4934, %v4935
    %v4937 = vand.u32 %v4936, 4294901760
    %4938 = vmatpush1.msra.mxu0 %v4937
    %v4939 = vand.u32 %v519, 4294901760
    %v4940 = vsub.f32 %v519, %v4939
    %v4941 = vand.u32 %v4940, 4294901760
    %v4942 = vsub.f32 %v4940, %v4941
    %v4943 = vand.u32 %v4942, 4294901760
    %4944 = vmatprep.subr.mxu0 %v4943
    %v4945 = vand.u32 %v518, 4294901760
    %v4946 = vsub.f32 %v518, %v4945
    %v4947 = vand.u32 %v4946, 4294901760
    %v4948 = vsub.f32 %v4946, %v4947
    %v4949 = vand.u32 %v4948, 4294901760
    %4950 = vmatpush1.msra.mxu0 %v4949
    %v4951 = vand.u32 %v565, 4294901760
    %4952 = vmatprep.mubr.f32.mxu0 %v4951
    %v4953 = vand.u32 %v563, 4294901760
    %4954 = vmatmul.mubr.f32.gmra.mrb[0].mxu0 %v4953
    %v4955 = vpop.f32.mrb[0].mxu0
    %v4956 = vadd.f32 %v4563, %v4955
    %v4957 = vpop.f32.mrb[0].mxu0
    %v4958 = vadd.f32 %v4565, %v4957
    %4959 = vdwg.mxu0
    %v4960 = vand.u32 %v364, 4294901760
    %v4961 = vsub.f32 %v364, %v4960
    %4962 = vmatprep.subr.mxu0 %v4961
    %v4963 = vand.u32 %v363, 4294901760
    %v4964 = vsub.f32 %v363, %v4963
    %4965 = vmatpush1.msra.mxu0 %v4964
    %v4966 = vand.u32 %v369, 4294901760
    %v4967 = vsub.f32 %v369, %v4966
    %4968 = vmatprep.subr.mxu0 %v4967
    %v4969 = vand.u32 %v368, 4294901760
    %v4970 = vsub.f32 %v368, %v4969
    %4971 = vmatpush1.msra.mxu0 %v4970
    %v4972 = vand.u32 %v374, 4294901760
    %v4973 = vsub.f32 %v374, %v4972
    %4974 = vmatprep.subr.mxu0 %v4973
    %v4975 = vand.u32 %v373, 4294901760
    %v4976 = vsub.f32 %v373, %v4975
    %4977 = vmatpush1.msra.mxu0 %v4976
    %v4978 = vand.u32 %v379, 4294901760
    %v4979 = vsub.f32 %v379, %v4978
    %4980 = vmatprep.subr.mxu0 %v4979
    %v4981 = vand.u32 %v378, 4294901760
    %v4982 = vsub.f32 %v378, %v4981
    %4983 = vmatpush1.msra.mxu0 %v4982
    %v4984 = vand.u32 %v384, 4294901760
    %v4985 = vsub.f32 %v384, %v4984
    %4986 = vmatprep.subr.mxu0 %v4985
    %v4987 = vand.u32 %v383, 4294901760
    %v4988 = vsub.f32 %v383, %v4987
    %4989 = vmatpush1.msra.mxu0 %v4988
    %v4990 = vand.u32 %v389, 4294901760
    %v4991 = vsub.f32 %v389, %v4990
    %4992 = vmatprep.subr.mxu0 %v4991
    %v4993 = vand.u32 %v388, 4294901760
    %v4994 = vsub.f32 %v388, %v4993
    %4995 = vmatpush1.msra.mxu0 %v4994
    %v4996 = vand.u32 %v394, 4294901760
    %v4997 = vsub.f32 %v394, %v4996
    %4998 = vmatprep.subr.mxu0 %v4997
    %v4999 = vand.u32 %v393, 4294901760
    %v5000 = vsub.f32 %v393, %v4999
    %5001 = vmatpush1.msra.mxu0 %v5000
    %v5002 = vand.u32 %v399, 4294901760
    %v5003 = vsub.f32 %v399, %v5002
    %5004 = vmatprep.subr.mxu0 %v5003
    %v5005 = vand.u32 %v398, 4294901760
    %v5006 = vsub.f32 %v398, %v5005
    %5007 = vmatpush1.msra.mxu0 %v5006
    %v5008 = vand.u32 %v404, 4294901760
    %v5009 = vsub.f32 %v404, %v5008
    %5010 = vmatprep.subr.mxu0 %v5009
    %v5011 = vand.u32 %v403, 4294901760
    %v5012 = vsub.f32 %v403, %v5011
    %5013 = vmatpush1.msra.mxu0 %v5012
    %v5014 = vand.u32 %v409, 4294901760
    %v5015 = vsub.f32 %v409, %v5014
    %5016 = vmatprep.subr.mxu0 %v5015
    %v5017 = vand.u32 %v408, 4294901760
    %v5018 = vsub.f32 %v408, %v5017
    %5019 = vmatpush1.msra.mxu0 %v5018
    %v5020 = vand.u32 %v414, 4294901760
    %v5021 = vsub.f32 %v414, %v5020
    %5022 = vmatprep.subr.mxu0 %v5021
    %v5023 = vand.u32 %v413, 4294901760
    %v5024 = vsub.f32 %v413, %v5023
    %5025 = vmatpush1.msra.mxu0 %v5024
    %v5026 = vand.u32 %v419, 4294901760
    %v5027 = vsub.f32 %v419, %v5026
    %5028 = vmatprep.subr.mxu0 %v5027
    %v5029 = vand.u32 %v418, 4294901760
    %v5030 = vsub.f32 %v418, %v5029
    %5031 = vmatpush1.msra.mxu0 %v5030
    %v5032 = vand.u32 %v424, 4294901760
    %v5033 = vsub.f32 %v424, %v5032
    %5034 = vmatprep.subr.mxu0 %v5033
    %v5035 = vand.u32 %v423, 4294901760
    %v5036 = vsub.f32 %v423, %v5035
    %5037 = vmatpush1.msra.mxu0 %v5036
    %v5038 = vand.u32 %v429, 4294901760
    %v5039 = vsub.f32 %v429, %v5038
    %5040 = vmatprep.subr.mxu0 %v5039
    %v5041 = vand.u32 %v428, 4294901760
    %v5042 = vsub.f32 %v428, %v5041
    %5043 = vmatpush1.msra.mxu0 %v5042
    %v5044 = vand.u32 %v434, 4294901760
    %v5045 = vsub.f32 %v434, %v5044
    %5046 = vmatprep.subr.mxu0 %v5045
    %v5047 = vand.u32 %v433, 4294901760
    %v5048 = vsub.f32 %v433, %v5047
    %5049 = vmatpush1.msra.mxu0 %v5048
    %v5050 = vand.u32 %v439, 4294901760
    %v5051 = vsub.f32 %v439, %v5050
    %5052 = vmatprep.subr.mxu0 %v5051
    %v5053 = vand.u32 %v438, 4294901760
    %v5054 = vsub.f32 %v438, %v5053
    %5055 = vmatpush1.msra.mxu0 %v5054
    %v5056 = vand.u32 %v444, 4294901760
    %v5057 = vsub.f32 %v444, %v5056
    %5058 = vmatprep.subr.mxu0 %v5057
    %v5059 = vand.u32 %v443, 4294901760
    %v5060 = vsub.f32 %v443, %v5059
    %5061 = vmatpush1.msra.mxu0 %v5060
    %v5062 = vand.u32 %v449, 4294901760
    %v5063 = vsub.f32 %v449, %v5062
    %5064 = vmatprep.subr.mxu0 %v5063
    %v5065 = vand.u32 %v448, 4294901760
    %v5066 = vsub.f32 %v448, %v5065
    %5067 = vmatpush1.msra.mxu0 %v5066
    %v5068 = vand.u32 %v454, 4294901760
    %v5069 = vsub.f32 %v454, %v5068
    %5070 = vmatprep.subr.mxu0 %v5069
    %v5071 = vand.u32 %v453, 4294901760
    %v5072 = vsub.f32 %v453, %v5071
    %5073 = vmatpush1.msra.mxu0 %v5072
    %v5074 = vand.u32 %v459, 4294901760
    %v5075 = vsub.f32 %v459, %v5074
    %5076 = vmatprep.subr.mxu0 %v5075
    %v5077 = vand.u32 %v458, 4294901760
    %v5078 = vsub.f32 %v458, %v5077
    %5079 = vmatpush1.msra.mxu0 %v5078
    %v5080 = vand.u32 %v464, 4294901760
    %v5081 = vsub.f32 %v464, %v5080
    %5082 = vmatprep.subr.mxu0 %v5081
    %v5083 = vand.u32 %v463, 4294901760
    %v5084 = vsub.f32 %v463, %v5083
    %5085 = vmatpush1.msra.mxu0 %v5084
    %v5086 = vand.u32 %v469, 4294901760
    %v5087 = vsub.f32 %v469, %v5086
    %5088 = vmatprep.subr.mxu0 %v5087
    %v5089 = vand.u32 %v468, 4294901760
    %v5090 = vsub.f32 %v468, %v5089
    %5091 = vmatpush1.msra.mxu0 %v5090
    %v5092 = vand.u32 %v474, 4294901760
    %v5093 = vsub.f32 %v474, %v5092
    %5094 = vmatprep.subr.mxu0 %v5093
    %v5095 = vand.u32 %v473, 4294901760
    %v5096 = vsub.f32 %v473, %v5095
    %5097 = vmatpush1.msra.mxu0 %v5096
    %v5098 = vand.u32 %v479, 4294901760
    %v5099 = vsub.f32 %v479, %v5098
    %5100 = vmatprep.subr.mxu0 %v5099
    %v5101 = vand.u32 %v478, 4294901760
    %v5102 = vsub.f32 %v478, %v5101
    %5103 = vmatpush1.msra.mxu0 %v5102
    %v5104 = vand.u32 %v484, 4294901760
    %v5105 = vsub.f32 %v484, %v5104
    %5106 = vmatprep.subr.mxu0 %v5105
    %v5107 = vand.u32 %v483, 4294901760
    %v5108 = vsub.f32 %v483, %v5107
    %5109 = vmatpush1.msra.mxu0 %v5108
    %v5110 = vand.u32 %v489, 4294901760
    %v5111 = vsub.f32 %v489, %v5110
    %5112 = vmatprep.subr.mxu0 %v5111
    %v5113 = vand.u32 %v488, 4294901760
    %v5114 = vsub.f32 %v488, %v5113
    %5115 = vmatpush1.msra.mxu0 %v5114
    %v5116 = vand.u32 %v494, 4294901760
    %v5117 = vsub.f32 %v494, %v5116
    %5118 = vmatprep.subr.mxu0 %v5117
    %v5119 = vand.u32 %v493, 4294901760
    %v5120 = vsub.f32 %v493, %v5119
    %5121 = vmatpush1.msra.mxu0 %v5120
    %v5122 = vand.u32 %v499, 4294901760
    %v5123 = vsub.f32 %v499, %v5122
    %5124 = vmatprep.subr.mxu0 %v5123
    %v5125 = vand.u32 %v498, 4294901760
    %v5126 = vsub.f32 %v498, %v5125
    %5127 = vmatpush1.msra.mxu0 %v5126
    %v5128 = vand.u32 %v504, 4294901760
    %v5129 = vsub.f32 %v504, %v5128
    %5130 = vmatprep.subr.mxu0 %v5129
    %v5131 = vand.u32 %v503, 4294901760
    %v5132 = vsub.f32 %v503, %v5131
    %5133 = vmatpush1.msra.mxu0 %v5132
    %v5134 = vand.u32 %v509, 4294901760
    %v5135 = vsub.f32 %v509, %v5134
    %5136 = vmatprep.subr.mxu0 %v5135
    %v5137 = vand.u32 %v508, 4294901760
    %v5138 = vsub.f32 %v508, %v5137
    %5139 = vmatpush1.msra.mxu0 %v5138
    %v5140 = vand.u32 %v514, 4294901760
    %v5141 = vsub.f32 %v514, %v5140
    %5142 = vmatprep.subr.mxu0 %v5141
    %v5143 = vand.u32 %v513, 4294901760
    %v5144 = vsub.f32 %v513, %v5143
    %5145 = vmatpush1.msra.mxu0 %v5144
    %v5146 = vand.u32 %v519, 4294901760
    %v5147 = vsub.f32 %v519, %v5146
    %5148 = vmatprep.subr.mxu0 %v5147
    %v5149 = vand.u32 %v518, 4294901760
    %v5150 = vsub.f32 %v518, %v5149
    %5151 = vmatpush1.msra.mxu0 %v5150
    %v5152 = vand.u32 %v565, 4294901760
    %v5153 = vsub.f32 %v565, %v5152
    %5154 = vmatprep.mubr.f32.mxu0 %v5153
    %v5155 = vand.u32 %v563, 4294901760
    %v5156 = vsub.f32 %v563, %v5155
    %5157 = vmatmul.mubr.f32.gmra.mrb[0].mxu0 %v5156
    %v5158 = vpop.f32.mrb[0].mxu0
    %v5159 = vadd.f32 %v4956, %v5158
    %v5160 = vpop.f32.mrb[0].mxu0
    %v5161 = vadd.f32 %v4958, %v5160
    %5162 = vdwg.mxu0
    %v5163 = vand.u32 %v364, 4294901760
    %5164 = vmatprep.subr.mxu0 %v5163
    %v5165 = vand.u32 %v363, 4294901760
    %5166 = vmatpush1.msra.mxu0 %v5165
    %v5167 = vand.u32 %v369, 4294901760
    %5168 = vmatprep.subr.mxu0 %v5167
    %v5169 = vand.u32 %v368, 4294901760
    %5170 = vmatpush1.msra.mxu0 %v5169
    %v5171 = vand.u32 %v374, 4294901760
    %5172 = vmatprep.subr.mxu0 %v5171
    %v5173 = vand.u32 %v373, 4294901760
    %5174 = vmatpush1.msra.mxu0 %v5173
    %v5175 = vand.u32 %v379, 4294901760
    %5176 = vmatprep.subr.mxu0 %v5175
    %v5177 = vand.u32 %v378, 4294901760
    %5178 = vmatpush1.msra.mxu0 %v5177
    %v5179 = vand.u32 %v384, 4294901760
    %5180 = vmatprep.subr.mxu0 %v5179
    %v5181 = vand.u32 %v383, 4294901760
    %5182 = vmatpush1.msra.mxu0 %v5181
    %v5183 = vand.u32 %v389, 4294901760
    %5184 = vmatprep.subr.mxu0 %v5183
    %v5185 = vand.u32 %v388, 4294901760
    %5186 = vmatpush1.msra.mxu0 %v5185
    %v5187 = vand.u32 %v394, 4294901760
    %5188 = vmatprep.subr.mxu0 %v5187
    %v5189 = vand.u32 %v393, 4294901760
    %5190 = vmatpush1.msra.mxu0 %v5189
    %v5191 = vand.u32 %v399, 4294901760
    %5192 = vmatprep.subr.mxu0 %v5191
    %v5193 = vand.u32 %v398, 4294901760
    %5194 = vmatpush1.msra.mxu0 %v5193
    %v5195 = vand.u32 %v404, 4294901760
    %5196 = vmatprep.subr.mxu0 %v5195
    %v5197 = vand.u32 %v403, 4294901760
    %5198 = vmatpush1.msra.mxu0 %v5197
    %v5199 = vand.u32 %v409, 4294901760
    %5200 = vmatprep.subr.mxu0 %v5199
    %v5201 = vand.u32 %v408, 4294901760
    %5202 = vmatpush1.msra.mxu0 %v5201
    %v5203 = vand.u32 %v414, 4294901760
    %5204 = vmatprep.subr.mxu0 %v5203
    %v5205 = vand.u32 %v413, 4294901760
    %5206 = vmatpush1.msra.mxu0 %v5205
    %v5207 = vand.u32 %v419, 4294901760
    %5208 = vmatprep.subr.mxu0 %v5207
    %v5209 = vand.u32 %v418, 4294901760
    %5210 = vmatpush1.msra.mxu0 %v5209
    %v5211 = vand.u32 %v424, 4294901760
    %5212 = vmatprep.subr.mxu0 %v5211
    %v5213 = vand.u32 %v423, 4294901760
    %5214 = vmatpush1.msra.mxu0 %v5213
    %v5215 = vand.u32 %v429, 4294901760
    %5216 = vmatprep.subr.mxu0 %v5215
    %v5217 = vand.u32 %v428, 4294901760
    %5218 = vmatpush1.msra.mxu0 %v5217
    %v5219 = vand.u32 %v434, 4294901760
    %5220 = vmatprep.subr.mxu0 %v5219
    %v5221 = vand.u32 %v433, 4294901760
    %5222 = vmatpush1.msra.mxu0 %v5221
    %v5223 = vand.u32 %v439, 4294901760
    %5224 = vmatprep.subr.mxu0 %v5223
    %v5225 = vand.u32 %v438, 4294901760
    %5226 = vmatpush1.msra.mxu0 %v5225
    %v5227 = vand.u32 %v444, 4294901760
    %5228 = vmatprep.subr.mxu0 %v5227
    %v5229 = vand.u32 %v443, 4294901760
    %5230 = vmatpush1.msra.mxu0 %v5229
    %v5231 = vand.u32 %v449, 4294901760
    %5232 = vmatprep.subr.mxu0 %v5231
    %v5233 = vand.u32 %v448, 4294901760
    %5234 = vmatpush1.msra.mxu0 %v5233
    %v5235 = vand.u32 %v454, 4294901760
    %5236 = vmatprep.subr.mxu0 %v5235
    %v5237 = vand.u32 %v453, 4294901760
    %5238 = vmatpush1.msra.mxu0 %v5237
    %v5239 = vand.u32 %v459, 4294901760
    %5240 = vmatprep.subr.mxu0 %v5239
    %v5241 = vand.u32 %v458, 4294901760
    %5242 = vmatpush1.msra.mxu0 %v5241
    %v5243 = vand.u32 %v464, 4294901760
    %5244 = vmatprep.subr.mxu0 %v5243
    %v5245 = vand.u32 %v463, 4294901760
    %5246 = vmatpush1.msra.mxu0 %v5245
    %v5247 = vand.u32 %v469, 4294901760
    %5248 = vmatprep.subr.mxu0 %v5247
    %v5249 = vand.u32 %v468, 4294901760
    %5250 = vmatpush1.msra.mxu0 %v5249
    %v5251 = vand.u32 %v474, 4294901760
    %5252 = vmatprep.subr.mxu0 %v5251
    %v5253 = vand.u32 %v473, 4294901760
    %5254 = vmatpush1.msra.mxu0 %v5253
    %v5255 = vand.u32 %v479, 4294901760
    %5256 = vmatprep.subr.mxu0 %v5255
    %v5257 = vand.u32 %v478, 4294901760
    %5258 = vmatpush1.msra.mxu0 %v5257
    %v5259 = vand.u32 %v484, 4294901760
    %5260 = vmatprep.subr.mxu0 %v5259
    %v5261 = vand.u32 %v483, 4294901760
    %5262 = vmatpush1.msra.mxu0 %v5261
    %v5263 = vand.u32 %v489, 4294901760
    %5264 = vmatprep.subr.mxu0 %v5263
    %v5265 = vand.u32 %v488, 4294901760
    %5266 = vmatpush1.msra.mxu0 %v5265
    %v5267 = vand.u32 %v494, 4294901760
    %5268 = vmatprep.subr.mxu0 %v5267
    %v5269 = vand.u32 %v493, 4294901760
    %5270 = vmatpush1.msra.mxu0 %v5269
    %v5271 = vand.u32 %v499, 4294901760
    %5272 = vmatprep.subr.mxu0 %v5271
    %v5273 = vand.u32 %v498, 4294901760
    %5274 = vmatpush1.msra.mxu0 %v5273
    %v5275 = vand.u32 %v504, 4294901760
    %5276 = vmatprep.subr.mxu0 %v5275
    %v5277 = vand.u32 %v503, 4294901760
    %5278 = vmatpush1.msra.mxu0 %v5277
    %v5279 = vand.u32 %v509, 4294901760
    %5280 = vmatprep.subr.mxu0 %v5279
    %v5281 = vand.u32 %v508, 4294901760
    %5282 = vmatpush1.msra.mxu0 %v5281
    %v5283 = vand.u32 %v514, 4294901760
    %5284 = vmatprep.subr.mxu0 %v5283
    %v5285 = vand.u32 %v513, 4294901760
    %5286 = vmatpush1.msra.mxu0 %v5285
    %v5287 = vand.u32 %v519, 4294901760
    %5288 = vmatprep.subr.mxu0 %v5287
    %v5289 = vand.u32 %v518, 4294901760
    %5290 = vmatpush1.msra.mxu0 %v5289
    %v5291 = vand.u32 %v565, 4294901760
    %v5292 = vsub.f32 %v565, %v5291
    %v5293 = vand.u32 %v5292, 4294901760
    %5294 = vmatprep.mubr.f32.mxu0 %v5293
    %v5295 = vand.u32 %v563, 4294901760
    %v5296 = vsub.f32 %v563, %v5295
    %v5297 = vand.u32 %v5296, 4294901760
    %5298 = vmatmul.mubr.f32.gmra.mrb[0].mxu0 %v5297
    %v5299 = vpop.f32.mrb[0].mxu0
    %v5300 = vadd.f32 %v5159, %v5299
    %v5301 = vpop.f32.mrb[0].mxu0
    %v5302 = vadd.f32 %v5161, %v5301
    %5303 = vdwg.mxu0
    %v5304 = vand.u32 %v364, 4294901760
    %v5305 = vsub.f32 %v364, %v5304
    %v5306 = vand.u32 %v5305, 4294901760
    %5307 = vmatprep.subr.mxu0 %v5306
    %v5308 = vand.u32 %v363, 4294901760
    %v5309 = vsub.f32 %v363, %v5308
    %v5310 = vand.u32 %v5309, 4294901760
    %5311 = vmatpush1.msra.mxu0 %v5310
    %v5312 = vand.u32 %v369, 4294901760
    %v5313 = vsub.f32 %v369, %v5312
    %v5314 = vand.u32 %v5313, 4294901760
    %5315 = vmatprep.subr.mxu0 %v5314
    %v5316 = vand.u32 %v368, 4294901760
    %v5317 = vsub.f32 %v368, %v5316
    %v5318 = vand.u32 %v5317, 4294901760
    %5319 = vmatpush1.msra.mxu0 %v5318
    %v5320 = vand.u32 %v374, 4294901760
    %v5321 = vsub.f32 %v374, %v5320
    %v5322 = vand.u32 %v5321, 4294901760
    %5323 = vmatprep.subr.mxu0 %v5322
    %v5324 = vand.u32 %v373, 4294901760
    %v5325 = vsub.f32 %v373, %v5324
    %v5326 = vand.u32 %v5325, 4294901760
    %5327 = vmatpush1.msra.mxu0 %v5326
    %v5328 = vand.u32 %v379, 4294901760
    %v5329 = vsub.f32 %v379, %v5328
    %v5330 = vand.u32 %v5329, 4294901760
    %5331 = vmatprep.subr.mxu0 %v5330
    %v5332 = vand.u32 %v378, 4294901760
    %v5333 = vsub.f32 %v378, %v5332
    %v5334 = vand.u32 %v5333, 4294901760
    %5335 = vmatpush1.msra.mxu0 %v5334
    %v5336 = vand.u32 %v384, 4294901760
    %v5337 = vsub.f32 %v384, %v5336
    %v5338 = vand.u32 %v5337, 4294901760
    %5339 = vmatprep.subr.mxu0 %v5338
    %v5340 = vand.u32 %v383, 4294901760
    %v5341 = vsub.f32 %v383, %v5340
    %v5342 = vand.u32 %v5341, 4294901760
    %5343 = vmatpush1.msra.mxu0 %v5342
    %v5344 = vand.u32 %v389, 4294901760
    %v5345 = vsub.f32 %v389, %v5344
    %v5346 = vand.u32 %v5345, 4294901760
    %5347 = vmatprep.subr.mxu0 %v5346
    %v5348 = vand.u32 %v388, 4294901760
    %v5349 = vsub.f32 %v388, %v5348
    %v5350 = vand.u32 %v5349, 4294901760
    %5351 = vmatpush1.msra.mxu0 %v5350
    %v5352 = vand.u32 %v394, 4294901760
    %v5353 = vsub.f32 %v394, %v5352
    %v5354 = vand.u32 %v5353, 4294901760
    %5355 = vmatprep.subr.mxu0 %v5354
    %v5356 = vand.u32 %v393, 4294901760
    %v5357 = vsub.f32 %v393, %v5356
    %v5358 = vand.u32 %v5357, 4294901760
    %5359 = vmatpush1.msra.mxu0 %v5358
    %v5360 = vand.u32 %v399, 4294901760
    %v5361 = vsub.f32 %v399, %v5360
    %v5362 = vand.u32 %v5361, 4294901760
    %5363 = vmatprep.subr.mxu0 %v5362
    %v5364 = vand.u32 %v398, 4294901760
    %v5365 = vsub.f32 %v398, %v5364
    %v5366 = vand.u32 %v5365, 4294901760
    %5367 = vmatpush1.msra.mxu0 %v5366
    %v5368 = vand.u32 %v404, 4294901760
    %v5369 = vsub.f32 %v404, %v5368
    %v5370 = vand.u32 %v5369, 4294901760
    %5371 = vmatprep.subr.mxu0 %v5370
    %v5372 = vand.u32 %v403, 4294901760
    %v5373 = vsub.f32 %v403, %v5372
    %v5374 = vand.u32 %v5373, 4294901760
    %5375 = vmatpush1.msra.mxu0 %v5374
    %v5376 = vand.u32 %v409, 4294901760
    %v5377 = vsub.f32 %v409, %v5376
    %v5378 = vand.u32 %v5377, 4294901760
    %5379 = vmatprep.subr.mxu0 %v5378
    %v5380 = vand.u32 %v408, 4294901760
    %v5381 = vsub.f32 %v408, %v5380
    %v5382 = vand.u32 %v5381, 4294901760
    %5383 = vmatpush1.msra.mxu0 %v5382
    %v5384 = vand.u32 %v414, 4294901760
    %v5385 = vsub.f32 %v414, %v5384
    %v5386 = vand.u32 %v5385, 4294901760
    %5387 = vmatprep.subr.mxu0 %v5386
    %v5388 = vand.u32 %v413, 4294901760
    %v5389 = vsub.f32 %v413, %v5388
    %v5390 = vand.u32 %v5389, 4294901760
    %5391 = vmatpush1.msra.mxu0 %v5390
    %v5392 = vand.u32 %v419, 4294901760
    %v5393 = vsub.f32 %v419, %v5392
    %v5394 = vand.u32 %v5393, 4294901760
    %5395 = vmatprep.subr.mxu0 %v5394
    %v5396 = vand.u32 %v418, 4294901760
    %v5397 = vsub.f32 %v418, %v5396
    %v5398 = vand.u32 %v5397, 4294901760
    %5399 = vmatpush1.msra.mxu0 %v5398
    %v5400 = vand.u32 %v424, 4294901760
    %v5401 = vsub.f32 %v424, %v5400
    %v5402 = vand.u32 %v5401, 4294901760
    %5403 = vmatprep.subr.mxu0 %v5402
    %v5404 = vand.u32 %v423, 4294901760
    %v5405 = vsub.f32 %v423, %v5404
    %v5406 = vand.u32 %v5405, 4294901760
    %5407 = vmatpush1.msra.mxu0 %v5406
    %v5408 = vand.u32 %v429, 4294901760
    %v5409 = vsub.f32 %v429, %v5408
    %v5410 = vand.u32 %v5409, 4294901760
    %5411 = vmatprep.subr.mxu0 %v5410
    %v5412 = vand.u32 %v428, 4294901760
    %v5413 = vsub.f32 %v428, %v5412
    %v5414 = vand.u32 %v5413, 4294901760
    %5415 = vmatpush1.msra.mxu0 %v5414
    %v5416 = vand.u32 %v434, 4294901760
    %v5417 = vsub.f32 %v434, %v5416
    %v5418 = vand.u32 %v5417, 4294901760
    %5419 = vmatprep.subr.mxu0 %v5418
    %v5420 = vand.u32 %v433, 4294901760
    %v5421 = vsub.f32 %v433, %v5420
    %v5422 = vand.u32 %v5421, 4294901760
    %5423 = vmatpush1.msra.mxu0 %v5422
    %v5424 = vand.u32 %v439, 4294901760
    %v5425 = vsub.f32 %v439, %v5424
    %v5426 = vand.u32 %v5425, 4294901760
    %5427 = vmatprep.subr.mxu0 %v5426
    %v5428 = vand.u32 %v438, 4294901760
    %v5429 = vsub.f32 %v438, %v5428
    %v5430 = vand.u32 %v5429, 4294901760
    %5431 = vmatpush1.msra.mxu0 %v5430
    %v5432 = vand.u32 %v444, 4294901760
    %v5433 = vsub.f32 %v444, %v5432
    %v5434 = vand.u32 %v5433, 4294901760
    %5435 = vmatprep.subr.mxu0 %v5434
    %v5436 = vand.u32 %v443, 4294901760
    %v5437 = vsub.f32 %v443, %v5436
    %v5438 = vand.u32 %v5437, 4294901760
    %5439 = vmatpush1.msra.mxu0 %v5438
    %v5440 = vand.u32 %v449, 4294901760
    %v5441 = vsub.f32 %v449, %v5440
    %v5442 = vand.u32 %v5441, 4294901760
    %5443 = vmatprep.subr.mxu0 %v5442
    %v5444 = vand.u32 %v448, 4294901760
    %v5445 = vsub.f32 %v448, %v5444
    %v5446 = vand.u32 %v5445, 4294901760
    %5447 = vmatpush1.msra.mxu0 %v5446
    %v5448 = vand.u32 %v454, 4294901760
    %v5449 = vsub.f32 %v454, %v5448
    %v5450 = vand.u32 %v5449, 4294901760
    %5451 = vmatprep.subr.mxu0 %v5450
    %v5452 = vand.u32 %v453, 4294901760
    %v5453 = vsub.f32 %v453, %v5452
    %v5454 = vand.u32 %v5453, 4294901760
    %5455 = vmatpush1.msra.mxu0 %v5454
    %v5456 = vand.u32 %v459, 4294901760
    %v5457 = vsub.f32 %v459, %v5456
    %v5458 = vand.u32 %v5457, 4294901760
    %5459 = vmatprep.subr.mxu0 %v5458
    %v5460 = vand.u32 %v458, 4294901760
    %v5461 = vsub.f32 %v458, %v5460
    %v5462 = vand.u32 %v5461, 4294901760
    %5463 = vmatpush1.msra.mxu0 %v5462
    %v5464 = vand.u32 %v464, 4294901760
    %v5465 = vsub.f32 %v464, %v5464
    %v5466 = vand.u32 %v5465, 4294901760
    %5467 = vmatprep.subr.mxu0 %v5466
    %v5468 = vand.u32 %v463, 4294901760
    %v5469 = vsub.f32 %v463, %v5468
    %v5470 = vand.u32 %v5469, 4294901760
    %5471 = vmatpush1.msra.mxu0 %v5470
    %v5472 = vand.u32 %v469, 4294901760
    %v5473 = vsub.f32 %v469, %v5472
    %v5474 = vand.u32 %v5473, 4294901760
    %5475 = vmatprep.subr.mxu0 %v5474
    %v5476 = vand.u32 %v468, 4294901760
    %v5477 = vsub.f32 %v468, %v5476
    %v5478 = vand.u32 %v5477, 4294901760
    %5479 = vmatpush1.msra.mxu0 %v5478
    %v5480 = vand.u32 %v474, 4294901760
    %v5481 = vsub.f32 %v474, %v5480
    %v5482 = vand.u32 %v5481, 4294901760
    %5483 = vmatprep.subr.mxu0 %v5482
    %v5484 = vand.u32 %v473, 4294901760
    %v5485 = vsub.f32 %v473, %v5484
    %v5486 = vand.u32 %v5485, 4294901760
    %5487 = vmatpush1.msra.mxu0 %v5486
    %v5488 = vand.u32 %v479, 4294901760
    %v5489 = vsub.f32 %v479, %v5488
    %v5490 = vand.u32 %v5489, 4294901760
    %5491 = vmatprep.subr.mxu0 %v5490
    %v5492 = vand.u32 %v478, 4294901760
    %v5493 = vsub.f32 %v478, %v5492
    %v5494 = vand.u32 %v5493, 4294901760
    %5495 = vmatpush1.msra.mxu0 %v5494
    %v5496 = vand.u32 %v484, 4294901760
    %v5497 = vsub.f32 %v484, %v5496
    %v5498 = vand.u32 %v5497, 4294901760
    %5499 = vmatprep.subr.mxu0 %v5498
    %v5500 = vand.u32 %v483, 4294901760
    %v5501 = vsub.f32 %v483, %v5500
    %v5502 = vand.u32 %v5501, 4294901760
    %5503 = vmatpush1.msra.mxu0 %v5502
    %v5504 = vand.u32 %v489, 4294901760
    %v5505 = vsub.f32 %v489, %v5504
    %v5506 = vand.u32 %v5505, 4294901760
    %5507 = vmatprep.subr.mxu0 %v5506
    %v5508 = vand.u32 %v488, 4294901760
    %v5509 = vsub.f32 %v488, %v5508
    %v5510 = vand.u32 %v5509, 4294901760
    %5511 = vmatpush1.msra.mxu0 %v5510
    %v5512 = vand.u32 %v494, 4294901760
    %v5513 = vsub.f32 %v494, %v5512
    %v5514 = vand.u32 %v5513, 4294901760
    %5515 = vmatprep.subr.mxu0 %v5514
    %v5516 = vand.u32 %v493, 4294901760
    %v5517 = vsub.f32 %v493, %v5516
    %v5518 = vand.u32 %v5517, 4294901760
    %5519 = vmatpush1.msra.mxu0 %v5518
    %v5520 = vand.u32 %v499, 4294901760
    %v5521 = vsub.f32 %v499, %v5520
    %v5522 = vand.u32 %v5521, 4294901760
    %5523 = vmatprep.subr.mxu0 %v5522
    %v5524 = vand.u32 %v498, 4294901760
    %v5525 = vsub.f32 %v498, %v5524
    %v5526 = vand.u32 %v5525, 4294901760
    %5527 = vmatpush1.msra.mxu0 %v5526
    %v5528 = vand.u32 %v504, 4294901760
    %v5529 = vsub.f32 %v504, %v5528
    %v5530 = vand.u32 %v5529, 4294901760
    %5531 = vmatprep.subr.mxu0 %v5530
    %v5532 = vand.u32 %v503, 4294901760
    %v5533 = vsub.f32 %v503, %v5532
    %v5534 = vand.u32 %v5533, 4294901760
    %5535 = vmatpush1.msra.mxu0 %v5534
    %v5536 = vand.u32 %v509, 4294901760
    %v5537 = vsub.f32 %v509, %v5536
    %v5538 = vand.u32 %v5537, 4294901760
    %5539 = vmatprep.subr.mxu0 %v5538
    %v5540 = vand.u32 %v508, 4294901760
    %v5541 = vsub.f32 %v508, %v5540
    %v5542 = vand.u32 %v5541, 4294901760
    %5543 = vmatpush1.msra.mxu0 %v5542
    %v5544 = vand.u32 %v514, 4294901760
    %v5545 = vsub.f32 %v514, %v5544
    %v5546 = vand.u32 %v5545, 4294901760
    %5547 = vmatprep.subr.mxu0 %v5546
    %v5548 = vand.u32 %v513, 4294901760
    %v5549 = vsub.f32 %v513, %v5548
    %v5550 = vand.u32 %v5549, 4294901760
    %5551 = vmatpush1.msra.mxu0 %v5550
    %v5552 = vand.u32 %v519, 4294901760
    %v5553 = vsub.f32 %v519, %v5552
    %v5554 = vand.u32 %v5553, 4294901760
    %5555 = vmatprep.subr.mxu0 %v5554
    %v5556 = vand.u32 %v518, 4294901760
    %v5557 = vsub.f32 %v518, %v5556
    %v5558 = vand.u32 %v5557, 4294901760
    %5559 = vmatpush1.msra.mxu0 %v5558
    %v5560 = vand.u32 %v565, 4294901760
    %5561 = vmatprep.mubr.f32.mxu0 %v5560
    %v5562 = vand.u32 %v563, 4294901760
    %5563 = vmatmul.mubr.f32.gmra.mrb[0].mxu0 %v5562
    %v5564 = vpop.f32.mrb[0].mxu0
    %v5565 = vadd.f32 %v5300, %v5564
    %v5566 = vpop.f32.mrb[0].mxu0
    %v5567 = vadd.f32 %v5302, %v5566
    %5568 = vdwg.mxu0
    %v5569 = vand.u32 %v364, 4294901760
    %5570 = vmatprep.subr.mxu0 %v5569
    %v5571 = vand.u32 %v363, 4294901760
    %5572 = vmatpush1.msra.mxu0 %v5571
    %v5573 = vand.u32 %v369, 4294901760
    %5574 = vmatprep.subr.mxu0 %v5573
    %v5575 = vand.u32 %v368, 4294901760
    %5576 = vmatpush1.msra.mxu0 %v5575
    %v5577 = vand.u32 %v374, 4294901760
    %5578 = vmatprep.subr.mxu0 %v5577
    %v5579 = vand.u32 %v373, 4294901760
    %5580 = vmatpush1.msra.mxu0 %v5579
    %v5581 = vand.u32 %v379, 4294901760
    %5582 = vmatprep.subr.mxu0 %v5581
    %v5583 = vand.u32 %v378, 4294901760
    %5584 = vmatpush1.msra.mxu0 %v5583
    %v5585 = vand.u32 %v384, 4294901760
    %5586 = vmatprep.subr.mxu0 %v5585
    %v5587 = vand.u32 %v383, 4294901760
    %5588 = vmatpush1.msra.mxu0 %v5587
    %v5589 = vand.u32 %v389, 4294901760
    %5590 = vmatprep.subr.mxu0 %v5589
    %v5591 = vand.u32 %v388, 4294901760
    %5592 = vmatpush1.msra.mxu0 %v5591
    %v5593 = vand.u32 %v394, 4294901760
    %5594 = vmatprep.subr.mxu0 %v5593
    %v5595 = vand.u32 %v393, 4294901760
    %5596 = vmatpush1.msra.mxu0 %v5595
    %v5597 = vand.u32 %v399, 4294901760
    %5598 = vmatprep.subr.mxu0 %v5597
    %v5599 = vand.u32 %v398, 4294901760
    %5600 = vmatpush1.msra.mxu0 %v5599
    %v5601 = vand.u32 %v404, 4294901760
    %5602 = vmatprep.subr.mxu0 %v5601
    %v5603 = vand.u32 %v403, 4294901760
    %5604 = vmatpush1.msra.mxu0 %v5603
    %v5605 = vand.u32 %v409, 4294901760
    %5606 = vmatprep.subr.mxu0 %v5605
    %v5607 = vand.u32 %v408, 4294901760
    %5608 = vmatpush1.msra.mxu0 %v5607
    %v5609 = vand.u32 %v414, 4294901760
    %5610 = vmatprep.subr.mxu0 %v5609
    %v5611 = vand.u32 %v413, 4294901760
    %5612 = vmatpush1.msra.mxu0 %v5611
    %v5613 = vand.u32 %v419, 4294901760
    %5614 = vmatprep.subr.mxu0 %v5613
    %v5615 = vand.u32 %v418, 4294901760
    %5616 = vmatpush1.msra.mxu0 %v5615
    %v5617 = vand.u32 %v424, 4294901760
    %5618 = vmatprep.subr.mxu0 %v5617
    %v5619 = vand.u32 %v423, 4294901760
    %5620 = vmatpush1.msra.mxu0 %v5619
    %v5621 = vand.u32 %v429, 4294901760
    %5622 = vmatprep.subr.mxu0 %v5621
    %v5623 = vand.u32 %v428, 4294901760
    %5624 = vmatpush1.msra.mxu0 %v5623
    %v5625 = vand.u32 %v434, 4294901760
    %5626 = vmatprep.subr.mxu0 %v5625
    %v5627 = vand.u32 %v433, 4294901760
    %5628 = vmatpush1.msra.mxu0 %v5627
    %v5629 = vand.u32 %v439, 4294901760
    %5630 = vmatprep.subr.mxu0 %v5629
    %v5631 = vand.u32 %v438, 4294901760
    %5632 = vmatpush1.msra.mxu0 %v5631
    %v5633 = vand.u32 %v444, 4294901760
    %5634 = vmatprep.subr.mxu0 %v5633
    %v5635 = vand.u32 %v443, 4294901760
    %5636 = vmatpush1.msra.mxu0 %v5635
    %v5637 = vand.u32 %v449, 4294901760
    %5638 = vmatprep.subr.mxu0 %v5637
    %v5639 = vand.u32 %v448, 4294901760
    %5640 = vmatpush1.msra.mxu0 %v5639
    %v5641 = vand.u32 %v454, 4294901760
    %5642 = vmatprep.subr.mxu0 %v5641
    %v5643 = vand.u32 %v453, 4294901760
    %5644 = vmatpush1.msra.mxu0 %v5643
    %v5645 = vand.u32 %v459, 4294901760
    %5646 = vmatprep.subr.mxu0 %v5645
    %v5647 = vand.u32 %v458, 4294901760
    %5648 = vmatpush1.msra.mxu0 %v5647
    %v5649 = vand.u32 %v464, 4294901760
    %5650 = vmatprep.subr.mxu0 %v5649
    %v5651 = vand.u32 %v463, 4294901760
    %5652 = vmatpush1.msra.mxu0 %v5651
    %v5653 = vand.u32 %v469, 4294901760
    %5654 = vmatprep.subr.mxu0 %v5653
    %v5655 = vand.u32 %v468, 4294901760
    %5656 = vmatpush1.msra.mxu0 %v5655
    %v5657 = vand.u32 %v474, 4294901760
    %5658 = vmatprep.subr.mxu0 %v5657
    %v5659 = vand.u32 %v473, 4294901760
    %5660 = vmatpush1.msra.mxu0 %v5659
    %v5661 = vand.u32 %v479, 4294901760
    %5662 = vmatprep.subr.mxu0 %v5661
    %v5663 = vand.u32 %v478, 4294901760
    %5664 = vmatpush1.msra.mxu0 %v5663
    %v5665 = vand.u32 %v484, 4294901760
    %5666 = vmatprep.subr.mxu0 %v5665
    %v5667 = vand.u32 %v483, 4294901760
    %5668 = vmatpush1.msra.mxu0 %v5667
    %v5669 = vand.u32 %v489, 4294901760
    %5670 = vmatprep.subr.mxu0 %v5669
    %v5671 = vand.u32 %v488, 4294901760
    %5672 = vmatpush1.msra.mxu0 %v5671
    %v5673 = vand.u32 %v494, 4294901760
    %5674 = vmatprep.subr.mxu0 %v5673
    %v5675 = vand.u32 %v493, 4294901760
    %5676 = vmatpush1.msra.mxu0 %v5675
    %v5677 = vand.u32 %v499, 4294901760
    %5678 = vmatprep.subr.mxu0 %v5677
    %v5679 = vand.u32 %v498, 4294901760
    %5680 = vmatpush1.msra.mxu0 %v5679
    %v5681 = vand.u32 %v504, 4294901760
    %5682 = vmatprep.subr.mxu0 %v5681
    %v5683 = vand.u32 %v503, 4294901760
    %5684 = vmatpush1.msra.mxu0 %v5683
    %v5685 = vand.u32 %v509, 4294901760
    %5686 = vmatprep.subr.mxu0 %v5685
    %v5687 = vand.u32 %v508, 4294901760
    %5688 = vmatpush1.msra.mxu0 %v5687
    %v5689 = vand.u32 %v514, 4294901760
    %5690 = vmatprep.subr.mxu0 %v5689
    %v5691 = vand.u32 %v513, 4294901760
    %5692 = vmatpush1.msra.mxu0 %v5691
    %v5693 = vand.u32 %v519, 4294901760
    %5694 = vmatprep.subr.mxu0 %v5693
    %v5695 = vand.u32 %v518, 4294901760
    %5696 = vmatpush1.msra.mxu0 %v5695
    %v5697 = vand.u32 %v565, 4294901760
    %5698 = vmatprep.mubr.f32.mxu0 %v5697
    %v5699 = vand.u32 %v563, 4294901760
    %5700 = vmatmul.mubr.f32.gmra.mrb[0].mxu0 %v5699
    %v5701 = vpop.f32.mrb[0].mxu0
    %v5702 = vadd.f32 %v5565, %v5701
    %v5703 = vpop.f32.mrb[0].mxu0
    %v5704 = vadd.f32 %v5567, %v5703
    %5705 = vdwg.mxu0
    %5706 = vmatprep.subr.mxu0 0.0
    %v5707 = vand.u32 %v205, 4294901760
    %5708 = vmatpush1.msra.mxu0 %v5707
    %5709 = vmatprep.subr.mxu0 0.0
    %v5710 = vand.u32 %v210, 4294901760
    %5711 = vmatpush1.msra.mxu0 %v5710
    %5712 = vmatprep.subr.mxu0 0.0
    %v5713 = vand.u32 %v215, 4294901760
    %5714 = vmatpush1.msra.mxu0 %v5713
    %5715 = vmatprep.subr.mxu0 0.0
    %v5716 = vand.u32 %v220, 4294901760
    %5717 = vmatpush1.msra.mxu0 %v5716
    %5718 = vmatprep.subr.mxu0 0.0
    %v5719 = vand.u32 %v225, 4294901760
    %5720 = vmatpush1.msra.mxu0 %v5719
    %5721 = vmatprep.subr.mxu0 0.0
    %v5722 = vand.u32 %v230, 4294901760
    %5723 = vmatpush1.msra.mxu0 %v5722
    %5724 = vmatprep.subr.mxu0 0.0
    %v5725 = vand.u32 %v235, 4294901760
    %5726 = vmatpush1.msra.mxu0 %v5725
    %5727 = vmatprep.subr.mxu0 0.0
    %v5728 = vand.u32 %v240, 4294901760
    %5729 = vmatpush1.msra.mxu0 %v5728
    %5730 = vmatprep.subr.mxu0 0.0
    %v5731 = vand.u32 %v245, 4294901760
    %5732 = vmatpush1.msra.mxu0 %v5731
    %5733 = vmatprep.subr.mxu0 0.0
    %v5734 = vand.u32 %v250, 4294901760
    %5735 = vmatpush1.msra.mxu0 %v5734
    %5736 = vmatprep.subr.mxu0 0.0
    %v5737 = vand.u32 %v255, 4294901760
    %5738 = vmatpush1.msra.mxu0 %v5737
    %5739 = vmatprep.subr.mxu0 0.0
    %v5740 = vand.u32 %v260, 4294901760
    %5741 = vmatpush1.msra.mxu0 %v5740
    %5742 = vmatprep.subr.mxu0 0.0
    %v5743 = vand.u32 %v265, 4294901760
    %5744 = vmatpush1.msra.mxu0 %v5743
    %5745 = vmatprep.subr.mxu0 0.0
    %v5746 = vand.u32 %v270, 4294901760
    %5747 = vmatpush1.msra.mxu0 %v5746
    %5748 = vmatprep.subr.mxu0 0.0
    %v5749 = vand.u32 %v275, 4294901760
    %5750 = vmatpush1.msra.mxu0 %v5749
    %5751 = vmatprep.subr.mxu0 0.0
    %v5752 = vand.u32 %v280, 4294901760
    %5753 = vmatpush1.msra.mxu0 %v5752
    %5754 = vmatprep.subr.mxu0 0.0
    %v5755 = vand.u32 %v285, 4294901760
    %5756 = vmatpush1.msra.mxu0 %v5755
    %5757 = vmatprep.subr.mxu0 0.0
    %v5758 = vand.u32 %v290, 4294901760
    %5759 = vmatpush1.msra.mxu0 %v5758
    %5760 = vmatprep.subr.mxu0 0.0
    %v5761 = vand.u32 %v295, 4294901760
    %5762 = vmatpush1.msra.mxu0 %v5761
    %5763 = vmatprep.subr.mxu0 0.0
    %v5764 = vand.u32 %v300, 4294901760
    %5765 = vmatpush1.msra.mxu0 %v5764
    %5766 = vmatprep.subr.mxu0 0.0
    %v5767 = vand.u32 %v305, 4294901760
    %5768 = vmatpush1.msra.mxu0 %v5767
    %5769 = vmatprep.subr.mxu0 0.0
    %v5770 = vand.u32 %v310, 4294901760
    %5771 = vmatpush1.msra.mxu0 %v5770
    %5772 = vmatprep.subr.mxu0 0.0
    %v5773 = vand.u32 %v315, 4294901760
    %5774 = vmatpush1.msra.mxu0 %v5773
    %5775 = vmatprep.subr.mxu0 0.0
    %v5776 = vand.u32 %v320, 4294901760
    %5777 = vmatpush1.msra.mxu0 %v5776
    %5778 = vmatprep.subr.mxu0 0.0
    %v5779 = vand.u32 %v325, 4294901760
    %5780 = vmatpush1.msra.mxu0 %v5779
    %5781 = vmatprep.subr.mxu0 0.0
    %v5782 = vand.u32 %v330, 4294901760
    %5783 = vmatpush1.msra.mxu0 %v5782
    %5784 = vmatprep.subr.mxu0 0.0
    %v5785 = vand.u32 %v335, 4294901760
    %5786 = vmatpush1.msra.mxu0 %v5785
    %5787 = vmatprep.subr.mxu0 0.0
    %v5788 = vand.u32 %v340, 4294901760
    %5789 = vmatpush1.msra.mxu0 %v5788
    %5790 = vmatprep.subr.mxu0 0.0
    %v5791 = vand.u32 %v345, 4294901760
    %5792 = vmatpush1.msra.mxu0 %v5791
    %5793 = vmatprep.subr.mxu0 0.0
    %v5794 = vand.u32 %v350, 4294901760
    %5795 = vmatpush1.msra.mxu0 %v5794
    %5796 = vmatprep.subr.mxu0 0.0
    %v5797 = vand.u32 %v355, 4294901760
    %5798 = vmatpush1.msra.mxu0 %v5797
    %5799 = vmatprep.subr.mxu0 0.0
    %v5800 = vand.u32 %v360, 4294901760
    %5801 = vmatpush1.msra.mxu0 %v5800
    %v5802 = vand.u32 %v564, 4294901760
    %v5803 = vsub.f32 %v564, %v5802
    %v5804 = vand.u32 %v5803, 4294901760
    %v5805 = vsub.f32 %v5803, %v5804
    %v5806 = vand.u32 %v5805, 4294901760
    %5807 = vmatprep.mubr.f32.mxu0 %v5806
    %v5808 = vand.u32 %v556, 4294901760
    %v5809 = vsub.f32 %v556, %v5808
    %v5810 = vand.u32 %v5809, 4294901760
    %v5811 = vsub.f32 %v5809, %v5810
    %v5812 = vand.u32 %v5811, 4294901760
    %5813 = vmatmul.mubr.f32.gmra.mrb[0].mxu0 %v5812
    %v5814 = vpop.f32.mrb[0].mxu0
    %v5815 = vadd.f32 %v542, %v5814
    %v5816 = vpop.f32.mrb[0].mxu0
    %5817 = vdwg.mxu0
    %5818 = vmatprep.subr.mxu0 0.0
    %v5819 = vand.u32 %v205, 4294901760
    %v5820 = vsub.f32 %v205, %v5819
    %v5821 = vand.u32 %v5820, 4294901760
    %v5822 = vsub.f32 %v5820, %v5821
    %v5823 = vand.u32 %v5822, 4294901760
    %5824 = vmatpush1.msra.mxu0 %v5823
    %5825 = vmatprep.subr.mxu0 0.0
    %v5826 = vand.u32 %v210, 4294901760
    %v5827 = vsub.f32 %v210, %v5826
    %v5828 = vand.u32 %v5827, 4294901760
    %v5829 = vsub.f32 %v5827, %v5828
    %v5830 = vand.u32 %v5829, 4294901760
    %5831 = vmatpush1.msra.mxu0 %v5830
    %5832 = vmatprep.subr.mxu0 0.0
    %v5833 = vand.u32 %v215, 4294901760
    %v5834 = vsub.f32 %v215, %v5833
    %v5835 = vand.u32 %v5834, 4294901760
    %v5836 = vsub.f32 %v5834, %v5835
    %v5837 = vand.u32 %v5836, 4294901760
    %5838 = vmatpush1.msra.mxu0 %v5837
    %5839 = vmatprep.subr.mxu0 0.0
    %v5840 = vand.u32 %v220, 4294901760
    %v5841 = vsub.f32 %v220, %v5840
    %v5842 = vand.u32 %v5841, 4294901760
    %v5843 = vsub.f32 %v5841, %v5842
    %v5844 = vand.u32 %v5843, 4294901760
    %5845 = vmatpush1.msra.mxu0 %v5844
    %5846 = vmatprep.subr.mxu0 0.0
    %v5847 = vand.u32 %v225, 4294901760
    %v5848 = vsub.f32 %v225, %v5847
    %v5849 = vand.u32 %v5848, 4294901760
    %v5850 = vsub.f32 %v5848, %v5849
    %v5851 = vand.u32 %v5850, 4294901760
    %5852 = vmatpush1.msra.mxu0 %v5851
    %5853 = vmatprep.subr.mxu0 0.0
    %v5854 = vand.u32 %v230, 4294901760
    %v5855 = vsub.f32 %v230, %v5854
    %v5856 = vand.u32 %v5855, 4294901760
    %v5857 = vsub.f32 %v5855, %v5856
    %v5858 = vand.u32 %v5857, 4294901760
    %5859 = vmatpush1.msra.mxu0 %v5858
    %5860 = vmatprep.subr.mxu0 0.0
    %v5861 = vand.u32 %v235, 4294901760
    %v5862 = vsub.f32 %v235, %v5861
    %v5863 = vand.u32 %v5862, 4294901760
    %v5864 = vsub.f32 %v5862, %v5863
    %v5865 = vand.u32 %v5864, 4294901760
    %5866 = vmatpush1.msra.mxu0 %v5865
    %5867 = vmatprep.subr.mxu0 0.0
    %v5868 = vand.u32 %v240, 4294901760
    %v5869 = vsub.f32 %v240, %v5868
    %v5870 = vand.u32 %v5869, 4294901760
    %v5871 = vsub.f32 %v5869, %v5870
    %v5872 = vand.u32 %v5871, 4294901760
    %5873 = vmatpush1.msra.mxu0 %v5872
    %5874 = vmatprep.subr.mxu0 0.0
    %v5875 = vand.u32 %v245, 4294901760
    %v5876 = vsub.f32 %v245, %v5875
    %v5877 = vand.u32 %v5876, 4294901760
    %v5878 = vsub.f32 %v5876, %v5877
    %v5879 = vand.u32 %v5878, 4294901760
    %5880 = vmatpush1.msra.mxu0 %v5879
    %5881 = vmatprep.subr.mxu0 0.0
    %v5882 = vand.u32 %v250, 4294901760
    %v5883 = vsub.f32 %v250, %v5882
    %v5884 = vand.u32 %v5883, 4294901760
    %v5885 = vsub.f32 %v5883, %v5884
    %v5886 = vand.u32 %v5885, 4294901760
    %5887 = vmatpush1.msra.mxu0 %v5886
    %5888 = vmatprep.subr.mxu0 0.0
    %v5889 = vand.u32 %v255, 4294901760
    %v5890 = vsub.f32 %v255, %v5889
    %v5891 = vand.u32 %v5890, 4294901760
    %v5892 = vsub.f32 %v5890, %v5891
    %v5893 = vand.u32 %v5892, 4294901760
    %5894 = vmatpush1.msra.mxu0 %v5893
    %5895 = vmatprep.subr.mxu0 0.0
    %v5896 = vand.u32 %v260, 4294901760
    %v5897 = vsub.f32 %v260, %v5896
    %v5898 = vand.u32 %v5897, 4294901760
    %v5899 = vsub.f32 %v5897, %v5898
    %v5900 = vand.u32 %v5899, 4294901760
    %5901 = vmatpush1.msra.mxu0 %v5900
    %5902 = vmatprep.subr.mxu0 0.0
    %v5903 = vand.u32 %v265, 4294901760
    %v5904 = vsub.f32 %v265, %v5903
    %v5905 = vand.u32 %v5904, 4294901760
    %v5906 = vsub.f32 %v5904, %v5905
    %v5907 = vand.u32 %v5906, 4294901760
    %5908 = vmatpush1.msra.mxu0 %v5907
    %5909 = vmatprep.subr.mxu0 0.0
    %v5910 = vand.u32 %v270, 4294901760
    %v5911 = vsub.f32 %v270, %v5910
    %v5912 = vand.u32 %v5911, 4294901760
    %v5913 = vsub.f32 %v5911, %v5912
    %v5914 = vand.u32 %v5913, 4294901760
    %5915 = vmatpush1.msra.mxu0 %v5914
    %5916 = vmatprep.subr.mxu0 0.0
    %v5917 = vand.u32 %v275, 4294901760
    %v5918 = vsub.f32 %v275, %v5917
    %v5919 = vand.u32 %v5918, 4294901760
    %v5920 = vsub.f32 %v5918, %v5919
    %v5921 = vand.u32 %v5920, 4294901760
    %5922 = vmatpush1.msra.mxu0 %v5921
    %5923 = vmatprep.subr.mxu0 0.0
    %v5924 = vand.u32 %v280, 4294901760
    %v5925 = vsub.f32 %v280, %v5924
    %v5926 = vand.u32 %v5925, 4294901760
    %v5927 = vsub.f32 %v5925, %v5926
    %v5928 = vand.u32 %v5927, 4294901760
    %5929 = vmatpush1.msra.mxu0 %v5928
    %5930 = vmatprep.subr.mxu0 0.0
    %v5931 = vand.u32 %v285, 4294901760
    %v5932 = vsub.f32 %v285, %v5931
    %v5933 = vand.u32 %v5932, 4294901760
    %v5934 = vsub.f32 %v5932, %v5933
    %v5935 = vand.u32 %v5934, 4294901760
    %5936 = vmatpush1.msra.mxu0 %v5935
    %5937 = vmatprep.subr.mxu0 0.0
    %v5938 = vand.u32 %v290, 4294901760
    %v5939 = vsub.f32 %v290, %v5938
    %v5940 = vand.u32 %v5939, 4294901760
    %v5941 = vsub.f32 %v5939, %v5940
    %v5942 = vand.u32 %v5941, 4294901760
    %5943 = vmatpush1.msra.mxu0 %v5942
    %5944 = vmatprep.subr.mxu0 0.0
    %v5945 = vand.u32 %v295, 4294901760
    %v5946 = vsub.f32 %v295, %v5945
    %v5947 = vand.u32 %v5946, 4294901760
    %v5948 = vsub.f32 %v5946, %v5947
    %v5949 = vand.u32 %v5948, 4294901760
    %5950 = vmatpush1.msra.mxu0 %v5949
    %5951 = vmatprep.subr.mxu0 0.0
    %v5952 = vand.u32 %v300, 4294901760
    %v5953 = vsub.f32 %v300, %v5952
    %v5954 = vand.u32 %v5953, 4294901760
    %v5955 = vsub.f32 %v5953, %v5954
    %v5956 = vand.u32 %v5955, 4294901760
    %5957 = vmatpush1.msra.mxu0 %v5956
    %5958 = vmatprep.subr.mxu0 0.0
    %v5959 = vand.u32 %v305, 4294901760
    %v5960 = vsub.f32 %v305, %v5959
    %v5961 = vand.u32 %v5960, 4294901760
    %v5962 = vsub.f32 %v5960, %v5961
    %v5963 = vand.u32 %v5962, 4294901760
    %5964 = vmatpush1.msra.mxu0 %v5963
    %5965 = vmatprep.subr.mxu0 0.0
    %v5966 = vand.u32 %v310, 4294901760
    %v5967 = vsub.f32 %v310, %v5966
    %v5968 = vand.u32 %v5967, 4294901760
    %v5969 = vsub.f32 %v5967, %v5968
    %v5970 = vand.u32 %v5969, 4294901760
    %5971 = vmatpush1.msra.mxu0 %v5970
    %5972 = vmatprep.subr.mxu0 0.0
    %v5973 = vand.u32 %v315, 4294901760
    %v5974 = vsub.f32 %v315, %v5973
    %v5975 = vand.u32 %v5974, 4294901760
    %v5976 = vsub.f32 %v5974, %v5975
    %v5977 = vand.u32 %v5976, 4294901760
    %5978 = vmatpush1.msra.mxu0 %v5977
    %5979 = vmatprep.subr.mxu0 0.0
    %v5980 = vand.u32 %v320, 4294901760
    %v5981 = vsub.f32 %v320, %v5980
    %v5982 = vand.u32 %v5981, 4294901760
    %v5983 = vsub.f32 %v5981, %v5982
    %v5984 = vand.u32 %v5983, 4294901760
    %5985 = vmatpush1.msra.mxu0 %v5984
    %5986 = vmatprep.subr.mxu0 0.0
    %v5987 = vand.u32 %v325, 4294901760
    %v5988 = vsub.f32 %v325, %v5987
    %v5989 = vand.u32 %v5988, 4294901760
    %v5990 = vsub.f32 %v5988, %v5989
    %v5991 = vand.u32 %v5990, 4294901760
    %5992 = vmatpush1.msra.mxu0 %v5991
    %5993 = vmatprep.subr.mxu0 0.0
    %v5994 = vand.u32 %v330, 4294901760
    %v5995 = vsub.f32 %v330, %v5994
    %v5996 = vand.u32 %v5995, 4294901760
    %v5997 = vsub.f32 %v5995, %v5996
    %v5998 = vand.u32 %v5997, 4294901760
    %5999 = vmatpush1.msra.mxu0 %v5998
    %6000 = vmatprep.subr.mxu0 0.0
    %v6001 = vand.u32 %v335, 4294901760
    %v6002 = vsub.f32 %v335, %v6001
    %v6003 = vand.u32 %v6002, 4294901760
    %v6004 = vsub.f32 %v6002, %v6003
    %v6005 = vand.u32 %v6004, 4294901760
    %6006 = vmatpush1.msra.mxu0 %v6005
    %6007 = vmatprep.subr.mxu0 0.0
    %v6008 = vand.u32 %v340, 4294901760
    %v6009 = vsub.f32 %v340, %v6008
    %v6010 = vand.u32 %v6009, 4294901760
    %v6011 = vsub.f32 %v6009, %v6010
    %v6012 = vand.u32 %v6011, 4294901760
    %6013 = vmatpush1.msra.mxu0 %v6012
    %6014 = vmatprep.subr.mxu0 0.0
    %v6015 = vand.u32 %v345, 4294901760
    %v6016 = vsub.f32 %v345, %v6015
    %v6017 = vand.u32 %v6016, 4294901760
    %v6018 = vsub.f32 %v6016, %v6017
    %v6019 = vand.u32 %v6018, 4294901760
    %6020 = vmatpush1.msra.mxu0 %v6019
    %6021 = vmatprep.subr.mxu0 0.0
    %v6022 = vand.u32 %v350, 4294901760
    %v6023 = vsub.f32 %v350, %v6022
    %v6024 = vand.u32 %v6023, 4294901760
    %v6025 = vsub.f32 %v6023, %v6024
    %v6026 = vand.u32 %v6025, 4294901760
    %6027 = vmatpush1.msra.mxu0 %v6026
    %6028 = vmatprep.subr.mxu0 0.0
    %v6029 = vand.u32 %v355, 4294901760
    %v6030 = vsub.f32 %v355, %v6029
    %v6031 = vand.u32 %v6030, 4294901760
    %v6032 = vsub.f32 %v6030, %v6031
    %v6033 = vand.u32 %v6032, 4294901760
    %6034 = vmatpush1.msra.mxu0 %v6033
    %6035 = vmatprep.subr.mxu0 0.0
    %v6036 = vand.u32 %v360, 4294901760
    %v6037 = vsub.f32 %v360, %v6036
    %v6038 = vand.u32 %v6037, 4294901760
    %v6039 = vsub.f32 %v6037, %v6038
    %v6040 = vand.u32 %v6039, 4294901760
    %6041 = vmatpush1.msra.mxu0 %v6040
    %v6042 = vand.u32 %v564, 4294901760
    %6043 = vmatprep.mubr.f32.mxu0 %v6042
    %v6044 = vand.u32 %v556, 4294901760
    %6045 = vmatmul.mubr.f32.gmra.mrb[0].mxu0 %v6044
    %v6046 = vpop.f32.mrb[0].mxu0
    %v6047 = vadd.f32 %v5815, %v6046
    %v6048 = vpop.f32.mrb[0].mxu0
    %6049 = vdwg.mxu0
    %6050 = vmatprep.subr.mxu0 0.0
    %v6051 = vand.u32 %v205, 4294901760
    %v6052 = vsub.f32 %v205, %v6051
    %6053 = vmatpush1.msra.mxu0 %v6052
    %6054 = vmatprep.subr.mxu0 0.0
    %v6055 = vand.u32 %v210, 4294901760
    %v6056 = vsub.f32 %v210, %v6055
    %6057 = vmatpush1.msra.mxu0 %v6056
    %6058 = vmatprep.subr.mxu0 0.0
    %v6059 = vand.u32 %v215, 4294901760
    %v6060 = vsub.f32 %v215, %v6059
    %6061 = vmatpush1.msra.mxu0 %v6060
    %6062 = vmatprep.subr.mxu0 0.0
    %v6063 = vand.u32 %v220, 4294901760
    %v6064 = vsub.f32 %v220, %v6063
    %6065 = vmatpush1.msra.mxu0 %v6064
    %6066 = vmatprep.subr.mxu0 0.0
    %v6067 = vand.u32 %v225, 4294901760
    %v6068 = vsub.f32 %v225, %v6067
    %6069 = vmatpush1.msra.mxu0 %v6068
    %6070 = vmatprep.subr.mxu0 0.0
    %v6071 = vand.u32 %v230, 4294901760
    %v6072 = vsub.f32 %v230, %v6071
    %6073 = vmatpush1.msra.mxu0 %v6072
    %6074 = vmatprep.subr.mxu0 0.0
    %v6075 = vand.u32 %v235, 4294901760
    %v6076 = vsub.f32 %v235, %v6075
    %6077 = vmatpush1.msra.mxu0 %v6076
    %6078 = vmatprep.subr.mxu0 0.0
    %v6079 = vand.u32 %v240, 4294901760
    %v6080 = vsub.f32 %v240, %v6079
    %6081 = vmatpush1.msra.mxu0 %v6080
    %6082 = vmatprep.subr.mxu0 0.0
    %v6083 = vand.u32 %v245, 4294901760
    %v6084 = vsub.f32 %v245, %v6083
    %6085 = vmatpush1.msra.mxu0 %v6084
    %6086 = vmatprep.subr.mxu0 0.0
    %v6087 = vand.u32 %v250, 4294901760
    %v6088 = vsub.f32 %v250, %v6087
    %6089 = vmatpush1.msra.mxu0 %v6088
    %6090 = vmatprep.subr.mxu0 0.0
    %v6091 = vand.u32 %v255, 4294901760
    %v6092 = vsub.f32 %v255, %v6091
    %6093 = vmatpush1.msra.mxu0 %v6092
    %6094 = vmatprep.subr.mxu0 0.0
    %v6095 = vand.u32 %v260, 4294901760
    %v6096 = vsub.f32 %v260, %v6095
    %6097 = vmatpush1.msra.mxu0 %v6096
    %6098 = vmatprep.subr.mxu0 0.0
    %v6099 = vand.u32 %v265, 4294901760
    %v6100 = vsub.f32 %v265, %v6099
    %6101 = vmatpush1.msra.mxu0 %v6100
    %6102 = vmatprep.subr.mxu0 0.0
    %v6103 = vand.u32 %v270, 4294901760
    %v6104 = vsub.f32 %v270, %v6103
    %6105 = vmatpush1.msra.mxu0 %v6104
    %6106 = vmatprep.subr.mxu0 0.0
    %v6107 = vand.u32 %v275, 4294901760
    %v6108 = vsub.f32 %v275, %v6107
    %6109 = vmatpush1.msra.mxu0 %v6108
    %6110 = vmatprep.subr.mxu0 0.0
    %v6111 = vand.u32 %v280, 4294901760
    %v6112 = vsub.f32 %v280, %v6111
    %6113 = vmatpush1.msra.mxu0 %v6112
    %6114 = vmatprep.subr.mxu0 0.0
    %v6115 = vand.u32 %v285, 4294901760
    %v6116 = vsub.f32 %v285, %v6115
    %6117 = vmatpush1.msra.mxu0 %v6116
    %6118 = vmatprep.subr.mxu0 0.0
    %v6119 = vand.u32 %v290, 4294901760
    %v6120 = vsub.f32 %v290, %v6119
    %6121 = vmatpush1.msra.mxu0 %v6120
    %6122 = vmatprep.subr.mxu0 0.0
    %v6123 = vand.u32 %v295, 4294901760
    %v6124 = vsub.f32 %v295, %v6123
    %6125 = vmatpush1.msra.mxu0 %v6124
    %6126 = vmatprep.subr.mxu0 0.0
    %v6127 = vand.u32 %v300, 4294901760
    %v6128 = vsub.f32 %v300, %v6127
    %6129 = vmatpush1.msra.mxu0 %v6128
    %6130 = vmatprep.subr.mxu0 0.0
    %v6131 = vand.u32 %v305, 4294901760
    %v6132 = vsub.f32 %v305, %v6131
    %6133 = vmatpush1.msra.mxu0 %v6132
    %6134 = vmatprep.subr.mxu0 0.0
    %v6135 = vand.u32 %v310, 4294901760
    %v6136 = vsub.f32 %v310, %v6135
    %6137 = vmatpush1.msra.mxu0 %v6136
    %6138 = vmatprep.subr.mxu0 0.0
    %v6139 = vand.u32 %v315, 4294901760
    %v6140 = vsub.f32 %v315, %v6139
    %6141 = vmatpush1.msra.mxu0 %v6140
    %6142 = vmatprep.subr.mxu0 0.0
    %v6143 = vand.u32 %v320, 4294901760
    %v6144 = vsub.f32 %v320, %v6143
    %6145 = vmatpush1.msra.mxu0 %v6144
    %6146 = vmatprep.subr.mxu0 0.0
    %v6147 = vand.u32 %v325, 4294901760
    %v6148 = vsub.f32 %v325, %v6147
    %6149 = vmatpush1.msra.mxu0 %v6148
    %6150 = vmatprep.subr.mxu0 0.0
    %v6151 = vand.u32 %v330, 4294901760
    %v6152 = vsub.f32 %v330, %v6151
    %6153 = vmatpush1.msra.mxu0 %v6152
    %6154 = vmatprep.subr.mxu0 0.0
    %v6155 = vand.u32 %v335, 4294901760
    %v6156 = vsub.f32 %v335, %v6155
    %6157 = vmatpush1.msra.mxu0 %v6156
    %6158 = vmatprep.subr.mxu0 0.0
    %v6159 = vand.u32 %v340, 4294901760
    %v6160 = vsub.f32 %v340, %v6159
    %6161 = vmatpush1.msra.mxu0 %v6160
    %6162 = vmatprep.subr.mxu0 0.0
    %v6163 = vand.u32 %v345, 4294901760
    %v6164 = vsub.f32 %v345, %v6163
    %6165 = vmatpush1.msra.mxu0 %v6164
    %6166 = vmatprep.subr.mxu0 0.0
    %v6167 = vand.u32 %v350, 4294901760
    %v6168 = vsub.f32 %v350, %v6167
    %6169 = vmatpush1.msra.mxu0 %v6168
    %6170 = vmatprep.subr.mxu0 0.0
    %v6171 = vand.u32 %v355, 4294901760
    %v6172 = vsub.f32 %v355, %v6171
    %6173 = vmatpush1.msra.mxu0 %v6172
    %6174 = vmatprep.subr.mxu0 0.0
    %v6175 = vand.u32 %v360, 4294901760
    %v6176 = vsub.f32 %v360, %v6175
    %6177 = vmatpush1.msra.mxu0 %v6176
    %v6178 = vand.u32 %v564, 4294901760
    %v6179 = vsub.f32 %v564, %v6178
    %6180 = vmatprep.mubr.f32.mxu0 %v6179
    %v6181 = vand.u32 %v556, 4294901760
    %v6182 = vsub.f32 %v556, %v6181
    %6183 = vmatmul.mubr.f32.gmra.mrb[0].mxu0 %v6182
    %v6184 = vpop.f32.mrb[0].mxu0
    %v6185 = vadd.f32 %v6047, %v6184
    %v6186 = vpop.f32.mrb[0].mxu0
    %6187 = vdwg.mxu0
    %6188 = vmatprep.subr.mxu0 0.0
    %v6189 = vand.u32 %v205, 4294901760
    %6190 = vmatpush1.msra.mxu0 %v6189
    %6191 = vmatprep.subr.mxu0 0.0
    %v6192 = vand.u32 %v210, 4294901760
    %6193 = vmatpush1.msra.mxu0 %v6192
    %6194 = vmatprep.subr.mxu0 0.0
    %v6195 = vand.u32 %v215, 4294901760
    %6196 = vmatpush1.msra.mxu0 %v6195
    %6197 = vmatprep.subr.mxu0 0.0
    %v6198 = vand.u32 %v220, 4294901760
    %6199 = vmatpush1.msra.mxu0 %v6198
    %6200 = vmatprep.subr.mxu0 0.0
    %v6201 = vand.u32 %v225, 4294901760
    %6202 = vmatpush1.msra.mxu0 %v6201
    %6203 = vmatprep.subr.mxu0 0.0
    %v6204 = vand.u32 %v230, 4294901760
    %6205 = vmatpush1.msra.mxu0 %v6204
    %6206 = vmatprep.subr.mxu0 0.0
    %v6207 = vand.u32 %v235, 4294901760
    %6208 = vmatpush1.msra.mxu0 %v6207
    %6209 = vmatprep.subr.mxu0 0.0
    %v6210 = vand.u32 %v240, 4294901760
    %6211 = vmatpush1.msra.mxu0 %v6210
    %6212 = vmatprep.subr.mxu0 0.0
    %v6213 = vand.u32 %v245, 4294901760
    %6214 = vmatpush1.msra.mxu0 %v6213
    %6215 = vmatprep.subr.mxu0 0.0
    %v6216 = vand.u32 %v250, 4294901760
    %6217 = vmatpush1.msra.mxu0 %v6216
    %6218 = vmatprep.subr.mxu0 0.0
    %v6219 = vand.u32 %v255, 4294901760
    %6220 = vmatpush1.msra.mxu0 %v6219
    %6221 = vmatprep.subr.mxu0 0.0
    %v6222 = vand.u32 %v260, 4294901760
    %6223 = vmatpush1.msra.mxu0 %v6222
    %6224 = vmatprep.subr.mxu0 0.0
    %v6225 = vand.u32 %v265, 4294901760
    %6226 = vmatpush1.msra.mxu0 %v6225
    %6227 = vmatprep.subr.mxu0 0.0
    %v6228 = vand.u32 %v270, 4294901760
    %6229 = vmatpush1.msra.mxu0 %v6228
    %6230 = vmatprep.subr.mxu0 0.0
    %v6231 = vand.u32 %v275, 4294901760
    %6232 = vmatpush1.msra.mxu0 %v6231
    %6233 = vmatprep.subr.mxu0 0.0
    %v6234 = vand.u32 %v280, 4294901760
    %6235 = vmatpush1.msra.mxu0 %v6234
    %6236 = vmatprep.subr.mxu0 0.0
    %v6237 = vand.u32 %v285, 4294901760
    %6238 = vmatpush1.msra.mxu0 %v6237
    %6239 = vmatprep.subr.mxu0 0.0
    %v6240 = vand.u32 %v290, 4294901760
    %6241 = vmatpush1.msra.mxu0 %v6240
    %6242 = vmatprep.subr.mxu0 0.0
    %v6243 = vand.u32 %v295, 4294901760
    %6244 = vmatpush1.msra.mxu0 %v6243
    %6245 = vmatprep.subr.mxu0 0.0
    %v6246 = vand.u32 %v300, 4294901760
    %6247 = vmatpush1.msra.mxu0 %v6246
    %6248 = vmatprep.subr.mxu0 0.0
    %v6249 = vand.u32 %v305, 4294901760
    %6250 = vmatpush1.msra.mxu0 %v6249
    %6251 = vmatprep.subr.mxu0 0.0
    %v6252 = vand.u32 %v310, 4294901760
    %6253 = vmatpush1.msra.mxu0 %v6252
    %6254 = vmatprep.subr.mxu0 0.0
    %v6255 = vand.u32 %v315, 4294901760
    %6256 = vmatpush1.msra.mxu0 %v6255
    %6257 = vmatprep.subr.mxu0 0.0
    %v6258 = vand.u32 %v320, 4294901760
    %6259 = vmatpush1.msra.mxu0 %v6258
    %6260 = vmatprep.subr.mxu0 0.0
    %v6261 = vand.u32 %v325, 4294901760
    %6262 = vmatpush1.msra.mxu0 %v6261
    %6263 = vmatprep.subr.mxu0 0.0
    %v6264 = vand.u32 %v330, 4294901760
    %6265 = vmatpush1.msra.mxu0 %v6264
    %6266 = vmatprep.subr.mxu0 0.0
    %v6267 = vand.u32 %v335, 4294901760
    %6268 = vmatpush1.msra.mxu0 %v6267
    %6269 = vmatprep.subr.mxu0 0.0
    %v6270 = vand.u32 %v340, 4294901760
    %6271 = vmatpush1.msra.mxu0 %v6270
    %6272 = vmatprep.subr.mxu0 0.0
    %v6273 = vand.u32 %v345, 4294901760
    %6274 = vmatpush1.msra.mxu0 %v6273
    %6275 = vmatprep.subr.mxu0 0.0
    %v6276 = vand.u32 %v350, 4294901760
    %6277 = vmatpush1.msra.mxu0 %v6276
    %6278 = vmatprep.subr.mxu0 0.0
    %v6279 = vand.u32 %v355, 4294901760
    %6280 = vmatpush1.msra.mxu0 %v6279
    %6281 = vmatprep.subr.mxu0 0.0
    %v6282 = vand.u32 %v360, 4294901760
    %6283 = vmatpush1.msra.mxu0 %v6282
    %v6284 = vand.u32 %v564, 4294901760
    %v6285 = vsub.f32 %v564, %v6284
    %v6286 = vand.u32 %v6285, 4294901760
    %6287 = vmatprep.mubr.f32.mxu0 %v6286
    %v6288 = vand.u32 %v556, 4294901760
    %v6289 = vsub.f32 %v556, %v6288
    %v6290 = vand.u32 %v6289, 4294901760
    %6291 = vmatmul.mubr.f32.gmra.mrb[0].mxu0 %v6290
    %v6292 = vpop.f32.mrb[0].mxu0
    %v6293 = vadd.f32 %v6185, %v6292
    %v6294 = vpop.f32.mrb[0].mxu0
    %6295 = vdwg.mxu0
    %6296 = vmatprep.subr.mxu0 0.0
    %v6297 = vand.u32 %v205, 4294901760
    %v6298 = vsub.f32 %v205, %v6297
    %v6299 = vand.u32 %v6298, 4294901760
    %6300 = vmatpush1.msra.mxu0 %v6299
    %6301 = vmatprep.subr.mxu0 0.0
    %v6302 = vand.u32 %v210, 4294901760
    %v6303 = vsub.f32 %v210, %v6302
    %v6304 = vand.u32 %v6303, 4294901760
    %6305 = vmatpush1.msra.mxu0 %v6304
    %6306 = vmatprep.subr.mxu0 0.0
    %v6307 = vand.u32 %v215, 4294901760
    %v6308 = vsub.f32 %v215, %v6307
    %v6309 = vand.u32 %v6308, 4294901760
    %6310 = vmatpush1.msra.mxu0 %v6309
    %6311 = vmatprep.subr.mxu0 0.0
    %v6312 = vand.u32 %v220, 4294901760
    %v6313 = vsub.f32 %v220, %v6312
    %v6314 = vand.u32 %v6313, 4294901760
    %6315 = vmatpush1.msra.mxu0 %v6314
    %6316 = vmatprep.subr.mxu0 0.0
    %v6317 = vand.u32 %v225, 4294901760
    %v6318 = vsub.f32 %v225, %v6317
    %v6319 = vand.u32 %v6318, 4294901760
    %6320 = vmatpush1.msra.mxu0 %v6319
    %6321 = vmatprep.subr.mxu0 0.0
    %v6322 = vand.u32 %v230, 4294901760
    %v6323 = vsub.f32 %v230, %v6322
    %v6324 = vand.u32 %v6323, 4294901760
    %6325 = vmatpush1.msra.mxu0 %v6324
    %6326 = vmatprep.subr.mxu0 0.0
    %v6327 = vand.u32 %v235, 4294901760
    %v6328 = vsub.f32 %v235, %v6327
    %v6329 = vand.u32 %v6328, 4294901760
    %6330 = vmatpush1.msra.mxu0 %v6329
    %6331 = vmatprep.subr.mxu0 0.0
    %v6332 = vand.u32 %v240, 4294901760
    %v6333 = vsub.f32 %v240, %v6332
    %v6334 = vand.u32 %v6333, 4294901760
    %6335 = vmatpush1.msra.mxu0 %v6334
    %6336 = vmatprep.subr.mxu0 0.0
    %v6337 = vand.u32 %v245, 4294901760
    %v6338 = vsub.f32 %v245, %v6337
    %v6339 = vand.u32 %v6338, 4294901760
    %6340 = vmatpush1.msra.mxu0 %v6339
    %6341 = vmatprep.subr.mxu0 0.0
    %v6342 = vand.u32 %v250, 4294901760
    %v6343 = vsub.f32 %v250, %v6342
    %v6344 = vand.u32 %v6343, 4294901760
    %6345 = vmatpush1.msra.mxu0 %v6344
    %6346 = vmatprep.subr.mxu0 0.0
    %v6347 = vand.u32 %v255, 4294901760
    %v6348 = vsub.f32 %v255, %v6347
    %v6349 = vand.u32 %v6348, 4294901760
    %6350 = vmatpush1.msra.mxu0 %v6349
    %6351 = vmatprep.subr.mxu0 0.0
    %v6352 = vand.u32 %v260, 4294901760
    %v6353 = vsub.f32 %v260, %v6352
    %v6354 = vand.u32 %v6353, 4294901760
    %6355 = vmatpush1.msra.mxu0 %v6354
    %6356 = vmatprep.subr.mxu0 0.0
    %v6357 = vand.u32 %v265, 4294901760
    %v6358 = vsub.f32 %v265, %v6357
    %v6359 = vand.u32 %v6358, 4294901760
    %6360 = vmatpush1.msra.mxu0 %v6359
    %6361 = vmatprep.subr.mxu0 0.0
    %v6362 = vand.u32 %v270, 4294901760
    %v6363 = vsub.f32 %v270, %v6362
    %v6364 = vand.u32 %v6363, 4294901760
    %6365 = vmatpush1.msra.mxu0 %v6364
    %6366 = vmatprep.subr.mxu0 0.0
    %v6367 = vand.u32 %v275, 4294901760
    %v6368 = vsub.f32 %v275, %v6367
    %v6369 = vand.u32 %v6368, 4294901760
    %6370 = vmatpush1.msra.mxu0 %v6369
    %6371 = vmatprep.subr.mxu0 0.0
    %v6372 = vand.u32 %v280, 4294901760
    %v6373 = vsub.f32 %v280, %v6372
    %v6374 = vand.u32 %v6373, 4294901760
    %6375 = vmatpush1.msra.mxu0 %v6374
    %6376 = vmatprep.subr.mxu0 0.0
    %v6377 = vand.u32 %v285, 4294901760
    %v6378 = vsub.f32 %v285, %v6377
    %v6379 = vand.u32 %v6378, 4294901760
    %6380 = vmatpush1.msra.mxu0 %v6379
    %6381 = vmatprep.subr.mxu0 0.0
    %v6382 = vand.u32 %v290, 4294901760
    %v6383 = vsub.f32 %v290, %v6382
    %v6384 = vand.u32 %v6383, 4294901760
    %6385 = vmatpush1.msra.mxu0 %v6384
    %6386 = vmatprep.subr.mxu0 0.0
    %v6387 = vand.u32 %v295, 4294901760
    %v6388 = vsub.f32 %v295, %v6387
    %v6389 = vand.u32 %v6388, 4294901760
    %6390 = vmatpush1.msra.mxu0 %v6389
    %6391 = vmatprep.subr.mxu0 0.0
    %v6392 = vand.u32 %v300, 4294901760
    %v6393 = vsub.f32 %v300, %v6392
    %v6394 = vand.u32 %v6393, 4294901760
    %6395 = vmatpush1.msra.mxu0 %v6394
    %6396 = vmatprep.subr.mxu0 0.0
    %v6397 = vand.u32 %v305, 4294901760
    %v6398 = vsub.f32 %v305, %v6397
    %v6399 = vand.u32 %v6398, 4294901760
    %6400 = vmatpush1.msra.mxu0 %v6399
    %6401 = vmatprep.subr.mxu0 0.0
    %v6402 = vand.u32 %v310, 4294901760
    %v6403 = vsub.f32 %v310, %v6402
    %v6404 = vand.u32 %v6403, 4294901760
    %6405 = vmatpush1.msra.mxu0 %v6404
    %6406 = vmatprep.subr.mxu0 0.0
    %v6407 = vand.u32 %v315, 4294901760
    %v6408 = vsub.f32 %v315, %v6407
    %v6409 = vand.u32 %v6408, 4294901760
    %6410 = vmatpush1.msra.mxu0 %v6409
    %6411 = vmatprep.subr.mxu0 0.0
    %v6412 = vand.u32 %v320, 4294901760
    %v6413 = vsub.f32 %v320, %v6412
    %v6414 = vand.u32 %v6413, 4294901760
    %6415 = vmatpush1.msra.mxu0 %v6414
    %6416 = vmatprep.subr.mxu0 0.0
    %v6417 = vand.u32 %v325, 4294901760
    %v6418 = vsub.f32 %v325, %v6417
    %v6419 = vand.u32 %v6418, 4294901760
    %6420 = vmatpush1.msra.mxu0 %v6419
    %6421 = vmatprep.subr.mxu0 0.0
    %v6422 = vand.u32 %v330, 4294901760
    %v6423 = vsub.f32 %v330, %v6422
    %v6424 = vand.u32 %v6423, 4294901760
    %6425 = vmatpush1.msra.mxu0 %v6424
    %6426 = vmatprep.subr.mxu0 0.0
    %v6427 = vand.u32 %v335, 4294901760
    %v6428 = vsub.f32 %v335, %v6427
    %v6429 = vand.u32 %v6428, 4294901760
    %6430 = vmatpush1.msra.mxu0 %v6429
    %6431 = vmatprep.subr.mxu0 0.0
    %v6432 = vand.u32 %v340, 4294901760
    %v6433 = vsub.f32 %v340, %v6432
    %v6434 = vand.u32 %v6433, 4294901760
    %6435 = vmatpush1.msra.mxu0 %v6434
    %6436 = vmatprep.subr.mxu0 0.0
    %v6437 = vand.u32 %v345, 4294901760
    %v6438 = vsub.f32 %v345, %v6437
    %v6439 = vand.u32 %v6438, 4294901760
    %6440 = vmatpush1.msra.mxu0 %v6439
    %6441 = vmatprep.subr.mxu0 0.0
    %v6442 = vand.u32 %v350, 4294901760
    %v6443 = vsub.f32 %v350, %v6442
    %v6444 = vand.u32 %v6443, 4294901760
    %6445 = vmatpush1.msra.mxu0 %v6444
    %6446 = vmatprep.subr.mxu0 0.0
    %v6447 = vand.u32 %v355, 4294901760
    %v6448 = vsub.f32 %v355, %v6447
    %v6449 = vand.u32 %v6448, 4294901760
    %6450 = vmatpush1.msra.mxu0 %v6449
    %6451 = vmatprep.subr.mxu0 0.0
    %v6452 = vand.u32 %v360, 4294901760
    %v6453 = vsub.f32 %v360, %v6452
    %v6454 = vand.u32 %v6453, 4294901760
    %6455 = vmatpush1.msra.mxu0 %v6454
    %v6456 = vand.u32 %v564, 4294901760
    %6457 = vmatprep.mubr.f32.mxu0 %v6456
    %v6458 = vand.u32 %v556, 4294901760
    %6459 = vmatmul.mubr.f32.gmra.mrb[0].mxu0 %v6458
    %v6460 = vpop.f32.mrb[0].mxu0
    %v6461 = vadd.f32 %v6293, %v6460
    %v6462 = vpop.f32.mrb[0].mxu0
    %6463 = vdwg.mxu0
    %6464 = vmatprep.subr.mxu0 0.0
    %v6465 = vand.u32 %v205, 4294901760
    %6466 = vmatpush1.msra.mxu0 %v6465
    %6467 = vmatprep.subr.mxu0 0.0
    %v6468 = vand.u32 %v210, 4294901760
    %6469 = vmatpush1.msra.mxu0 %v6468
    %6470 = vmatprep.subr.mxu0 0.0
    %v6471 = vand.u32 %v215, 4294901760
    %6472 = vmatpush1.msra.mxu0 %v6471
    %6473 = vmatprep.subr.mxu0 0.0
    %v6474 = vand.u32 %v220, 4294901760
    %6475 = vmatpush1.msra.mxu0 %v6474
    %6476 = vmatprep.subr.mxu0 0.0
    %v6477 = vand.u32 %v225, 4294901760
    %6478 = vmatpush1.msra.mxu0 %v6477
    %6479 = vmatprep.subr.mxu0 0.0
    %v6480 = vand.u32 %v230, 4294901760
    %6481 = vmatpush1.msra.mxu0 %v6480
    %6482 = vmatprep.subr.mxu0 0.0
    %v6483 = vand.u32 %v235, 4294901760
    %6484 = vmatpush1.msra.mxu0 %v6483
    %6485 = vmatprep.subr.mxu0 0.0
    %v6486 = vand.u32 %v240, 4294901760
    %6487 = vmatpush1.msra.mxu0 %v6486
    %6488 = vmatprep.subr.mxu0 0.0
    %v6489 = vand.u32 %v245, 4294901760
    %6490 = vmatpush1.msra.mxu0 %v6489
    %6491 = vmatprep.subr.mxu0 0.0
    %v6492 = vand.u32 %v250, 4294901760
    %6493 = vmatpush1.msra.mxu0 %v6492
    %6494 = vmatprep.subr.mxu0 0.0
    %v6495 = vand.u32 %v255, 4294901760
    %6496 = vmatpush1.msra.mxu0 %v6495
    %6497 = vmatprep.subr.mxu0 0.0
    %v6498 = vand.u32 %v260, 4294901760
    %6499 = vmatpush1.msra.mxu0 %v6498
    %6500 = vmatprep.subr.mxu0 0.0
    %v6501 = vand.u32 %v265, 4294901760
    %6502 = vmatpush1.msra.mxu0 %v6501
    %6503 = vmatprep.subr.mxu0 0.0
    %v6504 = vand.u32 %v270, 4294901760
    %6505 = vmatpush1.msra.mxu0 %v6504
    %6506 = vmatprep.subr.mxu0 0.0
    %v6507 = vand.u32 %v275, 4294901760
    %6508 = vmatpush1.msra.mxu0 %v6507
    %6509 = vmatprep.subr.mxu0 0.0
    %v6510 = vand.u32 %v280, 4294901760
    %6511 = vmatpush1.msra.mxu0 %v6510
    %6512 = vmatprep.subr.mxu0 0.0
    %v6513 = vand.u32 %v285, 4294901760
    %6514 = vmatpush1.msra.mxu0 %v6513
    %6515 = vmatprep.subr.mxu0 0.0
    %v6516 = vand.u32 %v290, 4294901760
    %6517 = vmatpush1.msra.mxu0 %v6516
    %6518 = vmatprep.subr.mxu0 0.0
    %v6519 = vand.u32 %v295, 4294901760
    %6520 = vmatpush1.msra.mxu0 %v6519
    %6521 = vmatprep.subr.mxu0 0.0
    %v6522 = vand.u32 %v300, 4294901760
    %6523 = vmatpush1.msra.mxu0 %v6522
    %6524 = vmatprep.subr.mxu0 0.0
    %v6525 = vand.u32 %v305, 4294901760
    %6526 = vmatpush1.msra.mxu0 %v6525
    %6527 = vmatprep.subr.mxu0 0.0
    %v6528 = vand.u32 %v310, 4294901760
    %6529 = vmatpush1.msra.mxu0 %v6528
    %6530 = vmatprep.subr.mxu0 0.0
    %v6531 = vand.u32 %v315, 4294901760
    %6532 = vmatpush1.msra.mxu0 %v6531
    %6533 = vmatprep.subr.mxu0 0.0
    %v6534 = vand.u32 %v320, 4294901760
    %6535 = vmatpush1.msra.mxu0 %v6534
    %6536 = vmatprep.subr.mxu0 0.0
    %v6537 = vand.u32 %v325, 4294901760
    %6538 = vmatpush1.msra.mxu0 %v6537
    %6539 = vmatprep.subr.mxu0 0.0
    %v6540 = vand.u32 %v330, 4294901760
    %6541 = vmatpush1.msra.mxu0 %v6540
    %6542 = vmatprep.subr.mxu0 0.0
    %v6543 = vand.u32 %v335, 4294901760
    %6544 = vmatpush1.msra.mxu0 %v6543
    %6545 = vmatprep.subr.mxu0 0.0
    %v6546 = vand.u32 %v340, 4294901760
    %6547 = vmatpush1.msra.mxu0 %v6546
    %6548 = vmatprep.subr.mxu0 0.0
    %v6549 = vand.u32 %v345, 4294901760
    %6550 = vmatpush1.msra.mxu0 %v6549
    %6551 = vmatprep.subr.mxu0 0.0
    %v6552 = vand.u32 %v350, 4294901760
    %6553 = vmatpush1.msra.mxu0 %v6552
    %6554 = vmatprep.subr.mxu0 0.0
    %v6555 = vand.u32 %v355, 4294901760
    %6556 = vmatpush1.msra.mxu0 %v6555
    %6557 = vmatprep.subr.mxu0 0.0
    %v6558 = vand.u32 %v360, 4294901760
    %6559 = vmatpush1.msra.mxu0 %v6558
    %v6560 = vand.u32 %v564, 4294901760
    %6561 = vmatprep.mubr.f32.mxu0 %v6560
    %v6562 = vand.u32 %v556, 4294901760
    %6563 = vmatmul.mubr.f32.gmra.mrb[0].mxu0 %v6562
    %v6564 = vpop.f32.mrb[0].mxu0
    %v6565 = vadd.f32 %v6461, %v6564
    %v6566 = vpop.f32.mrb[0].mxu0
    %6567 = vdwg.mxu0
    %6568 = vmatprep.subr.mxu0 0.0
    %v6569 = vand.u32 %v365, 4294901760
    %6570 = vmatpush1.msra.mxu0 %v6569
    %6571 = vmatprep.subr.mxu0 0.0
    %v6572 = vand.u32 %v370, 4294901760
    %6573 = vmatpush1.msra.mxu0 %v6572
    %6574 = vmatprep.subr.mxu0 0.0
    %v6575 = vand.u32 %v375, 4294901760
    %6576 = vmatpush1.msra.mxu0 %v6575
    %6577 = vmatprep.subr.mxu0 0.0
    %v6578 = vand.u32 %v380, 4294901760
    %6579 = vmatpush1.msra.mxu0 %v6578
    %6580 = vmatprep.subr.mxu0 0.0
    %v6581 = vand.u32 %v385, 4294901760
    %6582 = vmatpush1.msra.mxu0 %v6581
    %6583 = vmatprep.subr.mxu0 0.0
    %v6584 = vand.u32 %v390, 4294901760
    %6585 = vmatpush1.msra.mxu0 %v6584
    %6586 = vmatprep.subr.mxu0 0.0
    %v6587 = vand.u32 %v395, 4294901760
    %6588 = vmatpush1.msra.mxu0 %v6587
    %6589 = vmatprep.subr.mxu0 0.0
    %v6590 = vand.u32 %v400, 4294901760
    %6591 = vmatpush1.msra.mxu0 %v6590
    %6592 = vmatprep.subr.mxu0 0.0
    %v6593 = vand.u32 %v405, 4294901760
    %6594 = vmatpush1.msra.mxu0 %v6593
    %6595 = vmatprep.subr.mxu0 0.0
    %v6596 = vand.u32 %v410, 4294901760
    %6597 = vmatpush1.msra.mxu0 %v6596
    %6598 = vmatprep.subr.mxu0 0.0
    %v6599 = vand.u32 %v415, 4294901760
    %6600 = vmatpush1.msra.mxu0 %v6599
    %6601 = vmatprep.subr.mxu0 0.0
    %v6602 = vand.u32 %v420, 4294901760
    %6603 = vmatpush1.msra.mxu0 %v6602
    %6604 = vmatprep.subr.mxu0 0.0
    %v6605 = vand.u32 %v425, 4294901760
    %6606 = vmatpush1.msra.mxu0 %v6605
    %6607 = vmatprep.subr.mxu0 0.0
    %v6608 = vand.u32 %v430, 4294901760
    %6609 = vmatpush1.msra.mxu0 %v6608
    %6610 = vmatprep.subr.mxu0 0.0
    %v6611 = vand.u32 %v435, 4294901760
    %6612 = vmatpush1.msra.mxu0 %v6611
    %6613 = vmatprep.subr.mxu0 0.0
    %v6614 = vand.u32 %v440, 4294901760
    %6615 = vmatpush1.msra.mxu0 %v6614
    %6616 = vmatprep.subr.mxu0 0.0
    %v6617 = vand.u32 %v445, 4294901760
    %6618 = vmatpush1.msra.mxu0 %v6617
    %6619 = vmatprep.subr.mxu0 0.0
    %v6620 = vand.u32 %v450, 4294901760
    %6621 = vmatpush1.msra.mxu0 %v6620
    %6622 = vmatprep.subr.mxu0 0.0
    %v6623 = vand.u32 %v455, 4294901760
    %6624 = vmatpush1.msra.mxu0 %v6623
    %6625 = vmatprep.subr.mxu0 0.0
    %v6626 = vand.u32 %v460, 4294901760
    %6627 = vmatpush1.msra.mxu0 %v6626
    %6628 = vmatprep.subr.mxu0 0.0
    %v6629 = vand.u32 %v465, 4294901760
    %6630 = vmatpush1.msra.mxu0 %v6629
    %6631 = vmatprep.subr.mxu0 0.0
    %v6632 = vand.u32 %v470, 4294901760
    %6633 = vmatpush1.msra.mxu0 %v6632
    %6634 = vmatprep.subr.mxu0 0.0
    %v6635 = vand.u32 %v475, 4294901760
    %6636 = vmatpush1.msra.mxu0 %v6635
    %6637 = vmatprep.subr.mxu0 0.0
    %v6638 = vand.u32 %v480, 4294901760
    %6639 = vmatpush1.msra.mxu0 %v6638
    %6640 = vmatprep.subr.mxu0 0.0
    %v6641 = vand.u32 %v485, 4294901760
    %6642 = vmatpush1.msra.mxu0 %v6641
    %6643 = vmatprep.subr.mxu0 0.0
    %v6644 = vand.u32 %v490, 4294901760
    %6645 = vmatpush1.msra.mxu0 %v6644
    %6646 = vmatprep.subr.mxu0 0.0
    %v6647 = vand.u32 %v495, 4294901760
    %6648 = vmatpush1.msra.mxu0 %v6647
    %6649 = vmatprep.subr.mxu0 0.0
    %v6650 = vand.u32 %v500, 4294901760
    %6651 = vmatpush1.msra.mxu0 %v6650
    %6652 = vmatprep.subr.mxu0 0.0
    %v6653 = vand.u32 %v505, 4294901760
    %6654 = vmatpush1.msra.mxu0 %v6653
    %6655 = vmatprep.subr.mxu0 0.0
    %v6656 = vand.u32 %v510, 4294901760
    %6657 = vmatpush1.msra.mxu0 %v6656
    %6658 = vmatprep.subr.mxu0 0.0
    %v6659 = vand.u32 %v515, 4294901760
    %6660 = vmatpush1.msra.mxu0 %v6659
    %6661 = vmatprep.subr.mxu0 0.0
    %v6662 = vand.u32 %v520, 4294901760
    %6663 = vmatpush1.msra.mxu0 %v6662
    %v6664 = vand.u32 %v565, 4294901760
    %v6665 = vsub.f32 %v565, %v6664
    %v6666 = vand.u32 %v6665, 4294901760
    %v6667 = vsub.f32 %v6665, %v6666
    %v6668 = vand.u32 %v6667, 4294901760
    %6669 = vmatprep.mubr.f32.mxu0 %v6668
    %v6670 = vand.u32 %v563, 4294901760
    %v6671 = vsub.f32 %v563, %v6670
    %v6672 = vand.u32 %v6671, 4294901760
    %v6673 = vsub.f32 %v6671, %v6672
    %v6674 = vand.u32 %v6673, 4294901760
    %6675 = vmatmul.mubr.f32.gmra.mrb[0].mxu0 %v6674
    %v6676 = vpop.f32.mrb[0].mxu0
    %v6677 = vadd.f32 %v6565, %v6676
    %v6678 = vpop.f32.mrb[0].mxu0
    %6679 = vdwg.mxu0
    %6680 = vmatprep.subr.mxu0 0.0
    %v6681 = vand.u32 %v365, 4294901760
    %v6682 = vsub.f32 %v365, %v6681
    %v6683 = vand.u32 %v6682, 4294901760
    %v6684 = vsub.f32 %v6682, %v6683
    %v6685 = vand.u32 %v6684, 4294901760
    %6686 = vmatpush1.msra.mxu0 %v6685
    %6687 = vmatprep.subr.mxu0 0.0
    %v6688 = vand.u32 %v370, 4294901760
    %v6689 = vsub.f32 %v370, %v6688
    %v6690 = vand.u32 %v6689, 4294901760
    %v6691 = vsub.f32 %v6689, %v6690
    %v6692 = vand.u32 %v6691, 4294901760
    %6693 = vmatpush1.msra.mxu0 %v6692
    %6694 = vmatprep.subr.mxu0 0.0
    %v6695 = vand.u32 %v375, 4294901760
    %v6696 = vsub.f32 %v375, %v6695
    %v6697 = vand.u32 %v6696, 4294901760
    %v6698 = vsub.f32 %v6696, %v6697
    %v6699 = vand.u32 %v6698, 4294901760
    %6700 = vmatpush1.msra.mxu0 %v6699
    %6701 = vmatprep.subr.mxu0 0.0
    %v6702 = vand.u32 %v380, 4294901760
    %v6703 = vsub.f32 %v380, %v6702
    %v6704 = vand.u32 %v6703, 4294901760
    %v6705 = vsub.f32 %v6703, %v6704
    %v6706 = vand.u32 %v6705, 4294901760
    %6707 = vmatpush1.msra.mxu0 %v6706
    %6708 = vmatprep.subr.mxu0 0.0
    %v6709 = vand.u32 %v385, 4294901760
    %v6710 = vsub.f32 %v385, %v6709
    %v6711 = vand.u32 %v6710, 4294901760
    %v6712 = vsub.f32 %v6710, %v6711
    %v6713 = vand.u32 %v6712, 4294901760
    %6714 = vmatpush1.msra.mxu0 %v6713
    %6715 = vmatprep.subr.mxu0 0.0
    %v6716 = vand.u32 %v390, 4294901760
    %v6717 = vsub.f32 %v390, %v6716
    %v6718 = vand.u32 %v6717, 4294901760
    %v6719 = vsub.f32 %v6717, %v6718
    %v6720 = vand.u32 %v6719, 4294901760
    %6721 = vmatpush1.msra.mxu0 %v6720
    %6722 = vmatprep.subr.mxu0 0.0
    %v6723 = vand.u32 %v395, 4294901760
    %v6724 = vsub.f32 %v395, %v6723
    %v6725 = vand.u32 %v6724, 4294901760
    %v6726 = vsub.f32 %v6724, %v6725
    %v6727 = vand.u32 %v6726, 4294901760
    %6728 = vmatpush1.msra.mxu0 %v6727
    %6729 = vmatprep.subr.mxu0 0.0
    %v6730 = vand.u32 %v400, 4294901760
    %v6731 = vsub.f32 %v400, %v6730
    %v6732 = vand.u32 %v6731, 4294901760
    %v6733 = vsub.f32 %v6731, %v6732
    %v6734 = vand.u32 %v6733, 4294901760
    %6735 = vmatpush1.msra.mxu0 %v6734
    %6736 = vmatprep.subr.mxu0 0.0
    %v6737 = vand.u32 %v405, 4294901760
    %v6738 = vsub.f32 %v405, %v6737
    %v6739 = vand.u32 %v6738, 4294901760
    %v6740 = vsub.f32 %v6738, %v6739
    %v6741 = vand.u32 %v6740, 4294901760
    %6742 = vmatpush1.msra.mxu0 %v6741
    %6743 = vmatprep.subr.mxu0 0.0
    %v6744 = vand.u32 %v410, 4294901760
    %v6745 = vsub.f32 %v410, %v6744
    %v6746 = vand.u32 %v6745, 4294901760
    %v6747 = vsub.f32 %v6745, %v6746
    %v6748 = vand.u32 %v6747, 4294901760
    %6749 = vmatpush1.msra.mxu0 %v6748
    %6750 = vmatprep.subr.mxu0 0.0
    %v6751 = vand.u32 %v415, 4294901760
    %v6752 = vsub.f32 %v415, %v6751
    %v6753 = vand.u32 %v6752, 4294901760
    %v6754 = vsub.f32 %v6752, %v6753
    %v6755 = vand.u32 %v6754, 4294901760
    %6756 = vmatpush1.msra.mxu0 %v6755
    %6757 = vmatprep.subr.mxu0 0.0
    %v6758 = vand.u32 %v420, 4294901760
    %v6759 = vsub.f32 %v420, %v6758
    %v6760 = vand.u32 %v6759, 4294901760
    %v6761 = vsub.f32 %v6759, %v6760
    %v6762 = vand.u32 %v6761, 4294901760
    %6763 = vmatpush1.msra.mxu0 %v6762
    %6764 = vmatprep.subr.mxu0 0.0
    %v6765 = vand.u32 %v425, 4294901760
    %v6766 = vsub.f32 %v425, %v6765
    %v6767 = vand.u32 %v6766, 4294901760
    %v6768 = vsub.f32 %v6766, %v6767
    %v6769 = vand.u32 %v6768, 4294901760
    %6770 = vmatpush1.msra.mxu0 %v6769
    %6771 = vmatprep.subr.mxu0 0.0
    %v6772 = vand.u32 %v430, 4294901760
    %v6773 = vsub.f32 %v430, %v6772
    %v6774 = vand.u32 %v6773, 4294901760
    %v6775 = vsub.f32 %v6773, %v6774
    %v6776 = vand.u32 %v6775, 4294901760
    %6777 = vmatpush1.msra.mxu0 %v6776
    %6778 = vmatprep.subr.mxu0 0.0
    %v6779 = vand.u32 %v435, 4294901760
    %v6780 = vsub.f32 %v435, %v6779
    %v6781 = vand.u32 %v6780, 4294901760
    %v6782 = vsub.f32 %v6780, %v6781
    %v6783 = vand.u32 %v6782, 4294901760
    %6784 = vmatpush1.msra.mxu0 %v6783
    %6785 = vmatprep.subr.mxu0 0.0
    %v6786 = vand.u32 %v440, 4294901760
    %v6787 = vsub.f32 %v440, %v6786
    %v6788 = vand.u32 %v6787, 4294901760
    %v6789 = vsub.f32 %v6787, %v6788
    %v6790 = vand.u32 %v6789, 4294901760
    %6791 = vmatpush1.msra.mxu0 %v6790
    %6792 = vmatprep.subr.mxu0 0.0
    %v6793 = vand.u32 %v445, 4294901760
    %v6794 = vsub.f32 %v445, %v6793
    %v6795 = vand.u32 %v6794, 4294901760
    %v6796 = vsub.f32 %v6794, %v6795
    %v6797 = vand.u32 %v6796, 4294901760
    %6798 = vmatpush1.msra.mxu0 %v6797
    %6799 = vmatprep.subr.mxu0 0.0
    %v6800 = vand.u32 %v450, 4294901760
    %v6801 = vsub.f32 %v450, %v6800
    %v6802 = vand.u32 %v6801, 4294901760
    %v6803 = vsub.f32 %v6801, %v6802
    %v6804 = vand.u32 %v6803, 4294901760
    %6805 = vmatpush1.msra.mxu0 %v6804
    %6806 = vmatprep.subr.mxu0 0.0
    %v6807 = vand.u32 %v455, 4294901760
    %v6808 = vsub.f32 %v455, %v6807
    %v6809 = vand.u32 %v6808, 4294901760
    %v6810 = vsub.f32 %v6808, %v6809
    %v6811 = vand.u32 %v6810, 4294901760
    %6812 = vmatpush1.msra.mxu0 %v6811
    %6813 = vmatprep.subr.mxu0 0.0
    %v6814 = vand.u32 %v460, 4294901760
    %v6815 = vsub.f32 %v460, %v6814
    %v6816 = vand.u32 %v6815, 4294901760
    %v6817 = vsub.f32 %v6815, %v6816
    %v6818 = vand.u32 %v6817, 4294901760
    %6819 = vmatpush1.msra.mxu0 %v6818
    %6820 = vmatprep.subr.mxu0 0.0
    %v6821 = vand.u32 %v465, 4294901760
    %v6822 = vsub.f32 %v465, %v6821
    %v6823 = vand.u32 %v6822, 4294901760
    %v6824 = vsub.f32 %v6822, %v6823
    %v6825 = vand.u32 %v6824, 4294901760
    %6826 = vmatpush1.msra.mxu0 %v6825
    %6827 = vmatprep.subr.mxu0 0.0
    %v6828 = vand.u32 %v470, 4294901760
    %v6829 = vsub.f32 %v470, %v6828
    %v6830 = vand.u32 %v6829, 4294901760
    %v6831 = vsub.f32 %v6829, %v6830
    %v6832 = vand.u32 %v6831, 4294901760
    %6833 = vmatpush1.msra.mxu0 %v6832
    %6834 = vmatprep.subr.mxu0 0.0
    %v6835 = vand.u32 %v475, 4294901760
    %v6836 = vsub.f32 %v475, %v6835
    %v6837 = vand.u32 %v6836, 4294901760
    %v6838 = vsub.f32 %v6836, %v6837
    %v6839 = vand.u32 %v6838, 4294901760
    %6840 = vmatpush1.msra.mxu0 %v6839
    %6841 = vmatprep.subr.mxu0 0.0
    %v6842 = vand.u32 %v480, 4294901760
    %v6843 = vsub.f32 %v480, %v6842
    %v6844 = vand.u32 %v6843, 4294901760
    %v6845 = vsub.f32 %v6843, %v6844
    %v6846 = vand.u32 %v6845, 4294901760
    %6847 = vmatpush1.msra.mxu0 %v6846
    %6848 = vmatprep.subr.mxu0 0.0
    %v6849 = vand.u32 %v485, 4294901760
    %v6850 = vsub.f32 %v485, %v6849
    %v6851 = vand.u32 %v6850, 4294901760
    %v6852 = vsub.f32 %v6850, %v6851
    %v6853 = vand.u32 %v6852, 4294901760
    %6854 = vmatpush1.msra.mxu0 %v6853
    %6855 = vmatprep.subr.mxu0 0.0
    %v6856 = vand.u32 %v490, 4294901760
    %v6857 = vsub.f32 %v490, %v6856
    %v6858 = vand.u32 %v6857, 4294901760
    %v6859 = vsub.f32 %v6857, %v6858
    %v6860 = vand.u32 %v6859, 4294901760
    %6861 = vmatpush1.msra.mxu0 %v6860
    %6862 = vmatprep.subr.mxu0 0.0
    %v6863 = vand.u32 %v495, 4294901760
    %v6864 = vsub.f32 %v495, %v6863
    %v6865 = vand.u32 %v6864, 4294901760
    %v6866 = vsub.f32 %v6864, %v6865
    %v6867 = vand.u32 %v6866, 4294901760
    %6868 = vmatpush1.msra.mxu0 %v6867
    %6869 = vmatprep.subr.mxu0 0.0
    %v6870 = vand.u32 %v500, 4294901760
    %v6871 = vsub.f32 %v500, %v6870
    %v6872 = vand.u32 %v6871, 4294901760
    %v6873 = vsub.f32 %v6871, %v6872
    %v6874 = vand.u32 %v6873, 4294901760
    %6875 = vmatpush1.msra.mxu0 %v6874
    %6876 = vmatprep.subr.mxu0 0.0
    %v6877 = vand.u32 %v505, 4294901760
    %v6878 = vsub.f32 %v505, %v6877
    %v6879 = vand.u32 %v6878, 4294901760
    %v6880 = vsub.f32 %v6878, %v6879
    %v6881 = vand.u32 %v6880, 4294901760
    %6882 = vmatpush1.msra.mxu0 %v6881
    %6883 = vmatprep.subr.mxu0 0.0
    %v6884 = vand.u32 %v510, 4294901760
    %v6885 = vsub.f32 %v510, %v6884
    %v6886 = vand.u32 %v6885, 4294901760
    %v6887 = vsub.f32 %v6885, %v6886
    %v6888 = vand.u32 %v6887, 4294901760
    %6889 = vmatpush1.msra.mxu0 %v6888
    %6890 = vmatprep.subr.mxu0 0.0
    %v6891 = vand.u32 %v515, 4294901760
    %v6892 = vsub.f32 %v515, %v6891
    %v6893 = vand.u32 %v6892, 4294901760
    %v6894 = vsub.f32 %v6892, %v6893
    %v6895 = vand.u32 %v6894, 4294901760
    %6896 = vmatpush1.msra.mxu0 %v6895
    %6897 = vmatprep.subr.mxu0 0.0
    %v6898 = vand.u32 %v520, 4294901760
    %v6899 = vsub.f32 %v520, %v6898
    %v6900 = vand.u32 %v6899, 4294901760
    %v6901 = vsub.f32 %v6899, %v6900
    %v6902 = vand.u32 %v6901, 4294901760
    %6903 = vmatpush1.msra.mxu0 %v6902
    %v6904 = vand.u32 %v565, 4294901760
    %6905 = vmatprep.mubr.f32.mxu0 %v6904
    %v6906 = vand.u32 %v563, 4294901760
    %6907 = vmatmul.mubr.f32.gmra.mrb[0].mxu0 %v6906
    %v6908 = vpop.f32.mrb[0].mxu0
    %v6909 = vadd.f32 %v6677, %v6908
    %v6910 = vpop.f32.mrb[0].mxu0
    %6911 = vdwg.mxu0
    %6912 = vmatprep.subr.mxu0 0.0
    %v6913 = vand.u32 %v365, 4294901760
    %v6914 = vsub.f32 %v365, %v6913
    %6915 = vmatpush1.msra.mxu0 %v6914
    %6916 = vmatprep.subr.mxu0 0.0
    %v6917 = vand.u32 %v370, 4294901760
    %v6918 = vsub.f32 %v370, %v6917
    %6919 = vmatpush1.msra.mxu0 %v6918
    %6920 = vmatprep.subr.mxu0 0.0
    %v6921 = vand.u32 %v375, 4294901760
    %v6922 = vsub.f32 %v375, %v6921
    %6923 = vmatpush1.msra.mxu0 %v6922
    %6924 = vmatprep.subr.mxu0 0.0
    %v6925 = vand.u32 %v380, 4294901760
    %v6926 = vsub.f32 %v380, %v6925
    %6927 = vmatpush1.msra.mxu0 %v6926
    %6928 = vmatprep.subr.mxu0 0.0
    %v6929 = vand.u32 %v385, 4294901760
    %v6930 = vsub.f32 %v385, %v6929
    %6931 = vmatpush1.msra.mxu0 %v6930
    %6932 = vmatprep.subr.mxu0 0.0
    %v6933 = vand.u32 %v390, 4294901760
    %v6934 = vsub.f32 %v390, %v6933
    %6935 = vmatpush1.msra.mxu0 %v6934
    %6936 = vmatprep.subr.mxu0 0.0
    %v6937 = vand.u32 %v395, 4294901760
    %v6938 = vsub.f32 %v395, %v6937
    %6939 = vmatpush1.msra.mxu0 %v6938
    %6940 = vmatprep.subr.mxu0 0.0
    %v6941 = vand.u32 %v400, 4294901760
    %v6942 = vsub.f32 %v400, %v6941
    %6943 = vmatpush1.msra.mxu0 %v6942
    %6944 = vmatprep.subr.mxu0 0.0
    %v6945 = vand.u32 %v405, 4294901760
    %v6946 = vsub.f32 %v405, %v6945
    %6947 = vmatpush1.msra.mxu0 %v6946
    %6948 = vmatprep.subr.mxu0 0.0
    %v6949 = vand.u32 %v410, 4294901760
    %v6950 = vsub.f32 %v410, %v6949
    %6951 = vmatpush1.msra.mxu0 %v6950
    %6952 = vmatprep.subr.mxu0 0.0
    %v6953 = vand.u32 %v415, 4294901760
    %v6954 = vsub.f32 %v415, %v6953
    %6955 = vmatpush1.msra.mxu0 %v6954
    %6956 = vmatprep.subr.mxu0 0.0
    %v6957 = vand.u32 %v420, 4294901760
    %v6958 = vsub.f32 %v420, %v6957
    %6959 = vmatpush1.msra.mxu0 %v6958
    %6960 = vmatprep.subr.mxu0 0.0
    %v6961 = vand.u32 %v425, 4294901760
    %v6962 = vsub.f32 %v425, %v6961
    %6963 = vmatpush1.msra.mxu0 %v6962
    %6964 = vmatprep.subr.mxu0 0.0
    %v6965 = vand.u32 %v430, 4294901760
    %v6966 = vsub.f32 %v430, %v6965
    %6967 = vmatpush1.msra.mxu0 %v6966
    %6968 = vmatprep.subr.mxu0 0.0
    %v6969 = vand.u32 %v435, 4294901760
    %v6970 = vsub.f32 %v435, %v6969
    %6971 = vmatpush1.msra.mxu0 %v6970
    %6972 = vmatprep.subr.mxu0 0.0
    %v6973 = vand.u32 %v440, 4294901760
    %v6974 = vsub.f32 %v440, %v6973
    %6975 = vmatpush1.msra.mxu0 %v6974
    %6976 = vmatprep.subr.mxu0 0.0
    %v6977 = vand.u32 %v445, 4294901760
    %v6978 = vsub.f32 %v445, %v6977
    %6979 = vmatpush1.msra.mxu0 %v6978
    %6980 = vmatprep.subr.mxu0 0.0
    %v6981 = vand.u32 %v450, 4294901760
    %v6982 = vsub.f32 %v450, %v6981
    %6983 = vmatpush1.msra.mxu0 %v6982
    %6984 = vmatprep.subr.mxu0 0.0
    %v6985 = vand.u32 %v455, 4294901760
    %v6986 = vsub.f32 %v455, %v6985
    %6987 = vmatpush1.msra.mxu0 %v6986
    %6988 = vmatprep.subr.mxu0 0.0
    %v6989 = vand.u32 %v460, 4294901760
    %v6990 = vsub.f32 %v460, %v6989
    %6991 = vmatpush1.msra.mxu0 %v6990
    %6992 = vmatprep.subr.mxu0 0.0
    %v6993 = vand.u32 %v465, 4294901760
    %v6994 = vsub.f32 %v465, %v6993
    %6995 = vmatpush1.msra.mxu0 %v6994
    %6996 = vmatprep.subr.mxu0 0.0
    %v6997 = vand.u32 %v470, 4294901760
    %v6998 = vsub.f32 %v470, %v6997
    %6999 = vmatpush1.msra.mxu0 %v6998
    %7000 = vmatprep.subr.mxu0 0.0
    %v7001 = vand.u32 %v475, 4294901760
    %v7002 = vsub.f32 %v475, %v7001
    %7003 = vmatpush1.msra.mxu0 %v7002
    %7004 = vmatprep.subr.mxu0 0.0
    %v7005 = vand.u32 %v480, 4294901760
    %v7006 = vsub.f32 %v480, %v7005
    %7007 = vmatpush1.msra.mxu0 %v7006
    %7008 = vmatprep.subr.mxu0 0.0
    %v7009 = vand.u32 %v485, 4294901760
    %v7010 = vsub.f32 %v485, %v7009
    %7011 = vmatpush1.msra.mxu0 %v7010
    %7012 = vmatprep.subr.mxu0 0.0
    %v7013 = vand.u32 %v490, 4294901760
    %v7014 = vsub.f32 %v490, %v7013
    %7015 = vmatpush1.msra.mxu0 %v7014
    %7016 = vmatprep.subr.mxu0 0.0
    %v7017 = vand.u32 %v495, 4294901760
    %v7018 = vsub.f32 %v495, %v7017
    %7019 = vmatpush1.msra.mxu0 %v7018
    %7020 = vmatprep.subr.mxu0 0.0
    %v7021 = vand.u32 %v500, 4294901760
    %v7022 = vsub.f32 %v500, %v7021
    %7023 = vmatpush1.msra.mxu0 %v7022
    %7024 = vmatprep.subr.mxu0 0.0
    %v7025 = vand.u32 %v505, 4294901760
    %v7026 = vsub.f32 %v505, %v7025
    %7027 = vmatpush1.msra.mxu0 %v7026
    %7028 = vmatprep.subr.mxu0 0.0
    %v7029 = vand.u32 %v510, 4294901760
    %v7030 = vsub.f32 %v510, %v7029
    %7031 = vmatpush1.msra.mxu0 %v7030
    %7032 = vmatprep.subr.mxu0 0.0
    %v7033 = vand.u32 %v515, 4294901760
    %v7034 = vsub.f32 %v515, %v7033
    %7035 = vmatpush1.msra.mxu0 %v7034
    %7036 = vmatprep.subr.mxu0 0.0
    %v7037 = vand.u32 %v520, 4294901760
    %v7038 = vsub.f32 %v520, %v7037
    %7039 = vmatpush1.msra.mxu0 %v7038
    %v7040 = vand.u32 %v565, 4294901760
    %v7041 = vsub.f32 %v565, %v7040
    %7042 = vmatprep.mubr.f32.mxu0 %v7041
    %v7043 = vand.u32 %v563, 4294901760
    %v7044 = vsub.f32 %v563, %v7043
    %7045 = vmatmul.mubr.f32.gmra.mrb[0].mxu0 %v7044
    %v7046 = vpop.f32.mrb[0].mxu0
    %v7047 = vadd.f32 %v6909, %v7046
    %v7048 = vpop.f32.mrb[0].mxu0
    %7049 = vdwg.mxu0
    %7050 = vmatprep.subr.mxu0 0.0
    %v7051 = vand.u32 %v365, 4294901760
    %7052 = vmatpush1.msra.mxu0 %v7051
    %7053 = vmatprep.subr.mxu0 0.0
    %v7054 = vand.u32 %v370, 4294901760
    %7055 = vmatpush1.msra.mxu0 %v7054
    %7056 = vmatprep.subr.mxu0 0.0
    %v7057 = vand.u32 %v375, 4294901760
    %7058 = vmatpush1.msra.mxu0 %v7057
    %7059 = vmatprep.subr.mxu0 0.0
    %v7060 = vand.u32 %v380, 4294901760
    %7061 = vmatpush1.msra.mxu0 %v7060
    %7062 = vmatprep.subr.mxu0 0.0
    %v7063 = vand.u32 %v385, 4294901760
    %7064 = vmatpush1.msra.mxu0 %v7063
    %7065 = vmatprep.subr.mxu0 0.0
    %v7066 = vand.u32 %v390, 4294901760
    %7067 = vmatpush1.msra.mxu0 %v7066
    %7068 = vmatprep.subr.mxu0 0.0
    %v7069 = vand.u32 %v395, 4294901760
    %7070 = vmatpush1.msra.mxu0 %v7069
    %7071 = vmatprep.subr.mxu0 0.0
    %v7072 = vand.u32 %v400, 4294901760
    %7073 = vmatpush1.msra.mxu0 %v7072
    %7074 = vmatprep.subr.mxu0 0.0
    %v7075 = vand.u32 %v405, 4294901760
    %7076 = vmatpush1.msra.mxu0 %v7075
    %7077 = vmatprep.subr.mxu0 0.0
    %v7078 = vand.u32 %v410, 4294901760
    %7079 = vmatpush1.msra.mxu0 %v7078
    %7080 = vmatprep.subr.mxu0 0.0
    %v7081 = vand.u32 %v415, 4294901760
    %7082 = vmatpush1.msra.mxu0 %v7081
    %7083 = vmatprep.subr.mxu0 0.0
    %v7084 = vand.u32 %v420, 4294901760
    %7085 = vmatpush1.msra.mxu0 %v7084
    %7086 = vmatprep.subr.mxu0 0.0
    %v7087 = vand.u32 %v425, 4294901760
    %7088 = vmatpush1.msra.mxu0 %v7087
    %7089 = vmatprep.subr.mxu0 0.0
    %v7090 = vand.u32 %v430, 4294901760
    %7091 = vmatpush1.msra.mxu0 %v7090
    %7092 = vmatprep.subr.mxu0 0.0
    %v7093 = vand.u32 %v435, 4294901760
    %7094 = vmatpush1.msra.mxu0 %v7093
    %7095 = vmatprep.subr.mxu0 0.0
    %v7096 = vand.u32 %v440, 4294901760
    %7097 = vmatpush1.msra.mxu0 %v7096
    %7098 = vmatprep.subr.mxu0 0.0
    %v7099 = vand.u32 %v445, 4294901760
    %7100 = vmatpush1.msra.mxu0 %v7099
    %7101 = vmatprep.subr.mxu0 0.0
    %v7102 = vand.u32 %v450, 4294901760
    %7103 = vmatpush1.msra.mxu0 %v7102
    %7104 = vmatprep.subr.mxu0 0.0
    %v7105 = vand.u32 %v455, 4294901760
    %7106 = vmatpush1.msra.mxu0 %v7105
    %7107 = vmatprep.subr.mxu0 0.0
    %v7108 = vand.u32 %v460, 4294901760
    %7109 = vmatpush1.msra.mxu0 %v7108
    %7110 = vmatprep.subr.mxu0 0.0
    %v7111 = vand.u32 %v465, 4294901760
    %7112 = vmatpush1.msra.mxu0 %v7111
    %7113 = vmatprep.subr.mxu0 0.0
    %v7114 = vand.u32 %v470, 4294901760
    %7115 = vmatpush1.msra.mxu0 %v7114
    %7116 = vmatprep.subr.mxu0 0.0
    %v7117 = vand.u32 %v475, 4294901760
    %7118 = vmatpush1.msra.mxu0 %v7117
    %7119 = vmatprep.subr.mxu0 0.0
    %v7120 = vand.u32 %v480, 4294901760
    %7121 = vmatpush1.msra.mxu0 %v7120
    %7122 = vmatprep.subr.mxu0 0.0
    %v7123 = vand.u32 %v485, 4294901760
    %7124 = vmatpush1.msra.mxu0 %v7123
    %7125 = vmatprep.subr.mxu0 0.0
    %v7126 = vand.u32 %v490, 4294901760
    %7127 = vmatpush1.msra.mxu0 %v7126
    %7128 = vmatprep.subr.mxu0 0.0
    %v7129 = vand.u32 %v495, 4294901760
    %7130 = vmatpush1.msra.mxu0 %v7129
    %7131 = vmatprep.subr.mxu0 0.0
    %v7132 = vand.u32 %v500, 4294901760
    %7133 = vmatpush1.msra.mxu0 %v7132
    %7134 = vmatprep.subr.mxu0 0.0
    %v7135 = vand.u32 %v505, 4294901760
    %7136 = vmatpush1.msra.mxu0 %v7135
    %7137 = vmatprep.subr.mxu0 0.0
    %v7138 = vand.u32 %v510, 4294901760
    %7139 = vmatpush1.msra.mxu0 %v7138
    %7140 = vmatprep.subr.mxu0 0.0
    %v7141 = vand.u32 %v515, 4294901760
    %7142 = vmatpush1.msra.mxu0 %v7141
    %7143 = vmatprep.subr.mxu0 0.0
    %v7144 = vand.u32 %v520, 4294901760
    %7145 = vmatpush1.msra.mxu0 %v7144
    %v7146 = vand.u32 %v565, 4294901760
    %v7147 = vsub.f32 %v565, %v7146
    %v7148 = vand.u32 %v7147, 4294901760
    %7149 = vmatprep.mubr.f32.mxu0 %v7148
    %v7150 = vand.u32 %v563, 4294901760
    %v7151 = vsub.f32 %v563, %v7150
    %v7152 = vand.u32 %v7151, 4294901760
    %7153 = vmatmul.mubr.f32.gmra.mrb[0].mxu0 %v7152
    %v7154 = vpop.f32.mrb[0].mxu0
    %v7155 = vadd.f32 %v7047, %v7154
    %v7156 = vpop.f32.mrb[0].mxu0
    %7157 = vdwg.mxu0
    %7158 = vmatprep.subr.mxu0 0.0
    %v7159 = vand.u32 %v365, 4294901760
    %v7160 = vsub.f32 %v365, %v7159
    %v7161 = vand.u32 %v7160, 4294901760
    %7162 = vmatpush1.msra.mxu0 %v7161
    %7163 = vmatprep.subr.mxu0 0.0
    %v7164 = vand.u32 %v370, 4294901760
    %v7165 = vsub.f32 %v370, %v7164
    %v7166 = vand.u32 %v7165, 4294901760
    %7167 = vmatpush1.msra.mxu0 %v7166
    %7168 = vmatprep.subr.mxu0 0.0
    %v7169 = vand.u32 %v375, 4294901760
    %v7170 = vsub.f32 %v375, %v7169
    %v7171 = vand.u32 %v7170, 4294901760
    %7172 = vmatpush1.msra.mxu0 %v7171
    %7173 = vmatprep.subr.mxu0 0.0
    %v7174 = vand.u32 %v380, 4294901760
    %v7175 = vsub.f32 %v380, %v7174
    %v7176 = vand.u32 %v7175, 4294901760
    %7177 = vmatpush1.msra.mxu0 %v7176
    %7178 = vmatprep.subr.mxu0 0.0
    %v7179 = vand.u32 %v385, 4294901760
    %v7180 = vsub.f32 %v385, %v7179
    %v7181 = vand.u32 %v7180, 4294901760
    %7182 = vmatpush1.msra.mxu0 %v7181
    %7183 = vmatprep.subr.mxu0 0.0
    %v7184 = vand.u32 %v390, 4294901760
    %v7185 = vsub.f32 %v390, %v7184
    %v7186 = vand.u32 %v7185, 4294901760
    %7187 = vmatpush1.msra.mxu0 %v7186
    %7188 = vmatprep.subr.mxu0 0.0
    %v7189 = vand.u32 %v395, 4294901760
    %v7190 = vsub.f32 %v395, %v7189
    %v7191 = vand.u32 %v7190, 4294901760
    %7192 = vmatpush1.msra.mxu0 %v7191
    %7193 = vmatprep.subr.mxu0 0.0
    %v7194 = vand.u32 %v400, 4294901760
    %v7195 = vsub.f32 %v400, %v7194
    %v7196 = vand.u32 %v7195, 4294901760
    %7197 = vmatpush1.msra.mxu0 %v7196
    %7198 = vmatprep.subr.mxu0 0.0
    %v7199 = vand.u32 %v405, 4294901760
    %v7200 = vsub.f32 %v405, %v7199
    %v7201 = vand.u32 %v7200, 4294901760
    %7202 = vmatpush1.msra.mxu0 %v7201
    %7203 = vmatprep.subr.mxu0 0.0
    %v7204 = vand.u32 %v410, 4294901760
    %v7205 = vsub.f32 %v410, %v7204
    %v7206 = vand.u32 %v7205, 4294901760
    %7207 = vmatpush1.msra.mxu0 %v7206
    %7208 = vmatprep.subr.mxu0 0.0
    %v7209 = vand.u32 %v415, 4294901760
    %v7210 = vsub.f32 %v415, %v7209
    %v7211 = vand.u32 %v7210, 4294901760
    %7212 = vmatpush1.msra.mxu0 %v7211
    %7213 = vmatprep.subr.mxu0 0.0
    %v7214 = vand.u32 %v420, 4294901760
    %v7215 = vsub.f32 %v420, %v7214
    %v7216 = vand.u32 %v7215, 4294901760
    %7217 = vmatpush1.msra.mxu0 %v7216
    %7218 = vmatprep.subr.mxu0 0.0
    %v7219 = vand.u32 %v425, 4294901760
    %v7220 = vsub.f32 %v425, %v7219
    %v7221 = vand.u32 %v7220, 4294901760
    %7222 = vmatpush1.msra.mxu0 %v7221
    %7223 = vmatprep.subr.mxu0 0.0
    %v7224 = vand.u32 %v430, 4294901760
    %v7225 = vsub.f32 %v430, %v7224
    %v7226 = vand.u32 %v7225, 4294901760
    %7227 = vmatpush1.msra.mxu0 %v7226
    %7228 = vmatprep.subr.mxu0 0.0
    %v7229 = vand.u32 %v435, 4294901760
    %v7230 = vsub.f32 %v435, %v7229
    %v7231 = vand.u32 %v7230, 4294901760
    %7232 = vmatpush1.msra.mxu0 %v7231
    %7233 = vmatprep.subr.mxu0 0.0
    %v7234 = vand.u32 %v440, 4294901760
    %v7235 = vsub.f32 %v440, %v7234
    %v7236 = vand.u32 %v7235, 4294901760
    %7237 = vmatpush1.msra.mxu0 %v7236
    %7238 = vmatprep.subr.mxu0 0.0
    %v7239 = vand.u32 %v445, 4294901760
    %v7240 = vsub.f32 %v445, %v7239
    %v7241 = vand.u32 %v7240, 4294901760
    %7242 = vmatpush1.msra.mxu0 %v7241
    %7243 = vmatprep.subr.mxu0 0.0
    %v7244 = vand.u32 %v450, 4294901760
    %v7245 = vsub.f32 %v450, %v7244
    %v7246 = vand.u32 %v7245, 4294901760
    %7247 = vmatpush1.msra.mxu0 %v7246
    %7248 = vmatprep.subr.mxu0 0.0
    %v7249 = vand.u32 %v455, 4294901760
    %v7250 = vsub.f32 %v455, %v7249
    %v7251 = vand.u32 %v7250, 4294901760
    %7252 = vmatpush1.msra.mxu0 %v7251
    %7253 = vmatprep.subr.mxu0 0.0
    %v7254 = vand.u32 %v460, 4294901760
    %v7255 = vsub.f32 %v460, %v7254
    %v7256 = vand.u32 %v7255, 4294901760
    %7257 = vmatpush1.msra.mxu0 %v7256
    %7258 = vmatprep.subr.mxu0 0.0
    %v7259 = vand.u32 %v465, 4294901760
    %v7260 = vsub.f32 %v465, %v7259
    %v7261 = vand.u32 %v7260, 4294901760
    %7262 = vmatpush1.msra.mxu0 %v7261
    %7263 = vmatprep.subr.mxu0 0.0
    %v7264 = vand.u32 %v470, 4294901760
    %v7265 = vsub.f32 %v470, %v7264
    %v7266 = vand.u32 %v7265, 4294901760
    %7267 = vmatpush1.msra.mxu0 %v7266
    %7268 = vmatprep.subr.mxu0 0.0
    %v7269 = vand.u32 %v475, 4294901760
    %v7270 = vsub.f32 %v475, %v7269
    %v7271 = vand.u32 %v7270, 4294901760
    %7272 = vmatpush1.msra.mxu0 %v7271
    %7273 = vmatprep.subr.mxu0 0.0
    %v7274 = vand.u32 %v480, 4294901760
    %v7275 = vsub.f32 %v480, %v7274
    %v7276 = vand.u32 %v7275, 4294901760
    %7277 = vmatpush1.msra.mxu0 %v7276
    %7278 = vmatprep.subr.mxu0 0.0
    %v7279 = vand.u32 %v485, 4294901760
    %v7280 = vsub.f32 %v485, %v7279
    %v7281 = vand.u32 %v7280, 4294901760
    %7282 = vmatpush1.msra.mxu0 %v7281
    %7283 = vmatprep.subr.mxu0 0.0
    %v7284 = vand.u32 %v490, 4294901760
    %v7285 = vsub.f32 %v490, %v7284
    %v7286 = vand.u32 %v7285, 4294901760
    %7287 = vmatpush1.msra.mxu0 %v7286
    %7288 = vmatprep.subr.mxu0 0.0
    %v7289 = vand.u32 %v495, 4294901760
    %v7290 = vsub.f32 %v495, %v7289
    %v7291 = vand.u32 %v7290, 4294901760
    %7292 = vmatpush1.msra.mxu0 %v7291
    %7293 = vmatprep.subr.mxu0 0.0
    %v7294 = vand.u32 %v500, 4294901760
    %v7295 = vsub.f32 %v500, %v7294
    %v7296 = vand.u32 %v7295, 4294901760
    %7297 = vmatpush1.msra.mxu0 %v7296
    %7298 = vmatprep.subr.mxu0 0.0
    %v7299 = vand.u32 %v505, 4294901760
    %v7300 = vsub.f32 %v505, %v7299
    %v7301 = vand.u32 %v7300, 4294901760
    %7302 = vmatpush1.msra.mxu0 %v7301
    %7303 = vmatprep.subr.mxu0 0.0
    %v7304 = vand.u32 %v510, 4294901760
    %v7305 = vsub.f32 %v510, %v7304
    %v7306 = vand.u32 %v7305, 4294901760
    %7307 = vmatpush1.msra.mxu0 %v7306
    %7308 = vmatprep.subr.mxu0 0.0
    %v7309 = vand.u32 %v515, 4294901760
    %v7310 = vsub.f32 %v515, %v7309
    %v7311 = vand.u32 %v7310, 4294901760
    %7312 = vmatpush1.msra.mxu0 %v7311
    %7313 = vmatprep.subr.mxu0 0.0
    %v7314 = vand.u32 %v520, 4294901760
    %v7315 = vsub.f32 %v520, %v7314
    %v7316 = vand.u32 %v7315, 4294901760
    %7317 = vmatpush1.msra.mxu0 %v7316
    %v7318 = vand.u32 %v565, 4294901760
    %7319 = vmatprep.mubr.f32.mxu0 %v7318
    %v7320 = vand.u32 %v563, 4294901760
    %7321 = vmatmul.mubr.f32.gmra.mrb[0].mxu0 %v7320
    %v7322 = vpop.f32.mrb[0].mxu0
    %v7323 = vadd.f32 %v7155, %v7322
    %v7324 = vpop.f32.mrb[0].mxu0
    %7325 = vdwg.mxu0
    %7326 = vmatprep.subr.mxu0 0.0
    %v7327 = vand.u32 %v365, 4294901760
    %7328 = vmatpush1.msra.mxu0 %v7327
    %7329 = vmatprep.subr.mxu0 0.0
    %v7330 = vand.u32 %v370, 4294901760
    %7331 = vmatpush1.msra.mxu0 %v7330
    %7332 = vmatprep.subr.mxu0 0.0
    %v7333 = vand.u32 %v375, 4294901760
    %7334 = vmatpush1.msra.mxu0 %v7333
    %7335 = vmatprep.subr.mxu0 0.0
    %v7336 = vand.u32 %v380, 4294901760
    %7337 = vmatpush1.msra.mxu0 %v7336
    %7338 = vmatprep.subr.mxu0 0.0
    %v7339 = vand.u32 %v385, 4294901760
    %7340 = vmatpush1.msra.mxu0 %v7339
    %7341 = vmatprep.subr.mxu0 0.0
    %v7342 = vand.u32 %v390, 4294901760
    %7343 = vmatpush1.msra.mxu0 %v7342
    %7344 = vmatprep.subr.mxu0 0.0
    %v7345 = vand.u32 %v395, 4294901760
    %7346 = vmatpush1.msra.mxu0 %v7345
    %7347 = vmatprep.subr.mxu0 0.0
    %v7348 = vand.u32 %v400, 4294901760
    %7349 = vmatpush1.msra.mxu0 %v7348
    %7350 = vmatprep.subr.mxu0 0.0
    %v7351 = vand.u32 %v405, 4294901760
    %7352 = vmatpush1.msra.mxu0 %v7351
    %7353 = vmatprep.subr.mxu0 0.0
    %v7354 = vand.u32 %v410, 4294901760
    %7355 = vmatpush1.msra.mxu0 %v7354
    %7356 = vmatprep.subr.mxu0 0.0
    %v7357 = vand.u32 %v415, 4294901760
    %7358 = vmatpush1.msra.mxu0 %v7357
    %7359 = vmatprep.subr.mxu0 0.0
    %v7360 = vand.u32 %v420, 4294901760
    %7361 = vmatpush1.msra.mxu0 %v7360
    %7362 = vmatprep.subr.mxu0 0.0
    %v7363 = vand.u32 %v425, 4294901760
    %7364 = vmatpush1.msra.mxu0 %v7363
    %7365 = vmatprep.subr.mxu0 0.0
    %v7366 = vand.u32 %v430, 4294901760
    %7367 = vmatpush1.msra.mxu0 %v7366
    %7368 = vmatprep.subr.mxu0 0.0
    %v7369 = vand.u32 %v435, 4294901760
    %7370 = vmatpush1.msra.mxu0 %v7369
    %7371 = vmatprep.subr.mxu0 0.0
    %v7372 = vand.u32 %v440, 4294901760
    %7373 = vmatpush1.msra.mxu0 %v7372
    %7374 = vmatprep.subr.mxu0 0.0
    %v7375 = vand.u32 %v445, 4294901760
    %7376 = vmatpush1.msra.mxu0 %v7375
    %7377 = vmatprep.subr.mxu0 0.0
    %v7378 = vand.u32 %v450, 4294901760
    %7379 = vmatpush1.msra.mxu0 %v7378
    %7380 = vmatprep.subr.mxu0 0.0
    %v7381 = vand.u32 %v455, 4294901760
    %7382 = vmatpush1.msra.mxu0 %v7381
    %7383 = vmatprep.subr.mxu0 0.0
    %v7384 = vand.u32 %v460, 4294901760
    %7385 = vmatpush1.msra.mxu0 %v7384
    %7386 = vmatprep.subr.mxu0 0.0
    %v7387 = vand.u32 %v465, 4294901760
    %7388 = vmatpush1.msra.mxu0 %v7387
    %7389 = vmatprep.subr.mxu0 0.0
    %v7390 = vand.u32 %v470, 4294901760
    %7391 = vmatpush1.msra.mxu0 %v7390
    %7392 = vmatprep.subr.mxu0 0.0
    %v7393 = vand.u32 %v475, 4294901760
    %7394 = vmatpush1.msra.mxu0 %v7393
    %7395 = vmatprep.subr.mxu0 0.0
    %v7396 = vand.u32 %v480, 4294901760
    %7397 = vmatpush1.msra.mxu0 %v7396
    %7398 = vmatprep.subr.mxu0 0.0
    %v7399 = vand.u32 %v485, 4294901760
    %7400 = vmatpush1.msra.mxu0 %v7399
    %7401 = vmatprep.subr.mxu0 0.0
    %v7402 = vand.u32 %v490, 4294901760
    %7403 = vmatpush1.msra.mxu0 %v7402
    %7404 = vmatprep.subr.mxu0 0.0
    %v7405 = vand.u32 %v495, 4294901760
    %7406 = vmatpush1.msra.mxu0 %v7405
    %7407 = vmatprep.subr.mxu0 0.0
    %v7408 = vand.u32 %v500, 4294901760
    %7409 = vmatpush1.msra.mxu0 %v7408
    %7410 = vmatprep.subr.mxu0 0.0
    %v7411 = vand.u32 %v505, 4294901760
    %7412 = vmatpush1.msra.mxu0 %v7411
    %7413 = vmatprep.subr.mxu0 0.0
    %v7414 = vand.u32 %v510, 4294901760
    %7415 = vmatpush1.msra.mxu0 %v7414
    %7416 = vmatprep.subr.mxu0 0.0
    %v7417 = vand.u32 %v515, 4294901760
    %7418 = vmatpush1.msra.mxu0 %v7417
    %7419 = vmatprep.subr.mxu0 0.0
    %v7420 = vand.u32 %v520, 4294901760
    %7421 = vmatpush1.msra.mxu0 %v7420
    %v7422 = vand.u32 %v565, 4294901760
    %7423 = vmatprep.mubr.f32.mxu0 %v7422
    %v7424 = vand.u32 %v563, 4294901760
    %7425 = vmatmul.mubr.f32.gmra.mrb[0].mxu0 %v7424
    %v7426 = vpop.f32.mrb[0].mxu0
    %v7427 = vadd.f32 %v7323, %v7426
    %v7428 = vpop.f32.mrb[0].mxu0
    %7429 = vdwg.mxu0
    %v7430 = vtanh.pop %v3134
    %v7431 = vtanh.pop %v3136
    %v7432 = vtanh.pop %v5702
    %v7433 = vtanh.pop %v5704
    %v7434 = vtanh.pop %v7427
    %v7435 = vld [vmem:[%s7] sm:$0xff]
    %v7436 = vld [vmem:[%s7 + $0x8] sm:$0xff]
    %v7437 = vld [vmem:[%s7 + $0x10] sm:$0xff]
    %v7438 = vld [vmem:[%s7 + $0x18] sm:$0xff]
    %v7439 = vld [vmem:[%s7 + $0x20] sm:$0xff]
    %v7440 = vld [vmem:[%s7 + $0x28] sm:$0xff]
    %v7441 = vld [vmem:[%s7 + $0x30] sm:$0xff]
    %v7442 = vld [vmem:[%s7 + $0x38] sm:$0xff]
    %v7443 = vld [vmem:[%s7 + $0x40] sm:$0xff]
    %v7444 = vld [vmem:[%s7 + $0x48] sm:$0xff]
    %v7445 = vld [vmem:[%s7 + $0x50] sm:$0xff]
    %v7446 = vld [vmem:[%s7 + $0x58] sm:$0xff]
    %v7447 = vld [vmem:[%s7 + $0x60] sm:$0xff]
    %v7448 = vld [vmem:[%s7 + $0x68] sm:$0xff]
    %v7449 = vld [vmem:[%s7 + $0x70] sm:$0xff]
    %v7450 = vld [vmem:[%s7 + $0x78] sm:$0xff]
    %v7451 = vld [vmem:[%s7 + $0x80] sm:$0xff]
    %v7452 = vld [vmem:[%s7 + $0x88] sm:$0xff]
    %v7453 = vld [vmem:[%s7 + $0x90] sm:$0xff]
    %v7454 = vld [vmem:[%s7 + $0x98] sm:$0xff]
    %v7455 = vld [vmem:[%s7 + $0xa0] sm:$0xff]
    %v7456 = vld [vmem:[%s7 + $0xa8] sm:$0xff]
    %v7457 = vld [vmem:[%s7 + $0xb0] sm:$0xff]
    %v7458 = vld [vmem:[%s7 + $0xb8] sm:$0xff]
    %v7459 = vld [vmem:[%s7 + $0xc0] sm:$0xff]
    %v7460 = vld [vmem:[%s7 + $0xc8] sm:$0xff]
    %v7461 = vld [vmem:[%s7 + $0xd0] sm:$0xff]
    %v7462 = vld [vmem:[%s7 + $0xd8] sm:$0xff]
    %v7463 = vld [vmem:[%s7 + $0xe0] sm:$0xff]
    %v7464 = vld [vmem:[%s7 + $0xe8] sm:$0xff]
    %v7465 = vld [vmem:[%s7 + $0xf0] sm:$0xff]
    %v7466 = vld [vmem:[%s7 + $0xf8] sm:$0xff]
    %v7467 = vld [vmem:[%s7 + $0x100] sm:$0xff]
    %v7468 = vld [vmem:[%s7 + $0x108] sm:$0xff]
    %v7469 = vld [vmem:[%s7 + $0x110] sm:$0xff]
    %v7470 = vld [vmem:[%s7 + $0x118] sm:$0xff]
    %v7471 = vld [vmem:[%s7 + $0x120] sm:$0xff]
    %v7472 = vld [vmem:[%s7 + $0x128] sm:$0xff]
    %v7473 = vld [vmem:[%s7 + $0x130] sm:$0xff]
    %v7474 = vld [vmem:[%s7 + $0x138] sm:$0xff]
    %v7475 = vld [vmem:[%s7 + $0x140] sm:$0xff]
    %v7476 = vld [vmem:[%s7 + $0x148] sm:$0xff]
    %v7477 = vld [vmem:[%s7 + $0x150] sm:$0xff]
    %v7478 = vld [vmem:[%s7 + $0x158] sm:$0xff]
    %v7479 = vld [vmem:[%s7 + $0x160] sm:$0xff]
    %v7480 = vld [vmem:[%s7 + $0x168] sm:$0xff]
    %v7481 = vld [vmem:[%s7 + $0x170] sm:$0xff]
    %v7482 = vld [vmem:[%s7 + $0x178] sm:$0xff]
    %v7483 = vld [vmem:[%s7 + $0x180] sm:$0xff]
    %v7484 = vld [vmem:[%s7 + $0x188] sm:$0xff]
    %v7485 = vld [vmem:[%s7 + $0x190] sm:$0xff]
    %v7486 = vld [vmem:[%s7 + $0x198] sm:$0xff]
    %v7487 = vld [vmem:[%s7 + $0x1a0] sm:$0xff]
    %v7488 = vld [vmem:[%s7 + $0x1a8] sm:$0xff]
    %v7489 = vld [vmem:[%s7 + $0x1b0] sm:$0xff]
    %v7490 = vld [vmem:[%s7 + $0x1b8] sm:$0xff]
    %v7491 = vld [vmem:[%s7 + $0x1c0] sm:$0xff]
    %v7492 = vld [vmem:[%s7 + $0x1c8] sm:$0xff]
    %v7493 = vld [vmem:[%s7 + $0x1d0] sm:$0xff]
    %v7494 = vld [vmem:[%s7 + $0x1d8] sm:$0xff]
    %v7495 = vld [vmem:[%s7 + $0x1e0] sm:$0xff]
    %v7496 = vld [vmem:[%s7 + $0x1e8] sm:$0xff]
    %v7497 = vld [vmem:[%s7 + $0x1f0] sm:$0xff]
    %v7498 = vld [vmem:[%s7 + $0x1f8] sm:$0xff]
    %v7499 = vld [vmem:[%s7 + $0x200] sm:$0xff]
    %v7500 = vld [vmem:[%s7 + $0x208] sm:$0xff]
    %v7501 = vld [vmem:[%s7 + $0x210] sm:$0xff]
    %v7502 = vld [vmem:[%s7 + $0x218] sm:$0xff]
    %v7503 = vld [vmem:[%s7 + $0x220] sm:$0xff]
    %v7504 = vld [vmem:[%s7 + $0x228] sm:$0xff]
    %v7505 = vld [vmem:[%s7 + $0x230] sm:$0xff]
    %v7506 = vld [vmem:[%s7 + $0x238] sm:$0xff]
    %v7507 = vld [vmem:[%s7 + $0x240] sm:$0xff]
    %v7508 = vld [vmem:[%s7 + $0x248] sm:$0xff]
    %v7509 = vld [vmem:[%s7 + $0x250] sm:$0xff]
    %v7510 = vld [vmem:[%s7 + $0x258] sm:$0xff]
    %v7511 = vld [vmem:[%s7 + $0x260] sm:$0xff]
    %v7512 = vld [vmem:[%s7 + $0x268] sm:$0xff]
    %v7513 = vld [vmem:[%s7 + $0x270] sm:$0xff]
    %v7514 = vld [vmem:[%s7 + $0x278] sm:$0xff]
    %v7515 = vld [vmem:[%s7 + $0x280] sm:$0xff]
    %v7516 = vld [vmem:[%s7 + $0x288] sm:$0xff]
    %v7517 = vld [vmem:[%s7 + $0x290] sm:$0xff]
    %v7518 = vld [vmem:[%s7 + $0x298] sm:$0xff]
    %v7519 = vld [vmem:[%s7 + $0x2a0] sm:$0xff]
    %v7520 = vld [vmem:[%s7 + $0x2a8] sm:$0xff]
    %v7521 = vld [vmem:[%s7 + $0x2b0] sm:$0xff]
    %v7522 = vld [vmem:[%s7 + $0x2b8] sm:$0xff]
    %v7523 = vld [vmem:[%s7 + $0x2c0] sm:$0xff]
    %v7524 = vld [vmem:[%s7 + $0x2c8] sm:$0xff]
    %v7525 = vld [vmem:[%s7 + $0x2d0] sm:$0xff]
    %v7526 = vld [vmem:[%s7 + $0x2d8] sm:$0xff]
    %v7527 = vld [vmem:[%s7 + $0x2e0] sm:$0xff]
    %v7528 = vld [vmem:[%s7 + $0x2e8] sm:$0xff]
    %v7529 = vld [vmem:[%s7 + $0x2f0] sm:$0xff]
    %v7530 = vld [vmem:[%s7 + $0x2f8] sm:$0xff]
    %v7531 = vld [vmem:[%s7 + $0x300] sm:$0xff]
    %v7532 = vld [vmem:[%s7 + $0x308] sm:$0xff]
    %v7533 = vld [vmem:[%s7 + $0x310] sm:$0xff]
    %v7534 = vld [vmem:[%s7 + $0x318] sm:$0xff]
    %v7535 = vld [vmem:[%s7 + $0x320] sm:$0xff]
    %v7536 = vld [vmem:[%s7 + $0x328] sm:$0xff]
    %v7537 = vld [vmem:[%s7 + $0x330] sm:$0xff]
    %v7538 = vld [vmem:[%s7 + $0x338] sm:$0xff]
    %v7539 = vld [vmem:[%s7 + $0x340] sm:$0xff]
    %v7540 = vld [vmem:[%s7 + $0x348] sm:$0xff]
    %v7541 = vld [vmem:[%s7 + $0x350] sm:$0xff]
    %v7542 = vld [vmem:[%s7 + $0x358] sm:$0xff]
    %v7543 = vld [vmem:[%s7 + $0x360] sm:$0xff]
    %v7544 = vld [vmem:[%s7 + $0x368] sm:$0xff]
    %v7545 = vld [vmem:[%s7 + $0x370] sm:$0xff]
    %v7546 = vld [vmem:[%s7 + $0x378] sm:$0xff]
    %v7547 = vld [vmem:[%s7 + $0x380] sm:$0xff]
    %v7548 = vld [vmem:[%s7 + $0x388] sm:$0xff]
    %v7549 = vld [vmem:[%s7 + $0x390] sm:$0xff]
    %v7550 = vld [vmem:[%s7 + $0x398] sm:$0xff]
    %v7551 = vld [vmem:[%s7 + $0x3a0] sm:$0xff]
    %v7552 = vld [vmem:[%s7 + $0x3a8] sm:$0xff]
    %v7553 = vld [vmem:[%s7 + $0x3b0] sm:$0xff]
    %v7554 = vld [vmem:[%s7 + $0x3b8] sm:$0xff]
    %v7555 = vld [vmem:[%s7 + $0x3c0] sm:$0xff]
    %v7556 = vld [vmem:[%s7 + $0x3c8] sm:$0xff]
    %v7557 = vld [vmem:[%s7 + $0x3d0] sm:$0xff]
    %v7558 = vld [vmem:[%s7 + $0x3d8] sm:$0xff]
    %v7559 = vld [vmem:[%s7 + $0x3e0] sm:$0xff]
    %v7560 = vld [vmem:[%s7 + $0x3e8] sm:$0xff]
    %v7561 = vld [vmem:[%s7 + $0x3f0] sm:$0xff]
    %v7562 = vld [vmem:[%s7 + $0x3f8] sm:$0xff]
    %v7563 = vld [vmem:[%s7 + $0x400] sm:$0xff]
    %v7564 = vld [vmem:[%s7 + $0x408] sm:$0xff]
    %v7565 = vld [vmem:[%s7 + $0x410] sm:$0xff]
    %v7566 = vld [vmem:[%s7 + $0x418] sm:$0xff]
    %v7567 = vld [vmem:[%s8] sm:$0x3]
    %v7569 = vlaneseq
    %v7570 = vshrl.u32 %v7569, 7
    %v7571 = vsub.s32 0, %v7570
    %v7572 = vrot.slane %v7567, %v7571
    %v7573 = vlaneseq
    %v7574 = vshrl.u32 %v7573, 7
    %v7575 = vsub.s32 1, %v7574
    %v7576 = vrot.slane %v7567, %v7575
    %vm7579 = vcmask 130048
    %v7581 = vsel %vm7579, %v7434, 0
    %v7583 = vand.u32 %v7436, 4294901760
    %7584 = vmatprep.subr.mxu0 %v7583
    %v7585 = vand.u32 %v7435, 4294901760
    %7586 = vmatpush1.msra.mxu0 %v7585
    %v7587 = vand.u32 %v7438, 4294901760
    %7588 = vmatprep.subr.mxu0 %v7587
    %v7589 = vand.u32 %v7437, 4294901760
    %7590 = vmatpush1.msra.mxu0 %v7589
    %v7591 = vand.u32 %v7440, 4294901760
    %7592 = vmatprep.subr.mxu0 %v7591
    %v7593 = vand.u32 %v7439, 4294901760
    %7594 = vmatpush1.msra.mxu0 %v7593
    %v7595 = vand.u32 %v7442, 4294901760
    %7596 = vmatprep.subr.mxu0 %v7595
    %v7597 = vand.u32 %v7441, 4294901760
    %7598 = vmatpush1.msra.mxu0 %v7597
    %v7599 = vand.u32 %v7444, 4294901760
    %7600 = vmatprep.subr.mxu0 %v7599
    %v7601 = vand.u32 %v7443, 4294901760
    %7602 = vmatpush1.msra.mxu0 %v7601
    %v7603 = vand.u32 %v7446, 4294901760
    %7604 = vmatprep.subr.mxu0 %v7603
    %v7605 = vand.u32 %v7445, 4294901760
    %7606 = vmatpush1.msra.mxu0 %v7605
    %v7607 = vand.u32 %v7448, 4294901760
    %7608 = vmatprep.subr.mxu0 %v7607
    %v7609 = vand.u32 %v7447, 4294901760
    %7610 = vmatpush1.msra.mxu0 %v7609
    %v7611 = vand.u32 %v7450, 4294901760
    %7612 = vmatprep.subr.mxu0 %v7611
    %v7613 = vand.u32 %v7449, 4294901760
    %7614 = vmatpush1.msra.mxu0 %v7613
    %v7615 = vand.u32 %v7452, 4294901760
    %7616 = vmatprep.subr.mxu0 %v7615
    %v7617 = vand.u32 %v7451, 4294901760
    %7618 = vmatpush1.msra.mxu0 %v7617
    %v7619 = vand.u32 %v7454, 4294901760
    %7620 = vmatprep.subr.mxu0 %v7619
    %v7621 = vand.u32 %v7453, 4294901760
    %7622 = vmatpush1.msra.mxu0 %v7621
    %v7623 = vand.u32 %v7456, 4294901760
    %7624 = vmatprep.subr.mxu0 %v7623
    %v7625 = vand.u32 %v7455, 4294901760
    %7626 = vmatpush1.msra.mxu0 %v7625
    %v7627 = vand.u32 %v7458, 4294901760
    %7628 = vmatprep.subr.mxu0 %v7627
    %v7629 = vand.u32 %v7457, 4294901760
    %7630 = vmatpush1.msra.mxu0 %v7629
    %v7631 = vand.u32 %v7460, 4294901760
    %7632 = vmatprep.subr.mxu0 %v7631
    %v7633 = vand.u32 %v7459, 4294901760
    %7634 = vmatpush1.msra.mxu0 %v7633
    %v7635 = vand.u32 %v7462, 4294901760
    %7636 = vmatprep.subr.mxu0 %v7635
    %v7637 = vand.u32 %v7461, 4294901760
    %7638 = vmatpush1.msra.mxu0 %v7637
    %v7639 = vand.u32 %v7464, 4294901760
    %7640 = vmatprep.subr.mxu0 %v7639
    %v7641 = vand.u32 %v7463, 4294901760
    %7642 = vmatpush1.msra.mxu0 %v7641
    %v7643 = vand.u32 %v7466, 4294901760
    %7644 = vmatprep.subr.mxu0 %v7643
    %v7645 = vand.u32 %v7465, 4294901760
    %7646 = vmatpush1.msra.mxu0 %v7645
    %v7647 = vand.u32 %v7468, 4294901760
    %7648 = vmatprep.subr.mxu0 %v7647
    %v7649 = vand.u32 %v7467, 4294901760
    %7650 = vmatpush1.msra.mxu0 %v7649
    %v7651 = vand.u32 %v7470, 4294901760
    %7652 = vmatprep.subr.mxu0 %v7651
    %v7653 = vand.u32 %v7469, 4294901760
    %7654 = vmatpush1.msra.mxu0 %v7653
    %v7655 = vand.u32 %v7472, 4294901760
    %7656 = vmatprep.subr.mxu0 %v7655
    %v7657 = vand.u32 %v7471, 4294901760
    %7658 = vmatpush1.msra.mxu0 %v7657
    %v7659 = vand.u32 %v7474, 4294901760
    %7660 = vmatprep.subr.mxu0 %v7659
    %v7661 = vand.u32 %v7473, 4294901760
    %7662 = vmatpush1.msra.mxu0 %v7661
    %v7663 = vand.u32 %v7476, 4294901760
    %7664 = vmatprep.subr.mxu0 %v7663
    %v7665 = vand.u32 %v7475, 4294901760
    %7666 = vmatpush1.msra.mxu0 %v7665
    %v7667 = vand.u32 %v7478, 4294901760
    %7668 = vmatprep.subr.mxu0 %v7667
    %v7669 = vand.u32 %v7477, 4294901760
    %7670 = vmatpush1.msra.mxu0 %v7669
    %v7671 = vand.u32 %v7480, 4294901760
    %7672 = vmatprep.subr.mxu0 %v7671
    %v7673 = vand.u32 %v7479, 4294901760
    %7674 = vmatpush1.msra.mxu0 %v7673
    %v7675 = vand.u32 %v7482, 4294901760
    %7676 = vmatprep.subr.mxu0 %v7675
    %v7677 = vand.u32 %v7481, 4294901760
    %7678 = vmatpush1.msra.mxu0 %v7677
    %v7679 = vand.u32 %v7484, 4294901760
    %7680 = vmatprep.subr.mxu0 %v7679
    %v7681 = vand.u32 %v7483, 4294901760
    %7682 = vmatpush1.msra.mxu0 %v7681
    %v7683 = vand.u32 %v7486, 4294901760
    %7684 = vmatprep.subr.mxu0 %v7683
    %v7685 = vand.u32 %v7485, 4294901760
    %7686 = vmatpush1.msra.mxu0 %v7685
    %v7687 = vand.u32 %v7488, 4294901760
    %7688 = vmatprep.subr.mxu0 %v7687
    %v7689 = vand.u32 %v7487, 4294901760
    %7690 = vmatpush1.msra.mxu0 %v7689
    %v7691 = vand.u32 %v7490, 4294901760
    %7692 = vmatprep.subr.mxu0 %v7691
    %v7693 = vand.u32 %v7489, 4294901760
    %7694 = vmatpush1.msra.mxu0 %v7693
    %v7695 = vand.u32 %v7492, 4294901760
    %7696 = vmatprep.subr.mxu0 %v7695
    %v7697 = vand.u32 %v7491, 4294901760
    %7698 = vmatpush1.msra.mxu0 %v7697
    %v7699 = vand.u32 %v7494, 4294901760
    %7700 = vmatprep.subr.mxu0 %v7699
    %v7701 = vand.u32 %v7493, 4294901760
    %7702 = vmatpush1.msra.mxu0 %v7701
    %v7703 = vand.u32 %v7496, 4294901760
    %7704 = vmatprep.subr.mxu0 %v7703
    %v7705 = vand.u32 %v7495, 4294901760
    %7706 = vmatpush1.msra.mxu0 %v7705
    %v7707 = vand.u32 %v7498, 4294901760
    %7708 = vmatprep.subr.mxu0 %v7707
    %v7709 = vand.u32 %v7497, 4294901760
    %7710 = vmatpush1.msra.mxu0 %v7709
    %v7711 = vand.u32 %v7431, 4294901760
    %v7712 = vsub.f32 %v7431, %v7711
    %v7713 = vand.u32 %v7712, 4294901760
    %v7714 = vsub.f32 %v7712, %v7713
    %v7715 = vand.u32 %v7714, 4294901760
    %7716 = vmatprep.mubr.f32.mxu0 %v7715
    %v7717 = vand.u32 %v7430, 4294901760
    %v7718 = vsub.f32 %v7430, %v7717
    %v7719 = vand.u32 %v7718, 4294901760
    %v7720 = vsub.f32 %v7718, %v7719
    %v7721 = vand.u32 %v7720, 4294901760
    %7722 = vmatmul.mubr.f32.gmra.mrb[0].mxu0 %v7721
    %v7723 = vpop.f32.mrb[0].mxu0
    %v7724 = vadd.f32 %v7572, %v7723
    %v7725 = vpop.f32.mrb[0].mxu0
    %v7726 = vadd.f32 %v7576, %v7725
    %7727 = vdwg.mxu0
    %v7728 = vand.u32 %v7436, 4294901760
    %v7729 = vsub.f32 %v7436, %v7728
    %v7730 = vand.u32 %v7729, 4294901760
    %v7731 = vsub.f32 %v7729, %v7730
    %v7732 = vand.u32 %v7731, 4294901760
    %7733 = vmatprep.subr.mxu0 %v7732
    %v7734 = vand.u32 %v7435, 4294901760
    %v7735 = vsub.f32 %v7435, %v7734
    %v7736 = vand.u32 %v7735, 4294901760
    %v7737 = vsub.f32 %v7735, %v7736
    %v7738 = vand.u32 %v7737, 4294901760
    %7739 = vmatpush1.msra.mxu0 %v7738
    %v7740 = vand.u32 %v7438, 4294901760
    %v7741 = vsub.f32 %v7438, %v7740
    %v7742 = vand.u32 %v7741, 4294901760
    %v7743 = vsub.f32 %v7741, %v7742
    %v7744 = vand.u32 %v7743, 4294901760
    %7745 = vmatprep.subr.mxu0 %v7744
    %v7746 = vand.u32 %v7437, 4294901760
    %v7747 = vsub.f32 %v7437, %v7746
    %v7748 = vand.u32 %v7747, 4294901760
    %v7749 = vsub.f32 %v7747, %v7748
    %v7750 = vand.u32 %v7749, 4294901760
    %7751 = vmatpush1.msra.mxu0 %v7750
    %v7752 = vand.u32 %v7440, 4294901760
    %v7753 = vsub.f32 %v7440, %v7752
    %v7754 = vand.u32 %v7753, 4294901760
    %v7755 = vsub.f32 %v7753, %v7754
    %v7756 = vand.u32 %v7755, 4294901760
    %7757 = vmatprep.subr.mxu0 %v7756
    %v7758 = vand.u32 %v7439, 4294901760
    %v7759 = vsub.f32 %v7439, %v7758
    %v7760 = vand.u32 %v7759, 4294901760
    %v7761 = vsub.f32 %v7759, %v7760
    %v7762 = vand.u32 %v7761, 4294901760
    %7763 = vmatpush1.msra.mxu0 %v7762
    %v7764 = vand.u32 %v7442, 4294901760
    %v7765 = vsub.f32 %v7442, %v7764
    %v7766 = vand.u32 %v7765, 4294901760
    %v7767 = vsub.f32 %v7765, %v7766
    %v7768 = vand.u32 %v7767, 4294901760
    %7769 = vmatprep.subr.mxu0 %v7768
    %v7770 = vand.u32 %v7441, 4294901760
    %v7771 = vsub.f32 %v7441, %v7770
    %v7772 = vand.u32 %v7771, 4294901760
    %v7773 = vsub.f32 %v7771, %v7772
    %v7774 = vand.u32 %v7773, 4294901760
    %7775 = vmatpush1.msra.mxu0 %v7774
    %v7776 = vand.u32 %v7444, 4294901760
    %v7777 = vsub.f32 %v7444, %v7776
    %v7778 = vand.u32 %v7777, 4294901760
    %v7779 = vsub.f32 %v7777, %v7778
    %v7780 = vand.u32 %v7779, 4294901760
    %7781 = vmatprep.subr.mxu0 %v7780
    %v7782 = vand.u32 %v7443, 4294901760
    %v7783 = vsub.f32 %v7443, %v7782
    %v7784 = vand.u32 %v7783, 4294901760
    %v7785 = vsub.f32 %v7783, %v7784
    %v7786 = vand.u32 %v7785, 4294901760
    %7787 = vmatpush1.msra.mxu0 %v7786
    %v7788 = vand.u32 %v7446, 4294901760
    %v7789 = vsub.f32 %v7446, %v7788
    %v7790 = vand.u32 %v7789, 4294901760
    %v7791 = vsub.f32 %v7789, %v7790
    %v7792 = vand.u32 %v7791, 4294901760
    %7793 = vmatprep.subr.mxu0 %v7792
    %v7794 = vand.u32 %v7445, 4294901760
    %v7795 = vsub.f32 %v7445, %v7794
    %v7796 = vand.u32 %v7795, 4294901760
    %v7797 = vsub.f32 %v7795, %v7796
    %v7798 = vand.u32 %v7797, 4294901760
    %7799 = vmatpush1.msra.mxu0 %v7798
    %v7800 = vand.u32 %v7448, 4294901760
    %v7801 = vsub.f32 %v7448, %v7800
    %v7802 = vand.u32 %v7801, 4294901760
    %v7803 = vsub.f32 %v7801, %v7802
    %v7804 = vand.u32 %v7803, 4294901760
    %7805 = vmatprep.subr.mxu0 %v7804
    %v7806 = vand.u32 %v7447, 4294901760
    %v7807 = vsub.f32 %v7447, %v7806
    %v7808 = vand.u32 %v7807, 4294901760
    %v7809 = vsub.f32 %v7807, %v7808
    %v7810 = vand.u32 %v7809, 4294901760
    %7811 = vmatpush1.msra.mxu0 %v7810
    %v7812 = vand.u32 %v7450, 4294901760
    %v7813 = vsub.f32 %v7450, %v7812
    %v7814 = vand.u32 %v7813, 4294901760
    %v7815 = vsub.f32 %v7813, %v7814
    %v7816 = vand.u32 %v7815, 4294901760
    %7817 = vmatprep.subr.mxu0 %v7816
    %v7818 = vand.u32 %v7449, 4294901760
    %v7819 = vsub.f32 %v7449, %v7818
    %v7820 = vand.u32 %v7819, 4294901760
    %v7821 = vsub.f32 %v7819, %v7820
    %v7822 = vand.u32 %v7821, 4294901760
    %7823 = vmatpush1.msra.mxu0 %v7822
    %v7824 = vand.u32 %v7452, 4294901760
    %v7825 = vsub.f32 %v7452, %v7824
    %v7826 = vand.u32 %v7825, 4294901760
    %v7827 = vsub.f32 %v7825, %v7826
    %v7828 = vand.u32 %v7827, 4294901760
    %7829 = vmatprep.subr.mxu0 %v7828
    %v7830 = vand.u32 %v7451, 4294901760
    %v7831 = vsub.f32 %v7451, %v7830
    %v7832 = vand.u32 %v7831, 4294901760
    %v7833 = vsub.f32 %v7831, %v7832
    %v7834 = vand.u32 %v7833, 4294901760
    %7835 = vmatpush1.msra.mxu0 %v7834
    %v7836 = vand.u32 %v7454, 4294901760
    %v7837 = vsub.f32 %v7454, %v7836
    %v7838 = vand.u32 %v7837, 4294901760
    %v7839 = vsub.f32 %v7837, %v7838
    %v7840 = vand.u32 %v7839, 4294901760
    %7841 = vmatprep.subr.mxu0 %v7840
    %v7842 = vand.u32 %v7453, 4294901760
    %v7843 = vsub.f32 %v7453, %v7842
    %v7844 = vand.u32 %v7843, 4294901760
    %v7845 = vsub.f32 %v7843, %v7844
    %v7846 = vand.u32 %v7845, 4294901760
    %7847 = vmatpush1.msra.mxu0 %v7846
    %v7848 = vand.u32 %v7456, 4294901760
    %v7849 = vsub.f32 %v7456, %v7848
    %v7850 = vand.u32 %v7849, 4294901760
    %v7851 = vsub.f32 %v7849, %v7850
    %v7852 = vand.u32 %v7851, 4294901760
    %7853 = vmatprep.subr.mxu0 %v7852
    %v7854 = vand.u32 %v7455, 4294901760
    %v7855 = vsub.f32 %v7455, %v7854
    %v7856 = vand.u32 %v7855, 4294901760
    %v7857 = vsub.f32 %v7855, %v7856
    %v7858 = vand.u32 %v7857, 4294901760
    %7859 = vmatpush1.msra.mxu0 %v7858
    %v7860 = vand.u32 %v7458, 4294901760
    %v7861 = vsub.f32 %v7458, %v7860
    %v7862 = vand.u32 %v7861, 4294901760
    %v7863 = vsub.f32 %v7861, %v7862
    %v7864 = vand.u32 %v7863, 4294901760
    %7865 = vmatprep.subr.mxu0 %v7864
    %v7866 = vand.u32 %v7457, 4294901760
    %v7867 = vsub.f32 %v7457, %v7866
    %v7868 = vand.u32 %v7867, 4294901760
    %v7869 = vsub.f32 %v7867, %v7868
    %v7870 = vand.u32 %v7869, 4294901760
    %7871 = vmatpush1.msra.mxu0 %v7870
    %v7872 = vand.u32 %v7460, 4294901760
    %v7873 = vsub.f32 %v7460, %v7872
    %v7874 = vand.u32 %v7873, 4294901760
    %v7875 = vsub.f32 %v7873, %v7874
    %v7876 = vand.u32 %v7875, 4294901760
    %7877 = vmatprep.subr.mxu0 %v7876
    %v7878 = vand.u32 %v7459, 4294901760
    %v7879 = vsub.f32 %v7459, %v7878
    %v7880 = vand.u32 %v7879, 4294901760
    %v7881 = vsub.f32 %v7879, %v7880
    %v7882 = vand.u32 %v7881, 4294901760
    %7883 = vmatpush1.msra.mxu0 %v7882
    %v7884 = vand.u32 %v7462, 4294901760
    %v7885 = vsub.f32 %v7462, %v7884
    %v7886 = vand.u32 %v7885, 4294901760
    %v7887 = vsub.f32 %v7885, %v7886
    %v7888 = vand.u32 %v7887, 4294901760
    %7889 = vmatprep.subr.mxu0 %v7888
    %v7890 = vand.u32 %v7461, 4294901760
    %v7891 = vsub.f32 %v7461, %v7890
    %v7892 = vand.u32 %v7891, 4294901760
    %v7893 = vsub.f32 %v7891, %v7892
    %v7894 = vand.u32 %v7893, 4294901760
    %7895 = vmatpush1.msra.mxu0 %v7894
    %v7896 = vand.u32 %v7464, 4294901760
    %v7897 = vsub.f32 %v7464, %v7896
    %v7898 = vand.u32 %v7897, 4294901760
    %v7899 = vsub.f32 %v7897, %v7898
    %v7900 = vand.u32 %v7899, 4294901760
    %7901 = vmatprep.subr.mxu0 %v7900
    %v7902 = vand.u32 %v7463, 4294901760
    %v7903 = vsub.f32 %v7463, %v7902
    %v7904 = vand.u32 %v7903, 4294901760
    %v7905 = vsub.f32 %v7903, %v7904
    %v7906 = vand.u32 %v7905, 4294901760
    %7907 = vmatpush1.msra.mxu0 %v7906
    %v7908 = vand.u32 %v7466, 4294901760
    %v7909 = vsub.f32 %v7466, %v7908
    %v7910 = vand.u32 %v7909, 4294901760
    %v7911 = vsub.f32 %v7909, %v7910
    %v7912 = vand.u32 %v7911, 4294901760
    %7913 = vmatprep.subr.mxu0 %v7912
    %v7914 = vand.u32 %v7465, 4294901760
    %v7915 = vsub.f32 %v7465, %v7914
    %v7916 = vand.u32 %v7915, 4294901760
    %v7917 = vsub.f32 %v7915, %v7916
    %v7918 = vand.u32 %v7917, 4294901760
    %7919 = vmatpush1.msra.mxu0 %v7918
    %v7920 = vand.u32 %v7468, 4294901760
    %v7921 = vsub.f32 %v7468, %v7920
    %v7922 = vand.u32 %v7921, 4294901760
    %v7923 = vsub.f32 %v7921, %v7922
    %v7924 = vand.u32 %v7923, 4294901760
    %7925 = vmatprep.subr.mxu0 %v7924
    %v7926 = vand.u32 %v7467, 4294901760
    %v7927 = vsub.f32 %v7467, %v7926
    %v7928 = vand.u32 %v7927, 4294901760
    %v7929 = vsub.f32 %v7927, %v7928
    %v7930 = vand.u32 %v7929, 4294901760
    %7931 = vmatpush1.msra.mxu0 %v7930
    %v7932 = vand.u32 %v7470, 4294901760
    %v7933 = vsub.f32 %v7470, %v7932
    %v7934 = vand.u32 %v7933, 4294901760
    %v7935 = vsub.f32 %v7933, %v7934
    %v7936 = vand.u32 %v7935, 4294901760
    %7937 = vmatprep.subr.mxu0 %v7936
    %v7938 = vand.u32 %v7469, 4294901760
    %v7939 = vsub.f32 %v7469, %v7938
    %v7940 = vand.u32 %v7939, 4294901760
    %v7941 = vsub.f32 %v7939, %v7940
    %v7942 = vand.u32 %v7941, 4294901760
    %7943 = vmatpush1.msra.mxu0 %v7942
    %v7944 = vand.u32 %v7472, 4294901760
    %v7945 = vsub.f32 %v7472, %v7944
    %v7946 = vand.u32 %v7945, 4294901760
    %v7947 = vsub.f32 %v7945, %v7946
    %v7948 = vand.u32 %v7947, 4294901760
    %7949 = vmatprep.subr.mxu0 %v7948
    %v7950 = vand.u32 %v7471, 4294901760
    %v7951 = vsub.f32 %v7471, %v7950
    %v7952 = vand.u32 %v7951, 4294901760
    %v7953 = vsub.f32 %v7951, %v7952
    %v7954 = vand.u32 %v7953, 4294901760
    %7955 = vmatpush1.msra.mxu0 %v7954
    %v7956 = vand.u32 %v7474, 4294901760
    %v7957 = vsub.f32 %v7474, %v7956
    %v7958 = vand.u32 %v7957, 4294901760
    %v7959 = vsub.f32 %v7957, %v7958
    %v7960 = vand.u32 %v7959, 4294901760
    %7961 = vmatprep.subr.mxu0 %v7960
    %v7962 = vand.u32 %v7473, 4294901760
    %v7963 = vsub.f32 %v7473, %v7962
    %v7964 = vand.u32 %v7963, 4294901760
    %v7965 = vsub.f32 %v7963, %v7964
    %v7966 = vand.u32 %v7965, 4294901760
    %7967 = vmatpush1.msra.mxu0 %v7966
    %v7968 = vand.u32 %v7476, 4294901760
    %v7969 = vsub.f32 %v7476, %v7968
    %v7970 = vand.u32 %v7969, 4294901760
    %v7971 = vsub.f32 %v7969, %v7970
    %v7972 = vand.u32 %v7971, 4294901760
    %7973 = vmatprep.subr.mxu0 %v7972
    %v7974 = vand.u32 %v7475, 4294901760
    %v7975 = vsub.f32 %v7475, %v7974
    %v7976 = vand.u32 %v7975, 4294901760
    %v7977 = vsub.f32 %v7975, %v7976
    %v7978 = vand.u32 %v7977, 4294901760
    %7979 = vmatpush1.msra.mxu0 %v7978
    %v7980 = vand.u32 %v7478, 4294901760
    %v7981 = vsub.f32 %v7478, %v7980
    %v7982 = vand.u32 %v7981, 4294901760
    %v7983 = vsub.f32 %v7981, %v7982
    %v7984 = vand.u32 %v7983, 4294901760
    %7985 = vmatprep.subr.mxu0 %v7984
    %v7986 = vand.u32 %v7477, 4294901760
    %v7987 = vsub.f32 %v7477, %v7986
    %v7988 = vand.u32 %v7987, 4294901760
    %v7989 = vsub.f32 %v7987, %v7988
    %v7990 = vand.u32 %v7989, 4294901760
    %7991 = vmatpush1.msra.mxu0 %v7990
    %v7992 = vand.u32 %v7480, 4294901760
    %v7993 = vsub.f32 %v7480, %v7992
    %v7994 = vand.u32 %v7993, 4294901760
    %v7995 = vsub.f32 %v7993, %v7994
    %v7996 = vand.u32 %v7995, 4294901760
    %7997 = vmatprep.subr.mxu0 %v7996
    %v7998 = vand.u32 %v7479, 4294901760
    %v7999 = vsub.f32 %v7479, %v7998
    %v8000 = vand.u32 %v7999, 4294901760
    %v8001 = vsub.f32 %v7999, %v8000
    %v8002 = vand.u32 %v8001, 4294901760
    %8003 = vmatpush1.msra.mxu0 %v8002
    %v8004 = vand.u32 %v7482, 4294901760
    %v8005 = vsub.f32 %v7482, %v8004
    %v8006 = vand.u32 %v8005, 4294901760
    %v8007 = vsub.f32 %v8005, %v8006
    %v8008 = vand.u32 %v8007, 4294901760
    %8009 = vmatprep.subr.mxu0 %v8008
    %v8010 = vand.u32 %v7481, 4294901760
    %v8011 = vsub.f32 %v7481, %v8010
    %v8012 = vand.u32 %v8011, 4294901760
    %v8013 = vsub.f32 %v8011, %v8012
    %v8014 = vand.u32 %v8013, 4294901760
    %8015 = vmatpush1.msra.mxu0 %v8014
    %v8016 = vand.u32 %v7484, 4294901760
    %v8017 = vsub.f32 %v7484, %v8016
    %v8018 = vand.u32 %v8017, 4294901760
    %v8019 = vsub.f32 %v8017, %v8018
    %v8020 = vand.u32 %v8019, 4294901760
    %8021 = vmatprep.subr.mxu0 %v8020
    %v8022 = vand.u32 %v7483, 4294901760
    %v8023 = vsub.f32 %v7483, %v8022
    %v8024 = vand.u32 %v8023, 4294901760
    %v8025 = vsub.f32 %v8023, %v8024
    %v8026 = vand.u32 %v8025, 4294901760
    %8027 = vmatpush1.msra.mxu0 %v8026
    %v8028 = vand.u32 %v7486, 4294901760
    %v8029 = vsub.f32 %v7486, %v8028
    %v8030 = vand.u32 %v8029, 4294901760
    %v8031 = vsub.f32 %v8029, %v8030
    %v8032 = vand.u32 %v8031, 4294901760
    %8033 = vmatprep.subr.mxu0 %v8032
    %v8034 = vand.u32 %v7485, 4294901760
    %v8035 = vsub.f32 %v7485, %v8034
    %v8036 = vand.u32 %v8035, 4294901760
    %v8037 = vsub.f32 %v8035, %v8036
    %v8038 = vand.u32 %v8037, 4294901760
    %8039 = vmatpush1.msra.mxu0 %v8038
    %v8040 = vand.u32 %v7488, 4294901760
    %v8041 = vsub.f32 %v7488, %v8040
    %v8042 = vand.u32 %v8041, 4294901760
    %v8043 = vsub.f32 %v8041, %v8042
    %v8044 = vand.u32 %v8043, 4294901760
    %8045 = vmatprep.subr.mxu0 %v8044
    %v8046 = vand.u32 %v7487, 4294901760
    %v8047 = vsub.f32 %v7487, %v8046
    %v8048 = vand.u32 %v8047, 4294901760
    %v8049 = vsub.f32 %v8047, %v8048
    %v8050 = vand.u32 %v8049, 4294901760
    %8051 = vmatpush1.msra.mxu0 %v8050
    %v8052 = vand.u32 %v7490, 4294901760
    %v8053 = vsub.f32 %v7490, %v8052
    %v8054 = vand.u32 %v8053, 4294901760
    %v8055 = vsub.f32 %v8053, %v8054
    %v8056 = vand.u32 %v8055, 4294901760
    %8057 = vmatprep.subr.mxu0 %v8056
    %v8058 = vand.u32 %v7489, 4294901760
    %v8059 = vsub.f32 %v7489, %v8058
    %v8060 = vand.u32 %v8059, 4294901760
    %v8061 = vsub.f32 %v8059, %v8060
    %v8062 = vand.u32 %v8061, 4294901760
    %8063 = vmatpush1.msra.mxu0 %v8062
    %v8064 = vand.u32 %v7492, 4294901760
    %v8065 = vsub.f32 %v7492, %v8064
    %v8066 = vand.u32 %v8065, 4294901760
    %v8067 = vsub.f32 %v8065, %v8066
    %v8068 = vand.u32 %v8067, 4294901760
    %8069 = vmatprep.subr.mxu0 %v8068
    %v8070 = vand.u32 %v7491, 4294901760
    %v8071 = vsub.f32 %v7491, %v8070
    %v8072 = vand.u32 %v8071, 4294901760
    %v8073 = vsub.f32 %v8071, %v8072
    %v8074 = vand.u32 %v8073, 4294901760
    %8075 = vmatpush1.msra.mxu0 %v8074
    %v8076 = vand.u32 %v7494, 4294901760
    %v8077 = vsub.f32 %v7494, %v8076
    %v8078 = vand.u32 %v8077, 4294901760
    %v8079 = vsub.f32 %v8077, %v8078
    %v8080 = vand.u32 %v8079, 4294901760
    %8081 = vmatprep.subr.mxu0 %v8080
    %v8082 = vand.u32 %v7493, 4294901760
    %v8083 = vsub.f32 %v7493, %v8082
    %v8084 = vand.u32 %v8083, 4294901760
    %v8085 = vsub.f32 %v8083, %v8084
    %v8086 = vand.u32 %v8085, 4294901760
    %8087 = vmatpush1.msra.mxu0 %v8086
    %v8088 = vand.u32 %v7496, 4294901760
    %v8089 = vsub.f32 %v7496, %v8088
    %v8090 = vand.u32 %v8089, 4294901760
    %v8091 = vsub.f32 %v8089, %v8090
    %v8092 = vand.u32 %v8091, 4294901760
    %8093 = vmatprep.subr.mxu0 %v8092
    %v8094 = vand.u32 %v7495, 4294901760
    %v8095 = vsub.f32 %v7495, %v8094
    %v8096 = vand.u32 %v8095, 4294901760
    %v8097 = vsub.f32 %v8095, %v8096
    %v8098 = vand.u32 %v8097, 4294901760
    %8099 = vmatpush1.msra.mxu0 %v8098
    %v8100 = vand.u32 %v7498, 4294901760
    %v8101 = vsub.f32 %v7498, %v8100
    %v8102 = vand.u32 %v8101, 4294901760
    %v8103 = vsub.f32 %v8101, %v8102
    %v8104 = vand.u32 %v8103, 4294901760
    %8105 = vmatprep.subr.mxu0 %v8104
    %v8106 = vand.u32 %v7497, 4294901760
    %v8107 = vsub.f32 %v7497, %v8106
    %v8108 = vand.u32 %v8107, 4294901760
    %v8109 = vsub.f32 %v8107, %v8108
    %v8110 = vand.u32 %v8109, 4294901760
    %8111 = vmatpush1.msra.mxu0 %v8110
    %v8112 = vand.u32 %v7431, 4294901760
    %8113 = vmatprep.mubr.f32.mxu0 %v8112
    %v8114 = vand.u32 %v7430, 4294901760
    %8115 = vmatmul.mubr.f32.gmra.mrb[0].mxu0 %v8114
    %v8116 = vpop.f32.mrb[0].mxu0
    %v8117 = vadd.f32 %v7724, %v8116
    %v8118 = vpop.f32.mrb[0].mxu0
    %v8119 = vadd.f32 %v7726, %v8118
    %8120 = vdwg.mxu0
    %v8121 = vand.u32 %v7436, 4294901760
    %v8122 = vsub.f32 %v7436, %v8121
    %8123 = vmatprep.subr.mxu0 %v8122
    %v8124 = vand.u32 %v7435, 4294901760
    %v8125 = vsub.f32 %v7435, %v8124
    %8126 = vmatpush1.msra.mxu0 %v8125
    %v8127 = vand.u32 %v7438, 4294901760
    %v8128 = vsub.f32 %v7438, %v8127
    %8129 = vmatprep.subr.mxu0 %v8128
    %v8130 = vand.u32 %v7437, 4294901760
    %v8131 = vsub.f32 %v7437, %v8130
    %8132 = vmatpush1.msra.mxu0 %v8131
    %v8133 = vand.u32 %v7440, 4294901760
    %v8134 = vsub.f32 %v7440, %v8133
    %8135 = vmatprep.subr.mxu0 %v8134
    %v8136 = vand.u32 %v7439, 4294901760
    %v8137 = vsub.f32 %v7439, %v8136
    %8138 = vmatpush1.msra.mxu0 %v8137
    %v8139 = vand.u32 %v7442, 4294901760
    %v8140 = vsub.f32 %v7442, %v8139
    %8141 = vmatprep.subr.mxu0 %v8140
    %v8142 = vand.u32 %v7441, 4294901760
    %v8143 = vsub.f32 %v7441, %v8142
    %8144 = vmatpush1.msra.mxu0 %v8143
    %v8145 = vand.u32 %v7444, 4294901760
    %v8146 = vsub.f32 %v7444, %v8145
    %8147 = vmatprep.subr.mxu0 %v8146
    %v8148 = vand.u32 %v7443, 4294901760
    %v8149 = vsub.f32 %v7443, %v8148
    %8150 = vmatpush1.msra.mxu0 %v8149
    %v8151 = vand.u32 %v7446, 4294901760
    %v8152 = vsub.f32 %v7446, %v8151
    %8153 = vmatprep.subr.mxu0 %v8152
    %v8154 = vand.u32 %v7445, 4294901760
    %v8155 = vsub.f32 %v7445, %v8154
    %8156 = vmatpush1.msra.mxu0 %v8155
    %v8157 = vand.u32 %v7448, 4294901760
    %v8158 = vsub.f32 %v7448, %v8157
    %8159 = vmatprep.subr.mxu0 %v8158
    %v8160 = vand.u32 %v7447, 4294901760
    %v8161 = vsub.f32 %v7447, %v8160
    %8162 = vmatpush1.msra.mxu0 %v8161
    %v8163 = vand.u32 %v7450, 4294901760
    %v8164 = vsub.f32 %v7450, %v8163
    %8165 = vmatprep.subr.mxu0 %v8164
    %v8166 = vand.u32 %v7449, 4294901760
    %v8167 = vsub.f32 %v7449, %v8166
    %8168 = vmatpush1.msra.mxu0 %v8167
    %v8169 = vand.u32 %v7452, 4294901760
    %v8170 = vsub.f32 %v7452, %v8169
    %8171 = vmatprep.subr.mxu0 %v8170
    %v8172 = vand.u32 %v7451, 4294901760
    %v8173 = vsub.f32 %v7451, %v8172
    %8174 = vmatpush1.msra.mxu0 %v8173
    %v8175 = vand.u32 %v7454, 4294901760
    %v8176 = vsub.f32 %v7454, %v8175
    %8177 = vmatprep.subr.mxu0 %v8176
    %v8178 = vand.u32 %v7453, 4294901760
    %v8179 = vsub.f32 %v7453, %v8178
    %8180 = vmatpush1.msra.mxu0 %v8179
    %v8181 = vand.u32 %v7456, 4294901760
    %v8182 = vsub.f32 %v7456, %v8181
    %8183 = vmatprep.subr.mxu0 %v8182
    %v8184 = vand.u32 %v7455, 4294901760
    %v8185 = vsub.f32 %v7455, %v8184
    %8186 = vmatpush1.msra.mxu0 %v8185
    %v8187 = vand.u32 %v7458, 4294901760
    %v8188 = vsub.f32 %v7458, %v8187
    %8189 = vmatprep.subr.mxu0 %v8188
    %v8190 = vand.u32 %v7457, 4294901760
    %v8191 = vsub.f32 %v7457, %v8190
    %8192 = vmatpush1.msra.mxu0 %v8191
    %v8193 = vand.u32 %v7460, 4294901760
    %v8194 = vsub.f32 %v7460, %v8193
    %8195 = vmatprep.subr.mxu0 %v8194
    %v8196 = vand.u32 %v7459, 4294901760
    %v8197 = vsub.f32 %v7459, %v8196
    %8198 = vmatpush1.msra.mxu0 %v8197
    %v8199 = vand.u32 %v7462, 4294901760
    %v8200 = vsub.f32 %v7462, %v8199
    %8201 = vmatprep.subr.mxu0 %v8200
    %v8202 = vand.u32 %v7461, 4294901760
    %v8203 = vsub.f32 %v7461, %v8202
    %8204 = vmatpush1.msra.mxu0 %v8203
    %v8205 = vand.u32 %v7464, 4294901760
    %v8206 = vsub.f32 %v7464, %v8205
    %8207 = vmatprep.subr.mxu0 %v8206
    %v8208 = vand.u32 %v7463, 4294901760
    %v8209 = vsub.f32 %v7463, %v8208
    %8210 = vmatpush1.msra.mxu0 %v8209
    %v8211 = vand.u32 %v7466, 4294901760
    %v8212 = vsub.f32 %v7466, %v8211
    %8213 = vmatprep.subr.mxu0 %v8212
    %v8214 = vand.u32 %v7465, 4294901760
    %v8215 = vsub.f32 %v7465, %v8214
    %8216 = vmatpush1.msra.mxu0 %v8215
    %v8217 = vand.u32 %v7468, 4294901760
    %v8218 = vsub.f32 %v7468, %v8217
    %8219 = vmatprep.subr.mxu0 %v8218
    %v8220 = vand.u32 %v7467, 4294901760
    %v8221 = vsub.f32 %v7467, %v8220
    %8222 = vmatpush1.msra.mxu0 %v8221
    %v8223 = vand.u32 %v7470, 4294901760
    %v8224 = vsub.f32 %v7470, %v8223
    %8225 = vmatprep.subr.mxu0 %v8224
    %v8226 = vand.u32 %v7469, 4294901760
    %v8227 = vsub.f32 %v7469, %v8226
    %8228 = vmatpush1.msra.mxu0 %v8227
    %v8229 = vand.u32 %v7472, 4294901760
    %v8230 = vsub.f32 %v7472, %v8229
    %8231 = vmatprep.subr.mxu0 %v8230
    %v8232 = vand.u32 %v7471, 4294901760
    %v8233 = vsub.f32 %v7471, %v8232
    %8234 = vmatpush1.msra.mxu0 %v8233
    %v8235 = vand.u32 %v7474, 4294901760
    %v8236 = vsub.f32 %v7474, %v8235
    %8237 = vmatprep.subr.mxu0 %v8236
    %v8238 = vand.u32 %v7473, 4294901760
    %v8239 = vsub.f32 %v7473, %v8238
    %8240 = vmatpush1.msra.mxu0 %v8239
    %v8241 = vand.u32 %v7476, 4294901760
    %v8242 = vsub.f32 %v7476, %v8241
    %8243 = vmatprep.subr.mxu0 %v8242
    %v8244 = vand.u32 %v7475, 4294901760
    %v8245 = vsub.f32 %v7475, %v8244
    %8246 = vmatpush1.msra.mxu0 %v8245
    %v8247 = vand.u32 %v7478, 4294901760
    %v8248 = vsub.f32 %v7478, %v8247
    %8249 = vmatprep.subr.mxu0 %v8248
    %v8250 = vand.u32 %v7477, 4294901760
    %v8251 = vsub.f32 %v7477, %v8250
    %8252 = vmatpush1.msra.mxu0 %v8251
    %v8253 = vand.u32 %v7480, 4294901760
    %v8254 = vsub.f32 %v7480, %v8253
    %8255 = vmatprep.subr.mxu0 %v8254
    %v8256 = vand.u32 %v7479, 4294901760
    %v8257 = vsub.f32 %v7479, %v8256
    %8258 = vmatpush1.msra.mxu0 %v8257
    %v8259 = vand.u32 %v7482, 4294901760
    %v8260 = vsub.f32 %v7482, %v8259
    %8261 = vmatprep.subr.mxu0 %v8260
    %v8262 = vand.u32 %v7481, 4294901760
    %v8263 = vsub.f32 %v7481, %v8262
    %8264 = vmatpush1.msra.mxu0 %v8263
    %v8265 = vand.u32 %v7484, 4294901760
    %v8266 = vsub.f32 %v7484, %v8265
    %8267 = vmatprep.subr.mxu0 %v8266
    %v8268 = vand.u32 %v7483, 4294901760
    %v8269 = vsub.f32 %v7483, %v8268
    %8270 = vmatpush1.msra.mxu0 %v8269
    %v8271 = vand.u32 %v7486, 4294901760
    %v8272 = vsub.f32 %v7486, %v8271
    %8273 = vmatprep.subr.mxu0 %v8272
    %v8274 = vand.u32 %v7485, 4294901760
    %v8275 = vsub.f32 %v7485, %v8274
    %8276 = vmatpush1.msra.mxu0 %v8275
    %v8277 = vand.u32 %v7488, 4294901760
    %v8278 = vsub.f32 %v7488, %v8277
    %8279 = vmatprep.subr.mxu0 %v8278
    %v8280 = vand.u32 %v7487, 4294901760
    %v8281 = vsub.f32 %v7487, %v8280
    %8282 = vmatpush1.msra.mxu0 %v8281
    %v8283 = vand.u32 %v7490, 4294901760
    %v8284 = vsub.f32 %v7490, %v8283
    %8285 = vmatprep.subr.mxu0 %v8284
    %v8286 = vand.u32 %v7489, 4294901760
    %v8287 = vsub.f32 %v7489, %v8286
    %8288 = vmatpush1.msra.mxu0 %v8287
    %v8289 = vand.u32 %v7492, 4294901760
    %v8290 = vsub.f32 %v7492, %v8289
    %8291 = vmatprep.subr.mxu0 %v8290
    %v8292 = vand.u32 %v7491, 4294901760
    %v8293 = vsub.f32 %v7491, %v8292
    %8294 = vmatpush1.msra.mxu0 %v8293
    %v8295 = vand.u32 %v7494, 4294901760
    %v8296 = vsub.f32 %v7494, %v8295
    %8297 = vmatprep.subr.mxu0 %v8296
    %v8298 = vand.u32 %v7493, 4294901760
    %v8299 = vsub.f32 %v7493, %v8298
    %8300 = vmatpush1.msra.mxu0 %v8299
    %v8301 = vand.u32 %v7496, 4294901760
    %v8302 = vsub.f32 %v7496, %v8301
    %8303 = vmatprep.subr.mxu0 %v8302
    %v8304 = vand.u32 %v7495, 4294901760
    %v8305 = vsub.f32 %v7495, %v8304
    %8306 = vmatpush1.msra.mxu0 %v8305
    %v8307 = vand.u32 %v7498, 4294901760
    %v8308 = vsub.f32 %v7498, %v8307
    %8309 = vmatprep.subr.mxu0 %v8308
    %v8310 = vand.u32 %v7497, 4294901760
    %v8311 = vsub.f32 %v7497, %v8310
    %8312 = vmatpush1.msra.mxu0 %v8311
    %v8313 = vand.u32 %v7431, 4294901760
    %v8314 = vsub.f32 %v7431, %v8313
    %8315 = vmatprep.mubr.f32.mxu0 %v8314
    %v8316 = vand.u32 %v7430, 4294901760
    %v8317 = vsub.f32 %v7430, %v8316
    %8318 = vmatmul.mubr.f32.gmra.mrb[0].mxu0 %v8317
    %v8319 = vpop.f32.mrb[0].mxu0
    %v8320 = vadd.f32 %v8117, %v8319
    %v8321 = vpop.f32.mrb[0].mxu0
    %v8322 = vadd.f32 %v8119, %v8321
    %8323 = vdwg.mxu0
    %v8324 = vand.u32 %v7436, 4294901760
    %8325 = vmatprep.subr.mxu0 %v8324
    %v8326 = vand.u32 %v7435, 4294901760
    %8327 = vmatpush1.msra.mxu0 %v8326
    %v8328 = vand.u32 %v7438, 4294901760
    %8329 = vmatprep.subr.mxu0 %v8328
    %v8330 = vand.u32 %v7437, 4294901760
    %8331 = vmatpush1.msra.mxu0 %v8330
    %v8332 = vand.u32 %v7440, 4294901760
    %8333 = vmatprep.subr.mxu0 %v8332
    %v8334 = vand.u32 %v7439, 4294901760
    %8335 = vmatpush1.msra.mxu0 %v8334
    %v8336 = vand.u32 %v7442, 4294901760
    %8337 = vmatprep.subr.mxu0 %v8336
    %v8338 = vand.u32 %v7441, 4294901760
    %8339 = vmatpush1.msra.mxu0 %v8338
    %v8340 = vand.u32 %v7444, 4294901760
    %8341 = vmatprep.subr.mxu0 %v8340
    %v8342 = vand.u32 %v7443, 4294901760
    %8343 = vmatpush1.msra.mxu0 %v8342
    %v8344 = vand.u32 %v7446, 4294901760
    %8345 = vmatprep.subr.mxu0 %v8344
    %v8346 = vand.u32 %v7445, 4294901760
    %8347 = vmatpush1.msra.mxu0 %v8346
    %v8348 = vand.u32 %v7448, 4294901760
    %8349 = vmatprep.subr.mxu0 %v8348
    %v8350 = vand.u32 %v7447, 4294901760
    %8351 = vmatpush1.msra.mxu0 %v8350
    %v8352 = vand.u32 %v7450, 4294901760
    %8353 = vmatprep.subr.mxu0 %v8352
    %v8354 = vand.u32 %v7449, 4294901760
    %8355 = vmatpush1.msra.mxu0 %v8354
    %v8356 = vand.u32 %v7452, 4294901760
    %8357 = vmatprep.subr.mxu0 %v8356
    %v8358 = vand.u32 %v7451, 4294901760
    %8359 = vmatpush1.msra.mxu0 %v8358
    %v8360 = vand.u32 %v7454, 4294901760
    %8361 = vmatprep.subr.mxu0 %v8360
    %v8362 = vand.u32 %v7453, 4294901760
    %8363 = vmatpush1.msra.mxu0 %v8362
    %v8364 = vand.u32 %v7456, 4294901760
    %8365 = vmatprep.subr.mxu0 %v8364
    %v8366 = vand.u32 %v7455, 4294901760
    %8367 = vmatpush1.msra.mxu0 %v8366
    %v8368 = vand.u32 %v7458, 4294901760
    %8369 = vmatprep.subr.mxu0 %v8368
    %v8370 = vand.u32 %v7457, 4294901760
    %8371 = vmatpush1.msra.mxu0 %v8370
    %v8372 = vand.u32 %v7460, 4294901760
    %8373 = vmatprep.subr.mxu0 %v8372
    %v8374 = vand.u32 %v7459, 4294901760
    %8375 = vmatpush1.msra.mxu0 %v8374
    %v8376 = vand.u32 %v7462, 4294901760
    %8377 = vmatprep.subr.mxu0 %v8376
    %v8378 = vand.u32 %v7461, 4294901760
    %8379 = vmatpush1.msra.mxu0 %v8378
    %v8380 = vand.u32 %v7464, 4294901760
    %8381 = vmatprep.subr.mxu0 %v8380
    %v8382 = vand.u32 %v7463, 4294901760
    %8383 = vmatpush1.msra.mxu0 %v8382
    %v8384 = vand.u32 %v7466, 4294901760
    %8385 = vmatprep.subr.mxu0 %v8384
    %v8386 = vand.u32 %v7465, 4294901760
    %8387 = vmatpush1.msra.mxu0 %v8386
    %v8388 = vand.u32 %v7468, 4294901760
    %8389 = vmatprep.subr.mxu0 %v8388
    %v8390 = vand.u32 %v7467, 4294901760
    %8391 = vmatpush1.msra.mxu0 %v8390
    %v8392 = vand.u32 %v7470, 4294901760
    %8393 = vmatprep.subr.mxu0 %v8392
    %v8394 = vand.u32 %v7469, 4294901760
    %8395 = vmatpush1.msra.mxu0 %v8394
    %v8396 = vand.u32 %v7472, 4294901760
    %8397 = vmatprep.subr.mxu0 %v8396
    %v8398 = vand.u32 %v7471, 4294901760
    %8399 = vmatpush1.msra.mxu0 %v8398
    %v8400 = vand.u32 %v7474, 4294901760
    %8401 = vmatprep.subr.mxu0 %v8400
    %v8402 = vand.u32 %v7473, 4294901760
    %8403 = vmatpush1.msra.mxu0 %v8402
    %v8404 = vand.u32 %v7476, 4294901760
    %8405 = vmatprep.subr.mxu0 %v8404
    %v8406 = vand.u32 %v7475, 4294901760
    %8407 = vmatpush1.msra.mxu0 %v8406
    %v8408 = vand.u32 %v7478, 4294901760
    %8409 = vmatprep.subr.mxu0 %v8408
    %v8410 = vand.u32 %v7477, 4294901760
    %8411 = vmatpush1.msra.mxu0 %v8410
    %v8412 = vand.u32 %v7480, 4294901760
    %8413 = vmatprep.subr.mxu0 %v8412
    %v8414 = vand.u32 %v7479, 4294901760
    %8415 = vmatpush1.msra.mxu0 %v8414
    %v8416 = vand.u32 %v7482, 4294901760
    %8417 = vmatprep.subr.mxu0 %v8416
    %v8418 = vand.u32 %v7481, 4294901760
    %8419 = vmatpush1.msra.mxu0 %v8418
    %v8420 = vand.u32 %v7484, 4294901760
    %8421 = vmatprep.subr.mxu0 %v8420
    %v8422 = vand.u32 %v7483, 4294901760
    %8423 = vmatpush1.msra.mxu0 %v8422
    %v8424 = vand.u32 %v7486, 4294901760
    %8425 = vmatprep.subr.mxu0 %v8424
    %v8426 = vand.u32 %v7485, 4294901760
    %8427 = vmatpush1.msra.mxu0 %v8426
    %v8428 = vand.u32 %v7488, 4294901760
    %8429 = vmatprep.subr.mxu0 %v8428
    %v8430 = vand.u32 %v7487, 4294901760
    %8431 = vmatpush1.msra.mxu0 %v8430
    %v8432 = vand.u32 %v7490, 4294901760
    %8433 = vmatprep.subr.mxu0 %v8432
    %v8434 = vand.u32 %v7489, 4294901760
    %8435 = vmatpush1.msra.mxu0 %v8434
    %v8436 = vand.u32 %v7492, 4294901760
    %8437 = vmatprep.subr.mxu0 %v8436
    %v8438 = vand.u32 %v7491, 4294901760
    %8439 = vmatpush1.msra.mxu0 %v8438
    %v8440 = vand.u32 %v7494, 4294901760
    %8441 = vmatprep.subr.mxu0 %v8440
    %v8442 = vand.u32 %v7493, 4294901760
    %8443 = vmatpush1.msra.mxu0 %v8442
    %v8444 = vand.u32 %v7496, 4294901760
    %8445 = vmatprep.subr.mxu0 %v8444
    %v8446 = vand.u32 %v7495, 4294901760
    %8447 = vmatpush1.msra.mxu0 %v8446
    %v8448 = vand.u32 %v7498, 4294901760
    %8449 = vmatprep.subr.mxu0 %v8448
    %v8450 = vand.u32 %v7497, 4294901760
    %8451 = vmatpush1.msra.mxu0 %v8450
    %v8452 = vand.u32 %v7431, 4294901760
    %v8453 = vsub.f32 %v7431, %v8452
    %v8454 = vand.u32 %v8453, 4294901760
    %8455 = vmatprep.mubr.f32.mxu0 %v8454
    %v8456 = vand.u32 %v7430, 4294901760
    %v8457 = vsub.f32 %v7430, %v8456
    %v8458 = vand.u32 %v8457, 4294901760
    %8459 = vmatmul.mubr.f32.gmra.mrb[0].mxu0 %v8458
    %v8460 = vpop.f32.mrb[0].mxu0
    %v8461 = vadd.f32 %v8320, %v8460
    %v8462 = vpop.f32.mrb[0].mxu0
    %v8463 = vadd.f32 %v8322, %v8462
    %8464 = vdwg.mxu0
    %v8465 = vand.u32 %v7436, 4294901760
    %v8466 = vsub.f32 %v7436, %v8465
    %v8467 = vand.u32 %v8466, 4294901760
    %8468 = vmatprep.subr.mxu0 %v8467
    %v8469 = vand.u32 %v7435, 4294901760
    %v8470 = vsub.f32 %v7435, %v8469
    %v8471 = vand.u32 %v8470, 4294901760
    %8472 = vmatpush1.msra.mxu0 %v8471
    %v8473 = vand.u32 %v7438, 4294901760
    %v8474 = vsub.f32 %v7438, %v8473
    %v8475 = vand.u32 %v8474, 4294901760
    %8476 = vmatprep.subr.mxu0 %v8475
    %v8477 = vand.u32 %v7437, 4294901760
    %v8478 = vsub.f32 %v7437, %v8477
    %v8479 = vand.u32 %v8478, 4294901760
    %8480 = vmatpush1.msra.mxu0 %v8479
    %v8481 = vand.u32 %v7440, 4294901760
    %v8482 = vsub.f32 %v7440, %v8481
    %v8483 = vand.u32 %v8482, 4294901760
    %8484 = vmatprep.subr.mxu0 %v8483
    %v8485 = vand.u32 %v7439, 4294901760
    %v8486 = vsub.f32 %v7439, %v8485
    %v8487 = vand.u32 %v8486, 4294901760
    %8488 = vmatpush1.msra.mxu0 %v8487
    %v8489 = vand.u32 %v7442, 4294901760
    %v8490 = vsub.f32 %v7442, %v8489
    %v8491 = vand.u32 %v8490, 4294901760
    %8492 = vmatprep.subr.mxu0 %v8491
    %v8493 = vand.u32 %v7441, 4294901760
    %v8494 = vsub.f32 %v7441, %v8493
    %v8495 = vand.u32 %v8494, 4294901760
    %8496 = vmatpush1.msra.mxu0 %v8495
    %v8497 = vand.u32 %v7444, 4294901760
    %v8498 = vsub.f32 %v7444, %v8497
    %v8499 = vand.u32 %v8498, 4294901760
    %8500 = vmatprep.subr.mxu0 %v8499
    %v8501 = vand.u32 %v7443, 4294901760
    %v8502 = vsub.f32 %v7443, %v8501
    %v8503 = vand.u32 %v8502, 4294901760
    %8504 = vmatpush1.msra.mxu0 %v8503
    %v8505 = vand.u32 %v7446, 4294901760
    %v8506 = vsub.f32 %v7446, %v8505
    %v8507 = vand.u32 %v8506, 4294901760
    %8508 = vmatprep.subr.mxu0 %v8507
    %v8509 = vand.u32 %v7445, 4294901760
    %v8510 = vsub.f32 %v7445, %v8509
    %v8511 = vand.u32 %v8510, 4294901760
    %8512 = vmatpush1.msra.mxu0 %v8511
    %v8513 = vand.u32 %v7448, 4294901760
    %v8514 = vsub.f32 %v7448, %v8513
    %v8515 = vand.u32 %v8514, 4294901760
    %8516 = vmatprep.subr.mxu0 %v8515
    %v8517 = vand.u32 %v7447, 4294901760
    %v8518 = vsub.f32 %v7447, %v8517
    %v8519 = vand.u32 %v8518, 4294901760
    %8520 = vmatpush1.msra.mxu0 %v8519
    %v8521 = vand.u32 %v7450, 4294901760
    %v8522 = vsub.f32 %v7450, %v8521
    %v8523 = vand.u32 %v8522, 4294901760
    %8524 = vmatprep.subr.mxu0 %v8523
    %v8525 = vand.u32 %v7449, 4294901760
    %v8526 = vsub.f32 %v7449, %v8525
    %v8527 = vand.u32 %v8526, 4294901760
    %8528 = vmatpush1.msra.mxu0 %v8527
    %v8529 = vand.u32 %v7452, 4294901760
    %v8530 = vsub.f32 %v7452, %v8529
    %v8531 = vand.u32 %v8530, 4294901760
    %8532 = vmatprep.subr.mxu0 %v8531
    %v8533 = vand.u32 %v7451, 4294901760
    %v8534 = vsub.f32 %v7451, %v8533
    %v8535 = vand.u32 %v8534, 4294901760
    %8536 = vmatpush1.msra.mxu0 %v8535
    %v8537 = vand.u32 %v7454, 4294901760
    %v8538 = vsub.f32 %v7454, %v8537
    %v8539 = vand.u32 %v8538, 4294901760
    %8540 = vmatprep.subr.mxu0 %v8539
    %v8541 = vand.u32 %v7453, 4294901760
    %v8542 = vsub.f32 %v7453, %v8541
    %v8543 = vand.u32 %v8542, 4294901760
    %8544 = vmatpush1.msra.mxu0 %v8543
    %v8545 = vand.u32 %v7456, 4294901760
    %v8546 = vsub.f32 %v7456, %v8545
    %v8547 = vand.u32 %v8546, 4294901760
    %8548 = vmatprep.subr.mxu0 %v8547
    %v8549 = vand.u32 %v7455, 4294901760
    %v8550 = vsub.f32 %v7455, %v8549
    %v8551 = vand.u32 %v8550, 4294901760
    %8552 = vmatpush1.msra.mxu0 %v8551
    %v8553 = vand.u32 %v7458, 4294901760
    %v8554 = vsub.f32 %v7458, %v8553
    %v8555 = vand.u32 %v8554, 4294901760
    %8556 = vmatprep.subr.mxu0 %v8555
    %v8557 = vand.u32 %v7457, 4294901760
    %v8558 = vsub.f32 %v7457, %v8557
    %v8559 = vand.u32 %v8558, 4294901760
    %8560 = vmatpush1.msra.mxu0 %v8559
    %v8561 = vand.u32 %v7460, 4294901760
    %v8562 = vsub.f32 %v7460, %v8561
    %v8563 = vand.u32 %v8562, 4294901760
    %8564 = vmatprep.subr.mxu0 %v8563
    %v8565 = vand.u32 %v7459, 4294901760
    %v8566 = vsub.f32 %v7459, %v8565
    %v8567 = vand.u32 %v8566, 4294901760
    %8568 = vmatpush1.msra.mxu0 %v8567
    %v8569 = vand.u32 %v7462, 4294901760
    %v8570 = vsub.f32 %v7462, %v8569
    %v8571 = vand.u32 %v8570, 4294901760
    %8572 = vmatprep.subr.mxu0 %v8571
    %v8573 = vand.u32 %v7461, 4294901760
    %v8574 = vsub.f32 %v7461, %v8573
    %v8575 = vand.u32 %v8574, 4294901760
    %8576 = vmatpush1.msra.mxu0 %v8575
    %v8577 = vand.u32 %v7464, 4294901760
    %v8578 = vsub.f32 %v7464, %v8577
    %v8579 = vand.u32 %v8578, 4294901760
    %8580 = vmatprep.subr.mxu0 %v8579
    %v8581 = vand.u32 %v7463, 4294901760
    %v8582 = vsub.f32 %v7463, %v8581
    %v8583 = vand.u32 %v8582, 4294901760
    %8584 = vmatpush1.msra.mxu0 %v8583
    %v8585 = vand.u32 %v7466, 4294901760
    %v8586 = vsub.f32 %v7466, %v8585
    %v8587 = vand.u32 %v8586, 4294901760
    %8588 = vmatprep.subr.mxu0 %v8587
    %v8589 = vand.u32 %v7465, 4294901760
    %v8590 = vsub.f32 %v7465, %v8589
    %v8591 = vand.u32 %v8590, 4294901760
    %8592 = vmatpush1.msra.mxu0 %v8591
    %v8593 = vand.u32 %v7468, 4294901760
    %v8594 = vsub.f32 %v7468, %v8593
    %v8595 = vand.u32 %v8594, 4294901760
    %8596 = vmatprep.subr.mxu0 %v8595
    %v8597 = vand.u32 %v7467, 4294901760
    %v8598 = vsub.f32 %v7467, %v8597
    %v8599 = vand.u32 %v8598, 4294901760
    %8600 = vmatpush1.msra.mxu0 %v8599
    %v8601 = vand.u32 %v7470, 4294901760
    %v8602 = vsub.f32 %v7470, %v8601
    %v8603 = vand.u32 %v8602, 4294901760
    %8604 = vmatprep.subr.mxu0 %v8603
    %v8605 = vand.u32 %v7469, 4294901760
    %v8606 = vsub.f32 %v7469, %v8605
    %v8607 = vand.u32 %v8606, 4294901760
    %8608 = vmatpush1.msra.mxu0 %v8607
    %v8609 = vand.u32 %v7472, 4294901760
    %v8610 = vsub.f32 %v7472, %v8609
    %v8611 = vand.u32 %v8610, 4294901760
    %8612 = vmatprep.subr.mxu0 %v8611
    %v8613 = vand.u32 %v7471, 4294901760
    %v8614 = vsub.f32 %v7471, %v8613
    %v8615 = vand.u32 %v8614, 4294901760
    %8616 = vmatpush1.msra.mxu0 %v8615
    %v8617 = vand.u32 %v7474, 4294901760
    %v8618 = vsub.f32 %v7474, %v8617
    %v8619 = vand.u32 %v8618, 4294901760
    %8620 = vmatprep.subr.mxu0 %v8619
    %v8621 = vand.u32 %v7473, 4294901760
    %v8622 = vsub.f32 %v7473, %v8621
    %v8623 = vand.u32 %v8622, 4294901760
    %8624 = vmatpush1.msra.mxu0 %v8623
    %v8625 = vand.u32 %v7476, 4294901760
    %v8626 = vsub.f32 %v7476, %v8625
    %v8627 = vand.u32 %v8626, 4294901760
    %8628 = vmatprep.subr.mxu0 %v8627
    %v8629 = vand.u32 %v7475, 4294901760
    %v8630 = vsub.f32 %v7475, %v8629
    %v8631 = vand.u32 %v8630, 4294901760
    %8632 = vmatpush1.msra.mxu0 %v8631
    %v8633 = vand.u32 %v7478, 4294901760
    %v8634 = vsub.f32 %v7478, %v8633
    %v8635 = vand.u32 %v8634, 4294901760
    %8636 = vmatprep.subr.mxu0 %v8635
    %v8637 = vand.u32 %v7477, 4294901760
    %v8638 = vsub.f32 %v7477, %v8637
    %v8639 = vand.u32 %v8638, 4294901760
    %8640 = vmatpush1.msra.mxu0 %v8639
    %v8641 = vand.u32 %v7480, 4294901760
    %v8642 = vsub.f32 %v7480, %v8641
    %v8643 = vand.u32 %v8642, 4294901760
    %8644 = vmatprep.subr.mxu0 %v8643
    %v8645 = vand.u32 %v7479, 4294901760
    %v8646 = vsub.f32 %v7479, %v8645
    %v8647 = vand.u32 %v8646, 4294901760
    %8648 = vmatpush1.msra.mxu0 %v8647
    %v8649 = vand.u32 %v7482, 4294901760
    %v8650 = vsub.f32 %v7482, %v8649
    %v8651 = vand.u32 %v8650, 4294901760
    %8652 = vmatprep.subr.mxu0 %v8651
    %v8653 = vand.u32 %v7481, 4294901760
    %v8654 = vsub.f32 %v7481, %v8653
    %v8655 = vand.u32 %v8654, 4294901760
    %8656 = vmatpush1.msra.mxu0 %v8655
    %v8657 = vand.u32 %v7484, 4294901760
    %v8658 = vsub.f32 %v7484, %v8657
    %v8659 = vand.u32 %v8658, 4294901760
    %8660 = vmatprep.subr.mxu0 %v8659
    %v8661 = vand.u32 %v7483, 4294901760
    %v8662 = vsub.f32 %v7483, %v8661
    %v8663 = vand.u32 %v8662, 4294901760
    %8664 = vmatpush1.msra.mxu0 %v8663
    %v8665 = vand.u32 %v7486, 4294901760
    %v8666 = vsub.f32 %v7486, %v8665
    %v8667 = vand.u32 %v8666, 4294901760
    %8668 = vmatprep.subr.mxu0 %v8667
    %v8669 = vand.u32 %v7485, 4294901760
    %v8670 = vsub.f32 %v7485, %v8669
    %v8671 = vand.u32 %v8670, 4294901760
    %8672 = vmatpush1.msra.mxu0 %v8671
    %v8673 = vand.u32 %v7488, 4294901760
    %v8674 = vsub.f32 %v7488, %v8673
    %v8675 = vand.u32 %v8674, 4294901760
    %8676 = vmatprep.subr.mxu0 %v8675
    %v8677 = vand.u32 %v7487, 4294901760
    %v8678 = vsub.f32 %v7487, %v8677
    %v8679 = vand.u32 %v8678, 4294901760
    %8680 = vmatpush1.msra.mxu0 %v8679
    %v8681 = vand.u32 %v7490, 4294901760
    %v8682 = vsub.f32 %v7490, %v8681
    %v8683 = vand.u32 %v8682, 4294901760
    %8684 = vmatprep.subr.mxu0 %v8683
    %v8685 = vand.u32 %v7489, 4294901760
    %v8686 = vsub.f32 %v7489, %v8685
    %v8687 = vand.u32 %v8686, 4294901760
    %8688 = vmatpush1.msra.mxu0 %v8687
    %v8689 = vand.u32 %v7492, 4294901760
    %v8690 = vsub.f32 %v7492, %v8689
    %v8691 = vand.u32 %v8690, 4294901760
    %8692 = vmatprep.subr.mxu0 %v8691
    %v8693 = vand.u32 %v7491, 4294901760
    %v8694 = vsub.f32 %v7491, %v8693
    %v8695 = vand.u32 %v8694, 4294901760
    %8696 = vmatpush1.msra.mxu0 %v8695
    %v8697 = vand.u32 %v7494, 4294901760
    %v8698 = vsub.f32 %v7494, %v8697
    %v8699 = vand.u32 %v8698, 4294901760
    %8700 = vmatprep.subr.mxu0 %v8699
    %v8701 = vand.u32 %v7493, 4294901760
    %v8702 = vsub.f32 %v7493, %v8701
    %v8703 = vand.u32 %v8702, 4294901760
    %8704 = vmatpush1.msra.mxu0 %v8703
    %v8705 = vand.u32 %v7496, 4294901760
    %v8706 = vsub.f32 %v7496, %v8705
    %v8707 = vand.u32 %v8706, 4294901760
    %8708 = vmatprep.subr.mxu0 %v8707
    %v8709 = vand.u32 %v7495, 4294901760
    %v8710 = vsub.f32 %v7495, %v8709
    %v8711 = vand.u32 %v8710, 4294901760
    %8712 = vmatpush1.msra.mxu0 %v8711
    %v8713 = vand.u32 %v7498, 4294901760
    %v8714 = vsub.f32 %v7498, %v8713
    %v8715 = vand.u32 %v8714, 4294901760
    %8716 = vmatprep.subr.mxu0 %v8715
    %v8717 = vand.u32 %v7497, 4294901760
    %v8718 = vsub.f32 %v7497, %v8717
    %v8719 = vand.u32 %v8718, 4294901760
    %8720 = vmatpush1.msra.mxu0 %v8719
    %v8721 = vand.u32 %v7431, 4294901760
    %8722 = vmatprep.mubr.f32.mxu0 %v8721
    %v8723 = vand.u32 %v7430, 4294901760
    %8724 = vmatmul.mubr.f32.gmra.mrb[0].mxu0 %v8723
    %v8725 = vpop.f32.mrb[0].mxu0
    %v8726 = vadd.f32 %v8461, %v8725
    %v8727 = vpop.f32.mrb[0].mxu0
    %v8728 = vadd.f32 %v8463, %v8727
    %8729 = vdwg.mxu0
    %v8730 = vand.u32 %v7436, 4294901760
    %8731 = vmatprep.subr.mxu0 %v8730
    %v8732 = vand.u32 %v7435, 4294901760
    %8733 = vmatpush1.msra.mxu0 %v8732
    %v8734 = vand.u32 %v7438, 4294901760
    %8735 = vmatprep.subr.mxu0 %v8734
    %v8736 = vand.u32 %v7437, 4294901760
    %8737 = vmatpush1.msra.mxu0 %v8736
    %v8738 = vand.u32 %v7440, 4294901760
    %8739 = vmatprep.subr.mxu0 %v8738
    %v8740 = vand.u32 %v7439, 4294901760
    %8741 = vmatpush1.msra.mxu0 %v8740
    %v8742 = vand.u32 %v7442, 4294901760
    %8743 = vmatprep.subr.mxu0 %v8742
    %v8744 = vand.u32 %v7441, 4294901760
    %8745 = vmatpush1.msra.mxu0 %v8744
    %v8746 = vand.u32 %v7444, 4294901760
    %8747 = vmatprep.subr.mxu0 %v8746
    %v8748 = vand.u32 %v7443, 4294901760
    %8749 = vmatpush1.msra.mxu0 %v8748
    %v8750 = vand.u32 %v7446, 4294901760
    %8751 = vmatprep.subr.mxu0 %v8750
    %v8752 = vand.u32 %v7445, 4294901760
    %8753 = vmatpush1.msra.mxu0 %v8752
    %v8754 = vand.u32 %v7448, 4294901760
    %8755 = vmatprep.subr.mxu0 %v8754
    %v8756 = vand.u32 %v7447, 4294901760
    %8757 = vmatpush1.msra.mxu0 %v8756
    %v8758 = vand.u32 %v7450, 4294901760
    %8759 = vmatprep.subr.mxu0 %v8758
    %v8760 = vand.u32 %v7449, 4294901760
    %8761 = vmatpush1.msra.mxu0 %v8760
    %v8762 = vand.u32 %v7452, 4294901760
    %8763 = vmatprep.subr.mxu0 %v8762
    %v8764 = vand.u32 %v7451, 4294901760
    %8765 = vmatpush1.msra.mxu0 %v8764
    %v8766 = vand.u32 %v7454, 4294901760
    %8767 = vmatprep.subr.mxu0 %v8766
    %v8768 = vand.u32 %v7453, 4294901760
    %8769 = vmatpush1.msra.mxu0 %v8768
    %v8770 = vand.u32 %v7456, 4294901760
    %8771 = vmatprep.subr.mxu0 %v8770
    %v8772 = vand.u32 %v7455, 4294901760
    %8773 = vmatpush1.msra.mxu0 %v8772
    %v8774 = vand.u32 %v7458, 4294901760
    %8775 = vmatprep.subr.mxu0 %v8774
    %v8776 = vand.u32 %v7457, 4294901760
    %8777 = vmatpush1.msra.mxu0 %v8776
    %v8778 = vand.u32 %v7460, 4294901760
    %8779 = vmatprep.subr.mxu0 %v8778
    %v8780 = vand.u32 %v7459, 4294901760
    %8781 = vmatpush1.msra.mxu0 %v8780
    %v8782 = vand.u32 %v7462, 4294901760
    %8783 = vmatprep.subr.mxu0 %v8782
    %v8784 = vand.u32 %v7461, 4294901760
    %8785 = vmatpush1.msra.mxu0 %v8784
    %v8786 = vand.u32 %v7464, 4294901760
    %8787 = vmatprep.subr.mxu0 %v8786
    %v8788 = vand.u32 %v7463, 4294901760
    %8789 = vmatpush1.msra.mxu0 %v8788
    %v8790 = vand.u32 %v7466, 4294901760
    %8791 = vmatprep.subr.mxu0 %v8790
    %v8792 = vand.u32 %v7465, 4294901760
    %8793 = vmatpush1.msra.mxu0 %v8792
    %v8794 = vand.u32 %v7468, 4294901760
    %8795 = vmatprep.subr.mxu0 %v8794
    %v8796 = vand.u32 %v7467, 4294901760
    %8797 = vmatpush1.msra.mxu0 %v8796
    %v8798 = vand.u32 %v7470, 4294901760
    %8799 = vmatprep.subr.mxu0 %v8798
    %v8800 = vand.u32 %v7469, 4294901760
    %8801 = vmatpush1.msra.mxu0 %v8800
    %v8802 = vand.u32 %v7472, 4294901760
    %8803 = vmatprep.subr.mxu0 %v8802
    %v8804 = vand.u32 %v7471, 4294901760
    %8805 = vmatpush1.msra.mxu0 %v8804
    %v8806 = vand.u32 %v7474, 4294901760
    %8807 = vmatprep.subr.mxu0 %v8806
    %v8808 = vand.u32 %v7473, 4294901760
    %8809 = vmatpush1.msra.mxu0 %v8808
    %v8810 = vand.u32 %v7476, 4294901760
    %8811 = vmatprep.subr.mxu0 %v8810
    %v8812 = vand.u32 %v7475, 4294901760
    %8813 = vmatpush1.msra.mxu0 %v8812
    %v8814 = vand.u32 %v7478, 4294901760
    %8815 = vmatprep.subr.mxu0 %v8814
    %v8816 = vand.u32 %v7477, 4294901760
    %8817 = vmatpush1.msra.mxu0 %v8816
    %v8818 = vand.u32 %v7480, 4294901760
    %8819 = vmatprep.subr.mxu0 %v8818
    %v8820 = vand.u32 %v7479, 4294901760
    %8821 = vmatpush1.msra.mxu0 %v8820
    %v8822 = vand.u32 %v7482, 4294901760
    %8823 = vmatprep.subr.mxu0 %v8822
    %v8824 = vand.u32 %v7481, 4294901760
    %8825 = vmatpush1.msra.mxu0 %v8824
    %v8826 = vand.u32 %v7484, 4294901760
    %8827 = vmatprep.subr.mxu0 %v8826
    %v8828 = vand.u32 %v7483, 4294901760
    %8829 = vmatpush1.msra.mxu0 %v8828
    %v8830 = vand.u32 %v7486, 4294901760
    %8831 = vmatprep.subr.mxu0 %v8830
    %v8832 = vand.u32 %v7485, 4294901760
    %8833 = vmatpush1.msra.mxu0 %v8832
    %v8834 = vand.u32 %v7488, 4294901760
    %8835 = vmatprep.subr.mxu0 %v8834
    %v8836 = vand.u32 %v7487, 4294901760
    %8837 = vmatpush1.msra.mxu0 %v8836
    %v8838 = vand.u32 %v7490, 4294901760
    %8839 = vmatprep.subr.mxu0 %v8838
    %v8840 = vand.u32 %v7489, 4294901760
    %8841 = vmatpush1.msra.mxu0 %v8840
    %v8842 = vand.u32 %v7492, 4294901760
    %8843 = vmatprep.subr.mxu0 %v8842
    %v8844 = vand.u32 %v7491, 4294901760
    %8845 = vmatpush1.msra.mxu0 %v8844
    %v8846 = vand.u32 %v7494, 4294901760
    %8847 = vmatprep.subr.mxu0 %v8846
    %v8848 = vand.u32 %v7493, 4294901760
    %8849 = vmatpush1.msra.mxu0 %v8848
    %v8850 = vand.u32 %v7496, 4294901760
    %8851 = vmatprep.subr.mxu0 %v8850
    %v8852 = vand.u32 %v7495, 4294901760
    %8853 = vmatpush1.msra.mxu0 %v8852
    %v8854 = vand.u32 %v7498, 4294901760
    %8855 = vmatprep.subr.mxu0 %v8854
    %v8856 = vand.u32 %v7497, 4294901760
    %8857 = vmatpush1.msra.mxu0 %v8856
    %v8858 = vand.u32 %v7431, 4294901760
    %8859 = vmatprep.mubr.f32.mxu0 %v8858
    %v8860 = vand.u32 %v7430, 4294901760
    %8861 = vmatmul.mubr.f32.gmra.mrb[0].mxu0 %v8860
    %v8862 = vpop.f32.mrb[0].mxu0
    %v8863 = vadd.f32 %v8726, %v8862
    %v8864 = vpop.f32.mrb[0].mxu0
    %v8865 = vadd.f32 %v8728, %v8864
    %8866 = vdwg.mxu0
    %v8867 = vand.u32 %v7500, 4294901760
    %8868 = vmatprep.subr.mxu0 %v8867
    %v8869 = vand.u32 %v7499, 4294901760
    %8870 = vmatpush1.msra.mxu0 %v8869
    %v8871 = vand.u32 %v7502, 4294901760
    %8872 = vmatprep.subr.mxu0 %v8871
    %v8873 = vand.u32 %v7501, 4294901760
    %8874 = vmatpush1.msra.mxu0 %v8873
    %v8875 = vand.u32 %v7504, 4294901760
    %8876 = vmatprep.subr.mxu0 %v8875
    %v8877 = vand.u32 %v7503, 4294901760
    %8878 = vmatpush1.msra.mxu0 %v8877
    %v8879 = vand.u32 %v7506, 4294901760
    %8880 = vmatprep.subr.mxu0 %v8879
    %v8881 = vand.u32 %v7505, 4294901760
    %8882 = vmatpush1.msra.mxu0 %v8881
    %v8883 = vand.u32 %v7508, 4294901760
    %8884 = vmatprep.subr.mxu0 %v8883
    %v8885 = vand.u32 %v7507, 4294901760
    %8886 = vmatpush1.msra.mxu0 %v8885
    %v8887 = vand.u32 %v7510, 4294901760
    %8888 = vmatprep.subr.mxu0 %v8887
    %v8889 = vand.u32 %v7509, 4294901760
    %8890 = vmatpush1.msra.mxu0 %v8889
    %v8891 = vand.u32 %v7512, 4294901760
    %8892 = vmatprep.subr.mxu0 %v8891
    %v8893 = vand.u32 %v7511, 4294901760
    %8894 = vmatpush1.msra.mxu0 %v8893
    %v8895 = vand.u32 %v7514, 4294901760
    %8896 = vmatprep.subr.mxu0 %v8895
    %v8897 = vand.u32 %v7513, 4294901760
    %8898 = vmatpush1.msra.mxu0 %v8897
    %v8899 = vand.u32 %v7516, 4294901760
    %8900 = vmatprep.subr.mxu0 %v8899
    %v8901 = vand.u32 %v7515, 4294901760
    %8902 = vmatpush1.msra.mxu0 %v8901
    %v8903 = vand.u32 %v7518, 4294901760
    %8904 = vmatprep.subr.mxu0 %v8903
    %v8905 = vand.u32 %v7517, 4294901760
    %8906 = vmatpush1.msra.mxu0 %v8905
    %v8907 = vand.u32 %v7520, 4294901760
    %8908 = vmatprep.subr.mxu0 %v8907
    %v8909 = vand.u32 %v7519, 4294901760
    %8910 = vmatpush1.msra.mxu0 %v8909
    %v8911 = vand.u32 %v7522, 4294901760
    %8912 = vmatprep.subr.mxu0 %v8911
    %v8913 = vand.u32 %v7521, 4294901760
    %8914 = vmatpush1.msra.mxu0 %v8913
    %v8915 = vand.u32 %v7524, 4294901760
    %8916 = vmatprep.subr.mxu0 %v8915
    %v8917 = vand.u32 %v7523, 4294901760
    %8918 = vmatpush1.msra.mxu0 %v8917
    %v8919 = vand.u32 %v7526, 4294901760
    %8920 = vmatprep.subr.mxu0 %v8919
    %v8921 = vand.u32 %v7525, 4294901760
    %8922 = vmatpush1.msra.mxu0 %v8921
    %v8923 = vand.u32 %v7528, 4294901760
    %8924 = vmatprep.subr.mxu0 %v8923
    %v8925 = vand.u32 %v7527, 4294901760
    %8926 = vmatpush1.msra.mxu0 %v8925
    %v8927 = vand.u32 %v7530, 4294901760
    %8928 = vmatprep.subr.mxu0 %v8927
    %v8929 = vand.u32 %v7529, 4294901760
    %8930 = vmatpush1.msra.mxu0 %v8929
    %v8931 = vand.u32 %v7532, 4294901760
    %8932 = vmatprep.subr.mxu0 %v8931
    %v8933 = vand.u32 %v7531, 4294901760
    %8934 = vmatpush1.msra.mxu0 %v8933
    %v8935 = vand.u32 %v7534, 4294901760
    %8936 = vmatprep.subr.mxu0 %v8935
    %v8937 = vand.u32 %v7533, 4294901760
    %8938 = vmatpush1.msra.mxu0 %v8937
    %v8939 = vand.u32 %v7536, 4294901760
    %8940 = vmatprep.subr.mxu0 %v8939
    %v8941 = vand.u32 %v7535, 4294901760
    %8942 = vmatpush1.msra.mxu0 %v8941
    %v8943 = vand.u32 %v7538, 4294901760
    %8944 = vmatprep.subr.mxu0 %v8943
    %v8945 = vand.u32 %v7537, 4294901760
    %8946 = vmatpush1.msra.mxu0 %v8945
    %v8947 = vand.u32 %v7540, 4294901760
    %8948 = vmatprep.subr.mxu0 %v8947
    %v8949 = vand.u32 %v7539, 4294901760
    %8950 = vmatpush1.msra.mxu0 %v8949
    %v8951 = vand.u32 %v7542, 4294901760
    %8952 = vmatprep.subr.mxu0 %v8951
    %v8953 = vand.u32 %v7541, 4294901760
    %8954 = vmatpush1.msra.mxu0 %v8953
    %v8955 = vand.u32 %v7544, 4294901760
    %8956 = vmatprep.subr.mxu0 %v8955
    %v8957 = vand.u32 %v7543, 4294901760
    %8958 = vmatpush1.msra.mxu0 %v8957
    %v8959 = vand.u32 %v7546, 4294901760
    %8960 = vmatprep.subr.mxu0 %v8959
    %v8961 = vand.u32 %v7545, 4294901760
    %8962 = vmatpush1.msra.mxu0 %v8961
    %v8963 = vand.u32 %v7548, 4294901760
    %8964 = vmatprep.subr.mxu0 %v8963
    %v8965 = vand.u32 %v7547, 4294901760
    %8966 = vmatpush1.msra.mxu0 %v8965
    %v8967 = vand.u32 %v7550, 4294901760
    %8968 = vmatprep.subr.mxu0 %v8967
    %v8969 = vand.u32 %v7549, 4294901760
    %8970 = vmatpush1.msra.mxu0 %v8969
    %v8971 = vand.u32 %v7552, 4294901760
    %8972 = vmatprep.subr.mxu0 %v8971
    %v8973 = vand.u32 %v7551, 4294901760
    %8974 = vmatpush1.msra.mxu0 %v8973
    %v8975 = vand.u32 %v7554, 4294901760
    %8976 = vmatprep.subr.mxu0 %v8975
    %v8977 = vand.u32 %v7553, 4294901760
    %8978 = vmatpush1.msra.mxu0 %v8977
    %v8979 = vand.u32 %v7556, 4294901760
    %8980 = vmatprep.subr.mxu0 %v8979
    %v8981 = vand.u32 %v7555, 4294901760
    %8982 = vmatpush1.msra.mxu0 %v8981
    %v8983 = vand.u32 %v7558, 4294901760
    %8984 = vmatprep.subr.mxu0 %v8983
    %v8985 = vand.u32 %v7557, 4294901760
    %8986 = vmatpush1.msra.mxu0 %v8985
    %v8987 = vand.u32 %v7560, 4294901760
    %8988 = vmatprep.subr.mxu0 %v8987
    %v8989 = vand.u32 %v7559, 4294901760
    %8990 = vmatpush1.msra.mxu0 %v8989
    %v8991 = vand.u32 %v7562, 4294901760
    %8992 = vmatprep.subr.mxu0 %v8991
    %v8993 = vand.u32 %v7561, 4294901760
    %8994 = vmatpush1.msra.mxu0 %v8993
    %v8995 = vand.u32 %v7433, 4294901760
    %v8996 = vsub.f32 %v7433, %v8995
    %v8997 = vand.u32 %v8996, 4294901760
    %v8998 = vsub.f32 %v8996, %v8997
    %v8999 = vand.u32 %v8998, 4294901760
    %9000 = vmatprep.mubr.f32.mxu0 %v8999
    %v9001 = vand.u32 %v7432, 4294901760
    %v9002 = vsub.f32 %v7432, %v9001
    %v9003 = vand.u32 %v9002, 4294901760
    %v9004 = vsub.f32 %v9002, %v9003
    %v9005 = vand.u32 %v9004, 4294901760
    %9006 = vmatmul.mubr.f32.gmra.mrb[0].mxu0 %v9005
    %v9007 = vpop.f32.mrb[0].mxu0
    %v9008 = vadd.f32 %v8863, %v9007
    %v9009 = vpop.f32.mrb[0].mxu0
    %v9010 = vadd.f32 %v8865, %v9009
    %9011 = vdwg.mxu0
    %v9012 = vand.u32 %v7500, 4294901760
    %v9013 = vsub.f32 %v7500, %v9012
    %v9014 = vand.u32 %v9013, 4294901760
    %v9015 = vsub.f32 %v9013, %v9014
    %v9016 = vand.u32 %v9015, 4294901760
    %9017 = vmatprep.subr.mxu0 %v9016
    %v9018 = vand.u32 %v7499, 4294901760
    %v9019 = vsub.f32 %v7499, %v9018
    %v9020 = vand.u32 %v9019, 4294901760
    %v9021 = vsub.f32 %v9019, %v9020
    %v9022 = vand.u32 %v9021, 4294901760
    %9023 = vmatpush1.msra.mxu0 %v9022
    %v9024 = vand.u32 %v7502, 4294901760
    %v9025 = vsub.f32 %v7502, %v9024
    %v9026 = vand.u32 %v9025, 4294901760
    %v9027 = vsub.f32 %v9025, %v9026
    %v9028 = vand.u32 %v9027, 4294901760
    %9029 = vmatprep.subr.mxu0 %v9028
    %v9030 = vand.u32 %v7501, 4294901760
    %v9031 = vsub.f32 %v7501, %v9030
    %v9032 = vand.u32 %v9031, 4294901760
    %v9033 = vsub.f32 %v9031, %v9032
    %v9034 = vand.u32 %v9033, 4294901760
    %9035 = vmatpush1.msra.mxu0 %v9034
    %v9036 = vand.u32 %v7504, 4294901760
    %v9037 = vsub.f32 %v7504, %v9036
    %v9038 = vand.u32 %v9037, 4294901760
    %v9039 = vsub.f32 %v9037, %v9038
    %v9040 = vand.u32 %v9039, 4294901760
    %9041 = vmatprep.subr.mxu0 %v9040
    %v9042 = vand.u32 %v7503, 4294901760
    %v9043 = vsub.f32 %v7503, %v9042
    %v9044 = vand.u32 %v9043, 4294901760
    %v9045 = vsub.f32 %v9043, %v9044
    %v9046 = vand.u32 %v9045, 4294901760
    %9047 = vmatpush1.msra.mxu0 %v9046
    %v9048 = vand.u32 %v7506, 4294901760
    %v9049 = vsub.f32 %v7506, %v9048
    %v9050 = vand.u32 %v9049, 4294901760
    %v9051 = vsub.f32 %v9049, %v9050
    %v9052 = vand.u32 %v9051, 4294901760
    %9053 = vmatprep.subr.mxu0 %v9052
    %v9054 = vand.u32 %v7505, 4294901760
    %v9055 = vsub.f32 %v7505, %v9054
    %v9056 = vand.u32 %v9055, 4294901760
    %v9057 = vsub.f32 %v9055, %v9056
    %v9058 = vand.u32 %v9057, 4294901760
    %9059 = vmatpush1.msra.mxu0 %v9058
    %v9060 = vand.u32 %v7508, 4294901760
    %v9061 = vsub.f32 %v7508, %v9060
    %v9062 = vand.u32 %v9061, 4294901760
    %v9063 = vsub.f32 %v9061, %v9062
    %v9064 = vand.u32 %v9063, 4294901760
    %9065 = vmatprep.subr.mxu0 %v9064
    %v9066 = vand.u32 %v7507, 4294901760
    %v9067 = vsub.f32 %v7507, %v9066
    %v9068 = vand.u32 %v9067, 4294901760
    %v9069 = vsub.f32 %v9067, %v9068
    %v9070 = vand.u32 %v9069, 4294901760
    %9071 = vmatpush1.msra.mxu0 %v9070
    %v9072 = vand.u32 %v7510, 4294901760
    %v9073 = vsub.f32 %v7510, %v9072
    %v9074 = vand.u32 %v9073, 4294901760
    %v9075 = vsub.f32 %v9073, %v9074
    %v9076 = vand.u32 %v9075, 4294901760
    %9077 = vmatprep.subr.mxu0 %v9076
    %v9078 = vand.u32 %v7509, 4294901760
    %v9079 = vsub.f32 %v7509, %v9078
    %v9080 = vand.u32 %v9079, 4294901760
    %v9081 = vsub.f32 %v9079, %v9080
    %v9082 = vand.u32 %v9081, 4294901760
    %9083 = vmatpush1.msra.mxu0 %v9082
    %v9084 = vand.u32 %v7512, 4294901760
    %v9085 = vsub.f32 %v7512, %v9084
    %v9086 = vand.u32 %v9085, 4294901760
    %v9087 = vsub.f32 %v9085, %v9086
    %v9088 = vand.u32 %v9087, 4294901760
    %9089 = vmatprep.subr.mxu0 %v9088
    %v9090 = vand.u32 %v7511, 4294901760
    %v9091 = vsub.f32 %v7511, %v9090
    %v9092 = vand.u32 %v9091, 4294901760
    %v9093 = vsub.f32 %v9091, %v9092
    %v9094 = vand.u32 %v9093, 4294901760
    %9095 = vmatpush1.msra.mxu0 %v9094
    %v9096 = vand.u32 %v7514, 4294901760
    %v9097 = vsub.f32 %v7514, %v9096
    %v9098 = vand.u32 %v9097, 4294901760
    %v9099 = vsub.f32 %v9097, %v9098
    %v9100 = vand.u32 %v9099, 4294901760
    %9101 = vmatprep.subr.mxu0 %v9100
    %v9102 = vand.u32 %v7513, 4294901760
    %v9103 = vsub.f32 %v7513, %v9102
    %v9104 = vand.u32 %v9103, 4294901760
    %v9105 = vsub.f32 %v9103, %v9104
    %v9106 = vand.u32 %v9105, 4294901760
    %9107 = vmatpush1.msra.mxu0 %v9106
    %v9108 = vand.u32 %v7516, 4294901760
    %v9109 = vsub.f32 %v7516, %v9108
    %v9110 = vand.u32 %v9109, 4294901760
    %v9111 = vsub.f32 %v9109, %v9110
    %v9112 = vand.u32 %v9111, 4294901760
    %9113 = vmatprep.subr.mxu0 %v9112
    %v9114 = vand.u32 %v7515, 4294901760
    %v9115 = vsub.f32 %v7515, %v9114
    %v9116 = vand.u32 %v9115, 4294901760
    %v9117 = vsub.f32 %v9115, %v9116
    %v9118 = vand.u32 %v9117, 4294901760
    %9119 = vmatpush1.msra.mxu0 %v9118
    %v9120 = vand.u32 %v7518, 4294901760
    %v9121 = vsub.f32 %v7518, %v9120
    %v9122 = vand.u32 %v9121, 4294901760
    %v9123 = vsub.f32 %v9121, %v9122
    %v9124 = vand.u32 %v9123, 4294901760
    %9125 = vmatprep.subr.mxu0 %v9124
    %v9126 = vand.u32 %v7517, 4294901760
    %v9127 = vsub.f32 %v7517, %v9126
    %v9128 = vand.u32 %v9127, 4294901760
    %v9129 = vsub.f32 %v9127, %v9128
    %v9130 = vand.u32 %v9129, 4294901760
    %9131 = vmatpush1.msra.mxu0 %v9130
    %v9132 = vand.u32 %v7520, 4294901760
    %v9133 = vsub.f32 %v7520, %v9132
    %v9134 = vand.u32 %v9133, 4294901760
    %v9135 = vsub.f32 %v9133, %v9134
    %v9136 = vand.u32 %v9135, 4294901760
    %9137 = vmatprep.subr.mxu0 %v9136
    %v9138 = vand.u32 %v7519, 4294901760
    %v9139 = vsub.f32 %v7519, %v9138
    %v9140 = vand.u32 %v9139, 4294901760
    %v9141 = vsub.f32 %v9139, %v9140
    %v9142 = vand.u32 %v9141, 4294901760
    %9143 = vmatpush1.msra.mxu0 %v9142
    %v9144 = vand.u32 %v7522, 4294901760
    %v9145 = vsub.f32 %v7522, %v9144
    %v9146 = vand.u32 %v9145, 4294901760
    %v9147 = vsub.f32 %v9145, %v9146
    %v9148 = vand.u32 %v9147, 4294901760
    %9149 = vmatprep.subr.mxu0 %v9148
    %v9150 = vand.u32 %v7521, 4294901760
    %v9151 = vsub.f32 %v7521, %v9150
    %v9152 = vand.u32 %v9151, 4294901760
    %v9153 = vsub.f32 %v9151, %v9152
    %v9154 = vand.u32 %v9153, 4294901760
    %9155 = vmatpush1.msra.mxu0 %v9154
    %v9156 = vand.u32 %v7524, 4294901760
    %v9157 = vsub.f32 %v7524, %v9156
    %v9158 = vand.u32 %v9157, 4294901760
    %v9159 = vsub.f32 %v9157, %v9158
    %v9160 = vand.u32 %v9159, 4294901760
    %9161 = vmatprep.subr.mxu0 %v9160
    %v9162 = vand.u32 %v7523, 4294901760
    %v9163 = vsub.f32 %v7523, %v9162
    %v9164 = vand.u32 %v9163, 4294901760
    %v9165 = vsub.f32 %v9163, %v9164
    %v9166 = vand.u32 %v9165, 4294901760
    %9167 = vmatpush1.msra.mxu0 %v9166
    %v9168 = vand.u32 %v7526, 4294901760
    %v9169 = vsub.f32 %v7526, %v9168
    %v9170 = vand.u32 %v9169, 4294901760
    %v9171 = vsub.f32 %v9169, %v9170
    %v9172 = vand.u32 %v9171, 4294901760
    %9173 = vmatprep.subr.mxu0 %v9172
    %v9174 = vand.u32 %v7525, 4294901760
    %v9175 = vsub.f32 %v7525, %v9174
    %v9176 = vand.u32 %v9175, 4294901760
    %v9177 = vsub.f32 %v9175, %v9176
    %v9178 = vand.u32 %v9177, 4294901760
    %9179 = vmatpush1.msra.mxu0 %v9178
    %v9180 = vand.u32 %v7528, 4294901760
    %v9181 = vsub.f32 %v7528, %v9180
    %v9182 = vand.u32 %v9181, 4294901760
    %v9183 = vsub.f32 %v9181, %v9182
    %v9184 = vand.u32 %v9183, 4294901760
    %9185 = vmatprep.subr.mxu0 %v9184
    %v9186 = vand.u32 %v7527, 4294901760
    %v9187 = vsub.f32 %v7527, %v9186
    %v9188 = vand.u32 %v9187, 4294901760
    %v9189 = vsub.f32 %v9187, %v9188
    %v9190 = vand.u32 %v9189, 4294901760
    %9191 = vmatpush1.msra.mxu0 %v9190
    %v9192 = vand.u32 %v7530, 4294901760
    %v9193 = vsub.f32 %v7530, %v9192
    %v9194 = vand.u32 %v9193, 4294901760
    %v9195 = vsub.f32 %v9193, %v9194
    %v9196 = vand.u32 %v9195, 4294901760
    %9197 = vmatprep.subr.mxu0 %v9196
    %v9198 = vand.u32 %v7529, 4294901760
    %v9199 = vsub.f32 %v7529, %v9198
    %v9200 = vand.u32 %v9199, 4294901760
    %v9201 = vsub.f32 %v9199, %v9200
    %v9202 = vand.u32 %v9201, 4294901760
    %9203 = vmatpush1.msra.mxu0 %v9202
    %v9204 = vand.u32 %v7532, 4294901760
    %v9205 = vsub.f32 %v7532, %v9204
    %v9206 = vand.u32 %v9205, 4294901760
    %v9207 = vsub.f32 %v9205, %v9206
    %v9208 = vand.u32 %v9207, 4294901760
    %9209 = vmatprep.subr.mxu0 %v9208
    %v9210 = vand.u32 %v7531, 4294901760
    %v9211 = vsub.f32 %v7531, %v9210
    %v9212 = vand.u32 %v9211, 4294901760
    %v9213 = vsub.f32 %v9211, %v9212
    %v9214 = vand.u32 %v9213, 4294901760
    %9215 = vmatpush1.msra.mxu0 %v9214
    %v9216 = vand.u32 %v7534, 4294901760
    %v9217 = vsub.f32 %v7534, %v9216
    %v9218 = vand.u32 %v9217, 4294901760
    %v9219 = vsub.f32 %v9217, %v9218
    %v9220 = vand.u32 %v9219, 4294901760
    %9221 = vmatprep.subr.mxu0 %v9220
    %v9222 = vand.u32 %v7533, 4294901760
    %v9223 = vsub.f32 %v7533, %v9222
    %v9224 = vand.u32 %v9223, 4294901760
    %v9225 = vsub.f32 %v9223, %v9224
    %v9226 = vand.u32 %v9225, 4294901760
    %9227 = vmatpush1.msra.mxu0 %v9226
    %v9228 = vand.u32 %v7536, 4294901760
    %v9229 = vsub.f32 %v7536, %v9228
    %v9230 = vand.u32 %v9229, 4294901760
    %v9231 = vsub.f32 %v9229, %v9230
    %v9232 = vand.u32 %v9231, 4294901760
    %9233 = vmatprep.subr.mxu0 %v9232
    %v9234 = vand.u32 %v7535, 4294901760
    %v9235 = vsub.f32 %v7535, %v9234
    %v9236 = vand.u32 %v9235, 4294901760
    %v9237 = vsub.f32 %v9235, %v9236
    %v9238 = vand.u32 %v9237, 4294901760
    %9239 = vmatpush1.msra.mxu0 %v9238
    %v9240 = vand.u32 %v7538, 4294901760
    %v9241 = vsub.f32 %v7538, %v9240
    %v9242 = vand.u32 %v9241, 4294901760
    %v9243 = vsub.f32 %v9241, %v9242
    %v9244 = vand.u32 %v9243, 4294901760
    %9245 = vmatprep.subr.mxu0 %v9244
    %v9246 = vand.u32 %v7537, 4294901760
    %v9247 = vsub.f32 %v7537, %v9246
    %v9248 = vand.u32 %v9247, 4294901760
    %v9249 = vsub.f32 %v9247, %v9248
    %v9250 = vand.u32 %v9249, 4294901760
    %9251 = vmatpush1.msra.mxu0 %v9250
    %v9252 = vand.u32 %v7540, 4294901760
    %v9253 = vsub.f32 %v7540, %v9252
    %v9254 = vand.u32 %v9253, 4294901760
    %v9255 = vsub.f32 %v9253, %v9254
    %v9256 = vand.u32 %v9255, 4294901760
    %9257 = vmatprep.subr.mxu0 %v9256
    %v9258 = vand.u32 %v7539, 4294901760
    %v9259 = vsub.f32 %v7539, %v9258
    %v9260 = vand.u32 %v9259, 4294901760
    %v9261 = vsub.f32 %v9259, %v9260
    %v9262 = vand.u32 %v9261, 4294901760
    %9263 = vmatpush1.msra.mxu0 %v9262
    %v9264 = vand.u32 %v7542, 4294901760
    %v9265 = vsub.f32 %v7542, %v9264
    %v9266 = vand.u32 %v9265, 4294901760
    %v9267 = vsub.f32 %v9265, %v9266
    %v9268 = vand.u32 %v9267, 4294901760
    %9269 = vmatprep.subr.mxu0 %v9268
    %v9270 = vand.u32 %v7541, 4294901760
    %v9271 = vsub.f32 %v7541, %v9270
    %v9272 = vand.u32 %v9271, 4294901760
    %v9273 = vsub.f32 %v9271, %v9272
    %v9274 = vand.u32 %v9273, 4294901760
    %9275 = vmatpush1.msra.mxu0 %v9274
    %v9276 = vand.u32 %v7544, 4294901760
    %v9277 = vsub.f32 %v7544, %v9276
    %v9278 = vand.u32 %v9277, 4294901760
    %v9279 = vsub.f32 %v9277, %v9278
    %v9280 = vand.u32 %v9279, 4294901760
    %9281 = vmatprep.subr.mxu0 %v9280
    %v9282 = vand.u32 %v7543, 4294901760
    %v9283 = vsub.f32 %v7543, %v9282
    %v9284 = vand.u32 %v9283, 4294901760
    %v9285 = vsub.f32 %v9283, %v9284
    %v9286 = vand.u32 %v9285, 4294901760
    %9287 = vmatpush1.msra.mxu0 %v9286
    %v9288 = vand.u32 %v7546, 4294901760
    %v9289 = vsub.f32 %v7546, %v9288
    %v9290 = vand.u32 %v9289, 4294901760
    %v9291 = vsub.f32 %v9289, %v9290
    %v9292 = vand.u32 %v9291, 4294901760
    %9293 = vmatprep.subr.mxu0 %v9292
    %v9294 = vand.u32 %v7545, 4294901760
    %v9295 = vsub.f32 %v7545, %v9294
    %v9296 = vand.u32 %v9295, 4294901760
    %v9297 = vsub.f32 %v9295, %v9296
    %v9298 = vand.u32 %v9297, 4294901760
    %9299 = vmatpush1.msra.mxu0 %v9298
    %v9300 = vand.u32 %v7548, 4294901760
    %v9301 = vsub.f32 %v7548, %v9300
    %v9302 = vand.u32 %v9301, 4294901760
    %v9303 = vsub.f32 %v9301, %v9302
    %v9304 = vand.u32 %v9303, 4294901760
    %9305 = vmatprep.subr.mxu0 %v9304
    %v9306 = vand.u32 %v7547, 4294901760
    %v9307 = vsub.f32 %v7547, %v9306
    %v9308 = vand.u32 %v9307, 4294901760
    %v9309 = vsub.f32 %v9307, %v9308
    %v9310 = vand.u32 %v9309, 4294901760
    %9311 = vmatpush1.msra.mxu0 %v9310
    %v9312 = vand.u32 %v7550, 4294901760
    %v9313 = vsub.f32 %v7550, %v9312
    %v9314 = vand.u32 %v9313, 4294901760
    %v9315 = vsub.f32 %v9313, %v9314
    %v9316 = vand.u32 %v9315, 4294901760
    %9317 = vmatprep.subr.mxu0 %v9316
    %v9318 = vand.u32 %v7549, 4294901760
    %v9319 = vsub.f32 %v7549, %v9318
    %v9320 = vand.u32 %v9319, 4294901760
    %v9321 = vsub.f32 %v9319, %v9320
    %v9322 = vand.u32 %v9321, 4294901760
    %9323 = vmatpush1.msra.mxu0 %v9322
    %v9324 = vand.u32 %v7552, 4294901760
    %v9325 = vsub.f32 %v7552, %v9324
    %v9326 = vand.u32 %v9325, 4294901760
    %v9327 = vsub.f32 %v9325, %v9326
    %v9328 = vand.u32 %v9327, 4294901760
    %9329 = vmatprep.subr.mxu0 %v9328
    %v9330 = vand.u32 %v7551, 4294901760
    %v9331 = vsub.f32 %v7551, %v9330
    %v9332 = vand.u32 %v9331, 4294901760
    %v9333 = vsub.f32 %v9331, %v9332
    %v9334 = vand.u32 %v9333, 4294901760
    %9335 = vmatpush1.msra.mxu0 %v9334
    %v9336 = vand.u32 %v7554, 4294901760
    %v9337 = vsub.f32 %v7554, %v9336
    %v9338 = vand.u32 %v9337, 4294901760
    %v9339 = vsub.f32 %v9337, %v9338
    %v9340 = vand.u32 %v9339, 4294901760
    %9341 = vmatprep.subr.mxu0 %v9340
    %v9342 = vand.u32 %v7553, 4294901760
    %v9343 = vsub.f32 %v7553, %v9342
    %v9344 = vand.u32 %v9343, 4294901760
    %v9345 = vsub.f32 %v9343, %v9344
    %v9346 = vand.u32 %v9345, 4294901760
    %9347 = vmatpush1.msra.mxu0 %v9346
    %v9348 = vand.u32 %v7556, 4294901760
    %v9349 = vsub.f32 %v7556, %v9348
    %v9350 = vand.u32 %v9349, 4294901760
    %v9351 = vsub.f32 %v9349, %v9350
    %v9352 = vand.u32 %v9351, 4294901760
    %9353 = vmatprep.subr.mxu0 %v9352
    %v9354 = vand.u32 %v7555, 4294901760
    %v9355 = vsub.f32 %v7555, %v9354
    %v9356 = vand.u32 %v9355, 4294901760
    %v9357 = vsub.f32 %v9355, %v9356
    %v9358 = vand.u32 %v9357, 4294901760
    %9359 = vmatpush1.msra.mxu0 %v9358
    %v9360 = vand.u32 %v7558, 4294901760
    %v9361 = vsub.f32 %v7558, %v9360
    %v9362 = vand.u32 %v9361, 4294901760
    %v9363 = vsub.f32 %v9361, %v9362
    %v9364 = vand.u32 %v9363, 4294901760
    %9365 = vmatprep.subr.mxu0 %v9364
    %v9366 = vand.u32 %v7557, 4294901760
    %v9367 = vsub.f32 %v7557, %v9366
    %v9368 = vand.u32 %v9367, 4294901760
    %v9369 = vsub.f32 %v9367, %v9368
    %v9370 = vand.u32 %v9369, 4294901760
    %9371 = vmatpush1.msra.mxu0 %v9370
    %v9372 = vand.u32 %v7560, 4294901760
    %v9373 = vsub.f32 %v7560, %v9372
    %v9374 = vand.u32 %v9373, 4294901760
    %v9375 = vsub.f32 %v9373, %v9374
    %v9376 = vand.u32 %v9375, 4294901760
    %9377 = vmatprep.subr.mxu0 %v9376
    %v9378 = vand.u32 %v7559, 4294901760
    %v9379 = vsub.f32 %v7559, %v9378
    %v9380 = vand.u32 %v9379, 4294901760
    %v9381 = vsub.f32 %v9379, %v9380
    %v9382 = vand.u32 %v9381, 4294901760
    %9383 = vmatpush1.msra.mxu0 %v9382
    %v9384 = vand.u32 %v7562, 4294901760
    %v9385 = vsub.f32 %v7562, %v9384
    %v9386 = vand.u32 %v9385, 4294901760
    %v9387 = vsub.f32 %v9385, %v9386
    %v9388 = vand.u32 %v9387, 4294901760
    %9389 = vmatprep.subr.mxu0 %v9388
    %v9390 = vand.u32 %v7561, 4294901760
    %v9391 = vsub.f32 %v7561, %v9390
    %v9392 = vand.u32 %v9391, 4294901760
    %v9393 = vsub.f32 %v9391, %v9392
    %v9394 = vand.u32 %v9393, 4294901760
    %9395 = vmatpush1.msra.mxu0 %v9394
    %v9396 = vand.u32 %v7433, 4294901760
    %9397 = vmatprep.mubr.f32.mxu0 %v9396
    %v9398 = vand.u32 %v7432, 4294901760
    %9399 = vmatmul.mubr.f32.gmra.mrb[0].mxu0 %v9398
    %v9400 = vpop.f32.mrb[0].mxu0
    %v9401 = vadd.f32 %v9008, %v9400
    %v9402 = vpop.f32.mrb[0].mxu0
    %v9403 = vadd.f32 %v9010, %v9402
    %9404 = vdwg.mxu0
    %v9405 = vand.u32 %v7500, 4294901760
    %v9406 = vsub.f32 %v7500, %v9405
    %9407 = vmatprep.subr.mxu0 %v9406
    %v9408 = vand.u32 %v7499, 4294901760
    %v9409 = vsub.f32 %v7499, %v9408
    %9410 = vmatpush1.msra.mxu0 %v9409
    %v9411 = vand.u32 %v7502, 4294901760
    %v9412 = vsub.f32 %v7502, %v9411
    %9413 = vmatprep.subr.mxu0 %v9412
    %v9414 = vand.u32 %v7501, 4294901760
    %v9415 = vsub.f32 %v7501, %v9414
    %9416 = vmatpush1.msra.mxu0 %v9415
    %v9417 = vand.u32 %v7504, 4294901760
    %v9418 = vsub.f32 %v7504, %v9417
    %9419 = vmatprep.subr.mxu0 %v9418
    %v9420 = vand.u32 %v7503, 4294901760
    %v9421 = vsub.f32 %v7503, %v9420
    %9422 = vmatpush1.msra.mxu0 %v9421
    %v9423 = vand.u32 %v7506, 4294901760
    %v9424 = vsub.f32 %v7506, %v9423
    %9425 = vmatprep.subr.mxu0 %v9424
    %v9426 = vand.u32 %v7505, 4294901760
    %v9427 = vsub.f32 %v7505, %v9426
    %9428 = vmatpush1.msra.mxu0 %v9427
    %v9429 = vand.u32 %v7508, 4294901760
    %v9430 = vsub.f32 %v7508, %v9429
    %9431 = vmatprep.subr.mxu0 %v9430
    %v9432 = vand.u32 %v7507, 4294901760
    %v9433 = vsub.f32 %v7507, %v9432
    %9434 = vmatpush1.msra.mxu0 %v9433
    %v9435 = vand.u32 %v7510, 4294901760
    %v9436 = vsub.f32 %v7510, %v9435
    %9437 = vmatprep.subr.mxu0 %v9436
    %v9438 = vand.u32 %v7509, 4294901760
    %v9439 = vsub.f32 %v7509, %v9438
    %9440 = vmatpush1.msra.mxu0 %v9439
    %v9441 = vand.u32 %v7512, 4294901760
    %v9442 = vsub.f32 %v7512, %v9441
    %9443 = vmatprep.subr.mxu0 %v9442
    %v9444 = vand.u32 %v7511, 4294901760
    %v9445 = vsub.f32 %v7511, %v9444
    %9446 = vmatpush1.msra.mxu0 %v9445
    %v9447 = vand.u32 %v7514, 4294901760
    %v9448 = vsub.f32 %v7514, %v9447
    %9449 = vmatprep.subr.mxu0 %v9448
    %v9450 = vand.u32 %v7513, 4294901760
    %v9451 = vsub.f32 %v7513, %v9450
    %9452 = vmatpush1.msra.mxu0 %v9451
    %v9453 = vand.u32 %v7516, 4294901760
    %v9454 = vsub.f32 %v7516, %v9453
    %9455 = vmatprep.subr.mxu0 %v9454
    %v9456 = vand.u32 %v7515, 4294901760
    %v9457 = vsub.f32 %v7515, %v9456
    %9458 = vmatpush1.msra.mxu0 %v9457
    %v9459 = vand.u32 %v7518, 4294901760
    %v9460 = vsub.f32 %v7518, %v9459
    %9461 = vmatprep.subr.mxu0 %v9460
    %v9462 = vand.u32 %v7517, 4294901760
    %v9463 = vsub.f32 %v7517, %v9462
    %9464 = vmatpush1.msra.mxu0 %v9463
    %v9465 = vand.u32 %v7520, 4294901760
    %v9466 = vsub.f32 %v7520, %v9465
    %9467 = vmatprep.subr.mxu0 %v9466
    %v9468 = vand.u32 %v7519, 4294901760
    %v9469 = vsub.f32 %v7519, %v9468
    %9470 = vmatpush1.msra.mxu0 %v9469
    %v9471 = vand.u32 %v7522, 4294901760
    %v9472 = vsub.f32 %v7522, %v9471
    %9473 = vmatprep.subr.mxu0 %v9472
    %v9474 = vand.u32 %v7521, 4294901760
    %v9475 = vsub.f32 %v7521, %v9474
    %9476 = vmatpush1.msra.mxu0 %v9475
    %v9477 = vand.u32 %v7524, 4294901760
    %v9478 = vsub.f32 %v7524, %v9477
    %9479 = vmatprep.subr.mxu0 %v9478
    %v9480 = vand.u32 %v7523, 4294901760
    %v9481 = vsub.f32 %v7523, %v9480
    %9482 = vmatpush1.msra.mxu0 %v9481
    %v9483 = vand.u32 %v7526, 4294901760
    %v9484 = vsub.f32 %v7526, %v9483
    %9485 = vmatprep.subr.mxu0 %v9484
    %v9486 = vand.u32 %v7525, 4294901760
    %v9487 = vsub.f32 %v7525, %v9486
    %9488 = vmatpush1.msra.mxu0 %v9487
    %v9489 = vand.u32 %v7528, 4294901760
    %v9490 = vsub.f32 %v7528, %v9489
    %9491 = vmatprep.subr.mxu0 %v9490
    %v9492 = vand.u32 %v7527, 4294901760
    %v9493 = vsub.f32 %v7527, %v9492
    %9494 = vmatpush1.msra.mxu0 %v9493
    %v9495 = vand.u32 %v7530, 4294901760
    %v9496 = vsub.f32 %v7530, %v9495
    %9497 = vmatprep.subr.mxu0 %v9496
    %v9498 = vand.u32 %v7529, 4294901760
    %v9499 = vsub.f32 %v7529, %v9498
    %9500 = vmatpush1.msra.mxu0 %v9499
    %v9501 = vand.u32 %v7532, 4294901760
    %v9502 = vsub.f32 %v7532, %v9501
    %9503 = vmatprep.subr.mxu0 %v9502
    %v9504 = vand.u32 %v7531, 4294901760
    %v9505 = vsub.f32 %v7531, %v9504
    %9506 = vmatpush1.msra.mxu0 %v9505
    %v9507 = vand.u32 %v7534, 4294901760
    %v9508 = vsub.f32 %v7534, %v9507
    %9509 = vmatprep.subr.mxu0 %v9508
    %v9510 = vand.u32 %v7533, 4294901760
    %v9511 = vsub.f32 %v7533, %v9510
    %9512 = vmatpush1.msra.mxu0 %v9511
    %v9513 = vand.u32 %v7536, 4294901760
    %v9514 = vsub.f32 %v7536, %v9513
    %9515 = vmatprep.subr.mxu0 %v9514
    %v9516 = vand.u32 %v7535, 4294901760
    %v9517 = vsub.f32 %v7535, %v9516
    %9518 = vmatpush1.msra.mxu0 %v9517
    %v9519 = vand.u32 %v7538, 4294901760
    %v9520 = vsub.f32 %v7538, %v9519
    %9521 = vmatprep.subr.mxu0 %v9520
    %v9522 = vand.u32 %v7537, 4294901760
    %v9523 = vsub.f32 %v7537, %v9522
    %9524 = vmatpush1.msra.mxu0 %v9523
    %v9525 = vand.u32 %v7540, 4294901760
    %v9526 = vsub.f32 %v7540, %v9525
    %9527 = vmatprep.subr.mxu0 %v9526
    %v9528 = vand.u32 %v7539, 4294901760
    %v9529 = vsub.f32 %v7539, %v9528
    %9530 = vmatpush1.msra.mxu0 %v9529
    %v9531 = vand.u32 %v7542, 4294901760
    %v9532 = vsub.f32 %v7542, %v9531
    %9533 = vmatprep.subr.mxu0 %v9532
    %v9534 = vand.u32 %v7541, 4294901760
    %v9535 = vsub.f32 %v7541, %v9534
    %9536 = vmatpush1.msra.mxu0 %v9535
    %v9537 = vand.u32 %v7544, 4294901760
    %v9538 = vsub.f32 %v7544, %v9537
    %9539 = vmatprep.subr.mxu0 %v9538
    %v9540 = vand.u32 %v7543, 4294901760
    %v9541 = vsub.f32 %v7543, %v9540
    %9542 = vmatpush1.msra.mxu0 %v9541
    %v9543 = vand.u32 %v7546, 4294901760
    %v9544 = vsub.f32 %v7546, %v9543
    %9545 = vmatprep.subr.mxu0 %v9544
    %v9546 = vand.u32 %v7545, 4294901760
    %v9547 = vsub.f32 %v7545, %v9546
    %9548 = vmatpush1.msra.mxu0 %v9547
    %v9549 = vand.u32 %v7548, 4294901760
    %v9550 = vsub.f32 %v7548, %v9549
    %9551 = vmatprep.subr.mxu0 %v9550
    %v9552 = vand.u32 %v7547, 4294901760
    %v9553 = vsub.f32 %v7547, %v9552
    %9554 = vmatpush1.msra.mxu0 %v9553
    %v9555 = vand.u32 %v7550, 4294901760
    %v9556 = vsub.f32 %v7550, %v9555
    %9557 = vmatprep.subr.mxu0 %v9556
    %v9558 = vand.u32 %v7549, 4294901760
    %v9559 = vsub.f32 %v7549, %v9558
    %9560 = vmatpush1.msra.mxu0 %v9559
    %v9561 = vand.u32 %v7552, 4294901760
    %v9562 = vsub.f32 %v7552, %v9561
    %9563 = vmatprep.subr.mxu0 %v9562
    %v9564 = vand.u32 %v7551, 4294901760
    %v9565 = vsub.f32 %v7551, %v9564
    %9566 = vmatpush1.msra.mxu0 %v9565
    %v9567 = vand.u32 %v7554, 4294901760
    %v9568 = vsub.f32 %v7554, %v9567
    %9569 = vmatprep.subr.mxu0 %v9568
    %v9570 = vand.u32 %v7553, 4294901760
    %v9571 = vsub.f32 %v7553, %v9570
    %9572 = vmatpush1.msra.mxu0 %v9571
    %v9573 = vand.u32 %v7556, 4294901760
    %v9574 = vsub.f32 %v7556, %v9573
    %9575 = vmatprep.subr.mxu0 %v9574
    %v9576 = vand.u32 %v7555, 4294901760
    %v9577 = vsub.f32 %v7555, %v9576
    %9578 = vmatpush1.msra.mxu0 %v9577
    %v9579 = vand.u32 %v7558, 4294901760
    %v9580 = vsub.f32 %v7558, %v9579
    %9581 = vmatprep.subr.mxu0 %v9580
    %v9582 = vand.u32 %v7557, 4294901760
    %v9583 = vsub.f32 %v7557, %v9582
    %9584 = vmatpush1.msra.mxu0 %v9583
    %v9585 = vand.u32 %v7560, 4294901760
    %v9586 = vsub.f32 %v7560, %v9585
    %9587 = vmatprep.subr.mxu0 %v9586
    %v9588 = vand.u32 %v7559, 4294901760
    %v9589 = vsub.f32 %v7559, %v9588
    %9590 = vmatpush1.msra.mxu0 %v9589
    %v9591 = vand.u32 %v7562, 4294901760
    %v9592 = vsub.f32 %v7562, %v9591
    %9593 = vmatprep.subr.mxu0 %v9592
    %v9594 = vand.u32 %v7561, 4294901760
    %v9595 = vsub.f32 %v7561, %v9594
    %9596 = vmatpush1.msra.mxu0 %v9595
    %v9597 = vand.u32 %v7433, 4294901760
    %v9598 = vsub.f32 %v7433, %v9597
    %9599 = vmatprep.mubr.f32.mxu0 %v9598
    %v9600 = vand.u32 %v7432, 4294901760
    %v9601 = vsub.f32 %v7432, %v9600
    %9602 = vmatmul.mubr.f32.gmra.mrb[0].mxu0 %v9601
    %v9603 = vpop.f32.mrb[0].mxu0
    %v9604 = vadd.f32 %v9401, %v9603
    %v9605 = vpop.f32.mrb[0].mxu0
    %v9606 = vadd.f32 %v9403, %v9605
    %9607 = vdwg.mxu0
    %v9608 = vand.u32 %v7500, 4294901760
    %9609 = vmatprep.subr.mxu0 %v9608
    %v9610 = vand.u32 %v7499, 4294901760
    %9611 = vmatpush1.msra.mxu0 %v9610
    %v9612 = vand.u32 %v7502, 4294901760
    %9613 = vmatprep.subr.mxu0 %v9612
    %v9614 = vand.u32 %v7501, 4294901760
    %9615 = vmatpush1.msra.mxu0 %v9614
    %v9616 = vand.u32 %v7504, 4294901760
    %9617 = vmatprep.subr.mxu0 %v9616
    %v9618 = vand.u32 %v7503, 4294901760
    %9619 = vmatpush1.msra.mxu0 %v9618
    %v9620 = vand.u32 %v7506, 4294901760
    %9621 = vmatprep.subr.mxu0 %v9620
    %v9622 = vand.u32 %v7505, 4294901760
    %9623 = vmatpush1.msra.mxu0 %v9622
    %v9624 = vand.u32 %v7508, 4294901760
    %9625 = vmatprep.subr.mxu0 %v9624
    %v9626 = vand.u32 %v7507, 4294901760
    %9627 = vmatpush1.msra.mxu0 %v9626
    %v9628 = vand.u32 %v7510, 4294901760
    %9629 = vmatprep.subr.mxu0 %v9628
    %v9630 = vand.u32 %v7509, 4294901760
    %9631 = vmatpush1.msra.mxu0 %v9630
    %v9632 = vand.u32 %v7512, 4294901760
    %9633 = vmatprep.subr.mxu0 %v9632
    %v9634 = vand.u32 %v7511, 4294901760
    %9635 = vmatpush1.msra.mxu0 %v9634
    %v9636 = vand.u32 %v7514, 4294901760
    %9637 = vmatprep.subr.mxu0 %v9636
    %v9638 = vand.u32 %v7513, 4294901760
    %9639 = vmatpush1.msra.mxu0 %v9638
    %v9640 = vand.u32 %v7516, 4294901760
    %9641 = vmatprep.subr.mxu0 %v9640
    %v9642 = vand.u32 %v7515, 4294901760
    %9643 = vmatpush1.msra.mxu0 %v9642
    %v9644 = vand.u32 %v7518, 4294901760
    %9645 = vmatprep.subr.mxu0 %v9644
    %v9646 = vand.u32 %v7517, 4294901760
    %9647 = vmatpush1.msra.mxu0 %v9646
    %v9648 = vand.u32 %v7520, 4294901760
    %9649 = vmatprep.subr.mxu0 %v9648
    %v9650 = vand.u32 %v7519, 4294901760
    %9651 = vmatpush1.msra.mxu0 %v9650
    %v9652 = vand.u32 %v7522, 4294901760
    %9653 = vmatprep.subr.mxu0 %v9652
    %v9654 = vand.u32 %v7521, 4294901760
    %9655 = vmatpush1.msra.mxu0 %v9654
    %v9656 = vand.u32 %v7524, 4294901760
    %9657 = vmatprep.subr.mxu0 %v9656
    %v9658 = vand.u32 %v7523, 4294901760
    %9659 = vmatpush1.msra.mxu0 %v9658
    %v9660 = vand.u32 %v7526, 4294901760
    %9661 = vmatprep.subr.mxu0 %v9660
    %v9662 = vand.u32 %v7525, 4294901760
    %9663 = vmatpush1.msra.mxu0 %v9662
    %v9664 = vand.u32 %v7528, 4294901760
    %9665 = vmatprep.subr.mxu0 %v9664
    %v9666 = vand.u32 %v7527, 4294901760
    %9667 = vmatpush1.msra.mxu0 %v9666
    %v9668 = vand.u32 %v7530, 4294901760
    %9669 = vmatprep.subr.mxu0 %v9668
    %v9670 = vand.u32 %v7529, 4294901760
    %9671 = vmatpush1.msra.mxu0 %v9670
    %v9672 = vand.u32 %v7532, 4294901760
    %9673 = vmatprep.subr.mxu0 %v9672
    %v9674 = vand.u32 %v7531, 4294901760
    %9675 = vmatpush1.msra.mxu0 %v9674
    %v9676 = vand.u32 %v7534, 4294901760
    %9677 = vmatprep.subr.mxu0 %v9676
    %v9678 = vand.u32 %v7533, 4294901760
    %9679 = vmatpush1.msra.mxu0 %v9678
    %v9680 = vand.u32 %v7536, 4294901760
    %9681 = vmatprep.subr.mxu0 %v9680
    %v9682 = vand.u32 %v7535, 4294901760
    %9683 = vmatpush1.msra.mxu0 %v9682
    %v9684 = vand.u32 %v7538, 4294901760
    %9685 = vmatprep.subr.mxu0 %v9684
    %v9686 = vand.u32 %v7537, 4294901760
    %9687 = vmatpush1.msra.mxu0 %v9686
    %v9688 = vand.u32 %v7540, 4294901760
    %9689 = vmatprep.subr.mxu0 %v9688
    %v9690 = vand.u32 %v7539, 4294901760
    %9691 = vmatpush1.msra.mxu0 %v9690
    %v9692 = vand.u32 %v7542, 4294901760
    %9693 = vmatprep.subr.mxu0 %v9692
    %v9694 = vand.u32 %v7541, 4294901760
    %9695 = vmatpush1.msra.mxu0 %v9694
    %v9696 = vand.u32 %v7544, 4294901760
    %9697 = vmatprep.subr.mxu0 %v9696
    %v9698 = vand.u32 %v7543, 4294901760
    %9699 = vmatpush1.msra.mxu0 %v9698
    %v9700 = vand.u32 %v7546, 4294901760
    %9701 = vmatprep.subr.mxu0 %v9700
    %v9702 = vand.u32 %v7545, 4294901760
    %9703 = vmatpush1.msra.mxu0 %v9702
    %v9704 = vand.u32 %v7548, 4294901760
    %9705 = vmatprep.subr.mxu0 %v9704
    %v9706 = vand.u32 %v7547, 4294901760
    %9707 = vmatpush1.msra.mxu0 %v9706
    %v9708 = vand.u32 %v7550, 4294901760
    %9709 = vmatprep.subr.mxu0 %v9708
    %v9710 = vand.u32 %v7549, 4294901760
    %9711 = vmatpush1.msra.mxu0 %v9710
    %v9712 = vand.u32 %v7552, 4294901760
    %9713 = vmatprep.subr.mxu0 %v9712
    %v9714 = vand.u32 %v7551, 4294901760
    %9715 = vmatpush1.msra.mxu0 %v9714
    %v9716 = vand.u32 %v7554, 4294901760
    %9717 = vmatprep.subr.mxu0 %v9716
    %v9718 = vand.u32 %v7553, 4294901760
    %9719 = vmatpush1.msra.mxu0 %v9718
    %v9720 = vand.u32 %v7556, 4294901760
    %9721 = vmatprep.subr.mxu0 %v9720
    %v9722 = vand.u32 %v7555, 4294901760
    %9723 = vmatpush1.msra.mxu0 %v9722
    %v9724 = vand.u32 %v7558, 4294901760
    %9725 = vmatprep.subr.mxu0 %v9724
    %v9726 = vand.u32 %v7557, 4294901760
    %9727 = vmatpush1.msra.mxu0 %v9726
    %v9728 = vand.u32 %v7560, 4294901760
    %9729 = vmatprep.subr.mxu0 %v9728
    %v9730 = vand.u32 %v7559, 4294901760
    %9731 = vmatpush1.msra.mxu0 %v9730
    %v9732 = vand.u32 %v7562, 4294901760
    %9733 = vmatprep.subr.mxu0 %v9732
    %v9734 = vand.u32 %v7561, 4294901760
    %9735 = vmatpush1.msra.mxu0 %v9734
    %v9736 = vand.u32 %v7433, 4294901760
    %v9737 = vsub.f32 %v7433, %v9736
    %v9738 = vand.u32 %v9737, 4294901760
    %9739 = vmatprep.mubr.f32.mxu0 %v9738
    %v9740 = vand.u32 %v7432, 4294901760
    %v9741 = vsub.f32 %v7432, %v9740
    %v9742 = vand.u32 %v9741, 4294901760
    %9743 = vmatmul.mubr.f32.gmra.mrb[0].mxu0 %v9742
    %v9744 = vpop.f32.mrb[0].mxu0
    %v9745 = vadd.f32 %v9604, %v9744
    %v9746 = vpop.f32.mrb[0].mxu0
    %v9747 = vadd.f32 %v9606, %v9746
    %9748 = vdwg.mxu0
    %v9749 = vand.u32 %v7500, 4294901760
    %v9750 = vsub.f32 %v7500, %v9749
    %v9751 = vand.u32 %v9750, 4294901760
    %9752 = vmatprep.subr.mxu0 %v9751
    %v9753 = vand.u32 %v7499, 4294901760
    %v9754 = vsub.f32 %v7499, %v9753
    %v9755 = vand.u32 %v9754, 4294901760
    %9756 = vmatpush1.msra.mxu0 %v9755
    %v9757 = vand.u32 %v7502, 4294901760
    %v9758 = vsub.f32 %v7502, %v9757
    %v9759 = vand.u32 %v9758, 4294901760
    %9760 = vmatprep.subr.mxu0 %v9759
    %v9761 = vand.u32 %v7501, 4294901760
    %v9762 = vsub.f32 %v7501, %v9761
    %v9763 = vand.u32 %v9762, 4294901760
    %9764 = vmatpush1.msra.mxu0 %v9763
    %v9765 = vand.u32 %v7504, 4294901760
    %v9766 = vsub.f32 %v7504, %v9765
    %v9767 = vand.u32 %v9766, 4294901760
    %9768 = vmatprep.subr.mxu0 %v9767
    %v9769 = vand.u32 %v7503, 4294901760
    %v9770 = vsub.f32 %v7503, %v9769
    %v9771 = vand.u32 %v9770, 4294901760
    %9772 = vmatpush1.msra.mxu0 %v9771
    %v9773 = vand.u32 %v7506, 4294901760
    %v9774 = vsub.f32 %v7506, %v9773
    %v9775 = vand.u32 %v9774, 4294901760
    %9776 = vmatprep.subr.mxu0 %v9775
    %v9777 = vand.u32 %v7505, 4294901760
    %v9778 = vsub.f32 %v7505, %v9777
    %v9779 = vand.u32 %v9778, 4294901760
    %9780 = vmatpush1.msra.mxu0 %v9779
    %v9781 = vand.u32 %v7508, 4294901760
    %v9782 = vsub.f32 %v7508, %v9781
    %v9783 = vand.u32 %v9782, 4294901760
    %9784 = vmatprep.subr.mxu0 %v9783
    %v9785 = vand.u32 %v7507, 4294901760
    %v9786 = vsub.f32 %v7507, %v9785
    %v9787 = vand.u32 %v9786, 4294901760
    %9788 = vmatpush1.msra.mxu0 %v9787
    %v9789 = vand.u32 %v7510, 4294901760
    %v9790 = vsub.f32 %v7510, %v9789
    %v9791 = vand.u32 %v9790, 4294901760
    %9792 = vmatprep.subr.mxu0 %v9791
    %v9793 = vand.u32 %v7509, 4294901760
    %v9794 = vsub.f32 %v7509, %v9793
    %v9795 = vand.u32 %v9794, 4294901760
    %9796 = vmatpush1.msra.mxu0 %v9795
    %v9797 = vand.u32 %v7512, 4294901760
    %v9798 = vsub.f32 %v7512, %v9797
    %v9799 = vand.u32 %v9798, 4294901760
    %9800 = vmatprep.subr.mxu0 %v9799
    %v9801 = vand.u32 %v7511, 4294901760
    %v9802 = vsub.f32 %v7511, %v9801
    %v9803 = vand.u32 %v9802, 4294901760
    %9804 = vmatpush1.msra.mxu0 %v9803
    %v9805 = vand.u32 %v7514, 4294901760
    %v9806 = vsub.f32 %v7514, %v9805
    %v9807 = vand.u32 %v9806, 4294901760
    %9808 = vmatprep.subr.mxu0 %v9807
    %v9809 = vand.u32 %v7513, 4294901760
    %v9810 = vsub.f32 %v7513, %v9809
    %v9811 = vand.u32 %v9810, 4294901760
    %9812 = vmatpush1.msra.mxu0 %v9811
    %v9813 = vand.u32 %v7516, 4294901760
    %v9814 = vsub.f32 %v7516, %v9813
    %v9815 = vand.u32 %v9814, 4294901760
    %9816 = vmatprep.subr.mxu0 %v9815
    %v9817 = vand.u32 %v7515, 4294901760
    %v9818 = vsub.f32 %v7515, %v9817
    %v9819 = vand.u32 %v9818, 4294901760
    %9820 = vmatpush1.msra.mxu0 %v9819
    %v9821 = vand.u32 %v7518, 4294901760
    %v9822 = vsub.f32 %v7518, %v9821
    %v9823 = vand.u32 %v9822, 4294901760
    %9824 = vmatprep.subr.mxu0 %v9823
    %v9825 = vand.u32 %v7517, 4294901760
    %v9826 = vsub.f32 %v7517, %v9825
    %v9827 = vand.u32 %v9826, 4294901760
    %9828 = vmatpush1.msra.mxu0 %v9827
    %v9829 = vand.u32 %v7520, 4294901760
    %v9830 = vsub.f32 %v7520, %v9829
    %v9831 = vand.u32 %v9830, 4294901760
    %9832 = vmatprep.subr.mxu0 %v9831
    %v9833 = vand.u32 %v7519, 4294901760
    %v9834 = vsub.f32 %v7519, %v9833
    %v9835 = vand.u32 %v9834, 4294901760
    %9836 = vmatpush1.msra.mxu0 %v9835
    %v9837 = vand.u32 %v7522, 4294901760
    %v9838 = vsub.f32 %v7522, %v9837
    %v9839 = vand.u32 %v9838, 4294901760
    %9840 = vmatprep.subr.mxu0 %v9839
    %v9841 = vand.u32 %v7521, 4294901760
    %v9842 = vsub.f32 %v7521, %v9841
    %v9843 = vand.u32 %v9842, 4294901760
    %9844 = vmatpush1.msra.mxu0 %v9843
    %v9845 = vand.u32 %v7524, 4294901760
    %v9846 = vsub.f32 %v7524, %v9845
    %v9847 = vand.u32 %v9846, 4294901760
    %9848 = vmatprep.subr.mxu0 %v9847
    %v9849 = vand.u32 %v7523, 4294901760
    %v9850 = vsub.f32 %v7523, %v9849
    %v9851 = vand.u32 %v9850, 4294901760
    %9852 = vmatpush1.msra.mxu0 %v9851
    %v9853 = vand.u32 %v7526, 4294901760
    %v9854 = vsub.f32 %v7526, %v9853
    %v9855 = vand.u32 %v9854, 4294901760
    %9856 = vmatprep.subr.mxu0 %v9855
    %v9857 = vand.u32 %v7525, 4294901760
    %v9858 = vsub.f32 %v7525, %v9857
    %v9859 = vand.u32 %v9858, 4294901760
    %9860 = vmatpush1.msra.mxu0 %v9859
    %v9861 = vand.u32 %v7528, 4294901760
    %v9862 = vsub.f32 %v7528, %v9861
    %v9863 = vand.u32 %v9862, 4294901760
    %9864 = vmatprep.subr.mxu0 %v9863
    %v9865 = vand.u32 %v7527, 4294901760
    %v9866 = vsub.f32 %v7527, %v9865
    %v9867 = vand.u32 %v9866, 4294901760
    %9868 = vmatpush1.msra.mxu0 %v9867
    %v9869 = vand.u32 %v7530, 4294901760
    %v9870 = vsub.f32 %v7530, %v9869
    %v9871 = vand.u32 %v9870, 4294901760
    %9872 = vmatprep.subr.mxu0 %v9871
    %v9873 = vand.u32 %v7529, 4294901760
    %v9874 = vsub.f32 %v7529, %v9873
    %v9875 = vand.u32 %v9874, 4294901760
    %9876 = vmatpush1.msra.mxu0 %v9875
    %v9877 = vand.u32 %v7532, 4294901760
    %v9878 = vsub.f32 %v7532, %v9877
    %v9879 = vand.u32 %v9878, 4294901760
    %9880 = vmatprep.subr.mxu0 %v9879
    %v9881 = vand.u32 %v7531, 4294901760
    %v9882 = vsub.f32 %v7531, %v9881
    %v9883 = vand.u32 %v9882, 4294901760
    %9884 = vmatpush1.msra.mxu0 %v9883
    %v9885 = vand.u32 %v7534, 4294901760
    %v9886 = vsub.f32 %v7534, %v9885
    %v9887 = vand.u32 %v9886, 4294901760
    %9888 = vmatprep.subr.mxu0 %v9887
    %v9889 = vand.u32 %v7533, 4294901760
    %v9890 = vsub.f32 %v7533, %v9889
    %v9891 = vand.u32 %v9890, 4294901760
    %9892 = vmatpush1.msra.mxu0 %v9891
    %v9893 = vand.u32 %v7536, 4294901760
    %v9894 = vsub.f32 %v7536, %v9893
    %v9895 = vand.u32 %v9894, 4294901760
    %9896 = vmatprep.subr.mxu0 %v9895
    %v9897 = vand.u32 %v7535, 4294901760
    %v9898 = vsub.f32 %v7535, %v9897
    %v9899 = vand.u32 %v9898, 4294901760
    %9900 = vmatpush1.msra.mxu0 %v9899
    %v9901 = vand.u32 %v7538, 4294901760
    %v9902 = vsub.f32 %v7538, %v9901
    %v9903 = vand.u32 %v9902, 4294901760
    %9904 = vmatprep.subr.mxu0 %v9903
    %v9905 = vand.u32 %v7537, 4294901760
    %v9906 = vsub.f32 %v7537, %v9905
    %v9907 = vand.u32 %v9906, 4294901760
    %9908 = vmatpush1.msra.mxu0 %v9907
    %v9909 = vand.u32 %v7540, 4294901760
    %v9910 = vsub.f32 %v7540, %v9909
    %v9911 = vand.u32 %v9910, 4294901760
    %9912 = vmatprep.subr.mxu0 %v9911
    %v9913 = vand.u32 %v7539, 4294901760
    %v9914 = vsub.f32 %v7539, %v9913
    %v9915 = vand.u32 %v9914, 4294901760
    %9916 = vmatpush1.msra.mxu0 %v9915
    %v9917 = vand.u32 %v7542, 4294901760
    %v9918 = vsub.f32 %v7542, %v9917
    %v9919 = vand.u32 %v9918, 4294901760
    %9920 = vmatprep.subr.mxu0 %v9919
    %v9921 = vand.u32 %v7541, 4294901760
    %v9922 = vsub.f32 %v7541, %v9921
    %v9923 = vand.u32 %v9922, 4294901760
    %9924 = vmatpush1.msra.mxu0 %v9923
    %v9925 = vand.u32 %v7544, 4294901760
    %v9926 = vsub.f32 %v7544, %v9925
    %v9927 = vand.u32 %v9926, 4294901760
    %9928 = vmatprep.subr.mxu0 %v9927
    %v9929 = vand.u32 %v7543, 4294901760
    %v9930 = vsub.f32 %v7543, %v9929
    %v9931 = vand.u32 %v9930, 4294901760
    %9932 = vmatpush1.msra.mxu0 %v9931
    %v9933 = vand.u32 %v7546, 4294901760
    %v9934 = vsub.f32 %v7546, %v9933
    %v9935 = vand.u32 %v9934, 4294901760
    %9936 = vmatprep.subr.mxu0 %v9935
    %v9937 = vand.u32 %v7545, 4294901760
    %v9938 = vsub.f32 %v7545, %v9937
    %v9939 = vand.u32 %v9938, 4294901760
    %9940 = vmatpush1.msra.mxu0 %v9939
    %v9941 = vand.u32 %v7548, 4294901760
    %v9942 = vsub.f32 %v7548, %v9941
    %v9943 = vand.u32 %v9942, 4294901760
    %9944 = vmatprep.subr.mxu0 %v9943
    %v9945 = vand.u32 %v7547, 4294901760
    %v9946 = vsub.f32 %v7547, %v9945
    %v9947 = vand.u32 %v9946, 4294901760
    %9948 = vmatpush1.msra.mxu0 %v9947
    %v9949 = vand.u32 %v7550, 4294901760
    %v9950 = vsub.f32 %v7550, %v9949
    %v9951 = vand.u32 %v9950, 4294901760
    %9952 = vmatprep.subr.mxu0 %v9951
    %v9953 = vand.u32 %v7549, 4294901760
    %v9954 = vsub.f32 %v7549, %v9953
    %v9955 = vand.u32 %v9954, 4294901760
    %9956 = vmatpush1.msra.mxu0 %v9955
    %v9957 = vand.u32 %v7552, 4294901760
    %v9958 = vsub.f32 %v7552, %v9957
    %v9959 = vand.u32 %v9958, 4294901760
    %9960 = vmatprep.subr.mxu0 %v9959
    %v9961 = vand.u32 %v7551, 4294901760
    %v9962 = vsub.f32 %v7551, %v9961
    %v9963 = vand.u32 %v9962, 4294901760
    %9964 = vmatpush1.msra.mxu0 %v9963
    %v9965 = vand.u32 %v7554, 4294901760
    %v9966 = vsub.f32 %v7554, %v9965
    %v9967 = vand.u32 %v9966, 4294901760
    %9968 = vmatprep.subr.mxu0 %v9967
    %v9969 = vand.u32 %v7553, 4294901760
    %v9970 = vsub.f32 %v7553, %v9969
    %v9971 = vand.u32 %v9970, 4294901760
    %9972 = vmatpush1.msra.mxu0 %v9971
    %v9973 = vand.u32 %v7556, 4294901760
    %v9974 = vsub.f32 %v7556, %v9973
    %v9975 = vand.u32 %v9974, 4294901760
    %9976 = vmatprep.subr.mxu0 %v9975
    %v9977 = vand.u32 %v7555, 4294901760
    %v9978 = vsub.f32 %v7555, %v9977
    %v9979 = vand.u32 %v9978, 4294901760
    %9980 = vmatpush1.msra.mxu0 %v9979
    %v9981 = vand.u32 %v7558, 4294901760
    %v9982 = vsub.f32 %v7558, %v9981
    %v9983 = vand.u32 %v9982, 4294901760
    %9984 = vmatprep.subr.mxu0 %v9983
    %v9985 = vand.u32 %v7557, 4294901760
    %v9986 = vsub.f32 %v7557, %v9985
    %v9987 = vand.u32 %v9986, 4294901760
    %9988 = vmatpush1.msra.mxu0 %v9987
    %v9989 = vand.u32 %v7560, 4294901760
    %v9990 = vsub.f32 %v7560, %v9989
    %v9991 = vand.u32 %v9990, 4294901760
    %9992 = vmatprep.subr.mxu0 %v9991
    %v9993 = vand.u32 %v7559, 4294901760
    %v9994 = vsub.f32 %v7559, %v9993
    %v9995 = vand.u32 %v9994, 4294901760
    %9996 = vmatpush1.msra.mxu0 %v9995
    %v9997 = vand.u32 %v7562, 4294901760
    %v9998 = vsub.f32 %v7562, %v9997
    %v9999 = vand.u32 %v9998, 4294901760
    %10000 = vmatprep.subr.mxu0 %v9999
    %v10001 = vand.u32 %v7561, 4294901760
    %v10002 = vsub.f32 %v7561, %v10001
    %v10003 = vand.u32 %v10002, 4294901760
    %10004 = vmatpush1.msra.mxu0 %v10003
    %v10005 = vand.u32 %v7433, 4294901760
    %10006 = vmatprep.mubr.f32.mxu0 %v10005
    %v10007 = vand.u32 %v7432, 4294901760
    %10008 = vmatmul.mubr.f32.gmra.mrb[0].mxu0 %v10007
    %v10009 = vpop.f32.mrb[0].mxu0
    %v10010 = vadd.f32 %v9745, %v10009
    %v10011 = vpop.f32.mrb[0].mxu0
    %v10012 = vadd.f32 %v9747, %v10011
    %10013 = vdwg.mxu0
    %v10014 = vand.u32 %v7500, 4294901760
    %10015 = vmatprep.subr.mxu0 %v10014
    %v10016 = vand.u32 %v7499, 4294901760
    %10017 = vmatpush1.msra.mxu0 %v10016
    %v10018 = vand.u32 %v7502, 4294901760
    %10019 = vmatprep.subr.mxu0 %v10018
    %v10020 = vand.u32 %v7501, 4294901760
    %10021 = vmatpush1.msra.mxu0 %v10020
    %v10022 = vand.u32 %v7504, 4294901760
    %10023 = vmatprep.subr.mxu0 %v10022
    %v10024 = vand.u32 %v7503, 4294901760
    %10025 = vmatpush1.msra.mxu0 %v10024
    %v10026 = vand.u32 %v7506, 4294901760
    %10027 = vmatprep.subr.mxu0 %v10026
    %v10028 = vand.u32 %v7505, 4294901760
    %10029 = vmatpush1.msra.mxu0 %v10028
    %v10030 = vand.u32 %v7508, 4294901760
    %10031 = vmatprep.subr.mxu0 %v10030
    %v10032 = vand.u32 %v7507, 4294901760
    %10033 = vmatpush1.msra.mxu0 %v10032
    %v10034 = vand.u32 %v7510, 4294901760
    %10035 = vmatprep.subr.mxu0 %v10034
    %v10036 = vand.u32 %v7509, 4294901760
    %10037 = vmatpush1.msra.mxu0 %v10036
    %v10038 = vand.u32 %v7512, 4294901760
    %10039 = vmatprep.subr.mxu0 %v10038
    %v10040 = vand.u32 %v7511, 4294901760
    %10041 = vmatpush1.msra.mxu0 %v10040
    %v10042 = vand.u32 %v7514, 4294901760
    %10043 = vmatprep.subr.mxu0 %v10042
    %v10044 = vand.u32 %v7513, 4294901760
    %10045 = vmatpush1.msra.mxu0 %v10044
    %v10046 = vand.u32 %v7516, 4294901760
    %10047 = vmatprep.subr.mxu0 %v10046
    %v10048 = vand.u32 %v7515, 4294901760
    %10049 = vmatpush1.msra.mxu0 %v10048
    %v10050 = vand.u32 %v7518, 4294901760
    %10051 = vmatprep.subr.mxu0 %v10050
    %v10052 = vand.u32 %v7517, 4294901760
    %10053 = vmatpush1.msra.mxu0 %v10052
    %v10054 = vand.u32 %v7520, 4294901760
    %10055 = vmatprep.subr.mxu0 %v10054
    %v10056 = vand.u32 %v7519, 4294901760
    %10057 = vmatpush1.msra.mxu0 %v10056
    %v10058 = vand.u32 %v7522, 4294901760
    %10059 = vmatprep.subr.mxu0 %v10058
    %v10060 = vand.u32 %v7521, 4294901760
    %10061 = vmatpush1.msra.mxu0 %v10060
    %v10062 = vand.u32 %v7524, 4294901760
    %10063 = vmatprep.subr.mxu0 %v10062
    %v10064 = vand.u32 %v7523, 4294901760
    %10065 = vmatpush1.msra.mxu0 %v10064
    %v10066 = vand.u32 %v7526, 4294901760
    %10067 = vmatprep.subr.mxu0 %v10066
    %v10068 = vand.u32 %v7525, 4294901760
    %10069 = vmatpush1.msra.mxu0 %v10068
    %v10070 = vand.u32 %v7528, 4294901760
    %10071 = vmatprep.subr.mxu0 %v10070
    %v10072 = vand.u32 %v7527, 4294901760
    %10073 = vmatpush1.msra.mxu0 %v10072
    %v10074 = vand.u32 %v7530, 4294901760
    %10075 = vmatprep.subr.mxu0 %v10074
    %v10076 = vand.u32 %v7529, 4294901760
    %10077 = vmatpush1.msra.mxu0 %v10076
    %v10078 = vand.u32 %v7532, 4294901760
    %10079 = vmatprep.subr.mxu0 %v10078
    %v10080 = vand.u32 %v7531, 4294901760
    %10081 = vmatpush1.msra.mxu0 %v10080
    %v10082 = vand.u32 %v7534, 4294901760
    %10083 = vmatprep.subr.mxu0 %v10082
    %v10084 = vand.u32 %v7533, 4294901760
    %10085 = vmatpush1.msra.mxu0 %v10084
    %v10086 = vand.u32 %v7536, 4294901760
    %10087 = vmatprep.subr.mxu0 %v10086
    %v10088 = vand.u32 %v7535, 4294901760
    %10089 = vmatpush1.msra.mxu0 %v10088
    %v10090 = vand.u32 %v7538, 4294901760
    %10091 = vmatprep.subr.mxu0 %v10090
    %v10092 = vand.u32 %v7537, 4294901760
    %10093 = vmatpush1.msra.mxu0 %v10092
    %v10094 = vand.u32 %v7540, 4294901760
    %10095 = vmatprep.subr.mxu0 %v10094
    %v10096 = vand.u32 %v7539, 4294901760
    %10097 = vmatpush1.msra.mxu0 %v10096
    %v10098 = vand.u32 %v7542, 4294901760
    %10099 = vmatprep.subr.mxu0 %v10098
    %v10100 = vand.u32 %v7541, 4294901760
    %10101 = vmatpush1.msra.mxu0 %v10100
    %v10102 = vand.u32 %v7544, 4294901760
    %10103 = vmatprep.subr.mxu0 %v10102
    %v10104 = vand.u32 %v7543, 4294901760
    %10105 = vmatpush1.msra.mxu0 %v10104
    %v10106 = vand.u32 %v7546, 4294901760
    %10107 = vmatprep.subr.mxu0 %v10106
    %v10108 = vand.u32 %v7545, 4294901760
    %10109 = vmatpush1.msra.mxu0 %v10108
    %v10110 = vand.u32 %v7548, 4294901760
    %10111 = vmatprep.subr.mxu0 %v10110
    %v10112 = vand.u32 %v7547, 4294901760
    %10113 = vmatpush1.msra.mxu0 %v10112
    %v10114 = vand.u32 %v7550, 4294901760
    %10115 = vmatprep.subr.mxu0 %v10114
    %v10116 = vand.u32 %v7549, 4294901760
    %10117 = vmatpush1.msra.mxu0 %v10116
    %v10118 = vand.u32 %v7552, 4294901760
    %10119 = vmatprep.subr.mxu0 %v10118
    %v10120 = vand.u32 %v7551, 4294901760
    %10121 = vmatpush1.msra.mxu0 %v10120
    %v10122 = vand.u32 %v7554, 4294901760
    %10123 = vmatprep.subr.mxu0 %v10122
    %v10124 = vand.u32 %v7553, 4294901760
    %10125 = vmatpush1.msra.mxu0 %v10124
    %v10126 = vand.u32 %v7556, 4294901760
    %10127 = vmatprep.subr.mxu0 %v10126
    %v10128 = vand.u32 %v7555, 4294901760
    %10129 = vmatpush1.msra.mxu0 %v10128
    %v10130 = vand.u32 %v7558, 4294901760
    %10131 = vmatprep.subr.mxu0 %v10130
    %v10132 = vand.u32 %v7557, 4294901760
    %10133 = vmatpush1.msra.mxu0 %v10132
    %v10134 = vand.u32 %v7560, 4294901760
    %10135 = vmatprep.subr.mxu0 %v10134
    %v10136 = vand.u32 %v7559, 4294901760
    %10137 = vmatpush1.msra.mxu0 %v10136
    %v10138 = vand.u32 %v7562, 4294901760
    %10139 = vmatprep.subr.mxu0 %v10138
    %v10140 = vand.u32 %v7561, 4294901760
    %10141 = vmatpush1.msra.mxu0 %v10140
    %v10142 = vand.u32 %v7433, 4294901760
    %10143 = vmatprep.mubr.f32.mxu0 %v10142
    %v10144 = vand.u32 %v7432, 4294901760
    %10145 = vmatmul.mubr.f32.gmra.mrb[0].mxu0 %v10144
    %v10146 = vpop.f32.mrb[0].mxu0
    %v10147 = vadd.f32 %v10010, %v10146
    %v10148 = vpop.f32.mrb[0].mxu0
    %v10149 = vadd.f32 %v10012, %v10148
    %10150 = vdwg.mxu0
    %v10151 = vand.u32 %v7564, 4294901760
    %10152 = vmatprep.subr.mxu0 %v10151
    %v10153 = vand.u32 %v7563, 4294901760
    %10154 = vmatpush1.msra.mxu0 %v10153
    %v10155 = vand.u32 %v7566, 4294901760
    %10156 = vmatprep.subr.mxu0 %v10155
    %v10157 = vand.u32 %v7565, 4294901760
    %10158 = vmatpush1.msra.mxu0 %v10157
    %10159 = vmatprep.subr.mxu0 0.0
    %10160 = vmatpush1.msra.mxu0 0.0
    %10161 = vmatprep.subr.mxu0 0.0
    %10162 = vmatpush1.msra.mxu0 0.0
    %10163 = vmatprep.subr.mxu0 0.0
    %10164 = vmatpush1.msra.mxu0 0.0
    %10165 = vmatprep.subr.mxu0 0.0
    %10166 = vmatpush1.msra.mxu0 0.0
    %10167 = vmatprep.subr.mxu0 0.0
    %10168 = vmatpush1.msra.mxu0 0.0
    %10169 = vmatprep.subr.mxu0 0.0
    %10170 = vmatpush1.msra.mxu0 0.0
    %10171 = vmatprep.subr.mxu0 0.0
    %10172 = vmatpush1.msra.mxu0 0.0
    %10173 = vmatprep.subr.mxu0 0.0
    %10174 = vmatpush1.msra.mxu0 0.0
    %10175 = vmatprep.subr.mxu0 0.0
    %10176 = vmatpush1.msra.mxu0 0.0
    %10177 = vmatprep.subr.mxu0 0.0
    %10178 = vmatpush1.msra.mxu0 0.0
    %10179 = vmatprep.subr.mxu0 0.0
    %10180 = vmatpush1.msra.mxu0 0.0
    %10181 = vmatprep.subr.mxu0 0.0
    %10182 = vmatpush1.msra.mxu0 0.0
    %10183 = vmatprep.subr.mxu0 0.0
    %10184 = vmatpush1.msra.mxu0 0.0
    %10185 = vmatprep.subr.mxu0 0.0
    %10186 = vmatpush1.msra.mxu0 0.0
    %10187 = vmatprep.subr.mxu0 0.0
    %10188 = vmatpush1.msra.mxu0 0.0
    %10189 = vmatprep.subr.mxu0 0.0
    %10190 = vmatpush1.msra.mxu0 0.0
    %10191 = vmatprep.subr.mxu0 0.0
    %10192 = vmatpush1.msra.mxu0 0.0
    %10193 = vmatprep.subr.mxu0 0.0
    %10194 = vmatpush1.msra.mxu0 0.0
    %10195 = vmatprep.subr.mxu0 0.0
    %10196 = vmatpush1.msra.mxu0 0.0
    %10197 = vmatprep.subr.mxu0 0.0
    %10198 = vmatpush1.msra.mxu0 0.0
    %10199 = vmatprep.subr.mxu0 0.0
    %10200 = vmatpush1.msra.mxu0 0.0
    %10201 = vmatprep.subr.mxu0 0.0
    %10202 = vmatpush1.msra.mxu0 0.0
    %10203 = vmatprep.subr.mxu0 0.0
    %10204 = vmatpush1.msra.mxu0 0.0
    %10205 = vmatprep.subr.mxu0 0.0
    %10206 = vmatpush1.msra.mxu0 0.0
    %10207 = vmatprep.subr.mxu0 0.0
    %10208 = vmatpush1.msra.mxu0 0.0
    %10209 = vmatprep.subr.mxu0 0.0
    %10210 = vmatpush1.msra.mxu0 0.0
    %10211 = vmatprep.subr.mxu0 0.0
    %10212 = vmatpush1.msra.mxu0 0.0
    %10213 = vmatprep.subr.mxu0 0.0
    %10214 = vmatpush1.msra.mxu0 0.0
    %10215 = vmatprep.subr.mxu0 0.0
    %10216 = vmatpush1.msra.mxu0 0.0
    %10217 = vmatprep.subr.mxu0 0.0
    %10218 = vmatpush1.msra.mxu0 0.0
    %10219 = vmatprep.mubr.f32.mxu0 0.0
    %v10220 = vand.u32 %v7581, 4294901760
    %v10221 = vsub.f32 %v7581, %v10220
    %v10222 = vand.u32 %v10221, 4294901760
    %v10223 = vsub.f32 %v10221, %v10222
    %v10224 = vand.u32 %v10223, 4294901760
    %10225 = vmatmul.mubr.f32.gmra.mrb[0].mxu0 %v10224
    %v10226 = vpop.f32.mrb[0].mxu0
    %v10227 = vadd.f32 %v10147, %v10226
    %v10228 = vpop.f32.mrb[0].mxu0
    %v10229 = vadd.f32 %v10149, %v10228
    %10230 = vdwg.mxu0
    %v10231 = vand.u32 %v7564, 4294901760
    %v10232 = vsub.f32 %v7564, %v10231
    %v10233 = vand.u32 %v10232, 4294901760
    %v10234 = vsub.f32 %v10232, %v10233
    %v10235 = vand.u32 %v10234, 4294901760
    %10236 = vmatprep.subr.mxu0 %v10235
    %v10237 = vand.u32 %v7563, 4294901760
    %v10238 = vsub.f32 %v7563, %v10237
    %v10239 = vand.u32 %v10238, 4294901760
    %v10240 = vsub.f32 %v10238, %v10239
    %v10241 = vand.u32 %v10240, 4294901760
    %10242 = vmatpush1.msra.mxu0 %v10241
    %v10243 = vand.u32 %v7566, 4294901760
    %v10244 = vsub.f32 %v7566, %v10243
    %v10245 = vand.u32 %v10244, 4294901760
    %v10246 = vsub.f32 %v10244, %v10245
    %v10247 = vand.u32 %v10246, 4294901760
    %10248 = vmatprep.subr.mxu0 %v10247
    %v10249 = vand.u32 %v7565, 4294901760
    %v10250 = vsub.f32 %v7565, %v10249
    %v10251 = vand.u32 %v10250, 4294901760
    %v10252 = vsub.f32 %v10250, %v10251
    %v10253 = vand.u32 %v10252, 4294901760
    %10254 = vmatpush1.msra.mxu0 %v10253
    %10255 = vmatprep.subr.mxu0 0.0
    %10256 = vmatpush1.msra.mxu0 0.0
    %10257 = vmatprep.subr.mxu0 0.0
    %10258 = vmatpush1.msra.mxu0 0.0
    %10259 = vmatprep.subr.mxu0 0.0
    %10260 = vmatpush1.msra.mxu0 0.0
    %10261 = vmatprep.subr.mxu0 0.0
    %10262 = vmatpush1.msra.mxu0 0.0
    %10263 = vmatprep.subr.mxu0 0.0
    %10264 = vmatpush1.msra.mxu0 0.0
    %10265 = vmatprep.subr.mxu0 0.0
    %10266 = vmatpush1.msra.mxu0 0.0
    %10267 = vmatprep.subr.mxu0 0.0
    %10268 = vmatpush1.msra.mxu0 0.0
    %10269 = vmatprep.subr.mxu0 0.0
    %10270 = vmatpush1.msra.mxu0 0.0
    %10271 = vmatprep.subr.mxu0 0.0
    %10272 = vmatpush1.msra.mxu0 0.0
    %10273 = vmatprep.subr.mxu0 0.0
    %10274 = vmatpush1.msra.mxu0 0.0
    %10275 = vmatprep.subr.mxu0 0.0
    %10276 = vmatpush1.msra.mxu0 0.0
    %10277 = vmatprep.subr.mxu0 0.0
    %10278 = vmatpush1.msra.mxu0 0.0
    %10279 = vmatprep.subr.mxu0 0.0
    %10280 = vmatpush1.msra.mxu0 0.0
    %10281 = vmatprep.subr.mxu0 0.0
    %10282 = vmatpush1.msra.mxu0 0.0
    %10283 = vmatprep.subr.mxu0 0.0
    %10284 = vmatpush1.msra.mxu0 0.0
    %10285 = vmatprep.subr.mxu0 0.0
    %10286 = vmatpush1.msra.mxu0 0.0
    %10287 = vmatprep.subr.mxu0 0.0
    %10288 = vmatpush1.msra.mxu0 0.0
    %10289 = vmatprep.subr.mxu0 0.0
    %10290 = vmatpush1.msra.mxu0 0.0
    %10291 = vmatprep.subr.mxu0 0.0
    %10292 = vmatpush1.msra.mxu0 0.0
    %10293 = vmatprep.subr.mxu0 0.0
    %10294 = vmatpush1.msra.mxu0 0.0
    %10295 = vmatprep.subr.mxu0 0.0
    %10296 = vmatpush1.msra.mxu0 0.0
    %10297 = vmatprep.subr.mxu0 0.0
    %10298 = vmatpush1.msra.mxu0 0.0
    %10299 = vmatprep.subr.mxu0 0.0
    %10300 = vmatpush1.msra.mxu0 0.0
    %10301 = vmatprep.subr.mxu0 0.0
    %10302 = vmatpush1.msra.mxu0 0.0
    %10303 = vmatprep.subr.mxu0 0.0
    %10304 = vmatpush1.msra.mxu0 0.0
    %10305 = vmatprep.subr.mxu0 0.0
    %10306 = vmatpush1.msra.mxu0 0.0
    %10307 = vmatprep.subr.mxu0 0.0
    %10308 = vmatpush1.msra.mxu0 0.0
    %10309 = vmatprep.subr.mxu0 0.0
    %10310 = vmatpush1.msra.mxu0 0.0
    %10311 = vmatprep.subr.mxu0 0.0
    %10312 = vmatpush1.msra.mxu0 0.0
    %10313 = vmatprep.subr.mxu0 0.0
    %10314 = vmatpush1.msra.mxu0 0.0
    %10315 = vmatprep.mubr.f32.mxu0 0.0
    %v10316 = vand.u32 %v7581, 4294901760
    %10317 = vmatmul.mubr.f32.gmra.mrb[0].mxu0 %v10316
    %v10318 = vpop.f32.mrb[0].mxu0
    %v10319 = vadd.f32 %v10227, %v10318
    %v10320 = vpop.f32.mrb[0].mxu0
    %v10321 = vadd.f32 %v10229, %v10320
    %10322 = vdwg.mxu0
    %v10323 = vand.u32 %v7564, 4294901760
    %v10324 = vsub.f32 %v7564, %v10323
    %10325 = vmatprep.subr.mxu0 %v10324
    %v10326 = vand.u32 %v7563, 4294901760
    %v10327 = vsub.f32 %v7563, %v10326
    %10328 = vmatpush1.msra.mxu0 %v10327
    %v10329 = vand.u32 %v7566, 4294901760
    %v10330 = vsub.f32 %v7566, %v10329
    %10331 = vmatprep.subr.mxu0 %v10330
    %v10332 = vand.u32 %v7565, 4294901760
    %v10333 = vsub.f32 %v7565, %v10332
    %10334 = vmatpush1.msra.mxu0 %v10333
    %10335 = vmatprep.subr.mxu0 0.0
    %10336 = vmatpush1.msra.mxu0 0.0
    %10337 = vmatprep.subr.mxu0 0.0
    %10338 = vmatpush1.msra.mxu0 0.0
    %10339 = vmatprep.subr.mxu0 0.0
    %10340 = vmatpush1.msra.mxu0 0.0
    %10341 = vmatprep.subr.mxu0 0.0
    %10342 = vmatpush1.msra.mxu0 0.0
    %10343 = vmatprep.subr.mxu0 0.0
    %10344 = vmatpush1.msra.mxu0 0.0
    %10345 = vmatprep.subr.mxu0 0.0
    %10346 = vmatpush1.msra.mxu0 0.0
    %10347 = vmatprep.subr.mxu0 0.0
    %10348 = vmatpush1.msra.mxu0 0.0
    %10349 = vmatprep.subr.mxu0 0.0
    %10350 = vmatpush1.msra.mxu0 0.0
    %10351 = vmatprep.subr.mxu0 0.0
    %10352 = vmatpush1.msra.mxu0 0.0
    %10353 = vmatprep.subr.mxu0 0.0
    %10354 = vmatpush1.msra.mxu0 0.0
    %10355 = vmatprep.subr.mxu0 0.0
    %10356 = vmatpush1.msra.mxu0 0.0
    %10357 = vmatprep.subr.mxu0 0.0
    %10358 = vmatpush1.msra.mxu0 0.0
    %10359 = vmatprep.subr.mxu0 0.0
    %10360 = vmatpush1.msra.mxu0 0.0
    %10361 = vmatprep.subr.mxu0 0.0
    %10362 = vmatpush1.msra.mxu0 0.0
    %10363 = vmatprep.subr.mxu0 0.0
    %10364 = vmatpush1.msra.mxu0 0.0
    %10365 = vmatprep.subr.mxu0 0.0
    %10366 = vmatpush1.msra.mxu0 0.0
    %10367 = vmatprep.subr.mxu0 0.0
    %10368 = vmatpush1.msra.mxu0 0.0
    %10369 = vmatprep.subr.mxu0 0.0
    %10370 = vmatpush1.msra.mxu0 0.0
    %10371 = vmatprep.subr.mxu0 0.0
    %10372 = vmatpush1.msra.mxu0 0.0
    %10373 = vmatprep.subr.mxu0 0.0
    %10374 = vmatpush1.msra.mxu0 0.0
    %10375 = vmatprep.subr.mxu0 0.0
    %10376 = vmatpush1.msra.mxu0 0.0
    %10377 = vmatprep.subr.mxu0 0.0
    %10378 = vmatpush1.msra.mxu0 0.0
    %10379 = vmatprep.subr.mxu0 0.0
    %10380 = vmatpush1.msra.mxu0 0.0
    %10381 = vmatprep.subr.mxu0 0.0
    %10382 = vmatpush1.msra.mxu0 0.0
    %10383 = vmatprep.subr.mxu0 0.0
    %10384 = vmatpush1.msra.mxu0 0.0
    %10385 = vmatprep.subr.mxu0 0.0
    %10386 = vmatpush1.msra.mxu0 0.0
    %10387 = vmatprep.subr.mxu0 0.0
    %10388 = vmatpush1.msra.mxu0 0.0
    %10389 = vmatprep.subr.mxu0 0.0
    %10390 = vmatpush1.msra.mxu0 0.0
    %10391 = vmatprep.subr.mxu0 0.0
    %10392 = vmatpush1.msra.mxu0 0.0
    %10393 = vmatprep.subr.mxu0 0.0
    %10394 = vmatpush1.msra.mxu0 0.0
    %10395 = vmatprep.mubr.f32.mxu0 0.0
    %v10396 = vand.u32 %v7581, 4294901760
    %v10397 = vsub.f32 %v7581, %v10396
    %10398 = vmatmul.mubr.f32.gmra.mrb[0].mxu0 %v10397
    %v10399 = vpop.f32.mrb[0].mxu0
    %v10400 = vadd.f32 %v10319, %v10399
    %v10401 = vpop.f32.mrb[0].mxu0
    %v10402 = vadd.f32 %v10321, %v10401
    %10403 = vdwg.mxu0
    %v10404 = vand.u32 %v7564, 4294901760
    %10405 = vmatprep.subr.mxu0 %v10404
    %v10406 = vand.u32 %v7563, 4294901760
    %10407 = vmatpush1.msra.mxu0 %v10406
    %v10408 = vand.u32 %v7566, 4294901760
    %10409 = vmatprep.subr.mxu0 %v10408
    %v10410 = vand.u32 %v7565, 4294901760
    %10411 = vmatpush1.msra.mxu0 %v10410
    %10412 = vmatprep.subr.mxu0 0.0
    %10413 = vmatpush1.msra.mxu0 0.0
    %10414 = vmatprep.subr.mxu0 0.0
    %10415 = vmatpush1.msra.mxu0 0.0
    %10416 = vmatprep.subr.mxu0 0.0
    %10417 = vmatpush1.msra.mxu0 0.0
    %10418 = vmatprep.subr.mxu0 0.0
    %10419 = vmatpush1.msra.mxu0 0.0
    %10420 = vmatprep.subr.mxu0 0.0
    %10421 = vmatpush1.msra.mxu0 0.0
    %10422 = vmatprep.subr.mxu0 0.0
    %10423 = vmatpush1.msra.mxu0 0.0
    %10424 = vmatprep.subr.mxu0 0.0
    %10425 = vmatpush1.msra.mxu0 0.0
    %10426 = vmatprep.subr.mxu0 0.0
    %10427 = vmatpush1.msra.mxu0 0.0
    %10428 = vmatprep.subr.mxu0 0.0
    %10429 = vmatpush1.msra.mxu0 0.0
    %10430 = vmatprep.subr.mxu0 0.0
    %10431 = vmatpush1.msra.mxu0 0.0
    %10432 = vmatprep.subr.mxu0 0.0
    %10433 = vmatpush1.msra.mxu0 0.0
    %10434 = vmatprep.subr.mxu0 0.0
    %10435 = vmatpush1.msra.mxu0 0.0
    %10436 = vmatprep.subr.mxu0 0.0
    %10437 = vmatpush1.msra.mxu0 0.0
    %10438 = vmatprep.subr.mxu0 0.0
    %10439 = vmatpush1.msra.mxu0 0.0
    %10440 = vmatprep.subr.mxu0 0.0
    %10441 = vmatpush1.msra.mxu0 0.0
    %10442 = vmatprep.subr.mxu0 0.0
    %10443 = vmatpush1.msra.mxu0 0.0
    %10444 = vmatprep.subr.mxu0 0.0
    %10445 = vmatpush1.msra.mxu0 0.0
    %10446 = vmatprep.subr.mxu0 0.0
    %10447 = vmatpush1.msra.mxu0 0.0
    %10448 = vmatprep.subr.mxu0 0.0
    %10449 = vmatpush1.msra.mxu0 0.0
    %10450 = vmatprep.subr.mxu0 0.0
    %10451 = vmatpush1.msra.mxu0 0.0
    %10452 = vmatprep.subr.mxu0 0.0
    %10453 = vmatpush1.msra.mxu0 0.0
    %10454 = vmatprep.subr.mxu0 0.0
    %10455 = vmatpush1.msra.mxu0 0.0
    %10456 = vmatprep.subr.mxu0 0.0
    %10457 = vmatpush1.msra.mxu0 0.0
    %10458 = vmatprep.subr.mxu0 0.0
    %10459 = vmatpush1.msra.mxu0 0.0
    %10460 = vmatprep.subr.mxu0 0.0
    %10461 = vmatpush1.msra.mxu0 0.0
    %10462 = vmatprep.subr.mxu0 0.0
    %10463 = vmatpush1.msra.mxu0 0.0
    %10464 = vmatprep.subr.mxu0 0.0
    %10465 = vmatpush1.msra.mxu0 0.0
    %10466 = vmatprep.subr.mxu0 0.0
    %10467 = vmatpush1.msra.mxu0 0.0
    %10468 = vmatprep.subr.mxu0 0.0
    %10469 = vmatpush1.msra.mxu0 0.0
    %10470 = vmatprep.subr.mxu0 0.0
    %10471 = vmatpush1.msra.mxu0 0.0
    %10472 = vmatprep.mubr.f32.mxu0 0.0
    %v10473 = vand.u32 %v7581, 4294901760
    %v10474 = vsub.f32 %v7581, %v10473
    %v10475 = vand.u32 %v10474, 4294901760
    %10476 = vmatmul.mubr.f32.gmra.mrb[0].mxu0 %v10475
    %v10477 = vpop.f32.mrb[0].mxu0
    %v10478 = vadd.f32 %v10400, %v10477
    %v10479 = vpop.f32.mrb[0].mxu0
    %v10480 = vadd.f32 %v10402, %v10479
    %10481 = vdwg.mxu0
    %v10482 = vand.u32 %v7564, 4294901760
    %v10483 = vsub.f32 %v7564, %v10482
    %v10484 = vand.u32 %v10483, 4294901760
    %10485 = vmatprep.subr.mxu0 %v10484
    %v10486 = vand.u32 %v7563, 4294901760
    %v10487 = vsub.f32 %v7563, %v10486
    %v10488 = vand.u32 %v10487, 4294901760
    %10489 = vmatpush1.msra.mxu0 %v10488
    %v10490 = vand.u32 %v7566, 4294901760
    %v10491 = vsub.f32 %v7566, %v10490
    %v10492 = vand.u32 %v10491, 4294901760
    %10493 = vmatprep.subr.mxu0 %v10492
    %v10494 = vand.u32 %v7565, 4294901760
    %v10495 = vsub.f32 %v7565, %v10494
    %v10496 = vand.u32 %v10495, 4294901760
    %10497 = vmatpush1.msra.mxu0 %v10496
    %10498 = vmatprep.subr.mxu0 0.0
    %10499 = vmatpush1.msra.mxu0 0.0
    %10500 = vmatprep.subr.mxu0 0.0
    %10501 = vmatpush1.msra.mxu0 0.0
    %10502 = vmatprep.subr.mxu0 0.0
    %10503 = vmatpush1.msra.mxu0 0.0
    %10504 = vmatprep.subr.mxu0 0.0
    %10505 = vmatpush1.msra.mxu0 0.0
    %10506 = vmatprep.subr.mxu0 0.0
    %10507 = vmatpush1.msra.mxu0 0.0
    %10508 = vmatprep.subr.mxu0 0.0
    %10509 = vmatpush1.msra.mxu0 0.0
    %10510 = vmatprep.subr.mxu0 0.0
    %10511 = vmatpush1.msra.mxu0 0.0
    %10512 = vmatprep.subr.mxu0 0.0
    %10513 = vmatpush1.msra.mxu0 0.0
    %10514 = vmatprep.subr.mxu0 0.0
    %10515 = vmatpush1.msra.mxu0 0.0
    %10516 = vmatprep.subr.mxu0 0.0
    %10517 = vmatpush1.msra.mxu0 0.0
    %10518 = vmatprep.subr.mxu0 0.0
    %10519 = vmatpush1.msra.mxu0 0.0
    %10520 = vmatprep.subr.mxu0 0.0
    %10521 = vmatpush1.msra.mxu0 0.0
    %10522 = vmatprep.subr.mxu0 0.0
    %10523 = vmatpush1.msra.mxu0 0.0
    %10524 = vmatprep.subr.mxu0 0.0
    %10525 = vmatpush1.msra.mxu0 0.0
    %10526 = vmatprep.subr.mxu0 0.0
    %10527 = vmatpush1.msra.mxu0 0.0
    %10528 = vmatprep.subr.mxu0 0.0
    %10529 = vmatpush1.msra.mxu0 0.0
    %10530 = vmatprep.subr.mxu0 0.0
    %10531 = vmatpush1.msra.mxu0 0.0
    %10532 = vmatprep.subr.mxu0 0.0
    %10533 = vmatpush1.msra.mxu0 0.0
    %10534 = vmatprep.subr.mxu0 0.0
    %10535 = vmatpush1.msra.mxu0 0.0
    %10536 = vmatprep.subr.mxu0 0.0
    %10537 = vmatpush1.msra.mxu0 0.0
    %10538 = vmatprep.subr.mxu0 0.0
    %10539 = vmatpush1.msra.mxu0 0.0
    %10540 = vmatprep.subr.mxu0 0.0
    %10541 = vmatpush1.msra.mxu0 0.0
    %10542 = vmatprep.subr.mxu0 0.0
    %10543 = vmatpush1.msra.mxu0 0.0
    %10544 = vmatprep.subr.mxu0 0.0
    %10545 = vmatpush1.msra.mxu0 0.0
    %10546 = vmatprep.subr.mxu0 0.0
    %10547 = vmatpush1.msra.mxu0 0.0
    %10548 = vmatprep.subr.mxu0 0.0
    %10549 = vmatpush1.msra.mxu0 0.0
    %10550 = vmatprep.subr.mxu0 0.0
    %10551 = vmatpush1.msra.mxu0 0.0
    %10552 = vmatprep.subr.mxu0 0.0
    %10553 = vmatpush1.msra.mxu0 0.0
    %10554 = vmatprep.subr.mxu0 0.0
    %10555 = vmatpush1.msra.mxu0 0.0
    %10556 = vmatprep.subr.mxu0 0.0
    %10557 = vmatpush1.msra.mxu0 0.0
    %10558 = vmatprep.mubr.f32.mxu0 0.0
    %v10559 = vand.u32 %v7581, 4294901760
    %10560 = vmatmul.mubr.f32.gmra.mrb[0].mxu0 %v10559
    %v10561 = vpop.f32.mrb[0].mxu0
    %v10562 = vadd.f32 %v10478, %v10561
    %v10563 = vpop.f32.mrb[0].mxu0
    %v10564 = vadd.f32 %v10480, %v10563
    %10565 = vdwg.mxu0
    %v10566 = vand.u32 %v7564, 4294901760
    %10567 = vmatprep.subr.mxu0 %v10566
    %v10568 = vand.u32 %v7563, 4294901760
    %10569 = vmatpush1.msra.mxu0 %v10568
    %v10570 = vand.u32 %v7566, 4294901760
    %10571 = vmatprep.subr.mxu0 %v10570
    %v10572 = vand.u32 %v7565, 4294901760
    %10573 = vmatpush1.msra.mxu0 %v10572
    %10574 = vmatprep.subr.mxu0 0.0
    %10575 = vmatpush1.msra.mxu0 0.0
    %10576 = vmatprep.subr.mxu0 0.0
    %10577 = vmatpush1.msra.mxu0 0.0
    %10578 = vmatprep.subr.mxu0 0.0
    %10579 = vmatpush1.msra.mxu0 0.0
    %10580 = vmatprep.subr.mxu0 0.0
    %10581 = vmatpush1.msra.mxu0 0.0
    %10582 = vmatprep.subr.mxu0 0.0
    %10583 = vmatpush1.msra.mxu0 0.0
    %10584 = vmatprep.subr.mxu0 0.0
    %10585 = vmatpush1.msra.mxu0 0.0
    %10586 = vmatprep.subr.mxu0 0.0
    %10587 = vmatpush1.msra.mxu0 0.0
    %10588 = vmatprep.subr.mxu0 0.0
    %10589 = vmatpush1.msra.mxu0 0.0
    %10590 = vmatprep.subr.mxu0 0.0
    %10591 = vmatpush1.msra.mxu0 0.0
    %10592 = vmatprep.subr.mxu0 0.0
    %10593 = vmatpush1.msra.mxu0 0.0
    %10594 = vmatprep.subr.mxu0 0.0
    %10595 = vmatpush1.msra.mxu0 0.0
    %10596 = vmatprep.subr.mxu0 0.0
    %10597 = vmatpush1.msra.mxu0 0.0
    %10598 = vmatprep.subr.mxu0 0.0
    %10599 = vmatpush1.msra.mxu0 0.0
    %10600 = vmatprep.subr.mxu0 0.0
    %10601 = vmatpush1.msra.mxu0 0.0
    %10602 = vmatprep.subr.mxu0 0.0
    %10603 = vmatpush1.msra.mxu0 0.0
    %10604 = vmatprep.subr.mxu0 0.0
    %10605 = vmatpush1.msra.mxu0 0.0
    %10606 = vmatprep.subr.mxu0 0.0
    %10607 = vmatpush1.msra.mxu0 0.0
    %10608 = vmatprep.subr.mxu0 0.0
    %10609 = vmatpush1.msra.mxu0 0.0
    %10610 = vmatprep.subr.mxu0 0.0
    %10611 = vmatpush1.msra.mxu0 0.0
    %10612 = vmatprep.subr.mxu0 0.0
    %10613 = vmatpush1.msra.mxu0 0.0
    %10614 = vmatprep.subr.mxu0 0.0
    %10615 = vmatpush1.msra.mxu0 0.0
    %10616 = vmatprep.subr.mxu0 0.0
    %10617 = vmatpush1.msra.mxu0 0.0
    %10618 = vmatprep.subr.mxu0 0.0
    %10619 = vmatpush1.msra.mxu0 0.0
    %10620 = vmatprep.subr.mxu0 0.0
    %10621 = vmatpush1.msra.mxu0 0.0
    %10622 = vmatprep.subr.mxu0 0.0
    %10623 = vmatpush1.msra.mxu0 0.0
    %10624 = vmatprep.subr.mxu0 0.0
    %10625 = vmatpush1.msra.mxu0 0.0
    %10626 = vmatprep.subr.mxu0 0.0
    %10627 = vmatpush1.msra.mxu0 0.0
    %10628 = vmatprep.subr.mxu0 0.0
    %10629 = vmatpush1.msra.mxu0 0.0
    %10630 = vmatprep.subr.mxu0 0.0
    %10631 = vmatpush1.msra.mxu0 0.0
    %10632 = vmatprep.subr.mxu0 0.0
    %10633 = vmatpush1.msra.mxu0 0.0
    %10634 = vmatprep.mubr.f32.mxu0 0.0
    %v10635 = vand.u32 %v7581, 4294901760
    %10636 = vmatmul.mubr.f32.gmra.mrb[0].mxu0 %v10635
    %v10637 = vpop.f32.mrb[0].mxu0
    %v10638 = vadd.f32 %v10562, %v10637
    %v10639 = vpop.f32.mrb[0].mxu0
    %v10640 = vadd.f32 %v10564, %v10639
    %10641 = vdwg.mxu0
    %v10642 = vtanh.pop %v10638
    %v10643 = vtanh.pop %v10640
    %v10644 = vld [vmem:[%s9] sm:$0xff]
    %v10645 = vld [vmem:[%s9 + $0x8] sm:$0xff]
    %v10646 = vld [vmem:[%s9 + $0x10] sm:$0xff]
    %v10647 = vld [vmem:[%s9 + $0x18] sm:$0xff]
    %v10648 = vld [vmem:[%s9 + $0x20] sm:$0xff]
    %v10649 = vld [vmem:[%s9 + $0x28] sm:$0xff]
    %v10650 = vld [vmem:[%s9 + $0x30] sm:$0xff]
    %v10651 = vld [vmem:[%s9 + $0x38] sm:$0xff]
    %v10652 = vld [vmem:[%s9 + $0x40] sm:$0xff]
    %v10653 = vld [vmem:[%s9 + $0x48] sm:$0xff]
    %v10654 = vld [vmem:[%s9 + $0x50] sm:$0xff]
    %v10655 = vld [vmem:[%s9 + $0x58] sm:$0xff]
    %v10656 = vld [vmem:[%s9 + $0x60] sm:$0xff]
    %v10657 = vld [vmem:[%s9 + $0x68] sm:$0xff]
    %v10658 = vld [vmem:[%s9 + $0x70] sm:$0xff]
    %v10659 = vld [vmem:[%s9 + $0x78] sm:$0xff]
    %v10660 = vld [vmem:[%s9 + $0x80] sm:$0xff]
    %v10661 = vld [vmem:[%s9 + $0x88] sm:$0xff]
    %v10662 = vld [vmem:[%s10] sm:$0x1]
    %v10664 = vlaneseq
    %v10665 = vshrl.u32 %v10664, 7
    %v10666 = vsub.s32 0, %v10665
    %v10667 = vrot.slane %v10662, %v10666
    %v10670 = vsel %vm7579, %v10643, 0
    %10672 = vmatprep.subr.mxu0 0.0
    %v10673 = vand.u32 %v10644, 4294901760
    %10674 = vmatpush1.msra.mxu0 %v10673
    %10675 = vmatprep.subr.mxu0 0.0
    %v10676 = vand.u32 %v10645, 4294901760
    %10677 = vmatpush1.msra.mxu0 %v10676
    %10678 = vmatprep.subr.mxu0 0.0
    %v10679 = vand.u32 %v10646, 4294901760
    %10680 = vmatpush1.msra.mxu0 %v10679
    %10681 = vmatprep.subr.mxu0 0.0
    %v10682 = vand.u32 %v10647, 4294901760
    %10683 = vmatpush1.msra.mxu0 %v10682
    %10684 = vmatprep.subr.mxu0 0.0
    %v10685 = vand.u32 %v10648, 4294901760
    %10686 = vmatpush1.msra.mxu0 %v10685
    %10687 = vmatprep.subr.mxu0 0.0
    %v10688 = vand.u32 %v10649, 4294901760
    %10689 = vmatpush1.msra.mxu0 %v10688
    %10690 = vmatprep.subr.mxu0 0.0
    %v10691 = vand.u32 %v10650, 4294901760
    %10692 = vmatpush1.msra.mxu0 %v10691
    %10693 = vmatprep.subr.mxu0 0.0
    %v10694 = vand.u32 %v10651, 4294901760
    %10695 = vmatpush1.msra.mxu0 %v10694
    %10696 = vmatprep.subr.mxu0 0.0
    %v10697 = vand.u32 %v10652, 4294901760
    %10698 = vmatpush1.msra.mxu0 %v10697
    %10699 = vmatprep.subr.mxu0 0.0
    %v10700 = vand.u32 %v10653, 4294901760
    %10701 = vmatpush1.msra.mxu0 %v10700
    %10702 = vmatprep.subr.mxu0 0.0
    %v10703 = vand.u32 %v10654, 4294901760
    %10704 = vmatpush1.msra.mxu0 %v10703
    %10705 = vmatprep.subr.mxu0 0.0
    %v10706 = vand.u32 %v10655, 4294901760
    %10707 = vmatpush1.msra.mxu0 %v10706
    %10708 = vmatprep.subr.mxu0 0.0
    %v10709 = vand.u32 %v10656, 4294901760
    %10710 = vmatpush1.msra.mxu0 %v10709
    %10711 = vmatprep.subr.mxu0 0.0
    %v10712 = vand.u32 %v10657, 4294901760
    %10713 = vmatpush1.msra.mxu0 %v10712
    %10714 = vmatprep.subr.mxu0 0.0
    %v10715 = vand.u32 %v10658, 4294901760
    %10716 = vmatpush1.msra.mxu0 %v10715
    %10717 = vmatprep.subr.mxu0 0.0
    %v10718 = vand.u32 %v10659, 4294901760
    %10719 = vmatpush1.msra.mxu0 %v10718
    %10720 = vmatprep.subr.mxu0 0.0
    %v10721 = vand.u32 %v10660, 4294901760
    %10722 = vmatpush1.msra.mxu0 %v10721
    %10723 = vmatprep.subr.mxu0 0.0
    %v10724 = vand.u32 %v10661, 4294901760
    %10725 = vmatpush1.msra.mxu0 %v10724
    %10726 = vmatprep.subr.mxu0 0.0
    %10727 = vmatpush1.msra.mxu0 0.0
    %10728 = vmatprep.subr.mxu0 0.0
    %10729 = vmatpush1.msra.mxu0 0.0
    %10730 = vmatprep.subr.mxu0 0.0
    %10731 = vmatpush1.msra.mxu0 0.0
    %10732 = vmatprep.subr.mxu0 0.0
    %10733 = vmatpush1.msra.mxu0 0.0
    %10734 = vmatprep.subr.mxu0 0.0
    %10735 = vmatpush1.msra.mxu0 0.0
    %10736 = vmatprep.subr.mxu0 0.0
    %10737 = vmatpush1.msra.mxu0 0.0
    %10738 = vmatprep.subr.mxu0 0.0
    %10739 = vmatpush1.msra.mxu0 0.0
    %10740 = vmatprep.subr.mxu0 0.0
    %10741 = vmatpush1.msra.mxu0 0.0
    %10742 = vmatprep.subr.mxu0 0.0
    %10743 = vmatpush1.msra.mxu0 0.0
    %10744 = vmatprep.subr.mxu0 0.0
    %10745 = vmatpush1.msra.mxu0 0.0
    %10746 = vmatprep.subr.mxu0 0.0
    %10747 = vmatpush1.msra.mxu0 0.0
    %10748 = vmatprep.subr.mxu0 0.0
    %10749 = vmatpush1.msra.mxu0 0.0
    %10750 = vmatprep.subr.mxu0 0.0
    %10751 = vmatpush1.msra.mxu0 0.0
    %10752 = vmatprep.subr.mxu0 0.0
    %10753 = vmatpush1.msra.mxu0 0.0
    %v10754 = vand.u32 %v10670, 4294901760
    %v10755 = vsub.f32 %v10670, %v10754
    %v10756 = vand.u32 %v10755, 4294901760
    %v10757 = vsub.f32 %v10755, %v10756
    %v10758 = vand.u32 %v10757, 4294901760
    %10759 = vmatprep.mubr.f32.mxu0 %v10758
    %v10760 = vand.u32 %v10642, 4294901760
    %v10761 = vsub.f32 %v10642, %v10760
    %v10762 = vand.u32 %v10761, 4294901760
    %v10763 = vsub.f32 %v10761, %v10762
    %v10764 = vand.u32 %v10763, 4294901760
    %10765 = vmatmul.mubr.f32.gmra.mrb[0].mxu0 %v10764
    %v10766 = vpop.f32.mrb[0].mxu0
    %v10767 = vadd.f32 %v10667, %v10766
    %v10768 = vpop.f32.mrb[0].mxu0
    %10769 = vdwg.mxu0
    %10770 = vmatprep.subr.mxu0 0.0
    %v10771 = vand.u32 %v10644, 4294901760
    %v10772 = vsub.f32 %v10644, %v10771
    %v10773 = vand.u32 %v10772, 4294901760
    %v10774 = vsub.f32 %v10772, %v10773
    %v10775 = vand.u32 %v10774, 4294901760
    %10776 = vmatpush1.msra.mxu0 %v10775
    %10777 = vmatprep.subr.mxu0 0.0
    %v10778 = vand.u32 %v10645, 4294901760
    %v10779 = vsub.f32 %v10645, %v10778
    %v10780 = vand.u32 %v10779, 4294901760
    %v10781 = vsub.f32 %v10779, %v10780
    %v10782 = vand.u32 %v10781, 4294901760
    %10783 = vmatpush1.msra.mxu0 %v10782
    %10784 = vmatprep.subr.mxu0 0.0
    %v10785 = vand.u32 %v10646, 4294901760
    %v10786 = vsub.f32 %v10646, %v10785
    %v10787 = vand.u32 %v10786, 4294901760
    %v10788 = vsub.f32 %v10786, %v10787
    %v10789 = vand.u32 %v10788, 4294901760
    %10790 = vmatpush1.msra.mxu0 %v10789
    %10791 = vmatprep.subr.mxu0 0.0
    %v10792 = vand.u32 %v10647, 4294901760
    %v10793 = vsub.f32 %v10647, %v10792
    %v10794 = vand.u32 %v10793, 4294901760
    %v10795 = vsub.f32 %v10793, %v10794
    %v10796 = vand.u32 %v10795, 4294901760
    %10797 = vmatpush1.msra.mxu0 %v10796
    %10798 = vmatprep.subr.mxu0 0.0
    %v10799 = vand.u32 %v10648, 4294901760
    %v10800 = vsub.f32 %v10648, %v10799
    %v10801 = vand.u32 %v10800, 4294901760
    %v10802 = vsub.f32 %v10800, %v10801
    %v10803 = vand.u32 %v10802, 4294901760
    %10804 = vmatpush1.msra.mxu0 %v10803
    %10805 = vmatprep.subr.mxu0 0.0
    %v10806 = vand.u32 %v10649, 4294901760
    %v10807 = vsub.f32 %v10649, %v10806
    %v10808 = vand.u32 %v10807, 4294901760
    %v10809 = vsub.f32 %v10807, %v10808
    %v10810 = vand.u32 %v10809, 4294901760
    %10811 = vmatpush1.msra.mxu0 %v10810
    %10812 = vmatprep.subr.mxu0 0.0
    %v10813 = vand.u32 %v10650, 4294901760
    %v10814 = vsub.f32 %v10650, %v10813
    %v10815 = vand.u32 %v10814, 4294901760
    %v10816 = vsub.f32 %v10814, %v10815
    %v10817 = vand.u32 %v10816, 4294901760
    %10818 = vmatpush1.msra.mxu0 %v10817
    %10819 = vmatprep.subr.mxu0 0.0
    %v10820 = vand.u32 %v10651, 4294901760
    %v10821 = vsub.f32 %v10651, %v10820
    %v10822 = vand.u32 %v10821, 4294901760
    %v10823 = vsub.f32 %v10821, %v10822
    %v10824 = vand.u32 %v10823, 4294901760
    %10825 = vmatpush1.msra.mxu0 %v10824
    %10826 = vmatprep.subr.mxu0 0.0
    %v10827 = vand.u32 %v10652, 4294901760
    %v10828 = vsub.f32 %v10652, %v10827
    %v10829 = vand.u32 %v10828, 4294901760
    %v10830 = vsub.f32 %v10828, %v10829
    %v10831 = vand.u32 %v10830, 4294901760
    %10832 = vmatpush1.msra.mxu0 %v10831
    %10833 = vmatprep.subr.mxu0 0.0
    %v10834 = vand.u32 %v10653, 4294901760
    %v10835 = vsub.f32 %v10653, %v10834
    %v10836 = vand.u32 %v10835, 4294901760
    %v10837 = vsub.f32 %v10835, %v10836
    %v10838 = vand.u32 %v10837, 4294901760
    %10839 = vmatpush1.msra.mxu0 %v10838
    %10840 = vmatprep.subr.mxu0 0.0
    %v10841 = vand.u32 %v10654, 4294901760
    %v10842 = vsub.f32 %v10654, %v10841
    %v10843 = vand.u32 %v10842, 4294901760
    %v10844 = vsub.f32 %v10842, %v10843
    %v10845 = vand.u32 %v10844, 4294901760
    %10846 = vmatpush1.msra.mxu0 %v10845
    %10847 = vmatprep.subr.mxu0 0.0
    %v10848 = vand.u32 %v10655, 4294901760
    %v10849 = vsub.f32 %v10655, %v10848
    %v10850 = vand.u32 %v10849, 4294901760
    %v10851 = vsub.f32 %v10849, %v10850
    %v10852 = vand.u32 %v10851, 4294901760
    %10853 = vmatpush1.msra.mxu0 %v10852
    %10854 = vmatprep.subr.mxu0 0.0
    %v10855 = vand.u32 %v10656, 4294901760
    %v10856 = vsub.f32 %v10656, %v10855
    %v10857 = vand.u32 %v10856, 4294901760
    %v10858 = vsub.f32 %v10856, %v10857
    %v10859 = vand.u32 %v10858, 4294901760
    %10860 = vmatpush1.msra.mxu0 %v10859
    %10861 = vmatprep.subr.mxu0 0.0
    %v10862 = vand.u32 %v10657, 4294901760
    %v10863 = vsub.f32 %v10657, %v10862
    %v10864 = vand.u32 %v10863, 4294901760
    %v10865 = vsub.f32 %v10863, %v10864
    %v10866 = vand.u32 %v10865, 4294901760
    %10867 = vmatpush1.msra.mxu0 %v10866
    %10868 = vmatprep.subr.mxu0 0.0
    %v10869 = vand.u32 %v10658, 4294901760
    %v10870 = vsub.f32 %v10658, %v10869
    %v10871 = vand.u32 %v10870, 4294901760
    %v10872 = vsub.f32 %v10870, %v10871
    %v10873 = vand.u32 %v10872, 4294901760
    %10874 = vmatpush1.msra.mxu0 %v10873
    %10875 = vmatprep.subr.mxu0 0.0
    %v10876 = vand.u32 %v10659, 4294901760
    %v10877 = vsub.f32 %v10659, %v10876
    %v10878 = vand.u32 %v10877, 4294901760
    %v10879 = vsub.f32 %v10877, %v10878
    %v10880 = vand.u32 %v10879, 4294901760
    %10881 = vmatpush1.msra.mxu0 %v10880
    %10882 = vmatprep.subr.mxu0 0.0
    %v10883 = vand.u32 %v10660, 4294901760
    %v10884 = vsub.f32 %v10660, %v10883
    %v10885 = vand.u32 %v10884, 4294901760
    %v10886 = vsub.f32 %v10884, %v10885
    %v10887 = vand.u32 %v10886, 4294901760
    %10888 = vmatpush1.msra.mxu0 %v10887
    %10889 = vmatprep.subr.mxu0 0.0
    %v10890 = vand.u32 %v10661, 4294901760
    %v10891 = vsub.f32 %v10661, %v10890
    %v10892 = vand.u32 %v10891, 4294901760
    %v10893 = vsub.f32 %v10891, %v10892
    %v10894 = vand.u32 %v10893, 4294901760
    %10895 = vmatpush1.msra.mxu0 %v10894
    %10896 = vmatprep.subr.mxu0 0.0
    %10897 = vmatpush1.msra.mxu0 0.0
    %10898 = vmatprep.subr.mxu0 0.0
    %10899 = vmatpush1.msra.mxu0 0.0
    %10900 = vmatprep.subr.mxu0 0.0
    %10901 = vmatpush1.msra.mxu0 0.0
    %10902 = vmatprep.subr.mxu0 0.0
    %10903 = vmatpush1.msra.mxu0 0.0
    %10904 = vmatprep.subr.mxu0 0.0
    %10905 = vmatpush1.msra.mxu0 0.0
    %10906 = vmatprep.subr.mxu0 0.0
    %10907 = vmatpush1.msra.mxu0 0.0
    %10908 = vmatprep.subr.mxu0 0.0
    %10909 = vmatpush1.msra.mxu0 0.0
    %10910 = vmatprep.subr.mxu0 0.0
    %10911 = vmatpush1.msra.mxu0 0.0
    %10912 = vmatprep.subr.mxu0 0.0
    %10913 = vmatpush1.msra.mxu0 0.0
    %10914 = vmatprep.subr.mxu0 0.0
    %10915 = vmatpush1.msra.mxu0 0.0
    %10916 = vmatprep.subr.mxu0 0.0
    %10917 = vmatpush1.msra.mxu0 0.0
    %10918 = vmatprep.subr.mxu0 0.0
    %10919 = vmatpush1.msra.mxu0 0.0
    %10920 = vmatprep.subr.mxu0 0.0
    %10921 = vmatpush1.msra.mxu0 0.0
    %10922 = vmatprep.subr.mxu0 0.0
    %10923 = vmatpush1.msra.mxu0 0.0
    %v10924 = vand.u32 %v10670, 4294901760
    %10925 = vmatprep.mubr.f32.mxu0 %v10924
    %v10926 = vand.u32 %v10642, 4294901760
    %10927 = vmatmul.mubr.f32.gmra.mrb[0].mxu0 %v10926
    %v10928 = vpop.f32.mrb[0].mxu0
    %v10929 = vadd.f32 %v10767, %v10928
    %v10930 = vpop.f32.mrb[0].mxu0
    %10931 = vdwg.mxu0
    %10932 = vmatprep.subr.mxu0 0.0
    %v10933 = vand.u32 %v10644, 4294901760
    %v10934 = vsub.f32 %v10644, %v10933
    %10935 = vmatpush1.msra.mxu0 %v10934
    %10936 = vmatprep.subr.mxu0 0.0
    %v10937 = vand.u32 %v10645, 4294901760
    %v10938 = vsub.f32 %v10645, %v10937
    %10939 = vmatpush1.msra.mxu0 %v10938
    %10940 = vmatprep.subr.mxu0 0.0
    %v10941 = vand.u32 %v10646, 4294901760
    %v10942 = vsub.f32 %v10646, %v10941
    %10943 = vmatpush1.msra.mxu0 %v10942
    %10944 = vmatprep.subr.mxu0 0.0
    %v10945 = vand.u32 %v10647, 4294901760
    %v10946 = vsub.f32 %v10647, %v10945
    %10947 = vmatpush1.msra.mxu0 %v10946
    %10948 = vmatprep.subr.mxu0 0.0
    %v10949 = vand.u32 %v10648, 4294901760
    %v10950 = vsub.f32 %v10648, %v10949
    %10951 = vmatpush1.msra.mxu0 %v10950
    %10952 = vmatprep.subr.mxu0 0.0
    %v10953 = vand.u32 %v10649, 4294901760
    %v10954 = vsub.f32 %v10649, %v10953
    %10955 = vmatpush1.msra.mxu0 %v10954
    %10956 = vmatprep.subr.mxu0 0.0
    %v10957 = vand.u32 %v10650, 4294901760
    %v10958 = vsub.f32 %v10650, %v10957
    %10959 = vmatpush1.msra.mxu0 %v10958
    %10960 = vmatprep.subr.mxu0 0.0
    %v10961 = vand.u32 %v10651, 4294901760
    %v10962 = vsub.f32 %v10651, %v10961
    %10963 = vmatpush1.msra.mxu0 %v10962
    %10964 = vmatprep.subr.mxu0 0.0
    %v10965 = vand.u32 %v10652, 4294901760
    %v10966 = vsub.f32 %v10652, %v10965
    %10967 = vmatpush1.msra.mxu0 %v10966
    %10968 = vmatprep.subr.mxu0 0.0
    %v10969 = vand.u32 %v10653, 4294901760
    %v10970 = vsub.f32 %v10653, %v10969
    %10971 = vmatpush1.msra.mxu0 %v10970
    %10972 = vmatprep.subr.mxu0 0.0
    %v10973 = vand.u32 %v10654, 4294901760
    %v10974 = vsub.f32 %v10654, %v10973
    %10975 = vmatpush1.msra.mxu0 %v10974
    %10976 = vmatprep.subr.mxu0 0.0
    %v10977 = vand.u32 %v10655, 4294901760
    %v10978 = vsub.f32 %v10655, %v10977
    %10979 = vmatpush1.msra.mxu0 %v10978
    %10980 = vmatprep.subr.mxu0 0.0
    %v10981 = vand.u32 %v10656, 4294901760
    %v10982 = vsub.f32 %v10656, %v10981
    %10983 = vmatpush1.msra.mxu0 %v10982
    %10984 = vmatprep.subr.mxu0 0.0
    %v10985 = vand.u32 %v10657, 4294901760
    %v10986 = vsub.f32 %v10657, %v10985
    %10987 = vmatpush1.msra.mxu0 %v10986
    %10988 = vmatprep.subr.mxu0 0.0
    %v10989 = vand.u32 %v10658, 4294901760
    %v10990 = vsub.f32 %v10658, %v10989
    %10991 = vmatpush1.msra.mxu0 %v10990
    %10992 = vmatprep.subr.mxu0 0.0
    %v10993 = vand.u32 %v10659, 4294901760
    %v10994 = vsub.f32 %v10659, %v10993
    %10995 = vmatpush1.msra.mxu0 %v10994
    %10996 = vmatprep.subr.mxu0 0.0
    %v10997 = vand.u32 %v10660, 4294901760
    %v10998 = vsub.f32 %v10660, %v10997
    %10999 = vmatpush1.msra.mxu0 %v10998
    %11000 = vmatprep.subr.mxu0 0.0
    %v11001 = vand.u32 %v10661, 4294901760
    %v11002 = vsub.f32 %v10661, %v11001
    %11003 = vmatpush1.msra.mxu0 %v11002
    %11004 = vmatprep.subr.mxu0 0.0
    %11005 = vmatpush1.msra.mxu0 0.0
    %11006 = vmatprep.subr.mxu0 0.0
    %11007 = vmatpush1.msra.mxu0 0.0
    %11008 = vmatprep.subr.mxu0 0.0
    %11009 = vmatpush1.msra.mxu0 0.0
    %11010 = vmatprep.subr.mxu0 0.0
    %11011 = vmatpush1.msra.mxu0 0.0
    %11012 = vmatprep.subr.mxu0 0.0
    %11013 = vmatpush1.msra.mxu0 0.0
    %11014 = vmatprep.subr.mxu0 0.0
    %11015 = vmatpush1.msra.mxu0 0.0
    %11016 = vmatprep.subr.mxu0 0.0
    %11017 = vmatpush1.msra.mxu0 0.0
    %11018 = vmatprep.subr.mxu0 0.0
    %11019 = vmatpush1.msra.mxu0 0.0
    %11020 = vmatprep.subr.mxu0 0.0
    %11021 = vmatpush1.msra.mxu0 0.0
    %11022 = vmatprep.subr.mxu0 0.0
    %11023 = vmatpush1.msra.mxu0 0.0
    %11024 = vmatprep.subr.mxu0 0.0
    %11025 = vmatpush1.msra.mxu0 0.0
    %11026 = vmatprep.subr.mxu0 0.0
    %11027 = vmatpush1.msra.mxu0 0.0
    %11028 = vmatprep.subr.mxu0 0.0
    %11029 = vmatpush1.msra.mxu0 0.0
    %11030 = vmatprep.subr.mxu0 0.0
    %11031 = vmatpush1.msra.mxu0 0.0
    %v11032 = vand.u32 %v10670, 4294901760
    %v11033 = vsub.f32 %v10670, %v11032
    %11034 = vmatprep.mubr.f32.mxu0 %v11033
    %v11035 = vand.u32 %v10642, 4294901760
    %v11036 = vsub.f32 %v10642, %v11035
    %11037 = vmatmul.mubr.f32.gmra.mrb[0].mxu0 %v11036
    %v11038 = vpop.f32.mrb[0].mxu0
    %v11039 = vadd.f32 %v10929, %v11038
    %v11040 = vpop.f32.mrb[0].mxu0
    %11041 = vdwg.mxu0
    %11042 = vmatprep.subr.mxu0 0.0
    %v11043 = vand.u32 %v10644, 4294901760
    %11044 = vmatpush1.msra.mxu0 %v11043
    %11045 = vmatprep.subr.mxu0 0.0
    %v11046 = vand.u32 %v10645, 4294901760
    %11047 = vmatpush1.msra.mxu0 %v11046
    %11048 = vmatprep.subr.mxu0 0.0
    %v11049 = vand.u32 %v10646, 4294901760
    %11050 = vmatpush1.msra.mxu0 %v11049
    %11051 = vmatprep.subr.mxu0 0.0
    %v11052 = vand.u32 %v10647, 4294901760
    %11053 = vmatpush1.msra.mxu0 %v11052
    %11054 = vmatprep.subr.mxu0 0.0
    %v11055 = vand.u32 %v10648, 4294901760
    %11056 = vmatpush1.msra.mxu0 %v11055
    %11057 = vmatprep.subr.mxu0 0.0
    %v11058 = vand.u32 %v10649, 4294901760
    %11059 = vmatpush1.msra.mxu0 %v11058
    %11060 = vmatprep.subr.mxu0 0.0
    %v11061 = vand.u32 %v10650, 4294901760
    %11062 = vmatpush1.msra.mxu0 %v11061
    %11063 = vmatprep.subr.mxu0 0.0
    %v11064 = vand.u32 %v10651, 4294901760
    %11065 = vmatpush1.msra.mxu0 %v11064
    %11066 = vmatprep.subr.mxu0 0.0
    %v11067 = vand.u32 %v10652, 4294901760
    %11068 = vmatpush1.msra.mxu0 %v11067
    %11069 = vmatprep.subr.mxu0 0.0
    %v11070 = vand.u32 %v10653, 4294901760
    %11071 = vmatpush1.msra.mxu0 %v11070
    %11072 = vmatprep.subr.mxu0 0.0
    %v11073 = vand.u32 %v10654, 4294901760
    %11074 = vmatpush1.msra.mxu0 %v11073
    %11075 = vmatprep.subr.mxu0 0.0
    %v11076 = vand.u32 %v10655, 4294901760
    %11077 = vmatpush1.msra.mxu0 %v11076
    %11078 = vmatprep.subr.mxu0 0.0
    %v11079 = vand.u32 %v10656, 4294901760
    %11080 = vmatpush1.msra.mxu0 %v11079
    %11081 = vmatprep.subr.mxu0 0.0
    %v11082 = vand.u32 %v10657, 4294901760
    %11083 = vmatpush1.msra.mxu0 %v11082
    %11084 = vmatprep.subr.mxu0 0.0
    %v11085 = vand.u32 %v10658, 4294901760
    %11086 = vmatpush1.msra.mxu0 %v11085
    %11087 = vmatprep.subr.mxu0 0.0
    %v11088 = vand.u32 %v10659, 4294901760
    %11089 = vmatpush1.msra.mxu0 %v11088
    %11090 = vmatprep.subr.mxu0 0.0
    %v11091 = vand.u32 %v10660, 4294901760
    %11092 = vmatpush1.msra.mxu0 %v11091
    %11093 = vmatprep.subr.mxu0 0.0
    %v11094 = vand.u32 %v10661, 4294901760
    %11095 = vmatpush1.msra.mxu0 %v11094
    %11096 = vmatprep.subr.mxu0 0.0
    %11097 = vmatpush1.msra.mxu0 0.0
    %11098 = vmatprep.subr.mxu0 0.0
    %11099 = vmatpush1.msra.mxu0 0.0
    %11100 = vmatprep.subr.mxu0 0.0
    %11101 = vmatpush1.msra.mxu0 0.0
    %11102 = vmatprep.subr.mxu0 0.0
    %11103 = vmatpush1.msra.mxu0 0.0
    %11104 = vmatprep.subr.mxu0 0.0
    %11105 = vmatpush1.msra.mxu0 0.0
    %11106 = vmatprep.subr.mxu0 0.0
    %11107 = vmatpush1.msra.mxu0 0.0
    %11108 = vmatprep.subr.mxu0 0.0
    %11109 = vmatpush1.msra.mxu0 0.0
    %11110 = vmatprep.subr.mxu0 0.0
    %11111 = vmatpush1.msra.mxu0 0.0
    %11112 = vmatprep.subr.mxu0 0.0
    %11113 = vmatpush1.msra.mxu0 0.0
    %11114 = vmatprep.subr.mxu0 0.0
    %11115 = vmatpush1.msra.mxu0 0.0
    %11116 = vmatprep.subr.mxu0 0.0
    %11117 = vmatpush1.msra.mxu0 0.0
    %11118 = vmatprep.subr.mxu0 0.0
    %11119 = vmatpush1.msra.mxu0 0.0
    %11120 = vmatprep.subr.mxu0 0.0
    %11121 = vmatpush1.msra.mxu0 0.0
    %11122 = vmatprep.subr.mxu0 0.0
    %11123 = vmatpush1.msra.mxu0 0.0
    %v11124 = vand.u32 %v10670, 4294901760
    %v11125 = vsub.f32 %v10670, %v11124
    %v11126 = vand.u32 %v11125, 4294901760
    %11127 = vmatprep.mubr.f32.mxu0 %v11126
    %v11128 = vand.u32 %v10642, 4294901760
    %v11129 = vsub.f32 %v10642, %v11128
    %v11130 = vand.u32 %v11129, 4294901760
    %11131 = vmatmul.mubr.f32.gmra.mrb[0].mxu0 %v11130
    %v11132 = vpop.f32.mrb[0].mxu0
    %v11133 = vadd.f32 %v11039, %v11132
    %v11134 = vpop.f32.mrb[0].mxu0
    %11135 = vdwg.mxu0
    %11136 = vmatprep.subr.mxu0 0.0
    %v11137 = vand.u32 %v10644, 4294901760
    %v11138 = vsub.f32 %v10644, %v11137
    %v11139 = vand.u32 %v11138, 4294901760
    %11140 = vmatpush1.msra.mxu0 %v11139
    %11141 = vmatprep.subr.mxu0 0.0
    %v11142 = vand.u32 %v10645, 4294901760
    %v11143 = vsub.f32 %v10645, %v11142
    %v11144 = vand.u32 %v11143, 4294901760
    %11145 = vmatpush1.msra.mxu0 %v11144
    %11146 = vmatprep.subr.mxu0 0.0
    %v11147 = vand.u32 %v10646, 4294901760
    %v11148 = vsub.f32 %v10646, %v11147
    %v11149 = vand.u32 %v11148, 4294901760
    %11150 = vmatpush1.msra.mxu0 %v11149
    %11151 = vmatprep.subr.mxu0 0.0
    %v11152 = vand.u32 %v10647, 4294901760
    %v11153 = vsub.f32 %v10647, %v11152
    %v11154 = vand.u32 %v11153, 4294901760
    %11155 = vmatpush1.msra.mxu0 %v11154
    %11156 = vmatprep.subr.mxu0 0.0
    %v11157 = vand.u32 %v10648, 4294901760
    %v11158 = vsub.f32 %v10648, %v11157
    %v11159 = vand.u32 %v11158, 4294901760
    %11160 = vmatpush1.msra.mxu0 %v11159
    %11161 = vmatprep.subr.mxu0 0.0
    %v11162 = vand.u32 %v10649, 4294901760
    %v11163 = vsub.f32 %v10649, %v11162
    %v11164 = vand.u32 %v11163, 4294901760
    %11165 = vmatpush1.msra.mxu0 %v11164
    %11166 = vmatprep.subr.mxu0 0.0
    %v11167 = vand.u32 %v10650, 4294901760
    %v11168 = vsub.f32 %v10650, %v11167
    %v11169 = vand.u32 %v11168, 4294901760
    %11170 = vmatpush1.msra.mxu0 %v11169
    %11171 = vmatprep.subr.mxu0 0.0
    %v11172 = vand.u32 %v10651, 4294901760
    %v11173 = vsub.f32 %v10651, %v11172
    %v11174 = vand.u32 %v11173, 4294901760
    %11175 = vmatpush1.msra.mxu0 %v11174
    %11176 = vmatprep.subr.mxu0 0.0
    %v11177 = vand.u32 %v10652, 4294901760
    %v11178 = vsub.f32 %v10652, %v11177
    %v11179 = vand.u32 %v11178, 4294901760
    %11180 = vmatpush1.msra.mxu0 %v11179
    %11181 = vmatprep.subr.mxu0 0.0
    %v11182 = vand.u32 %v10653, 4294901760
    %v11183 = vsub.f32 %v10653, %v11182
    %v11184 = vand.u32 %v11183, 4294901760
    %11185 = vmatpush1.msra.mxu0 %v11184
    %11186 = vmatprep.subr.mxu0 0.0
    %v11187 = vand.u32 %v10654, 4294901760
    %v11188 = vsub.f32 %v10654, %v11187
    %v11189 = vand.u32 %v11188, 4294901760
    %11190 = vmatpush1.msra.mxu0 %v11189
    %11191 = vmatprep.subr.mxu0 0.0
    %v11192 = vand.u32 %v10655, 4294901760
    %v11193 = vsub.f32 %v10655, %v11192
    %v11194 = vand.u32 %v11193, 4294901760
    %11195 = vmatpush1.msra.mxu0 %v11194
    %11196 = vmatprep.subr.mxu0 0.0
    %v11197 = vand.u32 %v10656, 4294901760
    %v11198 = vsub.f32 %v10656, %v11197
    %v11199 = vand.u32 %v11198, 4294901760
    %11200 = vmatpush1.msra.mxu0 %v11199
    %11201 = vmatprep.subr.mxu0 0.0
    %v11202 = vand.u32 %v10657, 4294901760
    %v11203 = vsub.f32 %v10657, %v11202
    %v11204 = vand.u32 %v11203, 4294901760
    %11205 = vmatpush1.msra.mxu0 %v11204
    %11206 = vmatprep.subr.mxu0 0.0
    %v11207 = vand.u32 %v10658, 4294901760
    %v11208 = vsub.f32 %v10658, %v11207
    %v11209 = vand.u32 %v11208, 4294901760
    %11210 = vmatpush1.msra.mxu0 %v11209
    %11211 = vmatprep.subr.mxu0 0.0
    %v11212 = vand.u32 %v10659, 4294901760
    %v11213 = vsub.f32 %v10659, %v11212
    %v11214 = vand.u32 %v11213, 4294901760
    %11215 = vmatpush1.msra.mxu0 %v11214
    %11216 = vmatprep.subr.mxu0 0.0
    %v11217 = vand.u32 %v10660, 4294901760
    %v11218 = vsub.f32 %v10660, %v11217
    %v11219 = vand.u32 %v11218, 4294901760
    %11220 = vmatpush1.msra.mxu0 %v11219
    %11221 = vmatprep.subr.mxu0 0.0
    %v11222 = vand.u32 %v10661, 4294901760
    %v11223 = vsub.f32 %v10661, %v11222
    %v11224 = vand.u32 %v11223, 4294901760
    %11225 = vmatpush1.msra.mxu0 %v11224
    %11226 = vmatprep.subr.mxu0 0.0
    %11227 = vmatpush1.msra.mxu0 0.0
    %11228 = vmatprep.subr.mxu0 0.0
    %11229 = vmatpush1.msra.mxu0 0.0
    %11230 = vmatprep.subr.mxu0 0.0
    %11231 = vmatpush1.msra.mxu0 0.0
    %11232 = vmatprep.subr.mxu0 0.0
    %11233 = vmatpush1.msra.mxu0 0.0
    %11234 = vmatprep.subr.mxu0 0.0
    %11235 = vmatpush1.msra.mxu0 0.0
    %11236 = vmatprep.subr.mxu0 0.0
    %11237 = vmatpush1.msra.mxu0 0.0
    %11238 = vmatprep.subr.mxu0 0.0
    %11239 = vmatpush1.msra.mxu0 0.0
    %11240 = vmatprep.subr.mxu0 0.0
    %11241 = vmatpush1.msra.mxu0 0.0
    %11242 = vmatprep.subr.mxu0 0.0
    %11243 = vmatpush1.msra.mxu0 0.0
    %11244 = vmatprep.subr.mxu0 0.0
    %11245 = vmatpush1.msra.mxu0 0.0
    %11246 = vmatprep.subr.mxu0 0.0
    %11247 = vmatpush1.msra.mxu0 0.0
    %11248 = vmatprep.subr.mxu0 0.0
    %11249 = vmatpush1.msra.mxu0 0.0
    %11250 = vmatprep.subr.mxu0 0.0
    %11251 = vmatpush1.msra.mxu0 0.0
    %11252 = vmatprep.subr.mxu0 0.0
    %11253 = vmatpush1.msra.mxu0 0.0
    %v11254 = vand.u32 %v10670, 4294901760
    %11255 = vmatprep.mubr.f32.mxu0 %v11254
    %v11256 = vand.u32 %v10642, 4294901760
    %11257 = vmatmul.mubr.f32.gmra.mrb[0].mxu0 %v11256
    %v11258 = vpop.f32.mrb[0].mxu0
    %v11259 = vadd.f32 %v11133, %v11258
    %v11260 = vpop.f32.mrb[0].mxu0
    %11261 = vdwg.mxu0
    %11262 = vmatprep.subr.mxu0 0.0
    %v11263 = vand.u32 %v10644, 4294901760
    %11264 = vmatpush1.msra.mxu0 %v11263
    %11265 = vmatprep.subr.mxu0 0.0
    %v11266 = vand.u32 %v10645, 4294901760
    %11267 = vmatpush1.msra.mxu0 %v11266
    %11268 = vmatprep.subr.mxu0 0.0
    %v11269 = vand.u32 %v10646, 4294901760
    %11270 = vmatpush1.msra.mxu0 %v11269
    %11271 = vmatprep.subr.mxu0 0.0
    %v11272 = vand.u32 %v10647, 4294901760
    %11273 = vmatpush1.msra.mxu0 %v11272
    %11274 = vmatprep.subr.mxu0 0.0
    %v11275 = vand.u32 %v10648, 4294901760
    %11276 = vmatpush1.msra.mxu0 %v11275
    %11277 = vmatprep.subr.mxu0 0.0
    %v11278 = vand.u32 %v10649, 4294901760
    %11279 = vmatpush1.msra.mxu0 %v11278
    %11280 = vmatprep.subr.mxu0 0.0
    %v11281 = vand.u32 %v10650, 4294901760
    %11282 = vmatpush1.msra.mxu0 %v11281
    %11283 = vmatprep.subr.mxu0 0.0
    %v11284 = vand.u32 %v10651, 4294901760
    %11285 = vmatpush1.msra.mxu0 %v11284
    %11286 = vmatprep.subr.mxu0 0.0
    %v11287 = vand.u32 %v10652, 4294901760
    %11288 = vmatpush1.msra.mxu0 %v11287
    %11289 = vmatprep.subr.mxu0 0.0
    %v11290 = vand.u32 %v10653, 4294901760
    %11291 = vmatpush1.msra.mxu0 %v11290
    %11292 = vmatprep.subr.mxu0 0.0
    %v11293 = vand.u32 %v10654, 4294901760
    %11294 = vmatpush1.msra.mxu0 %v11293
    %11295 = vmatprep.subr.mxu0 0.0
    %v11296 = vand.u32 %v10655, 4294901760
    %11297 = vmatpush1.msra.mxu0 %v11296
    %11298 = vmatprep.subr.mxu0 0.0
    %v11299 = vand.u32 %v10656, 4294901760
    %11300 = vmatpush1.msra.mxu0 %v11299
    %11301 = vmatprep.subr.mxu0 0.0
    %v11302 = vand.u32 %v10657, 4294901760
    %11303 = vmatpush1.msra.mxu0 %v11302
    %11304 = vmatprep.subr.mxu0 0.0
    %v11305 = vand.u32 %v10658, 4294901760
    %11306 = vmatpush1.msra.mxu0 %v11305
    %11307 = vmatprep.subr.mxu0 0.0
    %v11308 = vand.u32 %v10659, 4294901760
    %11309 = vmatpush1.msra.mxu0 %v11308
    %11310 = vmatprep.subr.mxu0 0.0
    %v11311 = vand.u32 %v10660, 4294901760
    %11312 = vmatpush1.msra.mxu0 %v11311
    %11313 = vmatprep.subr.mxu0 0.0
    %v11314 = vand.u32 %v10661, 4294901760
    %11315 = vmatpush1.msra.mxu0 %v11314
    %11316 = vmatprep.subr.mxu0 0.0
    %11317 = vmatpush1.msra.mxu0 0.0
    %11318 = vmatprep.subr.mxu0 0.0
    %11319 = vmatpush1.msra.mxu0 0.0
    %11320 = vmatprep.subr.mxu0 0.0
    %11321 = vmatpush1.msra.mxu0 0.0
    %11322 = vmatprep.subr.mxu0 0.0
    %11323 = vmatpush1.msra.mxu0 0.0
    %11324 = vmatprep.subr.mxu0 0.0
    %11325 = vmatpush1.msra.mxu0 0.0
    %11326 = vmatprep.subr.mxu0 0.0
    %11327 = vmatpush1.msra.mxu0 0.0
    %11328 = vmatprep.subr.mxu0 0.0
    %11329 = vmatpush1.msra.mxu0 0.0
    %11330 = vmatprep.subr.mxu0 0.0
    %11331 = vmatpush1.msra.mxu0 0.0
    %11332 = vmatprep.subr.mxu0 0.0
    %11333 = vmatpush1.msra.mxu0 0.0
    %11334 = vmatprep.subr.mxu0 0.0
    %11335 = vmatpush1.msra.mxu0 0.0
    %11336 = vmatprep.subr.mxu0 0.0
    %11337 = vmatpush1.msra.mxu0 0.0
    %11338 = vmatprep.subr.mxu0 0.0
    %11339 = vmatpush1.msra.mxu0 0.0
    %11340 = vmatprep.subr.mxu0 0.0
    %11341 = vmatpush1.msra.mxu0 0.0
    %11342 = vmatprep.subr.mxu0 0.0
    %11343 = vmatpush1.msra.mxu0 0.0
    %v11344 = vand.u32 %v10670, 4294901760
    %11345 = vmatprep.mubr.f32.mxu0 %v11344
    %v11346 = vand.u32 %v10642, 4294901760
    %11347 = vmatmul.mubr.f32.gmra.mrb[0].mxu0 %v11346
    %v11348 = vpop.f32.mrb[0].mxu0
    %v11349 = vadd.f32 %v11259, %v11348
    %v11350 = vpop.f32.mrb[0].mxu0
    %11351 = vdwg.mxu0
    %v11352 = vtanh.pop %v11349
    %v11353 = vld [vmem:[%s11] sm:$0xff]
    %v11354 = vld [vmem:[%s11 + $0x8] sm:$0xff]
    %v11355 = vld [vmem:[%s11 + $0x10] sm:$0xff]
    %v11356 = vld [vmem:[%s11 + $0x18] sm:$0xff]
    %v11357 = vld [vmem:[%s12] sm:$0x1]
    %v11359 = vlaneseq
    %v11360 = vshrl.u32 %v11359, 7
    %v11361 = vsub.s32 0, %v11360
    %v11362 = vrot.slane %v11357, %v11361
    %vm11364 = vcmask 261120
    %v11366 = vsel %vm11364, %v11352, 0
    %11368 = vmatprep.subr.mxu0 0.0
    %v11369 = vand.u32 %v11353, 4294901760
    %11370 = vmatpush1.msra.mxu0 %v11369
    %11371 = vmatprep.subr.mxu0 0.0
    %v11372 = vand.u32 %v11354, 4294901760
    %11373 = vmatpush1.msra.mxu0 %v11372
    %11374 = vmatprep.subr.mxu0 0.0
    %v11375 = vand.u32 %v11355, 4294901760
    %11376 = vmatpush1.msra.mxu0 %v11375
    %11377 = vmatprep.subr.mxu0 0.0
    %v11378 = vand.u32 %v11356, 4294901760
    %11379 = vmatpush1.msra.mxu0 %v11378
    %11380 = vmatprep.subr.mxu0 0.0
    %11381 = vmatpush1.msra.mxu0 0.0
    %11382 = vmatprep.subr.mxu0 0.0
    %11383 = vmatpush1.msra.mxu0 0.0
    %11384 = vmatprep.subr.mxu0 0.0
    %11385 = vmatpush1.msra.mxu0 0.0
    %11386 = vmatprep.subr.mxu0 0.0
    %11387 = vmatpush1.msra.mxu0 0.0
    %11388 = vmatprep.subr.mxu0 0.0
    %11389 = vmatpush1.msra.mxu0 0.0
    %11390 = vmatprep.subr.mxu0 0.0
    %11391 = vmatpush1.msra.mxu0 0.0
    %11392 = vmatprep.subr.mxu0 0.0
    %11393 = vmatpush1.msra.mxu0 0.0
    %11394 = vmatprep.subr.mxu0 0.0
    %11395 = vmatpush1.msra.mxu0 0.0
    %11396 = vmatprep.subr.mxu0 0.0
    %11397 = vmatpush1.msra.mxu0 0.0
    %11398 = vmatprep.subr.mxu0 0.0
    %11399 = vmatpush1.msra.mxu0 0.0
    %11400 = vmatprep.subr.mxu0 0.0
    %11401 = vmatpush1.msra.mxu0 0.0
    %11402 = vmatprep.subr.mxu0 0.0
    %11403 = vmatpush1.msra.mxu0 0.0
    %11404 = vmatprep.subr.mxu0 0.0
    %11405 = vmatpush1.msra.mxu0 0.0
    %11406 = vmatprep.subr.mxu0 0.0
    %11407 = vmatpush1.msra.mxu0 0.0
    %11408 = vmatprep.subr.mxu0 0.0
    %11409 = vmatpush1.msra.mxu0 0.0
    %11410 = vmatprep.subr.mxu0 0.0
    %11411 = vmatpush1.msra.mxu0 0.0
    %11412 = vmatprep.subr.mxu0 0.0
    %11413 = vmatpush1.msra.mxu0 0.0
    %11414 = vmatprep.subr.mxu0 0.0
    %11415 = vmatpush1.msra.mxu0 0.0
    %11416 = vmatprep.subr.mxu0 0.0
    %11417 = vmatpush1.msra.mxu0 0.0
    %11418 = vmatprep.subr.mxu0 0.0
    %11419 = vmatpush1.msra.mxu0 0.0
    %11420 = vmatprep.subr.mxu0 0.0
    %11421 = vmatpush1.msra.mxu0 0.0
    %11422 = vmatprep.subr.mxu0 0.0
    %11423 = vmatpush1.msra.mxu0 0.0
    %11424 = vmatprep.subr.mxu0 0.0
    %11425 = vmatpush1.msra.mxu0 0.0
    %11426 = vmatprep.subr.mxu0 0.0
    %11427 = vmatpush1.msra.mxu0 0.0
    %11428 = vmatprep.subr.mxu0 0.0
    %11429 = vmatpush1.msra.mxu0 0.0
    %11430 = vmatprep.subr.mxu0 0.0
    %11431 = vmatpush1.msra.mxu0 0.0
    %11432 = vmatprep.subr.mxu0 0.0
    %11433 = vmatpush1.msra.mxu0 0.0
    %11434 = vmatprep.subr.mxu0 0.0
    %11435 = vmatpush1.msra.mxu0 0.0
    %11436 = vmatprep.mubr.f32.mxu0 0.0
    %v11437 = vand.u32 %v11366, 4294901760
    %v11438 = vsub.f32 %v11366, %v11437
    %v11439 = vand.u32 %v11438, 4294901760
    %v11440 = vsub.f32 %v11438, %v11439
    %v11441 = vand.u32 %v11440, 4294901760
    %11442 = vmatmul.mubr.f32.gmra.mrb[0].mxu0 %v11441
    %v11443 = vpop.f32.mrb[0].mxu0
    %v11444 = vadd.f32 %v11362, %v11443
    %v11445 = vpop.f32.mrb[0].mxu0
    %11446 = vdwg.mxu0
    %11447 = vmatprep.subr.mxu0 0.0
    %v11448 = vand.u32 %v11353, 4294901760
    %v11449 = vsub.f32 %v11353, %v11448
    %v11450 = vand.u32 %v11449, 4294901760
    %v11451 = vsub.f32 %v11449, %v11450
    %v11452 = vand.u32 %v11451, 4294901760
    %11453 = vmatpush1.msra.mxu0 %v11452
    %11454 = vmatprep.subr.mxu0 0.0
    %v11455 = vand.u32 %v11354, 4294901760
    %v11456 = vsub.f32 %v11354, %v11455
    %v11457 = vand.u32 %v11456, 4294901760
    %v11458 = vsub.f32 %v11456, %v11457
    %v11459 = vand.u32 %v11458, 4294901760
    %11460 = vmatpush1.msra.mxu0 %v11459
    %11461 = vmatprep.subr.mxu0 0.0
    %v11462 = vand.u32 %v11355, 4294901760
    %v11463 = vsub.f32 %v11355, %v11462
    %v11464 = vand.u32 %v11463, 4294901760
    %v11465 = vsub.f32 %v11463, %v11464
    %v11466 = vand.u32 %v11465, 4294901760
    %11467 = vmatpush1.msra.mxu0 %v11466
    %11468 = vmatprep.subr.mxu0 0.0
    %v11469 = vand.u32 %v11356, 4294901760
    %v11470 = vsub.f32 %v11356, %v11469
    %v11471 = vand.u32 %v11470, 4294901760
    %v11472 = vsub.f32 %v11470, %v11471
    %v11473 = vand.u32 %v11472, 4294901760
    %11474 = vmatpush1.msra.mxu0 %v11473
    %11475 = vmatprep.subr.mxu0 0.0
    %11476 = vmatpush1.msra.mxu0 0.0
    %11477 = vmatprep.subr.mxu0 0.0
    %11478 = vmatpush1.msra.mxu0 0.0
    %11479 = vmatprep.subr.mxu0 0.0
    %11480 = vmatpush1.msra.mxu0 0.0
    %11481 = vmatprep.subr.mxu0 0.0
    %11482 = vmatpush1.msra.mxu0 0.0
    %11483 = vmatprep.subr.mxu0 0.0
    %11484 = vmatpush1.msra.mxu0 0.0
    %11485 = vmatprep.subr.mxu0 0.0
    %11486 = vmatpush1.msra.mxu0 0.0
    %11487 = vmatprep.subr.mxu0 0.0
    %11488 = vmatpush1.msra.mxu0 0.0
    %11489 = vmatprep.subr.mxu0 0.0
    %11490 = vmatpush1.msra.mxu0 0.0
    %11491 = vmatprep.subr.mxu0 0.0
    %11492 = vmatpush1.msra.mxu0 0.0
    %11493 = vmatprep.subr.mxu0 0.0
    %11494 = vmatpush1.msra.mxu0 0.0
    %11495 = vmatprep.subr.mxu0 0.0
    %11496 = vmatpush1.msra.mxu0 0.0
    %11497 = vmatprep.subr.mxu0 0.0
    %11498 = vmatpush1.msra.mxu0 0.0
    %11499 = vmatprep.subr.mxu0 0.0
    %11500 = vmatpush1.msra.mxu0 0.0
    %11501 = vmatprep.subr.mxu0 0.0
    %11502 = vmatpush1.msra.mxu0 0.0
    %11503 = vmatprep.subr.mxu0 0.0
    %11504 = vmatpush1.msra.mxu0 0.0
    %11505 = vmatprep.subr.mxu0 0.0
    %11506 = vmatpush1.msra.mxu0 0.0
    %11507 = vmatprep.subr.mxu0 0.0
    %11508 = vmatpush1.msra.mxu0 0.0
    %11509 = vmatprep.subr.mxu0 0.0
    %11510 = vmatpush1.msra.mxu0 0.0
    %11511 = vmatprep.subr.mxu0 0.0
    %11512 = vmatpush1.msra.mxu0 0.0
    %11513 = vmatprep.subr.mxu0 0.0
    %11514 = vmatpush1.msra.mxu0 0.0
    %11515 = vmatprep.subr.mxu0 0.0
    %11516 = vmatpush1.msra.mxu0 0.0
    %11517 = vmatprep.subr.mxu0 0.0
    %11518 = vmatpush1.msra.mxu0 0.0
    %11519 = vmatprep.subr.mxu0 0.0
    %11520 = vmatpush1.msra.mxu0 0.0
    %11521 = vmatprep.subr.mxu0 0.0
    %11522 = vmatpush1.msra.mxu0 0.0
    %11523 = vmatprep.subr.mxu0 0.0
    %11524 = vmatpush1.msra.mxu0 0.0
    %11525 = vmatprep.subr.mxu0 0.0
    %11526 = vmatpush1.msra.mxu0 0.0
    %11527 = vmatprep.subr.mxu0 0.0
    %11528 = vmatpush1.msra.mxu0 0.0
    %11529 = vmatprep.subr.mxu0 0.0
    %11530 = vmatpush1.msra.mxu0 0.0
    %11531 = vmatprep.mubr.f32.mxu0 0.0
    %v11532 = vand.u32 %v11366, 4294901760
    %11533 = vmatmul.mubr.f32.gmra.mrb[0].mxu0 %v11532
    %v11534 = vpop.f32.mrb[0].mxu0
    %v11535 = vadd.f32 %v11444, %v11534
    %v11536 = vpop.f32.mrb[0].mxu0
    %11537 = vdwg.mxu0
    %11538 = vmatprep.subr.mxu0 0.0
    %v11539 = vand.u32 %v11353, 4294901760
    %v11540 = vsub.f32 %v11353, %v11539
    %11541 = vmatpush1.msra.mxu0 %v11540
    %11542 = vmatprep.subr.mxu0 0.0
    %v11543 = vand.u32 %v11354, 4294901760
    %v11544 = vsub.f32 %v11354, %v11543
    %11545 = vmatpush1.msra.mxu0 %v11544
    %11546 = vmatprep.subr.mxu0 0.0
    %v11547 = vand.u32 %v11355, 4294901760
    %v11548 = vsub.f32 %v11355, %v11547
    %11549 = vmatpush1.msra.mxu0 %v11548
    %11550 = vmatprep.subr.mxu0 0.0
    %v11551 = vand.u32 %v11356, 4294901760
    %v11552 = vsub.f32 %v11356, %v11551
    %11553 = vmatpush1.msra.mxu0 %v11552
    %11554 = vmatprep.subr.mxu0 0.0
    %11555 = vmatpush1.msra.mxu0 0.0
    %11556 = vmatprep.subr.mxu0 0.0
    %11557 = vmatpush1.msra.mxu0 0.0
    %11558 = vmatprep.subr.mxu0 0.0
    %11559 = vmatpush1.msra.mxu0 0.0
    %11560 = vmatprep.subr.mxu0 0.0
    %11561 = vmatpush1.msra.mxu0 0.0
    %11562 = vmatprep.subr.mxu0 0.0
    %11563 = vmatpush1.msra.mxu0 0.0
    %11564 = vmatprep.subr.mxu0 0.0
    %11565 = vmatpush1.msra.mxu0 0.0
    %11566 = vmatprep.subr.mxu0 0.0
    %11567 = vmatpush1.msra.mxu0 0.0
    %11568 = vmatprep.subr.mxu0 0.0
    %11569 = vmatpush1.msra.mxu0 0.0
    %11570 = vmatprep.subr.mxu0 0.0
    %11571 = vmatpush1.msra.mxu0 0.0
    %11572 = vmatprep.subr.mxu0 0.0
    %11573 = vmatpush1.msra.mxu0 0.0
    %11574 = vmatprep.subr.mxu0 0.0
    %11575 = vmatpush1.msra.mxu0 0.0
    %11576 = vmatprep.subr.mxu0 0.0
    %11577 = vmatpush1.msra.mxu0 0.0
    %11578 = vmatprep.subr.mxu0 0.0
    %11579 = vmatpush1.msra.mxu0 0.0
    %11580 = vmatprep.subr.mxu0 0.0
    %11581 = vmatpush1.msra.mxu0 0.0
    %11582 = vmatprep.subr.mxu0 0.0
    %11583 = vmatpush1.msra.mxu0 0.0
    %11584 = vmatprep.subr.mxu0 0.0
    %11585 = vmatpush1.msra.mxu0 0.0
    %11586 = vmatprep.subr.mxu0 0.0
    %11587 = vmatpush1.msra.mxu0 0.0
    %11588 = vmatprep.subr.mxu0 0.0
    %11589 = vmatpush1.msra.mxu0 0.0
    %11590 = vmatprep.subr.mxu0 0.0
    %11591 = vmatpush1.msra.mxu0 0.0
    %11592 = vmatprep.subr.mxu0 0.0
    %11593 = vmatpush1.msra.mxu0 0.0
    %11594 = vmatprep.subr.mxu0 0.0
    %11595 = vmatpush1.msra.mxu0 0.0
    %11596 = vmatprep.subr.mxu0 0.0
    %11597 = vmatpush1.msra.mxu0 0.0
    %11598 = vmatprep.subr.mxu0 0.0
    %11599 = vmatpush1.msra.mxu0 0.0
    %11600 = vmatprep.subr.mxu0 0.0
    %11601 = vmatpush1.msra.mxu0 0.0
    %11602 = vmatprep.subr.mxu0 0.0
    %11603 = vmatpush1.msra.mxu0 0.0
    %11604 = vmatprep.subr.mxu0 0.0
    %11605 = vmatpush1.msra.mxu0 0.0
    %11606 = vmatprep.subr.mxu0 0.0
    %11607 = vmatpush1.msra.mxu0 0.0
    %11608 = vmatprep.subr.mxu0 0.0
    %11609 = vmatpush1.msra.mxu0 0.0
    %11610 = vmatprep.mubr.f32.mxu0 0.0
    %v11611 = vand.u32 %v11366, 4294901760
    %v11612 = vsub.f32 %v11366, %v11611
    %11613 = vmatmul.mubr.f32.gmra.mrb[0].mxu0 %v11612
    %v11614 = vpop.f32.mrb[0].mxu0
    %v11615 = vadd.f32 %v11535, %v11614
    %v11616 = vpop.f32.mrb[0].mxu0
    %11617 = vdwg.mxu0
    %11618 = vmatprep.subr.mxu0 0.0
    %v11619 = vand.u32 %v11353, 4294901760
    %11620 = vmatpush1.msra.mxu0 %v11619
    %11621 = vmatprep.subr.mxu0 0.0
    %v11622 = vand.u32 %v11354, 4294901760
    %11623 = vmatpush1.msra.mxu0 %v11622
    %11624 = vmatprep.subr.mxu0 0.0
    %v11625 = vand.u32 %v11355, 4294901760
    %11626 = vmatpush1.msra.mxu0 %v11625
    %11627 = vmatprep.subr.mxu0 0.0
    %v11628 = vand.u32 %v11356, 4294901760
    %11629 = vmatpush1.msra.mxu0 %v11628
    %11630 = vmatprep.subr.mxu0 0.0
    %11631 = vmatpush1.msra.mxu0 0.0
    %11632 = vmatprep.subr.mxu0 0.0
    %11633 = vmatpush1.msra.mxu0 0.0
    %11634 = vmatprep.subr.mxu0 0.0
    %11635 = vmatpush1.msra.mxu0 0.0
    %11636 = vmatprep.subr.mxu0 0.0
    %11637 = vmatpush1.msra.mxu0 0.0
    %11638 = vmatprep.subr.mxu0 0.0
    %11639 = vmatpush1.msra.mxu0 0.0
    %11640 = vmatprep.subr.mxu0 0.0
    %11641 = vmatpush1.msra.mxu0 0.0
    %11642 = vmatprep.subr.mxu0 0.0
    %11643 = vmatpush1.msra.mxu0 0.0
    %11644 = vmatprep.subr.mxu0 0.0
    %11645 = vmatpush1.msra.mxu0 0.0
    %11646 = vmatprep.subr.mxu0 0.0
    %11647 = vmatpush1.msra.mxu0 0.0
    %11648 = vmatprep.subr.mxu0 0.0
    %11649 = vmatpush1.msra.mxu0 0.0
    %11650 = vmatprep.subr.mxu0 0.0
    %11651 = vmatpush1.msra.mxu0 0.0
    %11652 = vmatprep.subr.mxu0 0.0
    %11653 = vmatpush1.msra.mxu0 0.0
    %11654 = vmatprep.subr.mxu0 0.0
    %11655 = vmatpush1.msra.mxu0 0.0
    %11656 = vmatprep.subr.mxu0 0.0
    %11657 = vmatpush1.msra.mxu0 0.0
    %11658 = vmatprep.subr.mxu0 0.0
    %11659 = vmatpush1.msra.mxu0 0.0
    %11660 = vmatprep.subr.mxu0 0.0
    %11661 = vmatpush1.msra.mxu0 0.0
    %11662 = vmatprep.subr.mxu0 0.0
    %11663 = vmatpush1.msra.mxu0 0.0
    %11664 = vmatprep.subr.mxu0 0.0
    %11665 = vmatpush1.msra.mxu0 0.0
    %11666 = vmatprep.subr.mxu0 0.0
    %11667 = vmatpush1.msra.mxu0 0.0
    %11668 = vmatprep.subr.mxu0 0.0
    %11669 = vmatpush1.msra.mxu0 0.0
    %11670 = vmatprep.subr.mxu0 0.0
    %11671 = vmatpush1.msra.mxu0 0.0
    %11672 = vmatprep.subr.mxu0 0.0
    %11673 = vmatpush1.msra.mxu0 0.0
    %11674 = vmatprep.subr.mxu0 0.0
    %11675 = vmatpush1.msra.mxu0 0.0
    %11676 = vmatprep.subr.mxu0 0.0
    %11677 = vmatpush1.msra.mxu0 0.0
    %11678 = vmatprep.subr.mxu0 0.0
    %11679 = vmatpush1.msra.mxu0 0.0
    %11680 = vmatprep.subr.mxu0 0.0
    %11681 = vmatpush1.msra.mxu0 0.0
    %11682 = vmatprep.subr.mxu0 0.0
    %11683 = vmatpush1.msra.mxu0 0.0
    %11684 = vmatprep.subr.mxu0 0.0
    %11685 = vmatpush1.msra.mxu0 0.0
    %11686 = vmatprep.mubr.f32.mxu0 0.0
    %v11687 = vand.u32 %v11366, 4294901760
    %v11688 = vsub.f32 %v11366, %v11687
    %v11689 = vand.u32 %v11688, 4294901760
    %11690 = vmatmul.mubr.f32.gmra.mrb[0].mxu0 %v11689
    %v11691 = vpop.f32.mrb[0].mxu0
    %v11692 = vadd.f32 %v11615, %v11691
    %v11693 = vpop.f32.mrb[0].mxu0
    %11694 = vdwg.mxu0
    %11695 = vmatprep.subr.mxu0 0.0
    %v11696 = vand.u32 %v11353, 4294901760
    %v11697 = vsub.f32 %v11353, %v11696
    %v11698 = vand.u32 %v11697, 4294901760
    %11699 = vmatpush1.msra.mxu0 %v11698
    %11700 = vmatprep.subr.mxu0 0.0
    %v11701 = vand.u32 %v11354, 4294901760
    %v11702 = vsub.f32 %v11354, %v11701
    %v11703 = vand.u32 %v11702, 4294901760
    %11704 = vmatpush1.msra.mxu0 %v11703
    %11705 = vmatprep.subr.mxu0 0.0
    %v11706 = vand.u32 %v11355, 4294901760
    %v11707 = vsub.f32 %v11355, %v11706
    %v11708 = vand.u32 %v11707, 4294901760
    %11709 = vmatpush1.msra.mxu0 %v11708
    %11710 = vmatprep.subr.mxu0 0.0
    %v11711 = vand.u32 %v11356, 4294901760
    %v11712 = vsub.f32 %v11356, %v11711
    %v11713 = vand.u32 %v11712, 4294901760
    %11714 = vmatpush1.msra.mxu0 %v11713
    %11715 = vmatprep.subr.mxu0 0.0
    %11716 = vmatpush1.msra.mxu0 0.0
    %11717 = vmatprep.subr.mxu0 0.0
    %11718 = vmatpush1.msra.mxu0 0.0
    %11719 = vmatprep.subr.mxu0 0.0
    %11720 = vmatpush1.msra.mxu0 0.0
    %11721 = vmatprep.subr.mxu0 0.0
    %11722 = vmatpush1.msra.mxu0 0.0
    %11723 = vmatprep.subr.mxu0 0.0
    %11724 = vmatpush1.msra.mxu0 0.0
    %11725 = vmatprep.subr.mxu0 0.0
    %11726 = vmatpush1.msra.mxu0 0.0
    %11727 = vmatprep.subr.mxu0 0.0
    %11728 = vmatpush1.msra.mxu0 0.0
    %11729 = vmatprep.subr.mxu0 0.0
    %11730 = vmatpush1.msra.mxu0 0.0
    %11731 = vmatprep.subr.mxu0 0.0
    %11732 = vmatpush1.msra.mxu0 0.0
    %11733 = vmatprep.subr.mxu0 0.0
    %11734 = vmatpush1.msra.mxu0 0.0
    %11735 = vmatprep.subr.mxu0 0.0
    %11736 = vmatpush1.msra.mxu0 0.0
    %11737 = vmatprep.subr.mxu0 0.0
    %11738 = vmatpush1.msra.mxu0 0.0
    %11739 = vmatprep.subr.mxu0 0.0
    %11740 = vmatpush1.msra.mxu0 0.0
    %11741 = vmatprep.subr.mxu0 0.0
    %11742 = vmatpush1.msra.mxu0 0.0
    %11743 = vmatprep.subr.mxu0 0.0
    %11744 = vmatpush1.msra.mxu0 0.0
    %11745 = vmatprep.subr.mxu0 0.0
    %11746 = vmatpush1.msra.mxu0 0.0
    %11747 = vmatprep.subr.mxu0 0.0
    %11748 = vmatpush1.msra.mxu0 0.0
    %11749 = vmatprep.subr.mxu0 0.0
    %11750 = vmatpush1.msra.mxu0 0.0
    %11751 = vmatprep.subr.mxu0 0.0
    %11752 = vmatpush1.msra.mxu0 0.0
    %11753 = vmatprep.subr.mxu0 0.0
    %11754 = vmatpush1.msra.mxu0 0.0
    %11755 = vmatprep.subr.mxu0 0.0
    %11756 = vmatpush1.msra.mxu0 0.0
    %11757 = vmatprep.subr.mxu0 0.0
    %11758 = vmatpush1.msra.mxu0 0.0
    %11759 = vmatprep.subr.mxu0 0.0
    %11760 = vmatpush1.msra.mxu0 0.0
    %11761 = vmatprep.subr.mxu0 0.0
    %11762 = vmatpush1.msra.mxu0 0.0
    %11763 = vmatprep.subr.mxu0 0.0
    %11764 = vmatpush1.msra.mxu0 0.0
    %11765 = vmatprep.subr.mxu0 0.0
    %11766 = vmatpush1.msra.mxu0 0.0
    %11767 = vmatprep.subr.mxu0 0.0
    %11768 = vmatpush1.msra.mxu0 0.0
    %11769 = vmatprep.subr.mxu0 0.0
    %11770 = vmatpush1.msra.mxu0 0.0
    %11771 = vmatprep.mubr.f32.mxu0 0.0
    %v11772 = vand.u32 %v11366, 4294901760
    %11773 = vmatmul.mubr.f32.gmra.mrb[0].mxu0 %v11772
    %v11774 = vpop.f32.mrb[0].mxu0
    %v11775 = vadd.f32 %v11692, %v11774
    %v11776 = vpop.f32.mrb[0].mxu0
    %11777 = vdwg.mxu0
    %11778 = vmatprep.subr.mxu0 0.0
    %v11779 = vand.u32 %v11353, 4294901760
    %11780 = vmatpush1.msra.mxu0 %v11779
    %11781 = vmatprep.subr.mxu0 0.0
    %v11782 = vand.u32 %v11354, 4294901760
    %11783 = vmatpush1.msra.mxu0 %v11782
    %11784 = vmatprep.subr.mxu0 0.0
    %v11785 = vand.u32 %v11355, 4294901760
    %11786 = vmatpush1.msra.mxu0 %v11785
    %11787 = vmatprep.subr.mxu0 0.0
    %v11788 = vand.u32 %v11356, 4294901760
    %11789 = vmatpush1.msra.mxu0 %v11788
    %11790 = vmatprep.subr.mxu0 0.0
    %11791 = vmatpush1.msra.mxu0 0.0
    %11792 = vmatprep.subr.mxu0 0.0
    %11793 = vmatpush1.msra.mxu0 0.0
    %11794 = vmatprep.subr.mxu0 0.0
    %11795 = vmatpush1.msra.mxu0 0.0
    %11796 = vmatprep.subr.mxu0 0.0
    %11797 = vmatpush1.msra.mxu0 0.0
    %11798 = vmatprep.subr.mxu0 0.0
    %11799 = vmatpush1.msra.mxu0 0.0
    %11800 = vmatprep.subr.mxu0 0.0
    %11801 = vmatpush1.msra.mxu0 0.0
    %11802 = vmatprep.subr.mxu0 0.0
    %11803 = vmatpush1.msra.mxu0 0.0
    %11804 = vmatprep.subr.mxu0 0.0
    %11805 = vmatpush1.msra.mxu0 0.0
    %11806 = vmatprep.subr.mxu0 0.0
    %11807 = vmatpush1.msra.mxu0 0.0
    %11808 = vmatprep.subr.mxu0 0.0
    %11809 = vmatpush1.msra.mxu0 0.0
    %11810 = vmatprep.subr.mxu0 0.0
    %11811 = vmatpush1.msra.mxu0 0.0
    %11812 = vmatprep.subr.mxu0 0.0
    %11813 = vmatpush1.msra.mxu0 0.0
    %11814 = vmatprep.subr.mxu0 0.0
    %11815 = vmatpush1.msra.mxu0 0.0
    %11816 = vmatprep.subr.mxu0 0.0
    %11817 = vmatpush1.msra.mxu0 0.0
    %11818 = vmatprep.subr.mxu0 0.0
    %11819 = vmatpush1.msra.mxu0 0.0
    %11820 = vmatprep.subr.mxu0 0.0
    %11821 = vmatpush1.msra.mxu0 0.0
    %11822 = vmatprep.subr.mxu0 0.0
    %11823 = vmatpush1.msra.mxu0 0.0
    %11824 = vmatprep.subr.mxu0 0.0
    %11825 = vmatpush1.msra.mxu0 0.0
    %11826 = vmatprep.subr.mxu0 0.0
    %11827 = vmatpush1.msra.mxu0 0.0
    %11828 = vmatprep.subr.mxu0 0.0
    %11829 = vmatpush1.msra.mxu0 0.0
    %11830 = vmatprep.subr.mxu0 0.0
    %11831 = vmatpush1.msra.mxu0 0.0
    %11832 = vmatprep.subr.mxu0 0.0
    %11833 = vmatpush1.msra.mxu0 0.0
    %11834 = vmatprep.subr.mxu0 0.0
    %11835 = vmatpush1.msra.mxu0 0.0
    %11836 = vmatprep.subr.mxu0 0.0
    %11837 = vmatpush1.msra.mxu0 0.0
    %11838 = vmatprep.subr.mxu0 0.0
    %11839 = vmatpush1.msra.mxu0 0.0
    %11840 = vmatprep.subr.mxu0 0.0
    %11841 = vmatpush1.msra.mxu0 0.0
    %11842 = vmatprep.subr.mxu0 0.0
    %11843 = vmatpush1.msra.mxu0 0.0
    %11844 = vmatprep.subr.mxu0 0.0
    %11845 = vmatpush1.msra.mxu0 0.0
    %11846 = vmatprep.mubr.f32.mxu0 0.0
    %v11847 = vand.u32 %v11366, 4294901760
    %11848 = vmatmul.mubr.f32.gmra.mrb[0].mxu0 %v11847
    %v11849 = vpop.f32.mrb[0].mxu0
    %v11850 = vadd.f32 %v11775, %v11849
    %v11851 = vpop.f32.mrb[0].mxu0
    %11852 = vdwg.mxu0
    %v11853 = vtanh.pop %v11850
    %vm11854 = vcmask 58368
    %11855 = vst.msk [vmem:[#allocation2] sm:$0x3] %vm11854, %v11853
    // Predicated region
    $region54: #{tpu_custom_call.1} parent=1 // pred_check
      _
    $region55: #{tpu_custom_call.1} parent=1 // pred_check_branch
      %11857 = sbr.rel (0) target = $region57
    $region56: #{tpu_custom_call.1} parent=1 // pred_region
      %s11859 = ssub.s32 32, 32
      %11860 = vsyncadd [#allocation3], %s11859
      %s11862 = sshll.u32 [#allocation2], 4
      %s11863 = int_to_ptr.vmem [resolvable:$true] %s11862
      %11865 = dma.vmem_to_hbm [thread:$0]  %s11863, 32, %s13, [#allocation3]
    $region57: #{tpu_custom_call.1} parent=1 // pred_fallthru
      _
    // Predicated region
    $region58: #{tpu_custom_call.1} parent=1 // pred_check
      _
    $region59: #{tpu_custom_call.1} parent=1 // pred_check_branch
      %11867 = sbr.rel (0) target = $region61
    $region60: #{tpu_custom_call.1} parent=1 // pred_region
      %11868 = dma.done [#allocation3], 32
    $region61: #{tpu_custom_call.1} parent=1 // pred_fallthru
      _
    %11869 = vsyncpa [#allocation3], 1

</llo_original>
